<compile_context>
chip_gen: v7x
topology: tpu7x:2x2x1
jax: 0.10.0
libtpu: 0.0.40
codegen_flags: <defaults>
</compile_context>

<pallas_src>
import functools

import jax
import jax.numpy as jnp
from jax.experimental import pallas as pl
from jax.experimental.pallas import tpu as pltpu


CHAN_PAD = 128  # lane-dense padding width for narrow (D=3 / Cout=2,3) channels


def _round_up(x, m):
    return ((x + m - 1) // m) * m


# ----------------------- fused GEMM + bias + activation ----------------------

def _matmul_bias_act_kernel(a_ref, b_ref, bias_ref, o_ref, *, activation):
    acc = jnp.dot(a_ref[...], b_ref[...], preferred_element_type=jnp.float32)
    acc = acc + bias_ref[...]
    if activation == "relu":
        acc = jnp.maximum(acc, 0.0)
    elif activation == "tanh":
        acc = jnp.tanh(acc)
    o_ref[...] = acc.astype(o_ref.dtype)


def matmul_bias_act(a, b, bias, activation="none", out_dtype=jnp.float32, tm=512):
    """(M,K) @ (K,N) + bias with fused activation, tiled over M ("parallel")."""
    M, K = a.shape
    Kb, N = b.shape
    assert K == Kb
    tm = min(tm, _round_up(M, 8))
    Mp = _round_up(M, tm)
    if Mp != M:
        a = jnp.pad(a, ((0, Mp - M), (0, 0)))
    out = pl.pallas_call(
        functools.partial(_matmul_bias_act_kernel, activation=activation),
        out_shape=jax.ShapeDtypeStruct((Mp, N), out_dtype),
        grid=(Mp // tm,),
        in_specs=[pl.BlockSpec((tm, K), lambda i: (i, 0)),
                  pl.BlockSpec((K, N), lambda i: (0, 0)),      # weights resident
                  pl.BlockSpec((1, N), lambda i: (0, 0))],
        out_specs=pl.BlockSpec((tm, N), lambda i: (i, 0)),
        compiler_params=pltpu.CompilerParams(
            dimension_semantics=("parallel",)),
    )(a, b, bias.reshape(1, N).astype(jnp.float32))
    return out[:M]


# ------------- fused encoder-tail (conv3) + vector quantizer + MSE -----------

def _encvq_kernel(cols_ref, w3_ref, b3_ref, a_ref, c2_ref, cbpq_ref, pqb_ref,
                  out_ref, loss_ref, acc_sm, *, d_latent, m_true):
    i = pl.program_id(0)
    tm = cols_ref.shape[0]

    @pl.when(i == 0)
    def _():
        acc_sm[0] = 0.0

    # encoder conv3 tile (Cout padded to 128 lanes; padded lanes are exactly 0).
    z = jnp.dot(cols_ref[...], w3_ref[...], preferred_element_type=jnp.float32)
    z = z + b3_ref[...]                                        # (tm, 128), z_e in [:, :D]

    # Squared-distance scores vs codebook; quant_conv is folded into a_ref / c2_ref
    # by the wrapper. Contraction depth D=3 -> VPU broadcast-FMA sweeps, not MXU.
    score = c2_ref[...]                                        # (1, K)
    for d in range(d_latent):
        score = score - 2.0 * z[:, d:d + 1] * a_ref[d:d + 1, :]   # -> (tm, K)

    # nearest code, lowest-index tie-break (matches torch.argmin).
    k = score.shape[1]
    smin = jnp.min(score, axis=1, keepdims=True)
    lane = jax.lax.broadcasted_iota(jnp.int32, score.shape, 1)
    idx = jnp.min(jnp.where(score <= smin, lane, k), axis=1, keepdims=True)
    onehot = (lane == idx).astype(jnp.float32)                 # (tm, K)

    # codebook lookup with post_quant_conv folded in (codebook @ pq_w, lane-padded).
    q = jnp.dot(onehot, cbpq_ref[...],
                preferred_element_type=jnp.float32) + pqb_ref[...]   # (tm, 128)

    # latent MSE: mean((quantized - z_e)^2); padded lanes are 0 on both sides,
    # rows past m_true (tile padding) are masked out.
    row = i * tm + jax.lax.broadcasted_iota(jnp.int32, (tm, 1), 0)
    valid = (row < m_true).astype(jnp.float32)
    diff = (q - z) * valid
    acc_sm[0] = acc_sm[0] + jnp.sum(diff * diff)

    out_ref[...] = q.astype(out_ref.dtype)

    @pl.when(i == pl.num_programs(0) - 1)
    def _():
        loss_ref[0, 0] = acc_sm[0] / float(m_true * d_latent)


def encvq_fused(cols, w3p, b3p, a_mat, c2eff, cbpq, pqbp, *, d_latent, m_true, tm=256):
    M0, K3 = cols.shape
    K = cbpq.shape[0]
    tm = min(tm, _round_up(m_true, 8))
    Mp = _round_up(M0, tm)
    if Mp != M0:
        cols = jnp.pad(cols, ((0, Mp - M0), (0, 0)))
    out, loss = pl.pallas_call(
        functools.partial(_encvq_kernel, d_latent=d_latent, m_true=m_true),
        out_shape=(jax.ShapeDtypeStruct((Mp, CHAN_PAD), jnp.bfloat16),
                   jax.ShapeDtypeStruct((1, 1), jnp.float32)),
        grid=(Mp // tm,),
        in_specs=[pl.BlockSpec((tm, K3), lambda i: (i, 0)),
                  pl.BlockSpec((K3, CHAN_PAD), lambda i: (0, 0)),
                  pl.BlockSpec((1, CHAN_PAD), lambda i: (0, 0)),
                  pl.BlockSpec((d_latent, K), lambda i: (0, 0)),
                  pl.BlockSpec((1, K), lambda i: (0, 0)),
                  pl.BlockSpec((K, CHAN_PAD), lambda i: (0, 0)),
                  pl.BlockSpec((1, CHAN_PAD), lambda i: (0, 0))],
        out_specs=(pl.BlockSpec((tm, CHAN_PAD), lambda i: (i, 0)),
                   pl.BlockSpec(memory_space=pltpu.MemorySpace.SMEM)),
        scratch_shapes=[pltpu.SMEM((1,), jnp.float32)],
        compiler_params=pltpu.CompilerParams(
            dimension_semantics=("arbitrary",)),   # loss accumulator is revisited
    )(cols, w3p, b3p, a_mat, c2eff, cbpq, pqbp)
    return out, loss[0, 0]


# --------------------------------- conv glue ---------------------------------

def _im2col(xp, kh, kw, stride):
    # xp: (N, H, W, C), already padded
    N, H, W, C = xp.shape
    oh = (H - kh) // stride + 1
    ow = (W - kw) // stride + 1
    cols = []
    for i in range(kh):
        for j in range(kw):
            cols.append(xp[:, i:i + stride * (oh - 1) + 1:stride,
                           j:j + stride * (ow - 1) + 1:stride, :])
    cols = jnp.concatenate(cols, axis=-1)                      # (N, oh, ow, kh*kw*C)
    return cols.reshape(N * oh * ow, kh * kw * C), (N, oh, ow)


def conv2d_nhwc(x, w_hwio, bias, *, stride, pad, activation="none",
                out_dtype=jnp.bfloat16, cout_pad=None):
    kh, kw, cin, cout = w_hwio.shape
    xp = jnp.pad(x, ((0, 0), (pad, pad), (pad, pad), (0, 0)))
    cols, (n, oh, ow) = _im2col(xp, kh, kw, stride)
    wm = w_hwio.reshape(kh * kw * cin, cout)
    bvec = bias
    if cout_pad is not None and cout_pad > cout:               # lane-dense output
        wm = jnp.pad(wm, ((0, 0), (0, cout_pad - cout)))
        bvec = jnp.pad(bias, (0, cout_pad - cout))
    out = matmul_bias_act(cols.astype(jnp.bfloat16), wm.astype(jnp.bfloat16),
                          bvec, activation, out_dtype)
    return out[:, :cout].reshape(n, oh, ow, cout)


def _subpixel_weight_s2(wt):
    """ConvTranspose2d(k=4, s=2, p=1) weight (Cin,Cout,4,4) -> (9*Cin, 4*Cout) GEMM
    weight for a 3x3-window sub-pixel GEMM producing the 4 output phases."""
    cin, cout = wt.shape[0], wt.shape[1]
    w = jnp.zeros((3, 3, cin, 2, 2, cout), dtype=wt.dtype)
    for py in range(2):
        for px in range(2):
            for a in (py, py + 1):
                for b in (px, px + 1):
                    ky = 3 + py - 2 * a
                    kx = 3 + px - 2 * b
                    w = w.at[a, b, :, py, px, :].set(wt[:, :, ky, kx])
    return w.reshape(9 * cin, 4 * cout)


def conv_transpose2d_s2(x, wt, bias, *, activation="none", out_dtype=jnp.bfloat16):
    """ConvTranspose2d(k=4, s=2, p=1) via sub-pixel decomposition: one lane-dense
    GEMM (4*Cout columns) over the original (un-dilated) input + pixel shuffle."""
    cin, cout = wt.shape[0], wt.shape[1]
    n, h, w, _ = x.shape
    xp = jnp.pad(x, ((0, 0), (1, 1), (1, 1), (0, 0)))
    cols, _ = _im2col(xp, 3, 3, 1)                             # (n*h*w, 9*cin)
    wsub = _subpixel_weight_s2(wt)                             # (9*cin, 4*cout)
    bsub = jnp.tile(bias, 4)
    out = matmul_bias_act(cols.astype(jnp.bfloat16), wsub.astype(jnp.bfloat16),
                          bsub, activation, out_dtype)
    out = out.reshape(n, h, w, 2, 2, cout)
    out = jnp.transpose(out, (0, 1, 3, 2, 4, 5)).reshape(n, 2 * h, 2 * w, cout)
    return out


def conv_transpose2d_s1(x, wt, bias, *, padding=1, activation="none",
                        out_dtype=jnp.float32, cout_pad=None):
    """Stride-1 ConvTranspose2d == Conv2d with flipped kernel, padding k-1-p."""
    kh = wt.shape[2]
    w_conv = jnp.transpose(wt[:, :, ::-1, ::-1], (2, 3, 0, 1))     # HWIO
    return conv2d_nhwc(x, w_conv, bias, stride=1, pad=kh - 1 - padding,
                       activation=activation, out_dtype=out_dtype, cout_pad=cout_pad)


# --------------------------------- VQVAE model -------------------------------

def init_params(key, embedding_dim=3, num_embeddings=128):
    ks = jax.random.split(key, 12)

    def norm(k, shape, scale=0.05):
        return scale * jax.random.normal(k, shape, jnp.float32)

    return {
        # Encoder: Conv2d(2,128,k4,s2,p1), Conv2d(128,128,k4,s2,p1), Conv2d(128,D,k3,s1,p1)
        "enc_w1": norm(ks[0], (4, 4, 2, 128)),   "enc_b1": norm(ks[1], (128,)),
        "enc_w2": norm(ks[2], (4, 4, 128, 128)), "enc_b2": norm(ks[3], (128,)),
        "enc_w3": norm(ks[4], (3, 3, 128, embedding_dim)),
        "enc_b3": norm(ks[5], (embedding_dim,)),
        # Quantizer core: codebook + 1x1 quant / post-quant convs (identity init)
        "codebook": norm(ks[6], (num_embeddings, embedding_dim), scale=1.0 / num_embeddings),
        "quant_w": jnp.eye(embedding_dim, dtype=jnp.float32),
        "quant_b": jnp.zeros((embedding_dim,), jnp.float32),
        "pq_w": jnp.eye(embedding_dim, dtype=jnp.float32),
        "pq_b": jnp.zeros((embedding_dim,), jnp.float32),
        # Decoder (PyTorch ConvTranspose2d weight layout (Cin, Cout, kH, kW)):
        "dec_w1": norm(ks[7], (embedding_dim, 128, 4, 4)), "dec_b1": norm(ks[8], (128,)),
        "dec_w2": norm(ks[9], (128, 128, 4, 4)),           "dec_b2": norm(ks[10], (128,)),
        "dec_w3": norm(ks[11], (128, 2, 3, 3)),
        "dec_b3": jnp.zeros((2,), jnp.float32),
    }


def vqvae_forward(params, x_nchw, commitment_cost=0.25):
    x = jnp.transpose(x_nchw, (0, 2, 3, 1)).astype(jnp.float32)   # NCHW -> NHWC

    # ----- Encoder (conv1/conv2 as tiled bf16 GEMMs; conv3 fused into the quantizer)
    h = conv2d_nhwc(x, params["enc_w1"], params["enc_b1"], stride=2, pad=1,
                    activation="relu", out_dtype=jnp.bfloat16)
    h = conv2d_nhwc(h, params["enc_w2"], params["enc_b2"], stride=2, pad=1,
                    activation="relu", out_dtype=jnp.bfloat16)

    n, hq, wq, _ = h.shape
    d_latent = params["codebook"].shape[1]
    k_codes = params["codebook"].shape[0]
    m = n * hq * wq

    # im2col for encoder conv3 (3x3, stride 1, pad 1); the conv runs inside the fused kernel.
    hp = jnp.pad(h, ((0, 0), (1, 1), (1, 1), (0, 0)))
    cols3, _ = _im2col(hp, 3, 3, 1)                               # (m, 9*128) bf16

    # Fold quant_conv / post_quant_conv (1x1, D=3) into the codebook matrices (tiny glue).
    w3p = jnp.pad(params["enc_w3"].reshape(-1, d_latent),
                  ((0, 0), (0, CHAN_PAD - d_latent))).astype(jnp.bfloat16)
    b3p = jnp.pad(params["enc_b3"], (0, CHAN_PAD - d_latent)).reshape(1, CHAN_PAD)
    e = params["codebook"]                                        # (K, D)
    a_mat = params["quant_w"] @ e.T                               # (D, K)
    c2eff = (jnp.sum(e * e, axis=1)
             - 2.0 * (params["quant_b"] @ e.T)).reshape(1, k_codes)
    cbpq = jnp.pad(e @ params["pq_w"], ((0, 0), (0, CHAN_PAD - d_latent)))   # (K, 128)
    pqbp = jnp.pad(params["pq_b"], (0, CHAN_PAD - d_latent)).reshape(1, CHAN_PAD)

    # TODO(synk): diffusers VQModel's internal conv encoder/decoder stacks are not
    # reproduced (source not provided); only the quantization core is implemented.
    q_pad, latent_loss = encvq_fused(cols3.astype(jnp.bfloat16), w3p, b3p,
                                     a_mat, c2eff, cbpq, pqbp,
                                     d_latent=d_latent, m_true=m)
    # Forward values of q_latent_loss / e_latent_loss coincide (detach affects grads only).
    q_latent_loss = latent_loss
    e_latent_loss = latent_loss

    quantized = q_pad[:m, :d_latent].reshape(n, hq, wq, d_latent)

    # ----- Decoder -----
    d1 = conv_transpose2d_s2(quantized, params["dec_w1"], params["dec_b1"],
                             activation="relu", out_dtype=jnp.bfloat16)
    d2 = conv_transpose2d_s2(d1, params["dec_w2"], params["dec_b2"],
                             activation="relu", out_dtype=jnp.bfloat16)
    d3 = conv_transpose2d_s1(d2, params["dec_w3"], params["dec_b3"], padding=1,
                             activation="tanh", out_dtype=jnp.float32,
                             cout_pad=CHAN_PAD)

    x_recon = jnp.transpose(d3, (0, 3, 1, 2))                     # NHWC -> NCHW
    return x_recon, q_latent_loss, commitment_cost * e_latent_loss


# ------------------------------------ main -----------------------------------

if __name__ == "__main__":
    # Encoder.conv1 has in_channels=2 -> input is NCHW (batch=2, channels=2, 16, 16).
    x = jax.random.normal(jax.random.PRNGKey(0), (2, 2, 16, 16), jnp.float32)
    params = init_params(jax.random.PRNGKey(42))

    fwd = jax.jit(vqvae_forward)
    x_recon, q_loss, commit_loss = jax.block_until_ready(fwd(params, x))

    assert x_recon.shape == (2, 2, 16, 16), x_recon.shape
    assert q_loss.shape == () and commit_loss.shape == ()
    assert jnp.all(jnp.isfinite(x_recon)) and jnp.isfinite(q_loss) and jnp.isfinite(commit_loss)
    print("KERNEL_OK")
</pallas_src>

<mosaic_0001>
module attributes {stable_mosaic.version = 11 : i64} {
  func.func @_matmul_bias_act_kernel(%arg0: i32, %arg1: memref<128x32xbf16, #tpu.memory_space<vmem>>, %arg2: memref<32x128xbf16, #tpu.memory_space<vmem>>, %arg3: memref<1x128xf32, #tpu.memory_space<vmem>>, %arg4: memref<128x128xbf16, #tpu.memory_space<vmem>>) attributes {dimension_semantics = [#tpu.dimension_semantics<parallel>], iteration_bounds = array<i64: 1>, scalar_prefetch = 0 : i64, scratch_operands = 0 : i64, tpu.core_type = #tpu.core_type<tc>, window_params = [{transform_indices = @transform_0, window_bounds = array<i64: 128, 32>}, {pipeline_mode = #tpu.pipeline_mode<synchronous>, transform_indices = @transform_1, window_bounds = array<i64: 32, 128>}, {pipeline_mode = #tpu.pipeline_mode<synchronous>, transform_indices = @transform_2, window_bounds = array<i64: 1, 128>}, {transform_indices = @transform_3, window_bounds = array<i64: 128, 128>}]} {
    %c0 = arith.constant 0 : index
    %c0_0 = arith.constant 0 : index
    %0 = vector.load %arg1[%c0, %c0_0] : memref<128x32xbf16, #tpu.memory_space<vmem>>, vector<128x32xbf16>
    %c0_1 = arith.constant 0 : index
    %c0_2 = arith.constant 0 : index
    %1 = vector.load %arg2[%c0_1, %c0_2] : memref<32x128xbf16, #tpu.memory_space<vmem>>, vector<32x128xbf16>
    %cst = arith.constant dense<0.000000e+00> : vector<128x128xf32>
    %2 = tpu.matmul %0, %1, %cst {dimension_numbers = #tpu.dot_dimension_numbers<[1], [0], [0], [1], [0, 0, 1, 1], [], []>} : vector<128x32xbf16>, vector<32x128xbf16>, vector<128x128xf32> -> vector<128x128xf32>
    %c0_3 = arith.constant 0 : index
    %c0_4 = arith.constant 0 : index
    %3 = vector.load %arg3[%c0_3, %c0_4] : memref<1x128xf32, #tpu.memory_space<vmem>>, vector<1x128xf32>
    %4 = vector.broadcast %3 : vector<1x128xf32> to vector<128x128xf32>
    %5 = arith.addf %2, %4 : vector<128x128xf32>
    %cst_5 = arith.constant 0.000000e+00 : f32
    %6 = vector.broadcast %cst_5 : f32 to vector<128x128xf32>
    %7 = arith.maximumf %5, %6 : vector<128x128xf32>
    %8 = arith.truncf %7 : vector<128x128xf32> to vector<128x128xbf16>
    %c0_6 = arith.constant 0 : index
    %c0_7 = arith.constant 0 : index
    %9 = vector.load %arg4[%c0_6, %c0_7] : memref<128x128xbf16, #tpu.memory_space<vmem>>, vector<128x128xbf16>
    tpu.vector_store %arg4[%c0_6, %c0_7], %8 {strides = array<i32>} : memref<128x128xbf16, #tpu.memory_space<vmem>>, vector<128x128xbf16>,
    return
  }
  func.func @transform_0(%arg0: i32) -> (i32, i32) {
    %c0_i32 = arith.constant 0 : i32
    %c0_i32_0 = arith.constant 0 : i32
    return %arg0, %c0_i32 : i32, i32
  }
  func.func @transform_1(%arg0: i32) -> (i32, i32) {
    %c0_i32 = arith.constant 0 : i32
    %c0_i32_0 = arith.constant 0 : i32
    %c0_i32_1 = arith.constant 0 : i32
    return %c0_i32, %c0_i32_0 : i32, i32
  }
  func.func @transform_2(%arg0: i32) -> (i32, i32) {
    %c0_i32 = arith.constant 0 : i32
    %c0_i32_0 = arith.constant 0 : i32
    %c0_i32_1 = arith.constant 0 : i32
    return %c0_i32, %c0_i32_0 : i32, i32
  }
  func.func @transform_3(%arg0: i32) -> (i32, i32) {
    %c0_i32 = arith.constant 0 : i32
    %c0_i32_0 = arith.constant 0 : i32
    return %arg0, %c0_i32 : i32, i32
  }
}

module attributes {stable_mosaic.version = 11 : i64} {
  func.func @_matmul_bias_act_kernel(%arg0: i32, %arg1: memref<32x2048xbf16, #tpu.memory_space<vmem>>, %arg2: memref<2048x128xbf16, #tpu.memory_space<vmem>>, %arg3: memref<1x128xf32, #tpu.memory_space<vmem>>, %arg4: memref<32x128xbf16, #tpu.memory_space<vmem>>) attributes {dimension_semantics = [#tpu.dimension_semantics<parallel>], iteration_bounds = array<i64: 1>, scalar_prefetch = 0 : i64, scratch_operands = 0 : i64, tpu.core_type = #tpu.core_type<tc>, window_params = [{transform_indices = @transform_0, window_bounds = array<i64: 32, 2048>}, {pipeline_mode = #tpu.pipeline_mode<synchronous>, transform_indices = @transform_1, window_bounds = array<i64: 2048, 128>}, {pipeline_mode = #tpu.pipeline_mode<synchronous>, transform_indices = @transform_2, window_bounds = array<i64: 1, 128>}, {transform_indices = @transform_3, window_bounds = array<i64: 32, 128>}]} {
    %c0 = arith.constant 0 : index
    %c0_0 = arith.constant 0 : index
    %0 = vector.load %arg1[%c0, %c0_0] : memref<32x2048xbf16, #tpu.memory_space<vmem>>, vector<32x2048xbf16>
    %c0_1 = arith.constant 0 : index
    %c0_2 = arith.constant 0 : index
    %1 = vector.load %arg2[%c0_1, %c0_2] : memref<2048x128xbf16, #tpu.memory_space<vmem>>, vector<2048x128xbf16>
    %cst = arith.constant dense<0.000000e+00> : vector<32x128xf32>
    %2 = tpu.matmul %0, %1, %cst {dimension_numbers = #tpu.dot_dimension_numbers<[1], [0], [0], [1], [0, 0, 1, 1], [], []>} : vector<32x2048xbf16>, vector<2048x128xbf16>, vector<32x128xf32> -> vector<32x128xf32>
    %c0_3 = arith.constant 0 : index
    %c0_4 = arith.constant 0 : index
    %3 = vector.load %arg3[%c0_3, %c0_4] : memref<1x128xf32, #tpu.memory_space<vmem>>, vector<1x128xf32>
    %4 = vector.broadcast %3 : vector<1x128xf32> to vector<32x128xf32>
    %5 = arith.addf %2, %4 : vector<32x128xf32>
    %cst_5 = arith.constant 0.000000e+00 : f32
    %6 = vector.broadcast %cst_5 : f32 to vector<32x128xf32>
    %7 = arith.maximumf %5, %6 : vector<32x128xf32>
    %8 = arith.truncf %7 : vector<32x128xf32> to vector<32x128xbf16>
    %c0_6 = arith.constant 0 : index
    %c0_7 = arith.constant 0 : index
    %9 = vector.load %arg4[%c0_6, %c0_7] : memref<32x128xbf16, #tpu.memory_space<vmem>>, vector<32x128xbf16>
    tpu.vector_store %arg4[%c0_6, %c0_7], %8 {strides = array<i32>} : memref<32x128xbf16, #tpu.memory_space<vmem>>, vector<32x128xbf16>,
    return
  }
  func.func @transform_0(%arg0: i32) -> (i32, i32) {
    %c0_i32 = arith.constant 0 : i32
    %c0_i32_0 = arith.constant 0 : i32
    return %arg0, %c0_i32 : i32, i32
  }
  func.func @transform_1(%arg0: i32) -> (i32, i32) {
    %c0_i32 = arith.constant 0 : i32
    %c0_i32_0 = arith.constant 0 : i32
    %c0_i32_1 = arith.constant 0 : i32
    return %c0_i32, %c0_i32_0 : i32, i32
  }
  func.func @transform_2(%arg0: i32) -> (i32, i32) {
    %c0_i32 = arith.constant 0 : i32
    %c0_i32_0 = arith.constant 0 : i32
    %c0_i32_1 = arith.constant 0 : i32
    return %c0_i32, %c0_i32_0 : i32, i32
  }
  func.func @transform_3(%arg0: i32) -> (i32, i32) {
    %c0_i32 = arith.constant 0 : i32
    %c0_i32_0 = arith.constant 0 : i32
    return %arg0, %c0_i32 : i32, i32
  }
}

module attributes {stable_mosaic.version = 11 : i64} {
  func.func @_encvq_kernel(%arg0: i32, %arg1: memref<32x1152xbf16, #tpu.memory_space<vmem>>, %arg2: memref<1152x128xbf16, #tpu.memory_space<vmem>>, %arg3: memref<1x128xf32, #tpu.memory_space<vmem>>, %arg4: memref<3x128xf32, #tpu.memory_space<vmem>>, %arg5: memref<1x128xf32, #tpu.memory_space<vmem>>, %arg6: memref<128x128xf32, #tpu.memory_space<vmem>>, %arg7: memref<1x128xf32, #tpu.memory_space<vmem>>, %arg8: memref<32x128xbf16, #tpu.memory_space<vmem>>, %arg9: memref<1x1xf32, #tpu.memory_space<smem>>, %arg10: memref<1xf32, #tpu.memory_space<smem>>) attributes {dimension_semantics = [#tpu.dimension_semantics<arbitrary>], iteration_bounds = array<i64: 1>, scalar_prefetch = 0 : i64, scratch_operands = 1 : i64, tpu.core_type = #tpu.core_type<tc>, window_params = [{transform_indices = @transform_0, window_bounds = array<i64: 32, 1152>}, {pipeline_mode = #tpu.pipeline_mode<synchronous>, transform_indices = @transform_1, window_bounds = array<i64: 1152, 128>}, {pipeline_mode = #tpu.pipeline_mode<synchronous>, transform_indices = @transform_2, window_bounds = array<i64: 1, 128>}, {pipeline_mode = #tpu.pipeline_mode<synchronous>, transform_indices = @transform_3, window_bounds = array<i64: 3, 128>}, {pipeline_mode = #tpu.pipeline_mode<synchronous>, transform_indices = @transform_4, window_bounds = array<i64: 1, 128>}, {pipeline_mode = #tpu.pipeline_mode<synchronous>, transform_indices = @transform_5, window_bounds = array<i64: 128, 128>}, {pipeline_mode = #tpu.pipeline_mode<synchronous>, transform_indices = @transform_6, window_bounds = array<i64: 1, 128>}, {transform_indices = @transform_7, window_bounds = array<i64: 32, 128>}, {transform_indices = @transform_8, window_bounds = array<i64: 1, 1>}]} {
    %c0_i32 = arith.constant 0 : i32
    %0 = arith.cmpi eq, %arg0, %c0_i32 : i32
    %1 = arith.extui %0 : i1 to i32
    %c0_i32_0 = arith.constant 0 : i32
    %2 = arith.cmpi ne, %1, %c0_i32_0 : i32
    scf.if %2 {
      %cst_30 = arith.constant 0.000000e+00 : f32
      %c0_31 = arith.constant 0 : index
      %77 = memref.load %arg10[%c0_31] : memref<1xf32, #tpu.memory_space<smem>>
      memref.store %cst_30, %arg10[%c0_31] : memref<1xf32, #tpu.memory_space<smem>>
    } else {
    }
    %c0 = arith.constant 0 : index
    %c0_1 = arith.constant 0 : index
    %3 = vector.load %arg1[%c0, %c0_1] : memref<32x1152xbf16, #tpu.memory_space<vmem>>, vector<32x1152xbf16>
    %c0_2 = arith.constant 0 : index
    %c0_3 = arith.constant 0 : index
    %4 = vector.load %arg2[%c0_2, %c0_3] : memref<1152x128xbf16, #tpu.memory_space<vmem>>, vector<1152x128xbf16>
    %cst = arith.constant dense<0.000000e+00> : vector<32x128xf32>
    %5 = tpu.matmul %3, %4, %cst {dimension_numbers = #tpu.dot_dimension_numbers<[1], [0], [0], [1], [0, 0, 1, 1], [], []>} : vector<32x1152xbf16>, vector<1152x128xbf16>, vector<32x128xf32> -> vector<32x128xf32>
    %c0_4 = arith.constant 0 : index
    %c0_5 = arith.constant 0 : index
    %6 = vector.load %arg3[%c0_4, %c0_5] : memref<1x128xf32, #tpu.memory_space<vmem>>, vector<1x128xf32>
    %7 = vector.broadcast %6 : vector<1x128xf32> to vector<32x128xf32>
    %8 = arith.addf %5, %7 : vector<32x128xf32>
    %c0_6 = arith.constant 0 : index
    %c0_7 = arith.constant 0 : index
    %9 = vector.load %arg5[%c0_6, %c0_7] : memref<1x128xf32, #tpu.memory_space<vmem>>, vector<1x128xf32>
    %10 = vector.extract_strided_slice %8 {offsets = [0, 0], sizes = [32, 1], strides = [1, 1]} : vector<32x128xf32> to vector<32x1xf32>
    %cst_8 = arith.constant 2.000000e+00 : f32
    %11 = vector.broadcast %cst_8 : f32 to vector<32x1xf32>
    %12 = arith.mulf %11, %10 : vector<32x1xf32>
    %c0_9 = arith.constant 0 : index
    %c0_10 = arith.constant 0 : index
    %13 = vector.load %arg4[%c0_9, %c0_10] : memref<3x128xf32, #tpu.memory_space<vmem>>, vector<1x128xf32>
    %14 = vector.broadcast %12 : vector<32x1xf32> to vector<32x128xf32>
    %15 = vector.broadcast %13 : vector<1x128xf32> to vector<32x128xf32>
    %16 = arith.mulf %14, %15 : vector<32x128xf32>
    %17 = vector.broadcast %9 : vector<1x128xf32> to vector<32x128xf32>
    %18 = arith.subf %17, %16 : vector<32x128xf32>
    %19 = vector.extract_strided_slice %8 {offsets = [0, 1], sizes = [32, 1], strides = [1, 1]} : vector<32x128xf32> to vector<32x1xf32>
    %cst_11 = arith.constant 2.000000e+00 : f32
    %20 = vector.broadcast %cst_11 : f32 to vector<32x1xf32>
    %21 = arith.mulf %20, %19 : vector<32x1xf32>
    %c1 = arith.constant 1 : index
    %c0_12 = arith.constant 0 : index
    %22 = vector.load %arg4[%c1, %c0_12] : memref<3x128xf32, #tpu.memory_space<vmem>>, vector<1x128xf32>
    %23 = vector.broadcast %21 : vector<32x1xf32> to vector<32x128xf32>
    %24 = vector.broadcast %22 : vector<1x128xf32> to vector<32x128xf32>
    %25 = arith.mulf %23, %24 : vector<32x128xf32>
    %26 = arith.subf %18, %25 : vector<32x128xf32>
    %27 = vector.extract_strided_slice %8 {offsets = [0, 2], sizes = [32, 1], strides = [1, 1]} : vector<32x128xf32> to vector<32x1xf32>
    %cst_13 = arith.constant 2.000000e+00 : f32
    %28 = vector.broadcast %cst_13 : f32 to vector<32x1xf32>
    %29 = arith.mulf %28, %27 : vector<32x1xf32>
    %c2 = arith.constant 2 : index
    %c0_14 = arith.constant 0 : index
    %30 = vector.load %arg4[%c2, %c0_14] : memref<3x128xf32, #tpu.memory_space<vmem>>, vector<1x128xf32>
    %31 = vector.broadcast %29 : vector<32x1xf32> to vector<32x128xf32>
    %32 = vector.broadcast %30 : vector<1x128xf32> to vector<32x128xf32>
    %33 = arith.mulf %31, %32 : vector<32x128xf32>
    %34 = arith.subf %26, %33 : vector<32x128xf32>
    %cst_15 = arith.constant dense<0x7F800000> : vector<32xf32>
    %35 = vector.multi_reduction <minimumf>, %34, %cst_15 [1] : vector<32x128xf32> to vector<32xf32>
    %36 = vector.shape_cast %35 : vector<32xf32> to vector<32x1xf32>
    %37 = tpu.iota {dimensions = array<i32: 1>} : vector<32x128xi32>
    %38 = vector.broadcast %36 : vector<32x1xf32> to vector<32x128xf32>
    %39 = arith.cmpf ole, %34, %38 : vector<32x128xf32>
    %c128_i32 = arith.constant 128 : i32
    %40 = vector.broadcast %c128_i32 : i32 to vector<32x128xi32>
    %41 = arith.select %39, %37, %40 : vector<32x128xi1>, vector<32x128xi32>
    %cst_16 = arith.constant dense<2147483647> : vector<32xi32>
    %42 = vector.multi_reduction <minsi>, %41, %cst_16 [1] : vector<32x128xi32> to vector<32xi32>
    %43 = vector.shape_cast %42 : vector<32xi32> to vector<32x1xi32>
    %44 = vector.broadcast %43 : vector<32x1xi32> to vector<32x128xi32>
    %45 = arith.cmpi eq, %37, %44 : vector<32x128xi32>
    %46 = arith.extui %45 : vector<32x128xi1> to vector<32x128xi32>
    %47 = arith.sitofp %46 : vector<32x128xi32> to vector<32x128xf32>
    %c0_17 = arith.constant 0 : index
    %c0_18 = arith.constant 0 : index
    %48 = vector.load %arg6[%c0_17, %c0_18] : memref<128x128xf32, #tpu.memory_space<vmem>>, vector<128x128xf32>
    %cst_19 = arith.constant dense<0.000000e+00> : vector<32x128xf32>
    %49 = tpu.matmul %47, %48, %cst_19 {dimension_numbers = #tpu.dot_dimension_numbers<[1], [0], [0], [1], [0, 0, 1, 1], [], []>} : vector<32x128xf32>, vector<128x128xf32>, vector<32x128xf32> -> vector<32x128xf32>
    %c0_20 = arith.constant 0 : index
    %c0_21 = arith.constant 0 : index
    %50 = vector.load %arg7[%c0_20, %c0_21] : memref<1x128xf32, #tpu.memory_space<vmem>>, vector<1x128xf32>
    %51 = vector.broadcast %50 : vector<1x128xf32> to vector<32x128xf32>
    %52 = arith.addf %49, %51 : vector<32x128xf32>
    %c32_i32 = arith.constant 32 : i32
    %53 = arith.muli %arg0, %c32_i32 : i32
    %54 = tpu.iota {dimensions = array<i32: 0>} : vector<32x1xi32>
    %55 = vector.broadcast %53 : i32 to vector<32x1xi32>
    %56 = arith.addi %55, %54 : vector<32x1xi32>
    %c32_i32_22 = arith.constant 32 : i32
    %57 = vector.broadcast %c32_i32_22 : i32 to vector<32x1xi32>
    %58 = arith.cmpi slt, %56, %57 : vector<32x1xi32>
    %59 = arith.extui %58 : vector<32x1xi1> to vector<32x1xi32>
    %60 = arith.sitofp %59 : vector<32x1xi32> to vector<32x1xf32>
    %61 = arith.subf %52, %8 : vector<32x128xf32>
    %62 = vector.broadcast %60 : vector<32x1xf32> to vector<32x128xf32>
    %63 = arith.mulf %61, %62 : vector<32x128xf32>
    %c0_23 = arith.constant 0 : index
    %64 = memref.load %arg10[%c0_23] : memref<1xf32, #tpu.memory_space<smem>>
    %65 = arith.mulf %63, %63 : vector<32x128xf32>
    %66 = vector.shape_cast %65 : vector<32x128xf32> to vector<1x32x128xf32>
    %cst_24 = arith.constant dense<0.000000e+00> : vector<1xf32>
    %67 = vector.multi_reduction <add>, %66, %cst_24 [1, 2] : vector<1x32x128xf32> to vector<1xf32>
    %68 = vector.shape_cast %67 : vector<1xf32> to vector<1x1x1xf32>
    %69 = vector.extract %68[0, 0, 0] : f32 from vector<1x1x1xf32>
    %70 = arith.addf %64, %69 : f32
    %c0_25 = arith.constant 0 : index
    %71 = memref.load %arg10[%c0_25] : memref<1xf32, #tpu.memory_space<smem>>
    memref.store %70, %arg10[%c0_25] : memref<1xf32, #tpu.memory_space<smem>>
    %72 = arith.truncf %52 : vector<32x128xf32> to vector<32x128xbf16>
    %c0_26 = arith.constant 0 : index
    %c0_27 = arith.constant 0 : index
    %73 = vector.load %arg8[%c0_26, %c0_27] : memref<32x128xbf16, #tpu.memory_space<vmem>>, vector<32x128xbf16>
    tpu.vector_store %arg8[%c0_26, %c0_27], %72 {strides = array<i32>} : memref<32x128xbf16, #tpu.memory_space<vmem>>, vector<32x128xbf16>,
    %c0_i32_28 = arith.constant 0 : i32
    %74 = arith.cmpi eq, %arg0, %c0_i32_28 : i32
    %75 = arith.extui %74 : i1 to i32
    %c0_i32_29 = arith.constant 0 : i32
    %76 = arith.cmpi ne, %75, %c0_i32_29 : i32
    scf.if %76 {
      %c0_30 = arith.constant 0 : index
      %77 = memref.load %arg10[%c0_30] : memref<1xf32, #tpu.memory_space<smem>>
      %cst_31 = arith.constant 9.600000e+01 : f32
      %78 = arith.divf %77, %cst_31 : f32
      %c0_32 = arith.constant 0 : index
      %c0_33 = arith.constant 0 : index
      %79 = memref.load %arg9[%c0_32, %c0_33] : memref<1x1xf32, #tpu.memory_space<smem>>
      memref.store %78, %arg9[%c0_32, %c0_33] : memref<1x1xf32, #tpu.memory_space<smem>>
    } else {
    }
    return
  }
  func.func @transform_0(%arg0: i32) -> (i32, i32) {
    %c0_i32 = arith.constant 0 : i32
    %c0_i32_0 = arith.constant 0 : i32
    return %arg0, %c0_i32 : i32, i32
  }
  func.func @transform_1(%arg0: i32) -> (i32, i32) {
    %c0_i32 = arith.constant 0 : i32
    %c0_i32_0 = arith.constant 0 : i32
    %c0_i32_1 = arith.constant 0 : i32
    return %c0_i32, %c0_i32_0 : i32, i32
  }
  func.func @transform_2(%arg0: i32) -> (i32, i32) {
    %c0_i32 = arith.constant 0 : i32
    %c0_i32_0 = arith.constant 0 : i32
    %c0_i32_1 = arith.constant 0 : i32
    return %c0_i32, %c0_i32_0 : i32, i32
  }
  func.func @transform_3(%arg0: i32) -> (i32, i32) {
    %c0_i32 = arith.constant 0 : i32
    %c0_i32_0 = arith.constant 0 : i32
    %c0_i32_1 = arith.constant 0 : i32
    return %c0_i32, %c0_i32_0 : i32, i32
  }
  func.func @transform_4(%arg0: i32) -> (i32, i32) {
    %c0_i32 = arith.constant 0 : i32
    %c0_i32_0 = arith.constant 0 : i32
    %c0_i32_1 = arith.constant 0 : i32
    return %c0_i32, %c0_i32_0 : i32, i32
  }
  func.func @transform_5(%arg0: i32) -> (i32, i32) {
    %c0_i32 = arith.constant 0 : i32
    %c0_i32_0 = arith.constant 0 : i32
    %c0_i32_1 = arith.constant 0 : i32
    return %c0_i32, %c0_i32_0 : i32, i32
  }
  func.func @transform_6(%arg0: i32) -> (i32, i32) {
    %c0_i32 = arith.constant 0 : i32
    %c0_i32_0 = arith.constant 0 : i32
    %c0_i32_1 = arith.constant 0 : i32
    return %c0_i32, %c0_i32_0 : i32, i32
  }
  func.func @transform_7(%arg0: i32) -> (i32, i32) {
    %c0_i32 = arith.constant 0 : i32
    %c0_i32_0 = arith.constant 0 : i32
    return %arg0, %c0_i32 : i32, i32
  }
  func.func @transform_8(%arg0: i32) -> (i32, i32) {
    %c0_i32 = arith.constant 0 : i32
    %c0_i32_0 = arith.constant 0 : i32
    %c0_i32_1 = arith.constant 0 : i32
    return %c0_i32, %c0_i32_0 : i32, i32
  }
}

module attributes {stable_mosaic.version = 11 : i64} {
  func.func @_matmul_bias_act_kernel(%arg0: i32, %arg1: memref<32x27xbf16, #tpu.memory_space<vmem>>, %arg2: memref<27x512xbf16, #tpu.memory_space<vmem>>, %arg3: memref<1x512xf32, #tpu.memory_space<vmem>>, %arg4: memref<32x512xbf16, #tpu.memory_space<vmem>>) attributes {dimension_semantics = [#tpu.dimension_semantics<parallel>], iteration_bounds = array<i64: 1>, scalar_prefetch = 0 : i64, scratch_operands = 0 : i64, tpu.core_type = #tpu.core_type<tc>, window_params = [{transform_indices = @transform_0, window_bounds = array<i64: 32, 27>}, {pipeline_mode = #tpu.pipeline_mode<synchronous>, transform_indices = @transform_1, window_bounds = array<i64: 27, 512>}, {pipeline_mode = #tpu.pipeline_mode<synchronous>, transform_indices = @transform_2, window_bounds = array<i64: 1, 512>}, {transform_indices = @transform_3, window_bounds = array<i64: 32, 512>}]} {
    %c0 = arith.constant 0 : index
    %c0_0 = arith.constant 0 : index
    %0 = vector.load %arg1[%c0, %c0_0] : memref<32x27xbf16, #tpu.memory_space<vmem>>, vector<32x27xbf16>
    %c0_1 = arith.constant 0 : index
    %c0_2 = arith.constant 0 : index
    %1 = vector.load %arg2[%c0_1, %c0_2] : memref<27x512xbf16, #tpu.memory_space<vmem>>, vector<27x512xbf16>
    %cst = arith.constant dense<0.000000e+00> : vector<32x512xf32>
    %2 = tpu.matmul %0, %1, %cst {dimension_numbers = #tpu.dot_dimension_numbers<[1], [0], [0], [1], [0, 0, 1, 1], [], []>} : vector<32x27xbf16>, vector<27x512xbf16>, vector<32x512xf32> -> vector<32x512xf32>
    %c0_3 = arith.constant 0 : index
    %c0_4 = arith.constant 0 : index
    %3 = vector.load %arg3[%c0_3, %c0_4] : memref<1x512xf32, #tpu.memory_space<vmem>>, vector<1x512xf32>
    %4 = vector.broadcast %3 : vector<1x512xf32> to vector<32x512xf32>
    %5 = arith.addf %2, %4 : vector<32x512xf32>
    %cst_5 = arith.constant 0.000000e+00 : f32
    %6 = vector.broadcast %cst_5 : f32 to vector<32x512xf32>
    %7 = arith.maximumf %5, %6 : vector<32x512xf32>
    %8 = arith.truncf %7 : vector<32x512xf32> to vector<32x512xbf16>
    %c0_6 = arith.constant 0 : index
    %c0_7 = arith.constant 0 : index
    %9 = vector.load %arg4[%c0_6, %c0_7] : memref<32x512xbf16, #tpu.memory_space<vmem>>, vector<32x512xbf16>
    tpu.vector_store %arg4[%c0_6, %c0_7], %8 {strides = array<i32>} : memref<32x512xbf16, #tpu.memory_space<vmem>>, vector<32x512xbf16>,
    return
  }
  func.func @transform_0(%arg0: i32) -> (i32, i32) {
    %c0_i32 = arith.constant 0 : i32
    %c0_i32_0 = arith.constant 0 : i32
    return %arg0, %c0_i32 : i32, i32
  }
  func.func @transform_1(%arg0: i32) -> (i32, i32) {
    %c0_i32 = arith.constant 0 : i32
    %c0_i32_0 = arith.constant 0 : i32
    %c0_i32_1 = arith.constant 0 : i32
    return %c0_i32, %c0_i32_0 : i32, i32
  }
  func.func @transform_2(%arg0: i32) -> (i32, i32) {
    %c0_i32 = arith.constant 0 : i32
    %c0_i32_0 = arith.constant 0 : i32
    %c0_i32_1 = arith.constant 0 : i32
    return %c0_i32, %c0_i32_0 : i32, i32
  }
  func.func @transform_3(%arg0: i32) -> (i32, i32) {
    %c0_i32 = arith.constant 0 : i32
    %c0_i32_0 = arith.constant 0 : i32
    return %arg0, %c0_i32 : i32, i32
  }
}

module attributes {stable_mosaic.version = 11 : i64} {
  func.func @_matmul_bias_act_kernel(%arg0: i32, %arg1: memref<128x1152xbf16, #tpu.memory_space<vmem>>, %arg2: memref<1152x512xbf16, #tpu.memory_space<vmem>>, %arg3: memref<1x512xf32, #tpu.memory_space<vmem>>, %arg4: memref<128x512xbf16, #tpu.memory_space<vmem>>) attributes {dimension_semantics = [#tpu.dimension_semantics<parallel>], iteration_bounds = array<i64: 1>, scalar_prefetch = 0 : i64, scratch_operands = 0 : i64, tpu.core_type = #tpu.core_type<tc>, window_params = [{transform_indices = @transform_0, window_bounds = array<i64: 128, 1152>}, {pipeline_mode = #tpu.pipeline_mode<synchronous>, transform_indices = @transform_1, window_bounds = array<i64: 1152, 512>}, {pipeline_mode = #tpu.pipeline_mode<synchronous>, transform_indices = @transform_2, window_bounds = array<i64: 1, 512>}, {transform_indices = @transform_3, window_bounds = array<i64: 128, 512>}]} {
    %c0 = arith.constant 0 : index
    %c0_0 = arith.constant 0 : index
    %0 = vector.load %arg1[%c0, %c0_0] : memref<128x1152xbf16, #tpu.memory_space<vmem>>, vector<128x1152xbf16>
    %c0_1 = arith.constant 0 : index
    %c0_2 = arith.constant 0 : index
    %1 = vector.load %arg2[%c0_1, %c0_2] : memref<1152x512xbf16, #tpu.memory_space<vmem>>, vector<1152x512xbf16>
    %cst = arith.constant dense<0.000000e+00> : vector<128x512xf32>
    %2 = tpu.matmul %0, %1, %cst {dimension_numbers = #tpu.dot_dimension_numbers<[1], [0], [0], [1], [0, 0, 1, 1], [], []>} : vector<128x1152xbf16>, vector<1152x512xbf16>, vector<128x512xf32> -> vector<128x512xf32>
    %c0_3 = arith.constant 0 : index
    %c0_4 = arith.constant 0 : index
    %3 = vector.load %arg3[%c0_3, %c0_4] : memref<1x512xf32, #tpu.memory_space<vmem>>, vector<1x512xf32>
    %4 = vector.broadcast %3 : vector<1x512xf32> to vector<128x512xf32>
    %5 = arith.addf %2, %4 : vector<128x512xf32>
    %cst_5 = arith.constant 0.000000e+00 : f32
    %6 = vector.broadcast %cst_5 : f32 to vector<128x512xf32>
    %7 = arith.maximumf %5, %6 : vector<128x512xf32>
    %8 = arith.truncf %7 : vector<128x512xf32> to vector<128x512xbf16>
    %c0_6 = arith.constant 0 : index
    %c0_7 = arith.constant 0 : index
    %9 = vector.load %arg4[%c0_6, %c0_7] : memref<128x512xbf16, #tpu.memory_space<vmem>>, vector<128x512xbf16>
    tpu.vector_store %arg4[%c0_6, %c0_7], %8 {strides = array<i32>} : memref<128x512xbf16, #tpu.memory_space<vmem>>, vector<128x512xbf16>,
    return
  }
  func.func @transform_0(%arg0: i32) -> (i32, i32) {
    %c0_i32 = arith.constant 0 : i32
    %c0_i32_0 = arith.constant 0 : i32
    return %arg0, %c0_i32 : i32, i32
  }
  func.func @transform_1(%arg0: i32) -> (i32, i32) {
    %c0_i32 = arith.constant 0 : i32
    %c0_i32_0 = arith.constant 0 : i32
    %c0_i32_1 = arith.constant 0 : i32
    return %c0_i32, %c0_i32_0 : i32, i32
  }
  func.func @transform_2(%arg0: i32) -> (i32, i32) {
    %c0_i32 = arith.constant 0 : i32
    %c0_i32_0 = arith.constant 0 : i32
    %c0_i32_1 = arith.constant 0 : i32
    return %c0_i32, %c0_i32_0 : i32, i32
  }
  func.func @transform_3(%arg0: i32) -> (i32, i32) {
    %c0_i32 = arith.constant 0 : i32
    %c0_i32_0 = arith.constant 0 : i32
    return %arg0, %c0_i32 : i32, i32
  }
}

module attributes {stable_mosaic.version = 11 : i64} {
  func.func @_matmul_bias_act_kernel(%arg0: i32, %arg1: memref<512x1152xbf16, #tpu.memory_space<vmem>>, %arg2: memref<1152x128xbf16, #tpu.memory_space<vmem>>, %arg3: memref<1x128xf32, #tpu.memory_space<vmem>>, %arg4: memref<512x128xf32, #tpu.memory_space<vmem>>) attributes {dimension_semantics = [#tpu.dimension_semantics<parallel>], iteration_bounds = array<i64: 1>, scalar_prefetch = 0 : i64, scratch_operands = 0 : i64, tpu.core_type = #tpu.core_type<tc>, window_params = [{transform_indices = @transform_0, window_bounds = array<i64: 512, 1152>}, {pipeline_mode = #tpu.pipeline_mode<synchronous>, transform_indices = @transform_1, window_bounds = array<i64: 1152, 128>}, {pipeline_mode = #tpu.pipeline_mode<synchronous>, transform_indices = @transform_2, window_bounds = array<i64: 1, 128>}, {transform_indices = @transform_3, window_bounds = array<i64: 512, 128>}]} {
    %c0 = arith.constant 0 : index
    %c0_0 = arith.constant 0 : index
    %0 = vector.load %arg1[%c0, %c0_0] : memref<512x1152xbf16, #tpu.memory_space<vmem>>, vector<512x1152xbf16>
    %c0_1 = arith.constant 0 : index
    %c0_2 = arith.constant 0 : index
    %1 = vector.load %arg2[%c0_1, %c0_2] : memref<1152x128xbf16, #tpu.memory_space<vmem>>, vector<1152x128xbf16>
    %cst = arith.constant dense<0.000000e+00> : vector<512x128xf32>
    %2 = tpu.matmul %0, %1, %cst {dimension_numbers = #tpu.dot_dimension_numbers<[1], [0], [0], [1], [0, 0, 1, 1], [], []>} : vector<512x1152xbf16>, vector<1152x128xbf16>, vector<512x128xf32> -> vector<512x128xf32>
    %c0_3 = arith.constant 0 : index
    %c0_4 = arith.constant 0 : index
    %3 = vector.load %arg3[%c0_3, %c0_4] : memref<1x128xf32, #tpu.memory_space<vmem>>, vector<1x128xf32>
    %4 = vector.broadcast %3 : vector<1x128xf32> to vector<512x128xf32>
    %5 = arith.addf %2, %4 : vector<512x128xf32>
    %6 = math.tanh %5 : vector<512x128xf32>
    %c0_5 = arith.constant 0 : index
    %c0_6 = arith.constant 0 : index
    %7 = vector.load %arg4[%c0_5, %c0_6] : memref<512x128xf32, #tpu.memory_space<vmem>>, vector<512x128xf32>
    tpu.vector_store %arg4[%c0_5, %c0_6], %6 {strides = array<i32>} : memref<512x128xf32, #tpu.memory_space<vmem>>, vector<512x128xf32>,
    return
  }
  func.func @transform_0(%arg0: i32) -> (i32, i32) {
    %c0_i32 = arith.constant 0 : i32
    %c0_i32_0 = arith.constant 0 : i32
    return %arg0, %c0_i32 : i32, i32
  }
  func.func @transform_1(%arg0: i32) -> (i32, i32) {
    %c0_i32 = arith.constant 0 : i32
    %c0_i32_0 = arith.constant 0 : i32
    %c0_i32_1 = arith.constant 0 : i32
    return %c0_i32, %c0_i32_0 : i32, i32
  }
  func.func @transform_2(%arg0: i32) -> (i32, i32) {
    %c0_i32 = arith.constant 0 : i32
    %c0_i32_0 = arith.constant 0 : i32
    %c0_i32_1 = arith.constant 0 : i32
    return %c0_i32, %c0_i32_0 : i32, i32
  }
  func.func @transform_3(%arg0: i32) -> (i32, i32) {
    %c0_i32 = arith.constant 0 : i32
    %c0_i32_0 = arith.constant 0 : i32
    return %arg0, %c0_i32 : i32, i32
  }
}

</mosaic_0001>

<llo_original>
// kernel: vqvae_forward.6
$region0: #{vqvae_forward.6}
  #allocation0 [shape = 'u32[]', space=smem, size = 0x4, offset = 0x4, fixed_abs, tag = 'smem constant byte address 0x4 - core index']
  #allocation1 [shape = 'u32[144,128]{1,0:T(1,128)}', space=vmem, size = 0x12000, scoped, tag = 'internal scratch']
  %s0 = inlined_call_operand.vmem [shape: bf16[128,32], index: 0, kind: input, shape index: {}]
  %s1 = inlined_call_operand.vmem [shape: bf16[32,128], index: 1, kind: input, shape index: {}]
  %s2 = inlined_call_operand.vmem [shape: f32[1,128], index: 2, kind: input, shape index: {}]
  %s3 = inlined_call_operand.vmem [shape: bf16[128,128], index: 3, kind: output, shape index: {}]
  %s4 = sld [smem:[#allocation0]]
  $region22: #{vqvae_forward.6} parent=0
    _
  %s6 = ssub.s32 1, %s4
  %s7 = scalar_select 0, %s6, %s4
  // Predicated region
  $region2: #{vqvae_forward.6} parent=0 // pred_check
    _
  $region3: #{vqvae_forward.6} parent=0 // pred_check_branch
    %9 = sbr.rel (0) target = $region5
  $region4: #{vqvae_forward.6} parent=0 // pred_region
    _
  $region5: #{vqvae_forward.6} parent=0 // pred_fallthru
    _
  // Predicated region
  $region6: #{vqvae_forward.6} parent=0 // pred_check
    _
  $region7: #{vqvae_forward.6} parent=0 // pred_check_branch
    %11 = sbr.rel (0) target = $region9
  $region8: #{vqvae_forward.6} parent=0 // pred_region
    _
  $region9: #{vqvae_forward.6} parent=0 // pred_fallthru
    _
  // Predicated region
  $region10: #{vqvae_forward.6} parent=0 // pred_check
    _
  $region11: #{vqvae_forward.6} parent=0 // pred_check_branch
    %13 = sbr.rel (0) target = $region13
  $region12: #{vqvae_forward.6} parent=0 // pred_region
    _
  $region13: #{vqvae_forward.6} parent=0 // pred_fallthru
    _
  %v15 = vld [vmem:[%s0] sm:$0xf]
  %v16 = vld [vmem:[%s0 + $0x4] sm:$0xf]
  %v17 = vld [vmem:[%s0 + $0x8] sm:$0xf]
  %v18 = vld [vmem:[%s0 + $0xc] sm:$0xf]
  %v19 = vld [vmem:[%s0 + $0x10] sm:$0xf]
  %v20 = vld [vmem:[%s0 + $0x14] sm:$0xf]
  %v21 = vld [vmem:[%s0 + $0x18] sm:$0xf]
  %v22 = vld [vmem:[%s0 + $0x1c] sm:$0xf]
  %v23 = vld [vmem:[%s0 + $0x20] sm:$0xf]
  %v24 = vld [vmem:[%s0 + $0x24] sm:$0xf]
  %v25 = vld [vmem:[%s0 + $0x28] sm:$0xf]
  %v26 = vld [vmem:[%s0 + $0x2c] sm:$0xf]
  %v27 = vld [vmem:[%s0 + $0x30] sm:$0xf]
  %v28 = vld [vmem:[%s0 + $0x34] sm:$0xf]
  %v29 = vld [vmem:[%s0 + $0x38] sm:$0xf]
  %v30 = vld [vmem:[%s0 + $0x3c] sm:$0xf]
  %v31 = vld [vmem:[%s1] sm:$0xf]
  %v32 = vld [vmem:[%s1 + $0x4] sm:$0xf]
  %v33 = vld [vmem:[%s1 + $0x8] sm:$0xf]
  %v34 = vld [vmem:[%s1 + $0xc] sm:$0xf]
  %v35 = vld [vmem:[%s2] sm:$0x1]
  %v37 = vlaneseq
  %v38 = vshrl.u32 %v37, 7
  %v39 = vsub.s32 0, %v38
  %v40 = vrot.slane %v35, %v39
  %v58 = vunpack.c.l.b16 %v15
  %v59 = vunpack.c.l.b16 %v16
  %v60 = vunpack.c.l.b16 %v17
  %v61 = vunpack.c.l.b16 %v18
  %v62 = vunpack.c.l.b16 %v19
  %v63 = vunpack.c.l.b16 %v20
  %v64 = vunpack.c.l.b16 %v21
  %v65 = vunpack.c.l.b16 %v22
  %v66 = vunpack.c.l.b16 %v23
  %v67 = vunpack.c.l.b16 %v24
  %v68 = vunpack.c.l.b16 %v25
  %v69 = vunpack.c.l.b16 %v26
  %v70 = vunpack.c.l.b16 %v27
  %v71 = vunpack.c.l.b16 %v28
  %v72 = vunpack.c.l.b16 %v29
  %v73 = vunpack.c.l.b16 %v30
  %v74 = vpack.c.b16 %v59, %v58
  %v75 = vpack.c.b16 %v61, %v60
  %v76 = vpack.c.b16 %v63, %v62
  %v77 = vpack.c.b16 %v65, %v64
  %v78 = vpack.c.b16 %v67, %v66
  %v79 = vpack.c.b16 %v69, %v68
  %v80 = vpack.c.b16 %v71, %v70
  %v81 = vpack.c.b16 %v73, %v72
  %v86 = vunpack.c.l.b16 %v31
  %v87 = vunpack.c.l.b16 %v32
  %v88 = vunpack.c.l.b16 %v33
  %v89 = vunpack.c.l.b16 %v34
  %v90 = vpack.c.b16 %v87, %v86
  %v91 = vpack.c.b16 %v89, %v88
  %vm94 = vcmask 261120
  %v96 = vsel %vm94, %v74, 0
  %v99 = vsel %vm94, %v75, 0
  %v102 = vsel %vm94, %v76, 0
  %v105 = vsel %vm94, %v77, 0
  %v108 = vsel %vm94, %v78, 0
  %v111 = vsel %vm94, %v79, 0
  %v114 = vsel %vm94, %v80, 0
  %v117 = vsel %vm94, %v81, 0
  %119 = vmatprep.subr.bf16.mxu0 0
  %120 = vmatpush1.bf16.msra.mxu0 %v90
  %121 = vmatprep.subr.bf16.mxu0 0
  %122 = vmatpush1.bf16.msra.mxu0 %v91
  %123 = vmatprep.subr.bf16.mxu0 0
  %124 = vmatpush1.bf16.msra.mxu0 0
  %125 = vmatprep.subr.bf16.mxu0 0
  %126 = vmatpush1.bf16.msra.mxu0 0
  %127 = vmatprep.subr.bf16.mxu0 0
  %128 = vmatpush1.bf16.msra.mxu0 0
  %129 = vmatprep.subr.bf16.mxu0 0
  %130 = vmatpush1.bf16.msra.mxu0 0
  %131 = vmatprep.subr.bf16.mxu0 0
  %132 = vmatpush1.bf16.msra.mxu0 0
  %133 = vmatprep.subr.bf16.mxu0 0
  %134 = vmatpush1.bf16.msra.mxu0 0
  %135 = vmatprep.subr.bf16.mxu0 0
  %136 = vmatpush1.bf16.msra.mxu0 0
  %137 = vmatprep.subr.bf16.mxu0 0
  %138 = vmatpush1.bf16.msra.mxu0 0
  %139 = vmatprep.subr.bf16.mxu0 0
  %140 = vmatpush1.bf16.msra.mxu0 0
  %141 = vmatprep.subr.bf16.mxu0 0
  %142 = vmatpush1.bf16.msra.mxu0 0
  %143 = vmatprep.subr.bf16.mxu0 0
  %144 = vmatpush1.bf16.msra.mxu0 0
  %145 = vmatprep.subr.bf16.mxu0 0
  %146 = vmatpush1.bf16.msra.mxu0 0
  %147 = vmatprep.subr.bf16.mxu0 0
  %148 = vmatpush1.bf16.msra.mxu0 0
  %149 = vmatprep.subr.bf16.mxu0 0
  %150 = vmatpush1.bf16.msra.mxu0 0
  %151 = vmatprep.mubr.bf16.mxu0 0
  %152 = vmatmul.mubr.bf16.gmra.mrb[0].mxu0 %v96
  %v153 = vpop.f32.mrb[0].mxu0
  %v154 = vadd.f32 %v40, %v153
  %v155 = vpop.f32.mrb[0].mxu0
  %v156 = vpop.f32.mrb[0].mxu0
  %v157 = vadd.f32 %v40, %v156
  %v158 = vpop.f32.mrb[0].mxu0
  %159 = vmatprep.mubr.bf16.mxu0 0
  %160 = vmatmul.mubr.bf16.gmra.mrb[0].mxu0 %v99
  %v161 = vpop.f32.mrb[0].mxu0
  %v162 = vadd.f32 %v40, %v161
  %v163 = vpop.f32.mrb[0].mxu0
  %v164 = vpop.f32.mrb[0].mxu0
  %v165 = vadd.f32 %v40, %v164
  %v166 = vpop.f32.mrb[0].mxu0
  %167 = vmatprep.mubr.bf16.mxu0 0
  %168 = vmatmul.mubr.bf16.gmra.mrb[0].mxu0 %v102
  %v169 = vpop.f32.mrb[0].mxu0
  %v170 = vadd.f32 %v40, %v169
  %v171 = vpop.f32.mrb[0].mxu0
  %v172 = vpop.f32.mrb[0].mxu0
  %v173 = vadd.f32 %v40, %v172
  %v174 = vpop.f32.mrb[0].mxu0
  %175 = vmatprep.mubr.bf16.mxu0 0
  %176 = vmatmul.mubr.bf16.gmra.mrb[0].mxu0 %v105
  %v177 = vpop.f32.mrb[0].mxu0
  %v178 = vadd.f32 %v40, %v177
  %v179 = vpop.f32.mrb[0].mxu0
  %v180 = vpop.f32.mrb[0].mxu0
  %v181 = vadd.f32 %v40, %v180
  %v182 = vpop.f32.mrb[0].mxu0
  %183 = vmatprep.mubr.bf16.mxu0 0
  %184 = vmatmul.mubr.bf16.gmra.mrb[0].mxu0 %v108
  %v185 = vpop.f32.mrb[0].mxu0
  %v186 = vadd.f32 %v40, %v185
  %v187 = vpop.f32.mrb[0].mxu0
  %v188 = vpop.f32.mrb[0].mxu0
  %v189 = vadd.f32 %v40, %v188
  %v190 = vpop.f32.mrb[0].mxu0
  %191 = vmatprep.mubr.bf16.mxu0 0
  %192 = vmatmul.mubr.bf16.gmra.mrb[0].mxu0 %v111
  %v193 = vpop.f32.mrb[0].mxu0
  %v194 = vadd.f32 %v40, %v193
  %v195 = vpop.f32.mrb[0].mxu0
  %v196 = vpop.f32.mrb[0].mxu0
  %v197 = vadd.f32 %v40, %v196
  %v198 = vpop.f32.mrb[0].mxu0
  %199 = vmatprep.mubr.bf16.mxu0 0
  %200 = vmatmul.mubr.bf16.gmra.mrb[0].mxu0 %v114
  %v201 = vpop.f32.mrb[0].mxu0
  %v202 = vadd.f32 %v40, %v201
  %v203 = vpop.f32.mrb[0].mxu0
  %v204 = vpop.f32.mrb[0].mxu0
  %v205 = vadd.f32 %v40, %v204
  %v206 = vpop.f32.mrb[0].mxu0
  %207 = vmatprep.mubr.bf16.mxu0 0
  %208 = vmatmul.mubr.bf16.gmra.mrb[0].mxu0 %v117
  %v209 = vpop.f32.mrb[0].mxu0
  %v210 = vadd.f32 %v40, %v209
  %v211 = vpop.f32.mrb[0].mxu0
  %v212 = vpop.f32.mrb[0].mxu0
  %v213 = vadd.f32 %v40, %v212
  %v214 = vpop.f32.mrb[0].mxu0
  %215 = vdwg.mxu0
  %v216 = vmax.f32 %v154, 0.0
  %v217 = vmax.f32 %v157, 0.0
  %v218 = vmax.f32 %v162, 0.0
  %v219 = vmax.f32 %v165, 0.0
  %v220 = vmax.f32 %v170, 0.0
  %v221 = vmax.f32 %v173, 0.0
  %v222 = vmax.f32 %v178, 0.0
  %v223 = vmax.f32 %v181, 0.0
  %v224 = vmax.f32 %v186, 0.0
  %v225 = vmax.f32 %v189, 0.0
  %v226 = vmax.f32 %v194, 0.0
  %v227 = vmax.f32 %v197, 0.0
  %v228 = vmax.f32 %v202, 0.0
  %v229 = vmax.f32 %v205, 0.0
  %v230 = vmax.f32 %v210, 0.0
  %v231 = vmax.f32 %v213, 0.0
  %v232 = vpack.c.bf16 %v217, %v216
  %v233 = vpack.c.bf16 %v219, %v218
  %v234 = vpack.c.bf16 %v221, %v220
  %v235 = vpack.c.bf16 %v223, %v222
  %v236 = vpack.c.bf16 %v225, %v224
  %v237 = vpack.c.bf16 %v227, %v226
  %v238 = vpack.c.bf16 %v229, %v228
  %v239 = vpack.c.bf16 %v231, %v230
  %v248 = vunpack.c.l.b16 %v232
  %v249 = vunpack.c.h.b16 %v232
  %v250 = vunpack.c.l.b16 %v233
  %v251 = vunpack.c.h.b16 %v233
  %v252 = vunpack.c.l.b16 %v234
  %v253 = vunpack.c.h.b16 %v234
  %v254 = vunpack.c.l.b16 %v235
  %v255 = vunpack.c.h.b16 %v235
  %v256 = vunpack.c.l.b16 %v236
  %v257 = vunpack.c.h.b16 %v236
  %v258 = vunpack.c.l.b16 %v237
  %v259 = vunpack.c.h.b16 %v237
  %v260 = vunpack.c.l.b16 %v238
  %v261 = vunpack.c.h.b16 %v238
  %v262 = vunpack.c.l.b16 %v239
  %v263 = vunpack.c.h.b16 %v239
  %v264 = vpack.c.b16 %v248, %v248
  %v265 = vpack.c.b16 %v249, %v249
  %v266 = vpack.c.b16 %v250, %v250
  %v267 = vpack.c.b16 %v251, %v251
  %v268 = vpack.c.b16 %v252, %v252
  %v269 = vpack.c.b16 %v253, %v253
  %v270 = vpack.c.b16 %v254, %v254
  %v271 = vpack.c.b16 %v255, %v255
  %v272 = vpack.c.b16 %v256, %v256
  %v273 = vpack.c.b16 %v257, %v257
  %v274 = vpack.c.b16 %v258, %v258
  %v275 = vpack.c.b16 %v259, %v259
  %v276 = vpack.c.b16 %v260, %v260
  %v277 = vpack.c.b16 %v261, %v261
  %v278 = vpack.c.b16 %v262, %v262
  %v279 = vpack.c.b16 %v263, %v263
  %296 = vst [vmem:[%s3] sm:$0xf] %v264
  %297 = vst [vmem:[%s3 + $0x4] sm:$0xf] %v265
  %298 = vst [vmem:[%s3 + $0x8] sm:$0xf] %v266
  %299 = vst [vmem:[%s3 + $0xc] sm:$0xf] %v267
  %300 = vst [vmem:[%s3 + $0x10] sm:$0xf] %v268
  %301 = vst [vmem:[%s3 + $0x14] sm:$0xf] %v269
  %302 = vst [vmem:[%s3 + $0x18] sm:$0xf] %v270
  %303 = vst [vmem:[%s3 + $0x1c] sm:$0xf] %v271
  %304 = vst [vmem:[%s3 + $0x20] sm:$0xf] %v272
  %305 = vst [vmem:[%s3 + $0x24] sm:$0xf] %v273
  %306 = vst [vmem:[%s3 + $0x28] sm:$0xf] %v274
  %307 = vst [vmem:[%s3 + $0x2c] sm:$0xf] %v275
  %308 = vst [vmem:[%s3 + $0x30] sm:$0xf] %v276
  %309 = vst [vmem:[%s3 + $0x34] sm:$0xf] %v277
  %310 = vst [vmem:[%s3 + $0x38] sm:$0xf] %v278
  %311 = vst [vmem:[%s3 + $0x3c] sm:$0xf] %v279
  // Predicated region
  $region14: #{vqvae_forward.6} parent=0 // pred_check
    _
  $region15: #{vqvae_forward.6} parent=0 // pred_check_branch
    %313 = sbr.rel (0) target = $region17
  $region16: #{vqvae_forward.6} parent=0 // pred_region
    _
  $region17: #{vqvae_forward.6} parent=0 // pred_fallthru
    _
  // Predicated region
  $region18: #{vqvae_forward.6} parent=0 // pred_check
    _
  $region19: #{vqvae_forward.6} parent=0 // pred_check_branch
    %315 = sbr.rel (0) target = $region21
  $region20: #{vqvae_forward.6} parent=0 // pred_region
    _
  $region21: #{vqvae_forward.6} parent=0 // pred_fallthru
    _

// kernel: vqvae_forward.7
$region0: #{vqvae_forward.7}
  #allocation0 [shape = 'u32[]', space=smem, size = 0x4, offset = 0x4, fixed_abs, tag = 'smem constant byte address 0x4 - core index']
  #allocation1 [shape = 'u32[144,128]{1,0:T(1,128)}', space=vmem, size = 0x12000, scoped, tag = 'internal scratch']
  %s0 = inlined_call_operand.vmem [shape: bf16[32,2048], index: 0, kind: input, shape index: {}]
  %s1 = inlined_call_operand.vmem [shape: bf16[2048,128], index: 1, kind: input, shape index: {}]
  %s2 = inlined_call_operand.vmem [shape: f32[1,128], index: 2, kind: input, shape index: {}]
  %s3 = inlined_call_operand.vmem [shape: bf16[32,128], index: 3, kind: output, shape index: {}]
  %s4 = sld [smem:[#allocation0]]
  $region22: #{vqvae_forward.7} parent=0
    _
  %s6 = ssub.s32 1, %s4
  %s7 = scalar_select 0, %s6, %s4
  // Predicated region
  $region2: #{vqvae_forward.7} parent=0 // pred_check
    _
  $region3: #{vqvae_forward.7} parent=0 // pred_check_branch
    %9 = sbr.rel (0) target = $region5
  $region4: #{vqvae_forward.7} parent=0 // pred_region
    _
  $region5: #{vqvae_forward.7} parent=0 // pred_fallthru
    _
  // Predicated region
  $region6: #{vqvae_forward.7} parent=0 // pred_check
    _
  $region7: #{vqvae_forward.7} parent=0 // pred_check_branch
    %11 = sbr.rel (0) target = $region9
  $region8: #{vqvae_forward.7} parent=0 // pred_region
    _
  $region9: #{vqvae_forward.7} parent=0 // pred_fallthru
    _
  // Predicated region
  $region10: #{vqvae_forward.7} parent=0 // pred_check
    _
  $region11: #{vqvae_forward.7} parent=0 // pred_check_branch
    %13 = sbr.rel (0) target = $region13
  $region12: #{vqvae_forward.7} parent=0 // pred_region
    _
  $region13: #{vqvae_forward.7} parent=0 // pred_fallthru
    _
  %v15 = vld [vmem:[%s0] sm:$0xff]
  %v16 = vld [vmem:[%s0 + $0x8] sm:$0xff]
  %v17 = vld [vmem:[%s0 + $0x10] sm:$0xff]
  %v18 = vld [vmem:[%s0 + $0x18] sm:$0xff]
  %v19 = vld [vmem:[%s0 + $0x20] sm:$0xff]
  %v20 = vld [vmem:[%s0 + $0x28] sm:$0xff]
  %v21 = vld [vmem:[%s0 + $0x30] sm:$0xff]
  %v22 = vld [vmem:[%s0 + $0x38] sm:$0xff]
  %v23 = vld [vmem:[%s0 + $0x40] sm:$0xff]
  %v24 = vld [vmem:[%s0 + $0x48] sm:$0xff]
  %v25 = vld [vmem:[%s0 + $0x50] sm:$0xff]
  %v26 = vld [vmem:[%s0 + $0x58] sm:$0xff]
  %v27 = vld [vmem:[%s0 + $0x60] sm:$0xff]
  %v28 = vld [vmem:[%s0 + $0x68] sm:$0xff]
  %v29 = vld [vmem:[%s0 + $0x70] sm:$0xff]
  %v30 = vld [vmem:[%s0 + $0x78] sm:$0xff]
  %v31 = vld [vmem:[%s0 + $0x80] sm:$0xff]
  %v32 = vld [vmem:[%s0 + $0x88] sm:$0xff]
  %v33 = vld [vmem:[%s0 + $0x90] sm:$0xff]
  %v34 = vld [vmem:[%s0 + $0x98] sm:$0xff]
  %v35 = vld [vmem:[%s0 + $0xa0] sm:$0xff]
  %v36 = vld [vmem:[%s0 + $0xa8] sm:$0xff]
  %v37 = vld [vmem:[%s0 + $0xb0] sm:$0xff]
  %v38 = vld [vmem:[%s0 + $0xb8] sm:$0xff]
  %v39 = vld [vmem:[%s0 + $0xc0] sm:$0xff]
  %v40 = vld [vmem:[%s0 + $0xc8] sm:$0xff]
  %v41 = vld [vmem:[%s0 + $0xd0] sm:$0xff]
  %v42 = vld [vmem:[%s0 + $0xd8] sm:$0xff]
  %v43 = vld [vmem:[%s0 + $0xe0] sm:$0xff]
  %v44 = vld [vmem:[%s0 + $0xe8] sm:$0xff]
  %v45 = vld [vmem:[%s0 + $0xf0] sm:$0xff]
  %v46 = vld [vmem:[%s0 + $0xf8] sm:$0xff]
  %v47 = vld [vmem:[%s1] sm:$0xf]
  %v48 = vld [vmem:[%s1 + $0x4] sm:$0xf]
  %v49 = vld [vmem:[%s1 + $0x8] sm:$0xf]
  %v50 = vld [vmem:[%s1 + $0xc] sm:$0xf]
  %v51 = vld [vmem:[%s1 + $0x10] sm:$0xf]
  %v52 = vld [vmem:[%s1 + $0x14] sm:$0xf]
  %v53 = vld [vmem:[%s1 + $0x18] sm:$0xf]
  %v54 = vld [vmem:[%s1 + $0x1c] sm:$0xf]
  %v55 = vld [vmem:[%s1 + $0x20] sm:$0xf]
  %v56 = vld [vmem:[%s1 + $0x24] sm:$0xf]
  %v57 = vld [vmem:[%s1 + $0x28] sm:$0xf]
  %v58 = vld [vmem:[%s1 + $0x2c] sm:$0xf]
  %v59 = vld [vmem:[%s1 + $0x30] sm:$0xf]
  %v60 = vld [vmem:[%s1 + $0x34] sm:$0xf]
  %v61 = vld [vmem:[%s1 + $0x38] sm:$0xf]
  %v62 = vld [vmem:[%s1 + $0x3c] sm:$0xf]
  %v63 = vld [vmem:[%s1 + $0x40] sm:$0xf]
  %v64 = vld [vmem:[%s1 + $0x44] sm:$0xf]
  %v65 = vld [vmem:[%s1 + $0x48] sm:$0xf]
  %v66 = vld [vmem:[%s1 + $0x4c] sm:$0xf]
  %v67 = vld [vmem:[%s1 + $0x50] sm:$0xf]
  %v68 = vld [vmem:[%s1 + $0x54] sm:$0xf]
  %v69 = vld [vmem:[%s1 + $0x58] sm:$0xf]
  %v70 = vld [vmem:[%s1 + $0x5c] sm:$0xf]
  %v71 = vld [vmem:[%s1 + $0x60] sm:$0xf]
  %v72 = vld [vmem:[%s1 + $0x64] sm:$0xf]
  %v73 = vld [vmem:[%s1 + $0x68] sm:$0xf]
  %v74 = vld [vmem:[%s1 + $0x6c] sm:$0xf]
  %v75 = vld [vmem:[%s1 + $0x70] sm:$0xf]
  %v76 = vld [vmem:[%s1 + $0x74] sm:$0xf]
  %v77 = vld [vmem:[%s1 + $0x78] sm:$0xf]
  %v78 = vld [vmem:[%s1 + $0x7c] sm:$0xf]
  %v79 = vld [vmem:[%s1 + $0x80] sm:$0xf]
  %v80 = vld [vmem:[%s1 + $0x84] sm:$0xf]
  %v81 = vld [vmem:[%s1 + $0x88] sm:$0xf]
  %v82 = vld [vmem:[%s1 + $0x8c] sm:$0xf]
  %v83 = vld [vmem:[%s1 + $0x90] sm:$0xf]
  %v84 = vld [vmem:[%s1 + $0x94] sm:$0xf]
  %v85 = vld [vmem:[%s1 + $0x98] sm:$0xf]
  %v86 = vld [vmem:[%s1 + $0x9c] sm:$0xf]
  %v87 = vld [vmem:[%s1 + $0xa0] sm:$0xf]
  %v88 = vld [vmem:[%s1 + $0xa4] sm:$0xf]
  %v89 = vld [vmem:[%s1 + $0xa8] sm:$0xf]
  %v90 = vld [vmem:[%s1 + $0xac] sm:$0xf]
  %v91 = vld [vmem:[%s1 + $0xb0] sm:$0xf]
  %v92 = vld [vmem:[%s1 + $0xb4] sm:$0xf]
  %v93 = vld [vmem:[%s1 + $0xb8] sm:$0xf]
  %v94 = vld [vmem:[%s1 + $0xbc] sm:$0xf]
  %v95 = vld [vmem:[%s1 + $0xc0] sm:$0xf]
  %v96 = vld [vmem:[%s1 + $0xc4] sm:$0xf]
  %v97 = vld [vmem:[%s1 + $0xc8] sm:$0xf]
  %v98 = vld [vmem:[%s1 + $0xcc] sm:$0xf]
  %v99 = vld [vmem:[%s1 + $0xd0] sm:$0xf]
  %v100 = vld [vmem:[%s1 + $0xd4] sm:$0xf]
  %v101 = vld [vmem:[%s1 + $0xd8] sm:$0xf]
  %v102 = vld [vmem:[%s1 + $0xdc] sm:$0xf]
  %v103 = vld [vmem:[%s1 + $0xe0] sm:$0xf]
  %v104 = vld [vmem:[%s1 + $0xe4] sm:$0xf]
  %v105 = vld [vmem:[%s1 + $0xe8] sm:$0xf]
  %v106 = vld [vmem:[%s1 + $0xec] sm:$0xf]
  %v107 = vld [vmem:[%s1 + $0xf0] sm:$0xf]
  %v108 = vld [vmem:[%s1 + $0xf4] sm:$0xf]
  %v109 = vld [vmem:[%s1 + $0xf8] sm:$0xf]
  %v110 = vld [vmem:[%s1 + $0xfc] sm:$0xf]
  %v111 = vld [vmem:[%s1 + $0x100] sm:$0xf]
  %v112 = vld [vmem:[%s1 + $0x104] sm:$0xf]
  %v113 = vld [vmem:[%s1 + $0x108] sm:$0xf]
  %v114 = vld [vmem:[%s1 + $0x10c] sm:$0xf]
  %v115 = vld [vmem:[%s1 + $0x110] sm:$0xf]
  %v116 = vld [vmem:[%s1 + $0x114] sm:$0xf]
  %v117 = vld [vmem:[%s1 + $0x118] sm:$0xf]
  %v118 = vld [vmem:[%s1 + $0x11c] sm:$0xf]
  %v119 = vld [vmem:[%s1 + $0x120] sm:$0xf]
  %v120 = vld [vmem:[%s1 + $0x124] sm:$0xf]
  %v121 = vld [vmem:[%s1 + $0x128] sm:$0xf]
  %v122 = vld [vmem:[%s1 + $0x12c] sm:$0xf]
  %v123 = vld [vmem:[%s1 + $0x130] sm:$0xf]
  %v124 = vld [vmem:[%s1 + $0x134] sm:$0xf]
  %v125 = vld [vmem:[%s1 + $0x138] sm:$0xf]
  %v126 = vld [vmem:[%s1 + $0x13c] sm:$0xf]
  %v127 = vld [vmem:[%s1 + $0x140] sm:$0xf]
  %v128 = vld [vmem:[%s1 + $0x144] sm:$0xf]
  %v129 = vld [vmem:[%s1 + $0x148] sm:$0xf]
  %v130 = vld [vmem:[%s1 + $0x14c] sm:$0xf]
  %v131 = vld [vmem:[%s1 + $0x150] sm:$0xf]
  %v132 = vld [vmem:[%s1 + $0x154] sm:$0xf]
  %v133 = vld [vmem:[%s1 + $0x158] sm:$0xf]
  %v134 = vld [vmem:[%s1 + $0x15c] sm:$0xf]
  %v135 = vld [vmem:[%s1 + $0x160] sm:$0xf]
  %v136 = vld [vmem:[%s1 + $0x164] sm:$0xf]
  %v137 = vld [vmem:[%s1 + $0x168] sm:$0xf]
  %v138 = vld [vmem:[%s1 + $0x16c] sm:$0xf]
  %v139 = vld [vmem:[%s1 + $0x170] sm:$0xf]
  %v140 = vld [vmem:[%s1 + $0x174] sm:$0xf]
  %v141 = vld [vmem:[%s1 + $0x178] sm:$0xf]
  %v142 = vld [vmem:[%s1 + $0x17c] sm:$0xf]
  %v143 = vld [vmem:[%s1 + $0x180] sm:$0xf]
  %v144 = vld [vmem:[%s1 + $0x184] sm:$0xf]
  %v145 = vld [vmem:[%s1 + $0x188] sm:$0xf]
  %v146 = vld [vmem:[%s1 + $0x18c] sm:$0xf]
  %v147 = vld [vmem:[%s1 + $0x190] sm:$0xf]
  %v148 = vld [vmem:[%s1 + $0x194] sm:$0xf]
  %v149 = vld [vmem:[%s1 + $0x198] sm:$0xf]
  %v150 = vld [vmem:[%s1 + $0x19c] sm:$0xf]
  %v151 = vld [vmem:[%s1 + $0x1a0] sm:$0xf]
  %v152 = vld [vmem:[%s1 + $0x1a4] sm:$0xf]
  %v153 = vld [vmem:[%s1 + $0x1a8] sm:$0xf]
  %v154 = vld [vmem:[%s1 + $0x1ac] sm:$0xf]
  %v155 = vld [vmem:[%s1 + $0x1b0] sm:$0xf]
  %v156 = vld [vmem:[%s1 + $0x1b4] sm:$0xf]
  %v157 = vld [vmem:[%s1 + $0x1b8] sm:$0xf]
  %v158 = vld [vmem:[%s1 + $0x1bc] sm:$0xf]
  %v159 = vld [vmem:[%s1 + $0x1c0] sm:$0xf]
  %v160 = vld [vmem:[%s1 + $0x1c4] sm:$0xf]
  %v161 = vld [vmem:[%s1 + $0x1c8] sm:$0xf]
  %v162 = vld [vmem:[%s1 + $0x1cc] sm:$0xf]
  %v163 = vld [vmem:[%s1 + $0x1d0] sm:$0xf]
  %v164 = vld [vmem:[%s1 + $0x1d4] sm:$0xf]
  %v165 = vld [vmem:[%s1 + $0x1d8] sm:$0xf]
  %v166 = vld [vmem:[%s1 + $0x1dc] sm:$0xf]
  %v167 = vld [vmem:[%s1 + $0x1e0] sm:$0xf]
  %v168 = vld [vmem:[%s1 + $0x1e4] sm:$0xf]
  %v169 = vld [vmem:[%s1 + $0x1e8] sm:$0xf]
  %v170 = vld [vmem:[%s1 + $0x1ec] sm:$0xf]
  %v171 = vld [vmem:[%s1 + $0x1f0] sm:$0xf]
  %v172 = vld [vmem:[%s1 + $0x1f4] sm:$0xf]
  %v173 = vld [vmem:[%s1 + $0x1f8] sm:$0xf]
  %v174 = vld [vmem:[%s1 + $0x1fc] sm:$0xf]
  %v175 = vld [vmem:[%s1 + $0x200] sm:$0xf]
  %v176 = vld [vmem:[%s1 + $0x204] sm:$0xf]
  %v177 = vld [vmem:[%s1 + $0x208] sm:$0xf]
  %v178 = vld [vmem:[%s1 + $0x20c] sm:$0xf]
  %v179 = vld [vmem:[%s1 + $0x210] sm:$0xf]
  %v180 = vld [vmem:[%s1 + $0x214] sm:$0xf]
  %v181 = vld [vmem:[%s1 + $0x218] sm:$0xf]
  %v182 = vld [vmem:[%s1 + $0x21c] sm:$0xf]
  %v183 = vld [vmem:[%s1 + $0x220] sm:$0xf]
  %v184 = vld [vmem:[%s1 + $0x224] sm:$0xf]
  %v185 = vld [vmem:[%s1 + $0x228] sm:$0xf]
  %v186 = vld [vmem:[%s1 + $0x22c] sm:$0xf]
  %v187 = vld [vmem:[%s1 + $0x230] sm:$0xf]
  %v188 = vld [vmem:[%s1 + $0x234] sm:$0xf]
  %v189 = vld [vmem:[%s1 + $0x238] sm:$0xf]
  %v190 = vld [vmem:[%s1 + $0x23c] sm:$0xf]
  %v191 = vld [vmem:[%s1 + $0x240] sm:$0xf]
  %v192 = vld [vmem:[%s1 + $0x244] sm:$0xf]
  %v193 = vld [vmem:[%s1 + $0x248] sm:$0xf]
  %v194 = vld [vmem:[%s1 + $0x24c] sm:$0xf]
  %v195 = vld [vmem:[%s1 + $0x250] sm:$0xf]
  %v196 = vld [vmem:[%s1 + $0x254] sm:$0xf]
  %v197 = vld [vmem:[%s1 + $0x258] sm:$0xf]
  %v198 = vld [vmem:[%s1 + $0x25c] sm:$0xf]
  %v199 = vld [vmem:[%s1 + $0x260] sm:$0xf]
  %v200 = vld [vmem:[%s1 + $0x264] sm:$0xf]
  %v201 = vld [vmem:[%s1 + $0x268] sm:$0xf]
  %v202 = vld [vmem:[%s1 + $0x26c] sm:$0xf]
  %v203 = vld [vmem:[%s1 + $0x270] sm:$0xf]
  %v204 = vld [vmem:[%s1 + $0x274] sm:$0xf]
  %v205 = vld [vmem:[%s1 + $0x278] sm:$0xf]
  %v206 = vld [vmem:[%s1 + $0x27c] sm:$0xf]
  %v207 = vld [vmem:[%s1 + $0x280] sm:$0xf]
  %v208 = vld [vmem:[%s1 + $0x284] sm:$0xf]
  %v209 = vld [vmem:[%s1 + $0x288] sm:$0xf]
  %v210 = vld [vmem:[%s1 + $0x28c] sm:$0xf]
  %v211 = vld [vmem:[%s1 + $0x290] sm:$0xf]
  %v212 = vld [vmem:[%s1 + $0x294] sm:$0xf]
  %v213 = vld [vmem:[%s1 + $0x298] sm:$0xf]
  %v214 = vld [vmem:[%s1 + $0x29c] sm:$0xf]
  %v215 = vld [vmem:[%s1 + $0x2a0] sm:$0xf]
  %v216 = vld [vmem:[%s1 + $0x2a4] sm:$0xf]
  %v217 = vld [vmem:[%s1 + $0x2a8] sm:$0xf]
  %v218 = vld [vmem:[%s1 + $0x2ac] sm:$0xf]
  %v219 = vld [vmem:[%s1 + $0x2b0] sm:$0xf]
  %v220 = vld [vmem:[%s1 + $0x2b4] sm:$0xf]
  %v221 = vld [vmem:[%s1 + $0x2b8] sm:$0xf]
  %v222 = vld [vmem:[%s1 + $0x2bc] sm:$0xf]
  %v223 = vld [vmem:[%s1 + $0x2c0] sm:$0xf]
  %v224 = vld [vmem:[%s1 + $0x2c4] sm:$0xf]
  %v225 = vld [vmem:[%s1 + $0x2c8] sm:$0xf]
  %v226 = vld [vmem:[%s1 + $0x2cc] sm:$0xf]
  %v227 = vld [vmem:[%s1 + $0x2d0] sm:$0xf]
  %v228 = vld [vmem:[%s1 + $0x2d4] sm:$0xf]
  %v229 = vld [vmem:[%s1 + $0x2d8] sm:$0xf]
  %v230 = vld [vmem:[%s1 + $0x2dc] sm:$0xf]
  %v231 = vld [vmem:[%s1 + $0x2e0] sm:$0xf]
  %v232 = vld [vmem:[%s1 + $0x2e4] sm:$0xf]
  %v233 = vld [vmem:[%s1 + $0x2e8] sm:$0xf]
  %v234 = vld [vmem:[%s1 + $0x2ec] sm:$0xf]
  %v235 = vld [vmem:[%s1 + $0x2f0] sm:$0xf]
  %v236 = vld [vmem:[%s1 + $0x2f4] sm:$0xf]
  %v237 = vld [vmem:[%s1 + $0x2f8] sm:$0xf]
  %v238 = vld [vmem:[%s1 + $0x2fc] sm:$0xf]
  %v239 = vld [vmem:[%s1 + $0x300] sm:$0xf]
  %v240 = vld [vmem:[%s1 + $0x304] sm:$0xf]
  %v241 = vld [vmem:[%s1 + $0x308] sm:$0xf]
  %v242 = vld [vmem:[%s1 + $0x30c] sm:$0xf]
  %v243 = vld [vmem:[%s1 + $0x310] sm:$0xf]
  %v244 = vld [vmem:[%s1 + $0x314] sm:$0xf]
  %v245 = vld [vmem:[%s1 + $0x318] sm:$0xf]
  %v246 = vld [vmem:[%s1 + $0x31c] sm:$0xf]
  %v247 = vld [vmem:[%s1 + $0x320] sm:$0xf]
  %v248 = vld [vmem:[%s1 + $0x324] sm:$0xf]
  %v249 = vld [vmem:[%s1 + $0x328] sm:$0xf]
  %v250 = vld [vmem:[%s1 + $0x32c] sm:$0xf]
  %v251 = vld [vmem:[%s1 + $0x330] sm:$0xf]
  %v252 = vld [vmem:[%s1 + $0x334] sm:$0xf]
  %v253 = vld [vmem:[%s1 + $0x338] sm:$0xf]
  %v254 = vld [vmem:[%s1 + $0x33c] sm:$0xf]
  %v255 = vld [vmem:[%s1 + $0x340] sm:$0xf]
  %v256 = vld [vmem:[%s1 + $0x344] sm:$0xf]
  %v257 = vld [vmem:[%s1 + $0x348] sm:$0xf]
  %v258 = vld [vmem:[%s1 + $0x34c] sm:$0xf]
  %v259 = vld [vmem:[%s1 + $0x350] sm:$0xf]
  %v260 = vld [vmem:[%s1 + $0x354] sm:$0xf]
  %v261 = vld [vmem:[%s1 + $0x358] sm:$0xf]
  %v262 = vld [vmem:[%s1 + $0x35c] sm:$0xf]
  %v263 = vld [vmem:[%s1 + $0x360] sm:$0xf]
  %v264 = vld [vmem:[%s1 + $0x364] sm:$0xf]
  %v265 = vld [vmem:[%s1 + $0x368] sm:$0xf]
  %v266 = vld [vmem:[%s1 + $0x36c] sm:$0xf]
  %v267 = vld [vmem:[%s1 + $0x370] sm:$0xf]
  %v268 = vld [vmem:[%s1 + $0x374] sm:$0xf]
  %v269 = vld [vmem:[%s1 + $0x378] sm:$0xf]
  %v270 = vld [vmem:[%s1 + $0x37c] sm:$0xf]
  %v271 = vld [vmem:[%s1 + $0x380] sm:$0xf]
  %v272 = vld [vmem:[%s1 + $0x384] sm:$0xf]
  %v273 = vld [vmem:[%s1 + $0x388] sm:$0xf]
  %v274 = vld [vmem:[%s1 + $0x38c] sm:$0xf]
  %v275 = vld [vmem:[%s1 + $0x390] sm:$0xf]
  %v276 = vld [vmem:[%s1 + $0x394] sm:$0xf]
  %v277 = vld [vmem:[%s1 + $0x398] sm:$0xf]
  %v278 = vld [vmem:[%s1 + $0x39c] sm:$0xf]
  %v279 = vld [vmem:[%s1 + $0x3a0] sm:$0xf]
  %v280 = vld [vmem:[%s1 + $0x3a4] sm:$0xf]
  %v281 = vld [vmem:[%s1 + $0x3a8] sm:$0xf]
  %v282 = vld [vmem:[%s1 + $0x3ac] sm:$0xf]
  %v283 = vld [vmem:[%s1 + $0x3b0] sm:$0xf]
  %v284 = vld [vmem:[%s1 + $0x3b4] sm:$0xf]
  %v285 = vld [vmem:[%s1 + $0x3b8] sm:$0xf]
  %v286 = vld [vmem:[%s1 + $0x3bc] sm:$0xf]
  %v287 = vld [vmem:[%s1 + $0x3c0] sm:$0xf]
  %v288 = vld [vmem:[%s1 + $0x3c4] sm:$0xf]
  %v289 = vld [vmem:[%s1 + $0x3c8] sm:$0xf]
  %v290 = vld [vmem:[%s1 + $0x3cc] sm:$0xf]
  %v291 = vld [vmem:[%s1 + $0x3d0] sm:$0xf]
  %v292 = vld [vmem:[%s1 + $0x3d4] sm:$0xf]
  %v293 = vld [vmem:[%s1 + $0x3d8] sm:$0xf]
  %v294 = vld [vmem:[%s1 + $0x3dc] sm:$0xf]
  %v295 = vld [vmem:[%s1 + $0x3e0] sm:$0xf]
  %v296 = vld [vmem:[%s1 + $0x3e4] sm:$0xf]
  %v297 = vld [vmem:[%s1 + $0x3e8] sm:$0xf]
  %v298 = vld [vmem:[%s1 + $0x3ec] sm:$0xf]
  %v299 = vld [vmem:[%s1 + $0x3f0] sm:$0xf]
  %v300 = vld [vmem:[%s1 + $0x3f4] sm:$0xf]
  %v301 = vld [vmem:[%s1 + $0x3f8] sm:$0xf]
  %v302 = vld [vmem:[%s1 + $0x3fc] sm:$0xf]
  %v303 = vld [vmem:[%s2] sm:$0x1]
  %v305 = vlaneseq
  %v306 = vshrl.u32 %v305, 7
  %v307 = vsub.s32 0, %v306
  %v308 = vrot.slane %v303, %v307
  %v342 = vunpack.c.l.b16 %v15
  %v343 = vunpack.c.h.b16 %v15
  %v344 = vunpack.c.l.b16 %v16
  %v345 = vunpack.c.h.b16 %v16
  %v346 = vunpack.c.l.b16 %v17
  %v347 = vunpack.c.h.b16 %v17
  %v348 = vunpack.c.l.b16 %v18
  %v349 = vunpack.c.h.b16 %v18
  %v350 = vunpack.c.l.b16 %v19
  %v351 = vunpack.c.h.b16 %v19
  %v352 = vunpack.c.l.b16 %v20
  %v353 = vunpack.c.h.b16 %v20
  %v354 = vunpack.c.l.b16 %v21
  %v355 = vunpack.c.h.b16 %v21
  %v356 = vunpack.c.l.b16 %v22
  %v357 = vunpack.c.h.b16 %v22
  %v358 = vunpack.c.l.b16 %v23
  %v359 = vunpack.c.h.b16 %v23
  %v360 = vunpack.c.l.b16 %v24
  %v361 = vunpack.c.h.b16 %v24
  %v362 = vunpack.c.l.b16 %v25
  %v363 = vunpack.c.h.b16 %v25
  %v364 = vunpack.c.l.b16 %v26
  %v365 = vunpack.c.h.b16 %v26
  %v366 = vunpack.c.l.b16 %v27
  %v367 = vunpack.c.h.b16 %v27
  %v368 = vunpack.c.l.b16 %v28
  %v369 = vunpack.c.h.b16 %v28
  %v370 = vunpack.c.l.b16 %v29
  %v371 = vunpack.c.h.b16 %v29
  %v372 = vunpack.c.l.b16 %v30
  %v373 = vunpack.c.h.b16 %v30
  %v374 = vunpack.c.l.b16 %v31
  %v375 = vunpack.c.h.b16 %v31
  %v376 = vunpack.c.l.b16 %v32
  %v377 = vunpack.c.h.b16 %v32
  %v378 = vunpack.c.l.b16 %v33
  %v379 = vunpack.c.h.b16 %v33
  %v380 = vunpack.c.l.b16 %v34
  %v381 = vunpack.c.h.b16 %v34
  %v382 = vunpack.c.l.b16 %v35
  %v383 = vunpack.c.h.b16 %v35
  %v384 = vunpack.c.l.b16 %v36
  %v385 = vunpack.c.h.b16 %v36
  %v386 = vunpack.c.l.b16 %v37
  %v387 = vunpack.c.h.b16 %v37
  %v388 = vunpack.c.l.b16 %v38
  %v389 = vunpack.c.h.b16 %v38
  %v390 = vunpack.c.l.b16 %v39
  %v391 = vunpack.c.h.b16 %v39
  %v392 = vunpack.c.l.b16 %v40
  %v393 = vunpack.c.h.b16 %v40
  %v394 = vunpack.c.l.b16 %v41
  %v395 = vunpack.c.h.b16 %v41
  %v396 = vunpack.c.l.b16 %v42
  %v397 = vunpack.c.h.b16 %v42
  %v398 = vunpack.c.l.b16 %v43
  %v399 = vunpack.c.h.b16 %v43
  %v400 = vunpack.c.l.b16 %v44
  %v401 = vunpack.c.h.b16 %v44
  %v402 = vunpack.c.l.b16 %v45
  %v403 = vunpack.c.h.b16 %v45
  %v404 = vunpack.c.l.b16 %v46
  %v405 = vunpack.c.h.b16 %v46
  %v406 = vpack.c.b16 %v358, %v342
  %v407 = vpack.c.b16 %v359, %v343
  %v408 = vpack.c.b16 %v360, %v344
  %v409 = vpack.c.b16 %v361, %v345
  %v410 = vpack.c.b16 %v362, %v346
  %v411 = vpack.c.b16 %v363, %v347
  %v412 = vpack.c.b16 %v364, %v348
  %v413 = vpack.c.b16 %v365, %v349
  %v414 = vpack.c.b16 %v366, %v350
  %v415 = vpack.c.b16 %v367, %v351
  %v416 = vpack.c.b16 %v368, %v352
  %v417 = vpack.c.b16 %v369, %v353
  %v418 = vpack.c.b16 %v370, %v354
  %v419 = vpack.c.b16 %v371, %v355
  %v420 = vpack.c.b16 %v372, %v356
  %v421 = vpack.c.b16 %v373, %v357
  %v422 = vpack.c.b16 %v390, %v374
  %v423 = vpack.c.b16 %v391, %v375
  %v424 = vpack.c.b16 %v392, %v376
  %v425 = vpack.c.b16 %v393, %v377
  %v426 = vpack.c.b16 %v394, %v378
  %v427 = vpack.c.b16 %v395, %v379
  %v428 = vpack.c.b16 %v396, %v380
  %v429 = vpack.c.b16 %v397, %v381
  %v430 = vpack.c.b16 %v398, %v382
  %v431 = vpack.c.b16 %v399, %v383
  %v432 = vpack.c.b16 %v400, %v384
  %v433 = vpack.c.b16 %v401, %v385
  %v434 = vpack.c.b16 %v402, %v386
  %v435 = vpack.c.b16 %v403, %v387
  %v436 = vpack.c.b16 %v404, %v388
  %v437 = vpack.c.b16 %v405, %v389
  %v726 = vunpack.c.l.b16 %v47
  %v727 = vunpack.c.l.b16 %v48
  %v728 = vunpack.c.l.b16 %v49
  %v729 = vunpack.c.l.b16 %v50
  %v730 = vunpack.c.l.b16 %v51
  %v731 = vunpack.c.l.b16 %v52
  %v732 = vunpack.c.l.b16 %v53
  %v733 = vunpack.c.l.b16 %v54
  %v734 = vunpack.c.l.b16 %v55
  %v735 = vunpack.c.l.b16 %v56
  %v736 = vunpack.c.l.b16 %v57
  %v737 = vunpack.c.l.b16 %v58
  %v738 = vunpack.c.l.b16 %v59
  %v739 = vunpack.c.l.b16 %v60
  %v740 = vunpack.c.l.b16 %v61
  %v741 = vunpack.c.l.b16 %v62
  %v742 = vunpack.c.l.b16 %v63
  %v743 = vunpack.c.l.b16 %v64
  %v744 = vunpack.c.l.b16 %v65
  %v745 = vunpack.c.l.b16 %v66
  %v746 = vunpack.c.l.b16 %v67
  %v747 = vunpack.c.l.b16 %v68
  %v748 = vunpack.c.l.b16 %v69
  %v749 = vunpack.c.l.b16 %v70
  %v750 = vunpack.c.l.b16 %v71
  %v751 = vunpack.c.l.b16 %v72
  %v752 = vunpack.c.l.b16 %v73
  %v753 = vunpack.c.l.b16 %v74
  %v754 = vunpack.c.l.b16 %v75
  %v755 = vunpack.c.l.b16 %v76
  %v756 = vunpack.c.l.b16 %v77
  %v757 = vunpack.c.l.b16 %v78
  %v758 = vunpack.c.l.b16 %v79
  %v759 = vunpack.c.l.b16 %v80
  %v760 = vunpack.c.l.b16 %v81
  %v761 = vunpack.c.l.b16 %v82
  %v762 = vunpack.c.l.b16 %v83
  %v763 = vunpack.c.l.b16 %v84
  %v764 = vunpack.c.l.b16 %v85
  %v765 = vunpack.c.l.b16 %v86
  %v766 = vunpack.c.l.b16 %v87
  %v767 = vunpack.c.l.b16 %v88
  %v768 = vunpack.c.l.b16 %v89
  %v769 = vunpack.c.l.b16 %v90
  %v770 = vunpack.c.l.b16 %v91
  %v771 = vunpack.c.l.b16 %v92
  %v772 = vunpack.c.l.b16 %v93
  %v773 = vunpack.c.l.b16 %v94
  %v774 = vunpack.c.l.b16 %v95
  %v775 = vunpack.c.l.b16 %v96
  %v776 = vunpack.c.l.b16 %v97
  %v777 = vunpack.c.l.b16 %v98
  %v778 = vunpack.c.l.b16 %v99
  %v779 = vunpack.c.l.b16 %v100
  %v780 = vunpack.c.l.b16 %v101
  %v781 = vunpack.c.l.b16 %v102
  %v782 = vunpack.c.l.b16 %v103
  %v783 = vunpack.c.l.b16 %v104
  %v784 = vunpack.c.l.b16 %v105
  %v785 = vunpack.c.l.b16 %v106
  %v786 = vunpack.c.l.b16 %v107
  %v787 = vunpack.c.l.b16 %v108
  %v788 = vunpack.c.l.b16 %v109
  %v789 = vunpack.c.l.b16 %v110
  %v790 = vunpack.c.l.b16 %v111
  %v791 = vunpack.c.l.b16 %v112
  %v792 = vunpack.c.l.b16 %v113
  %v793 = vunpack.c.l.b16 %v114
  %v794 = vunpack.c.l.b16 %v115
  %v795 = vunpack.c.l.b16 %v116
  %v796 = vunpack.c.l.b16 %v117
  %v797 = vunpack.c.l.b16 %v118
  %v798 = vunpack.c.l.b16 %v119
  %v799 = vunpack.c.l.b16 %v120
  %v800 = vunpack.c.l.b16 %v121
  %v801 = vunpack.c.l.b16 %v122
  %v802 = vunpack.c.l.b16 %v123
  %v803 = vunpack.c.l.b16 %v124
  %v804 = vunpack.c.l.b16 %v125
  %v805 = vunpack.c.l.b16 %v126
  %v806 = vunpack.c.l.b16 %v127
  %v807 = vunpack.c.l.b16 %v128
  %v808 = vunpack.c.l.b16 %v129
  %v809 = vunpack.c.l.b16 %v130
  %v810 = vunpack.c.l.b16 %v131
  %v811 = vunpack.c.l.b16 %v132
  %v812 = vunpack.c.l.b16 %v133
  %v813 = vunpack.c.l.b16 %v134
  %v814 = vunpack.c.l.b16 %v135
  %v815 = vunpack.c.l.b16 %v136
  %v816 = vunpack.c.l.b16 %v137
  %v817 = vunpack.c.l.b16 %v138
  %v818 = vunpack.c.l.b16 %v139
  %v819 = vunpack.c.l.b16 %v140
  %v820 = vunpack.c.l.b16 %v141
  %v821 = vunpack.c.l.b16 %v142
  %v822 = vunpack.c.l.b16 %v143
  %v823 = vunpack.c.l.b16 %v144
  %v824 = vunpack.c.l.b16 %v145
  %v825 = vunpack.c.l.b16 %v146
  %v826 = vunpack.c.l.b16 %v147
  %v827 = vunpack.c.l.b16 %v148
  %v828 = vunpack.c.l.b16 %v149
  %v829 = vunpack.c.l.b16 %v150
  %v830 = vunpack.c.l.b16 %v151
  %v831 = vunpack.c.l.b16 %v152
  %v832 = vunpack.c.l.b16 %v153
  %v833 = vunpack.c.l.b16 %v154
  %v834 = vunpack.c.l.b16 %v155
  %v835 = vunpack.c.l.b16 %v156
  %v836 = vunpack.c.l.b16 %v157
  %v837 = vunpack.c.l.b16 %v158
  %v838 = vunpack.c.l.b16 %v159
  %v839 = vunpack.c.l.b16 %v160
  %v840 = vunpack.c.l.b16 %v161
  %v841 = vunpack.c.l.b16 %v162
  %v842 = vunpack.c.l.b16 %v163
  %v843 = vunpack.c.l.b16 %v164
  %v844 = vunpack.c.l.b16 %v165
  %v845 = vunpack.c.l.b16 %v166
  %v846 = vunpack.c.l.b16 %v167
  %v847 = vunpack.c.l.b16 %v168
  %v848 = vunpack.c.l.b16 %v169
  %v849 = vunpack.c.l.b16 %v170
  %v850 = vunpack.c.l.b16 %v171
  %v851 = vunpack.c.l.b16 %v172
  %v852 = vunpack.c.l.b16 %v173
  %v853 = vunpack.c.l.b16 %v174
  %v854 = vunpack.c.l.b16 %v175
  %v855 = vunpack.c.l.b16 %v176
  %v856 = vunpack.c.l.b16 %v177
  %v857 = vunpack.c.l.b16 %v178
  %v858 = vunpack.c.l.b16 %v179
  %v859 = vunpack.c.l.b16 %v180
  %v860 = vunpack.c.l.b16 %v181
  %v861 = vunpack.c.l.b16 %v182
  %v862 = vunpack.c.l.b16 %v183
  %v863 = vunpack.c.l.b16 %v184
  %v864 = vunpack.c.l.b16 %v185
  %v865 = vunpack.c.l.b16 %v186
  %v866 = vunpack.c.l.b16 %v187
  %v867 = vunpack.c.l.b16 %v188
  %v868 = vunpack.c.l.b16 %v189
  %v869 = vunpack.c.l.b16 %v190
  %v870 = vunpack.c.l.b16 %v191
  %v871 = vunpack.c.l.b16 %v192
  %v872 = vunpack.c.l.b16 %v193
  %v873 = vunpack.c.l.b16 %v194
  %v874 = vunpack.c.l.b16 %v195
  %v875 = vunpack.c.l.b16 %v196
  %v876 = vunpack.c.l.b16 %v197
  %v877 = vunpack.c.l.b16 %v198
  %v878 = vunpack.c.l.b16 %v199
  %v879 = vunpack.c.l.b16 %v200
  %v880 = vunpack.c.l.b16 %v201
  %v881 = vunpack.c.l.b16 %v202
  %v882 = vunpack.c.l.b16 %v203
  %v883 = vunpack.c.l.b16 %v204
  %v884 = vunpack.c.l.b16 %v205
  %v885 = vunpack.c.l.b16 %v206
  %v886 = vunpack.c.l.b16 %v207
  %v887 = vunpack.c.l.b16 %v208
  %v888 = vunpack.c.l.b16 %v209
  %v889 = vunpack.c.l.b16 %v210
  %v890 = vunpack.c.l.b16 %v211
  %v891 = vunpack.c.l.b16 %v212
  %v892 = vunpack.c.l.b16 %v213
  %v893 = vunpack.c.l.b16 %v214
  %v894 = vunpack.c.l.b16 %v215
  %v895 = vunpack.c.l.b16 %v216
  %v896 = vunpack.c.l.b16 %v217
  %v897 = vunpack.c.l.b16 %v218
  %v898 = vunpack.c.l.b16 %v219
  %v899 = vunpack.c.l.b16 %v220
  %v900 = vunpack.c.l.b16 %v221
  %v901 = vunpack.c.l.b16 %v222
  %v902 = vunpack.c.l.b16 %v223
  %v903 = vunpack.c.l.b16 %v224
  %v904 = vunpack.c.l.b16 %v225
  %v905 = vunpack.c.l.b16 %v226
  %v906 = vunpack.c.l.b16 %v227
  %v907 = vunpack.c.l.b16 %v228
  %v908 = vunpack.c.l.b16 %v229
  %v909 = vunpack.c.l.b16 %v230
  %v910 = vunpack.c.l.b16 %v231
  %v911 = vunpack.c.l.b16 %v232
  %v912 = vunpack.c.l.b16 %v233
  %v913 = vunpack.c.l.b16 %v234
  %v914 = vunpack.c.l.b16 %v235
  %v915 = vunpack.c.l.b16 %v236
  %v916 = vunpack.c.l.b16 %v237
  %v917 = vunpack.c.l.b16 %v238
  %v918 = vunpack.c.l.b16 %v239
  %v919 = vunpack.c.l.b16 %v240
  %v920 = vunpack.c.l.b16 %v241
  %v921 = vunpack.c.l.b16 %v242
  %v922 = vunpack.c.l.b16 %v243
  %v923 = vunpack.c.l.b16 %v244
  %v924 = vunpack.c.l.b16 %v245
  %v925 = vunpack.c.l.b16 %v246
  %v926 = vunpack.c.l.b16 %v247
  %v927 = vunpack.c.l.b16 %v248
  %v928 = vunpack.c.l.b16 %v249
  %v929 = vunpack.c.l.b16 %v250
  %v930 = vunpack.c.l.b16 %v251
  %v931 = vunpack.c.l.b16 %v252
  %v932 = vunpack.c.l.b16 %v253
  %v933 = vunpack.c.l.b16 %v254
  %v934 = vunpack.c.l.b16 %v255
  %v935 = vunpack.c.l.b16 %v256
  %v936 = vunpack.c.l.b16 %v257
  %v937 = vunpack.c.l.b16 %v258
  %v938 = vunpack.c.l.b16 %v259
  %v939 = vunpack.c.l.b16 %v260
  %v940 = vunpack.c.l.b16 %v261
  %v941 = vunpack.c.l.b16 %v262
  %v942 = vunpack.c.l.b16 %v263
  %v943 = vunpack.c.l.b16 %v264
  %v944 = vunpack.c.l.b16 %v265
  %v945 = vunpack.c.l.b16 %v266
  %v946 = vunpack.c.l.b16 %v267
  %v947 = vunpack.c.l.b16 %v268
  %v948 = vunpack.c.l.b16 %v269
  %v949 = vunpack.c.l.b16 %v270
  %v950 = vunpack.c.l.b16 %v271
  %v951 = vunpack.c.l.b16 %v272
  %v952 = vunpack.c.l.b16 %v273
  %v953 = vunpack.c.l.b16 %v274
  %v954 = vunpack.c.l.b16 %v275
  %v955 = vunpack.c.l.b16 %v276
  %v956 = vunpack.c.l.b16 %v277
  %v957 = vunpack.c.l.b16 %v278
  %v958 = vunpack.c.l.b16 %v279
  %v959 = vunpack.c.l.b16 %v280
  %v960 = vunpack.c.l.b16 %v281
  %v961 = vunpack.c.l.b16 %v282
  %v962 = vunpack.c.l.b16 %v283
  %v963 = vunpack.c.l.b16 %v284
  %v964 = vunpack.c.l.b16 %v285
  %v965 = vunpack.c.l.b16 %v286
  %v966 = vunpack.c.l.b16 %v287
  %v967 = vunpack.c.l.b16 %v288
  %v968 = vunpack.c.l.b16 %v289
  %v969 = vunpack.c.l.b16 %v290
  %v970 = vunpack.c.l.b16 %v291
  %v971 = vunpack.c.l.b16 %v292
  %v972 = vunpack.c.l.b16 %v293
  %v973 = vunpack.c.l.b16 %v294
  %v974 = vunpack.c.l.b16 %v295
  %v975 = vunpack.c.l.b16 %v296
  %v976 = vunpack.c.l.b16 %v297
  %v977 = vunpack.c.l.b16 %v298
  %v978 = vunpack.c.l.b16 %v299
  %v979 = vunpack.c.l.b16 %v300
  %v980 = vunpack.c.l.b16 %v301
  %v981 = vunpack.c.l.b16 %v302
  %v982 = vpack.c.b16 %v727, %v726
  %v983 = vpack.c.b16 %v729, %v728
  %v984 = vpack.c.b16 %v731, %v730
  %v985 = vpack.c.b16 %v733, %v732
  %v986 = vpack.c.b16 %v735, %v734
  %v987 = vpack.c.b16 %v737, %v736
  %v988 = vpack.c.b16 %v739, %v738
  %v989 = vpack.c.b16 %v741, %v740
  %v990 = vpack.c.b16 %v743, %v742
  %v991 = vpack.c.b16 %v745, %v744
  %v992 = vpack.c.b16 %v747, %v746
  %v993 = vpack.c.b16 %v749, %v748
  %v994 = vpack.c.b16 %v751, %v750
  %v995 = vpack.c.b16 %v753, %v752
  %v996 = vpack.c.b16 %v755, %v754
  %v997 = vpack.c.b16 %v757, %v756
  %v998 = vpack.c.b16 %v759, %v758
  %v999 = vpack.c.b16 %v761, %v760
  %v1000 = vpack.c.b16 %v763, %v762
  %v1001 = vpack.c.b16 %v765, %v764
  %v1002 = vpack.c.b16 %v767, %v766
  %v1003 = vpack.c.b16 %v769, %v768
  %v1004 = vpack.c.b16 %v771, %v770
  %v1005 = vpack.c.b16 %v773, %v772
  %v1006 = vpack.c.b16 %v775, %v774
  %v1007 = vpack.c.b16 %v777, %v776
  %v1008 = vpack.c.b16 %v779, %v778
  %v1009 = vpack.c.b16 %v781, %v780
  %v1010 = vpack.c.b16 %v783, %v782
  %v1011 = vpack.c.b16 %v785, %v784
  %v1012 = vpack.c.b16 %v787, %v786
  %v1013 = vpack.c.b16 %v789, %v788
  %v1014 = vpack.c.b16 %v791, %v790
  %v1015 = vpack.c.b16 %v793, %v792
  %v1016 = vpack.c.b16 %v795, %v794
  %v1017 = vpack.c.b16 %v797, %v796
  %v1018 = vpack.c.b16 %v799, %v798
  %v1019 = vpack.c.b16 %v801, %v800
  %v1020 = vpack.c.b16 %v803, %v802
  %v1021 = vpack.c.b16 %v805, %v804
  %v1022 = vpack.c.b16 %v807, %v806
  %v1023 = vpack.c.b16 %v809, %v808
  %v1024 = vpack.c.b16 %v811, %v810
  %v1025 = vpack.c.b16 %v813, %v812
  %v1026 = vpack.c.b16 %v815, %v814
  %v1027 = vpack.c.b16 %v817, %v816
  %v1028 = vpack.c.b16 %v819, %v818
  %v1029 = vpack.c.b16 %v821, %v820
  %v1030 = vpack.c.b16 %v823, %v822
  %v1031 = vpack.c.b16 %v825, %v824
  %v1032 = vpack.c.b16 %v827, %v826
  %v1033 = vpack.c.b16 %v829, %v828
  %v1034 = vpack.c.b16 %v831, %v830
  %v1035 = vpack.c.b16 %v833, %v832
  %v1036 = vpack.c.b16 %v835, %v834
  %v1037 = vpack.c.b16 %v837, %v836
  %v1038 = vpack.c.b16 %v839, %v838
  %v1039 = vpack.c.b16 %v841, %v840
  %v1040 = vpack.c.b16 %v843, %v842
  %v1041 = vpack.c.b16 %v845, %v844
  %v1042 = vpack.c.b16 %v847, %v846
  %v1043 = vpack.c.b16 %v849, %v848
  %v1044 = vpack.c.b16 %v851, %v850
  %v1045 = vpack.c.b16 %v853, %v852
  %v1046 = vpack.c.b16 %v855, %v854
  %v1047 = vpack.c.b16 %v857, %v856
  %v1048 = vpack.c.b16 %v859, %v858
  %v1049 = vpack.c.b16 %v861, %v860
  %v1050 = vpack.c.b16 %v863, %v862
  %v1051 = vpack.c.b16 %v865, %v864
  %v1052 = vpack.c.b16 %v867, %v866
  %v1053 = vpack.c.b16 %v869, %v868
  %v1054 = vpack.c.b16 %v871, %v870
  %v1055 = vpack.c.b16 %v873, %v872
  %v1056 = vpack.c.b16 %v875, %v874
  %v1057 = vpack.c.b16 %v877, %v876
  %v1058 = vpack.c.b16 %v879, %v878
  %v1059 = vpack.c.b16 %v881, %v880
  %v1060 = vpack.c.b16 %v883, %v882
  %v1061 = vpack.c.b16 %v885, %v884
  %v1062 = vpack.c.b16 %v887, %v886
  %v1063 = vpack.c.b16 %v889, %v888
  %v1064 = vpack.c.b16 %v891, %v890
  %v1065 = vpack.c.b16 %v893, %v892
  %v1066 = vpack.c.b16 %v895, %v894
  %v1067 = vpack.c.b16 %v897, %v896
  %v1068 = vpack.c.b16 %v899, %v898
  %v1069 = vpack.c.b16 %v901, %v900
  %v1070 = vpack.c.b16 %v903, %v902
  %v1071 = vpack.c.b16 %v905, %v904
  %v1072 = vpack.c.b16 %v907, %v906
  %v1073 = vpack.c.b16 %v909, %v908
  %v1074 = vpack.c.b16 %v911, %v910
  %v1075 = vpack.c.b16 %v913, %v912
  %v1076 = vpack.c.b16 %v915, %v914
  %v1077 = vpack.c.b16 %v917, %v916
  %v1078 = vpack.c.b16 %v919, %v918
  %v1079 = vpack.c.b16 %v921, %v920
  %v1080 = vpack.c.b16 %v923, %v922
  %v1081 = vpack.c.b16 %v925, %v924
  %v1082 = vpack.c.b16 %v927, %v926
  %v1083 = vpack.c.b16 %v929, %v928
  %v1084 = vpack.c.b16 %v931, %v930
  %v1085 = vpack.c.b16 %v933, %v932
  %v1086 = vpack.c.b16 %v935, %v934
  %v1087 = vpack.c.b16 %v937, %v936
  %v1088 = vpack.c.b16 %v939, %v938
  %v1089 = vpack.c.b16 %v941, %v940
  %v1090 = vpack.c.b16 %v943, %v942
  %v1091 = vpack.c.b16 %v945, %v944
  %v1092 = vpack.c.b16 %v947, %v946
  %v1093 = vpack.c.b16 %v949, %v948
  %v1094 = vpack.c.b16 %v951, %v950
  %v1095 = vpack.c.b16 %v953, %v952
  %v1096 = vpack.c.b16 %v955, %v954
  %v1097 = vpack.c.b16 %v957, %v956
  %v1098 = vpack.c.b16 %v959, %v958
  %v1099 = vpack.c.b16 %v961, %v960
  %v1100 = vpack.c.b16 %v963, %v962
  %v1101 = vpack.c.b16 %v965, %v964
  %v1102 = vpack.c.b16 %v967, %v966
  %v1103 = vpack.c.b16 %v969, %v968
  %v1104 = vpack.c.b16 %v971, %v970
  %v1105 = vpack.c.b16 %v973, %v972
  %v1106 = vpack.c.b16 %v975, %v974
  %v1107 = vpack.c.b16 %v977, %v976
  %v1108 = vpack.c.b16 %v979, %v978
  %v1109 = vpack.c.b16 %v981, %v980
  %1238 = vmatprep.subr.bf16.mxu0 0
  %1239 = vmatpush1.bf16.msra.mxu0 %v982
  %1240 = vmatprep.subr.bf16.mxu0 0
  %1241 = vmatpush1.bf16.msra.mxu0 %v983
  %1242 = vmatprep.subr.bf16.mxu0 0
  %1243 = vmatpush1.bf16.msra.mxu0 %v984
  %1244 = vmatprep.subr.bf16.mxu0 0
  %1245 = vmatpush1.bf16.msra.mxu0 %v985
  %1246 = vmatprep.subr.bf16.mxu0 0
  %1247 = vmatpush1.bf16.msra.mxu0 %v986
  %1248 = vmatprep.subr.bf16.mxu0 0
  %1249 = vmatpush1.bf16.msra.mxu0 %v987
  %1250 = vmatprep.subr.bf16.mxu0 0
  %1251 = vmatpush1.bf16.msra.mxu0 %v988
  %1252 = vmatprep.subr.bf16.mxu0 0
  %1253 = vmatpush1.bf16.msra.mxu0 %v989
  %1254 = vmatprep.subr.bf16.mxu0 0
  %1255 = vmatpush1.bf16.msra.mxu0 %v990
  %1256 = vmatprep.subr.bf16.mxu0 0
  %1257 = vmatpush1.bf16.msra.mxu0 %v991
  %1258 = vmatprep.subr.bf16.mxu0 0
  %1259 = vmatpush1.bf16.msra.mxu0 %v992
  %1260 = vmatprep.subr.bf16.mxu0 0
  %1261 = vmatpush1.bf16.msra.mxu0 %v993
  %1262 = vmatprep.subr.bf16.mxu0 0
  %1263 = vmatpush1.bf16.msra.mxu0 %v994
  %1264 = vmatprep.subr.bf16.mxu0 0
  %1265 = vmatpush1.bf16.msra.mxu0 %v995
  %1266 = vmatprep.subr.bf16.mxu0 0
  %1267 = vmatpush1.bf16.msra.mxu0 %v996
  %1268 = vmatprep.subr.bf16.mxu0 0
  %1269 = vmatpush1.bf16.msra.mxu0 %v997
  %1270 = vmatprep.mubr.bf16.mxu0 %v407
  %1271 = vmatmul.mubr.bf16.gmra.mrb[0].mxu0 %v406
  %v1272 = vpop.f32.mrb[0].mxu0
  %v1273 = vadd.f32 %v308, %v1272
  %v1274 = vpop.f32.mrb[0].mxu0
  %v1275 = vpop.f32.mrb[0].mxu0
  %v1276 = vadd.f32 %v308, %v1275
  %v1277 = vpop.f32.mrb[0].mxu0
  %1278 = vmatprep.mubr.bf16.mxu0 %v423
  %1279 = vmatmul.mubr.bf16.gmra.mrb[0].mxu0 %v422
  %v1280 = vpop.f32.mrb[0].mxu0
  %v1281 = vadd.f32 %v308, %v1280
  %v1282 = vpop.f32.mrb[0].mxu0
  %v1283 = vpop.f32.mrb[0].mxu0
  %v1284 = vadd.f32 %v308, %v1283
  %v1285 = vpop.f32.mrb[0].mxu0
  %1286 = vdwg.mxu0
  %1287 = vmatprep.subr.bf16.mxu0 0
  %1288 = vmatpush1.bf16.msra.mxu0 %v998
  %1289 = vmatprep.subr.bf16.mxu0 0
  %1290 = vmatpush1.bf16.msra.mxu0 %v999
  %1291 = vmatprep.subr.bf16.mxu0 0
  %1292 = vmatpush1.bf16.msra.mxu0 %v1000
  %1293 = vmatprep.subr.bf16.mxu0 0
  %1294 = vmatpush1.bf16.msra.mxu0 %v1001
  %1295 = vmatprep.subr.bf16.mxu0 0
  %1296 = vmatpush1.bf16.msra.mxu0 %v1002
  %1297 = vmatprep.subr.bf16.mxu0 0
  %1298 = vmatpush1.bf16.msra.mxu0 %v1003
  %1299 = vmatprep.subr.bf16.mxu0 0
  %1300 = vmatpush1.bf16.msra.mxu0 %v1004
  %1301 = vmatprep.subr.bf16.mxu0 0
  %1302 = vmatpush1.bf16.msra.mxu0 %v1005
  %1303 = vmatprep.subr.bf16.mxu0 0
  %1304 = vmatpush1.bf16.msra.mxu0 %v1006
  %1305 = vmatprep.subr.bf16.mxu0 0
  %1306 = vmatpush1.bf16.msra.mxu0 %v1007
  %1307 = vmatprep.subr.bf16.mxu0 0
  %1308 = vmatpush1.bf16.msra.mxu0 %v1008
  %1309 = vmatprep.subr.bf16.mxu0 0
  %1310 = vmatpush1.bf16.msra.mxu0 %v1009
  %1311 = vmatprep.subr.bf16.mxu0 0
  %1312 = vmatpush1.bf16.msra.mxu0 %v1010
  %1313 = vmatprep.subr.bf16.mxu0 0
  %1314 = vmatpush1.bf16.msra.mxu0 %v1011
  %1315 = vmatprep.subr.bf16.mxu0 0
  %1316 = vmatpush1.bf16.msra.mxu0 %v1012
  %1317 = vmatprep.subr.bf16.mxu0 0
  %1318 = vmatpush1.bf16.msra.mxu0 %v1013
  %1319 = vmatprep.mubr.bf16.mxu0 %v409
  %1320 = vmatmul.mubr.bf16.gmra.mrb[0].mxu0 %v408
  %v1321 = vpop.f32.mrb[0].mxu0
  %v1322 = vadd.f32 %v1273, %v1321
  %v1323 = vpop.f32.mrb[0].mxu0
  %v1324 = vpop.f32.mrb[0].mxu0
  %v1325 = vadd.f32 %v1276, %v1324
  %v1326 = vpop.f32.mrb[0].mxu0
  %1327 = vmatprep.mubr.bf16.mxu0 %v425
  %1328 = vmatmul.mubr.bf16.gmra.mrb[0].mxu0 %v424
  %v1329 = vpop.f32.mrb[0].mxu0
  %v1330 = vadd.f32 %v1281, %v1329
  %v1331 = vpop.f32.mrb[0].mxu0
  %v1332 = vpop.f32.mrb[0].mxu0
  %v1333 = vadd.f32 %v1284, %v1332
  %v1334 = vpop.f32.mrb[0].mxu0
  %1335 = vdwg.mxu0
  %1336 = vmatprep.subr.bf16.mxu0 0
  %1337 = vmatpush1.bf16.msra.mxu0 %v1014
  %1338 = vmatprep.subr.bf16.mxu0 0
  %1339 = vmatpush1.bf16.msra.mxu0 %v1015
  %1340 = vmatprep.subr.bf16.mxu0 0
  %1341 = vmatpush1.bf16.msra.mxu0 %v1016
  %1342 = vmatprep.subr.bf16.mxu0 0
  %1343 = vmatpush1.bf16.msra.mxu0 %v1017
  %1344 = vmatprep.subr.bf16.mxu0 0
  %1345 = vmatpush1.bf16.msra.mxu0 %v1018
  %1346 = vmatprep.subr.bf16.mxu0 0
  %1347 = vmatpush1.bf16.msra.mxu0 %v1019
  %1348 = vmatprep.subr.bf16.mxu0 0
  %1349 = vmatpush1.bf16.msra.mxu0 %v1020
  %1350 = vmatprep.subr.bf16.mxu0 0
  %1351 = vmatpush1.bf16.msra.mxu0 %v1021
  %1352 = vmatprep.subr.bf16.mxu0 0
  %1353 = vmatpush1.bf16.msra.mxu0 %v1022
  %1354 = vmatprep.subr.bf16.mxu0 0
  %1355 = vmatpush1.bf16.msra.mxu0 %v1023
  %1356 = vmatprep.subr.bf16.mxu0 0
  %1357 = vmatpush1.bf16.msra.mxu0 %v1024
  %1358 = vmatprep.subr.bf16.mxu0 0
  %1359 = vmatpush1.bf16.msra.mxu0 %v1025
  %1360 = vmatprep.subr.bf16.mxu0 0
  %1361 = vmatpush1.bf16.msra.mxu0 %v1026
  %1362 = vmatprep.subr.bf16.mxu0 0
  %1363 = vmatpush1.bf16.msra.mxu0 %v1027
  %1364 = vmatprep.subr.bf16.mxu0 0
  %1365 = vmatpush1.bf16.msra.mxu0 %v1028
  %1366 = vmatprep.subr.bf16.mxu0 0
  %1367 = vmatpush1.bf16.msra.mxu0 %v1029
  %1368 = vmatprep.mubr.bf16.mxu0 %v411
  %1369 = vmatmul.mubr.bf16.gmra.mrb[0].mxu0 %v410
  %v1370 = vpop.f32.mrb[0].mxu0
  %v1371 = vadd.f32 %v1322, %v1370
  %v1372 = vpop.f32.mrb[0].mxu0
  %v1373 = vpop.f32.mrb[0].mxu0
  %v1374 = vadd.f32 %v1325, %v1373
  %v1375 = vpop.f32.mrb[0].mxu0
  %1376 = vmatprep.mubr.bf16.mxu0 %v427
  %1377 = vmatmul.mubr.bf16.gmra.mrb[0].mxu0 %v426
  %v1378 = vpop.f32.mrb[0].mxu0
  %v1379 = vadd.f32 %v1330, %v1378
  %v1380 = vpop.f32.mrb[0].mxu0
  %v1381 = vpop.f32.mrb[0].mxu0
  %v1382 = vadd.f32 %v1333, %v1381
  %v1383 = vpop.f32.mrb[0].mxu0
  %1384 = vdwg.mxu0
  %1385 = vmatprep.subr.bf16.mxu0 0
  %1386 = vmatpush1.bf16.msra.mxu0 %v1030
  %1387 = vmatprep.subr.bf16.mxu0 0
  %1388 = vmatpush1.bf16.msra.mxu0 %v1031
  %1389 = vmatprep.subr.bf16.mxu0 0
  %1390 = vmatpush1.bf16.msra.mxu0 %v1032
  %1391 = vmatprep.subr.bf16.mxu0 0
  %1392 = vmatpush1.bf16.msra.mxu0 %v1033
  %1393 = vmatprep.subr.bf16.mxu0 0
  %1394 = vmatpush1.bf16.msra.mxu0 %v1034
  %1395 = vmatprep.subr.bf16.mxu0 0
  %1396 = vmatpush1.bf16.msra.mxu0 %v1035
  %1397 = vmatprep.subr.bf16.mxu0 0
  %1398 = vmatpush1.bf16.msra.mxu0 %v1036
  %1399 = vmatprep.subr.bf16.mxu0 0
  %1400 = vmatpush1.bf16.msra.mxu0 %v1037
  %1401 = vmatprep.subr.bf16.mxu0 0
  %1402 = vmatpush1.bf16.msra.mxu0 %v1038
  %1403 = vmatprep.subr.bf16.mxu0 0
  %1404 = vmatpush1.bf16.msra.mxu0 %v1039
  %1405 = vmatprep.subr.bf16.mxu0 0
  %1406 = vmatpush1.bf16.msra.mxu0 %v1040
  %1407 = vmatprep.subr.bf16.mxu0 0
  %1408 = vmatpush1.bf16.msra.mxu0 %v1041
  %1409 = vmatprep.subr.bf16.mxu0 0
  %1410 = vmatpush1.bf16.msra.mxu0 %v1042
  %1411 = vmatprep.subr.bf16.mxu0 0
  %1412 = vmatpush1.bf16.msra.mxu0 %v1043
  %1413 = vmatprep.subr.bf16.mxu0 0
  %1414 = vmatpush1.bf16.msra.mxu0 %v1044
  %1415 = vmatprep.subr.bf16.mxu0 0
  %1416 = vmatpush1.bf16.msra.mxu0 %v1045
  %1417 = vmatprep.mubr.bf16.mxu0 %v413
  %1418 = vmatmul.mubr.bf16.gmra.mrb[0].mxu0 %v412
  %v1419 = vpop.f32.mrb[0].mxu0
  %v1420 = vadd.f32 %v1371, %v1419
  %v1421 = vpop.f32.mrb[0].mxu0
  %v1422 = vpop.f32.mrb[0].mxu0
  %v1423 = vadd.f32 %v1374, %v1422
  %v1424 = vpop.f32.mrb[0].mxu0
  %1425 = vmatprep.mubr.bf16.mxu0 %v429
  %1426 = vmatmul.mubr.bf16.gmra.mrb[0].mxu0 %v428
  %v1427 = vpop.f32.mrb[0].mxu0
  %v1428 = vadd.f32 %v1379, %v1427
  %v1429 = vpop.f32.mrb[0].mxu0
  %v1430 = vpop.f32.mrb[0].mxu0
  %v1431 = vadd.f32 %v1382, %v1430
  %v1432 = vpop.f32.mrb[0].mxu0
  %1433 = vdwg.mxu0
  %1434 = vmatprep.subr.bf16.mxu0 0
  %1435 = vmatpush1.bf16.msra.mxu0 %v1046
  %1436 = vmatprep.subr.bf16.mxu0 0
  %1437 = vmatpush1.bf16.msra.mxu0 %v1047
  %1438 = vmatprep.subr.bf16.mxu0 0
  %1439 = vmatpush1.bf16.msra.mxu0 %v1048
  %1440 = vmatprep.subr.bf16.mxu0 0
  %1441 = vmatpush1.bf16.msra.mxu0 %v1049
  %1442 = vmatprep.subr.bf16.mxu0 0
  %1443 = vmatpush1.bf16.msra.mxu0 %v1050
  %1444 = vmatprep.subr.bf16.mxu0 0
  %1445 = vmatpush1.bf16.msra.mxu0 %v1051
  %1446 = vmatprep.subr.bf16.mxu0 0
  %1447 = vmatpush1.bf16.msra.mxu0 %v1052
  %1448 = vmatprep.subr.bf16.mxu0 0
  %1449 = vmatpush1.bf16.msra.mxu0 %v1053
  %1450 = vmatprep.subr.bf16.mxu0 0
  %1451 = vmatpush1.bf16.msra.mxu0 %v1054
  %1452 = vmatprep.subr.bf16.mxu0 0
  %1453 = vmatpush1.bf16.msra.mxu0 %v1055
  %1454 = vmatprep.subr.bf16.mxu0 0
  %1455 = vmatpush1.bf16.msra.mxu0 %v1056
  %1456 = vmatprep.subr.bf16.mxu0 0
  %1457 = vmatpush1.bf16.msra.mxu0 %v1057
  %1458 = vmatprep.subr.bf16.mxu0 0
  %1459 = vmatpush1.bf16.msra.mxu0 %v1058
  %1460 = vmatprep.subr.bf16.mxu0 0
  %1461 = vmatpush1.bf16.msra.mxu0 %v1059
  %1462 = vmatprep.subr.bf16.mxu0 0
  %1463 = vmatpush1.bf16.msra.mxu0 %v1060
  %1464 = vmatprep.subr.bf16.mxu0 0
  %1465 = vmatpush1.bf16.msra.mxu0 %v1061
  %1466 = vmatprep.mubr.bf16.mxu0 %v415
  %1467 = vmatmul.mubr.bf16.gmra.mrb[0].mxu0 %v414
  %v1468 = vpop.f32.mrb[0].mxu0
  %v1469 = vadd.f32 %v1420, %v1468
  %v1470 = vpop.f32.mrb[0].mxu0
  %v1471 = vpop.f32.mrb[0].mxu0
  %v1472 = vadd.f32 %v1423, %v1471
  %v1473 = vpop.f32.mrb[0].mxu0
  %1474 = vmatprep.mubr.bf16.mxu0 %v431
  %1475 = vmatmul.mubr.bf16.gmra.mrb[0].mxu0 %v430
  %v1476 = vpop.f32.mrb[0].mxu0
  %v1477 = vadd.f32 %v1428, %v1476
  %v1478 = vpop.f32.mrb[0].mxu0
  %v1479 = vpop.f32.mrb[0].mxu0
  %v1480 = vadd.f32 %v1431, %v1479
  %v1481 = vpop.f32.mrb[0].mxu0
  %1482 = vdwg.mxu0
  %1483 = vmatprep.subr.bf16.mxu0 0
  %1484 = vmatpush1.bf16.msra.mxu0 %v1062
  %1485 = vmatprep.subr.bf16.mxu0 0
  %1486 = vmatpush1.bf16.msra.mxu0 %v1063
  %1487 = vmatprep.subr.bf16.mxu0 0
  %1488 = vmatpush1.bf16.msra.mxu0 %v1064
  %1489 = vmatprep.subr.bf16.mxu0 0
  %1490 = vmatpush1.bf16.msra.mxu0 %v1065
  %1491 = vmatprep.subr.bf16.mxu0 0
  %1492 = vmatpush1.bf16.msra.mxu0 %v1066
  %1493 = vmatprep.subr.bf16.mxu0 0
  %1494 = vmatpush1.bf16.msra.mxu0 %v1067
  %1495 = vmatprep.subr.bf16.mxu0 0
  %1496 = vmatpush1.bf16.msra.mxu0 %v1068
  %1497 = vmatprep.subr.bf16.mxu0 0
  %1498 = vmatpush1.bf16.msra.mxu0 %v1069
  %1499 = vmatprep.subr.bf16.mxu0 0
  %1500 = vmatpush1.bf16.msra.mxu0 %v1070
  %1501 = vmatprep.subr.bf16.mxu0 0
  %1502 = vmatpush1.bf16.msra.mxu0 %v1071
  %1503 = vmatprep.subr.bf16.mxu0 0
  %1504 = vmatpush1.bf16.msra.mxu0 %v1072
  %1505 = vmatprep.subr.bf16.mxu0 0
  %1506 = vmatpush1.bf16.msra.mxu0 %v1073
  %1507 = vmatprep.subr.bf16.mxu0 0
  %1508 = vmatpush1.bf16.msra.mxu0 %v1074
  %1509 = vmatprep.subr.bf16.mxu0 0
  %1510 = vmatpush1.bf16.msra.mxu0 %v1075
  %1511 = vmatprep.subr.bf16.mxu0 0
  %1512 = vmatpush1.bf16.msra.mxu0 %v1076
  %1513 = vmatprep.subr.bf16.mxu0 0
  %1514 = vmatpush1.bf16.msra.mxu0 %v1077
  %1515 = vmatprep.mubr.bf16.mxu0 %v417
  %1516 = vmatmul.mubr.bf16.gmra.mrb[0].mxu0 %v416
  %v1517 = vpop.f32.mrb[0].mxu0
  %v1518 = vadd.f32 %v1469, %v1517
  %v1519 = vpop.f32.mrb[0].mxu0
  %v1520 = vpop.f32.mrb[0].mxu0
  %v1521 = vadd.f32 %v1472, %v1520
  %v1522 = vpop.f32.mrb[0].mxu0
  %1523 = vmatprep.mubr.bf16.mxu0 %v433
  %1524 = vmatmul.mubr.bf16.gmra.mrb[0].mxu0 %v432
  %v1525 = vpop.f32.mrb[0].mxu0
  %v1526 = vadd.f32 %v1477, %v1525
  %v1527 = vpop.f32.mrb[0].mxu0
  %v1528 = vpop.f32.mrb[0].mxu0
  %v1529 = vadd.f32 %v1480, %v1528
  %v1530 = vpop.f32.mrb[0].mxu0
  %1531 = vdwg.mxu0
  %1532 = vmatprep.subr.bf16.mxu0 0
  %1533 = vmatpush1.bf16.msra.mxu0 %v1078
  %1534 = vmatprep.subr.bf16.mxu0 0
  %1535 = vmatpush1.bf16.msra.mxu0 %v1079
  %1536 = vmatprep.subr.bf16.mxu0 0
  %1537 = vmatpush1.bf16.msra.mxu0 %v1080
  %1538 = vmatprep.subr.bf16.mxu0 0
  %1539 = vmatpush1.bf16.msra.mxu0 %v1081
  %1540 = vmatprep.subr.bf16.mxu0 0
  %1541 = vmatpush1.bf16.msra.mxu0 %v1082
  %1542 = vmatprep.subr.bf16.mxu0 0
  %1543 = vmatpush1.bf16.msra.mxu0 %v1083
  %1544 = vmatprep.subr.bf16.mxu0 0
  %1545 = vmatpush1.bf16.msra.mxu0 %v1084
  %1546 = vmatprep.subr.bf16.mxu0 0
  %1547 = vmatpush1.bf16.msra.mxu0 %v1085
  %1548 = vmatprep.subr.bf16.mxu0 0
  %1549 = vmatpush1.bf16.msra.mxu0 %v1086
  %1550 = vmatprep.subr.bf16.mxu0 0
  %1551 = vmatpush1.bf16.msra.mxu0 %v1087
  %1552 = vmatprep.subr.bf16.mxu0 0
  %1553 = vmatpush1.bf16.msra.mxu0 %v1088
  %1554 = vmatprep.subr.bf16.mxu0 0
  %1555 = vmatpush1.bf16.msra.mxu0 %v1089
  %1556 = vmatprep.subr.bf16.mxu0 0
  %1557 = vmatpush1.bf16.msra.mxu0 %v1090
  %1558 = vmatprep.subr.bf16.mxu0 0
  %1559 = vmatpush1.bf16.msra.mxu0 %v1091
  %1560 = vmatprep.subr.bf16.mxu0 0
  %1561 = vmatpush1.bf16.msra.mxu0 %v1092
  %1562 = vmatprep.subr.bf16.mxu0 0
  %1563 = vmatpush1.bf16.msra.mxu0 %v1093
  %1564 = vmatprep.mubr.bf16.mxu0 %v419
  %1565 = vmatmul.mubr.bf16.gmra.mrb[0].mxu0 %v418
  %v1566 = vpop.f32.mrb[0].mxu0
  %v1567 = vadd.f32 %v1518, %v1566
  %v1568 = vpop.f32.mrb[0].mxu0
  %v1569 = vpop.f32.mrb[0].mxu0
  %v1570 = vadd.f32 %v1521, %v1569
  %v1571 = vpop.f32.mrb[0].mxu0
  %1572 = vmatprep.mubr.bf16.mxu0 %v435
  %1573 = vmatmul.mubr.bf16.gmra.mrb[0].mxu0 %v434
  %v1574 = vpop.f32.mrb[0].mxu0
  %v1575 = vadd.f32 %v1526, %v1574
  %v1576 = vpop.f32.mrb[0].mxu0
  %v1577 = vpop.f32.mrb[0].mxu0
  %v1578 = vadd.f32 %v1529, %v1577
  %v1579 = vpop.f32.mrb[0].mxu0
  %1580 = vdwg.mxu0
  %1581 = vmatprep.subr.bf16.mxu0 0
  %1582 = vmatpush1.bf16.msra.mxu0 %v1094
  %1583 = vmatprep.subr.bf16.mxu0 0
  %1584 = vmatpush1.bf16.msra.mxu0 %v1095
  %1585 = vmatprep.subr.bf16.mxu0 0
  %1586 = vmatpush1.bf16.msra.mxu0 %v1096
  %1587 = vmatprep.subr.bf16.mxu0 0
  %1588 = vmatpush1.bf16.msra.mxu0 %v1097
  %1589 = vmatprep.subr.bf16.mxu0 0
  %1590 = vmatpush1.bf16.msra.mxu0 %v1098
  %1591 = vmatprep.subr.bf16.mxu0 0
  %1592 = vmatpush1.bf16.msra.mxu0 %v1099
  %1593 = vmatprep.subr.bf16.mxu0 0
  %1594 = vmatpush1.bf16.msra.mxu0 %v1100
  %1595 = vmatprep.subr.bf16.mxu0 0
  %1596 = vmatpush1.bf16.msra.mxu0 %v1101
  %1597 = vmatprep.subr.bf16.mxu0 0
  %1598 = vmatpush1.bf16.msra.mxu0 %v1102
  %1599 = vmatprep.subr.bf16.mxu0 0
  %1600 = vmatpush1.bf16.msra.mxu0 %v1103
  %1601 = vmatprep.subr.bf16.mxu0 0
  %1602 = vmatpush1.bf16.msra.mxu0 %v1104
  %1603 = vmatprep.subr.bf16.mxu0 0
  %1604 = vmatpush1.bf16.msra.mxu0 %v1105
  %1605 = vmatprep.subr.bf16.mxu0 0
  %1606 = vmatpush1.bf16.msra.mxu0 %v1106
  %1607 = vmatprep.subr.bf16.mxu0 0
  %1608 = vmatpush1.bf16.msra.mxu0 %v1107
  %1609 = vmatprep.subr.bf16.mxu0 0
  %1610 = vmatpush1.bf16.msra.mxu0 %v1108
  %1611 = vmatprep.subr.bf16.mxu0 0
  %1612 = vmatpush1.bf16.msra.mxu0 %v1109
  %1613 = vmatprep.mubr.bf16.mxu0 %v421
  %1614 = vmatmul.mubr.bf16.gmra.mrb[0].mxu0 %v420
  %v1615 = vpop.f32.mrb[0].mxu0
  %v1616 = vadd.f32 %v1567, %v1615
  %v1617 = vpop.f32.mrb[0].mxu0
  %v1618 = vpop.f32.mrb[0].mxu0
  %v1619 = vadd.f32 %v1570, %v1618
  %v1620 = vpop.f32.mrb[0].mxu0
  %1621 = vmatprep.mubr.bf16.mxu0 %v437
  %1622 = vmatmul.mubr.bf16.gmra.mrb[0].mxu0 %v436
  %v1623 = vpop.f32.mrb[0].mxu0
  %v1624 = vadd.f32 %v1575, %v1623
  %v1625 = vpop.f32.mrb[0].mxu0
  %v1626 = vpop.f32.mrb[0].mxu0
  %v1627 = vadd.f32 %v1578, %v1626
  %v1628 = vpop.f32.mrb[0].mxu0
  %1629 = vdwg.mxu0
  %v1630 = vmax.f32 %v1616, 0.0
  %v1631 = vmax.f32 %v1619, 0.0
  %v1632 = vmax.f32 %v1624, 0.0
  %v1633 = vmax.f32 %v1627, 0.0
  %v1634 = vpack.c.bf16 %v1631, %v1630
  %v1635 = vpack.c.bf16 %v1633, %v1632
  %v1638 = vunpack.c.l.b16 %v1634
  %v1639 = vunpack.c.h.b16 %v1634
  %v1640 = vunpack.c.l.b16 %v1635
  %v1641 = vunpack.c.h.b16 %v1635
  %v1642 = vpack.c.b16 %v1638, %v1638
  %v1643 = vpack.c.b16 %v1639, %v1639
  %v1644 = vpack.c.b16 %v1640, %v1640
  %v1645 = vpack.c.b16 %v1641, %v1641
  %1650 = vst [vmem:[%s3] sm:$0xf] %v1642
  %1651 = vst [vmem:[%s3 + $0x4] sm:$0xf] %v1643
  %1652 = vst [vmem:[%s3 + $0x8] sm:$0xf] %v1644
  %1653 = vst [vmem:[%s3 + $0xc] sm:$0xf] %v1645
  // Predicated region
  $region14: #{vqvae_forward.7} parent=0 // pred_check
    _
  $region15: #{vqvae_forward.7} parent=0 // pred_check_branch
    %1655 = sbr.rel (0) target = $region17
  $region16: #{vqvae_forward.7} parent=0 // pred_region
    _
  $region17: #{vqvae_forward.7} parent=0 // pred_fallthru
    _
  // Predicated region
  $region18: #{vqvae_forward.7} parent=0 // pred_check
    _
  $region19: #{vqvae_forward.7} parent=0 // pred_check_branch
    %1657 = sbr.rel (0) target = $region21
  $region20: #{vqvae_forward.7} parent=0 // pred_region
    _
  $region21: #{vqvae_forward.7} parent=0 // pred_fallthru
    _

// kernel: vqvae_forward.8
$region0: #{vqvae_forward.8}
  #allocation0 [shape = 'u32[]', space=smem, size = 0x4, offset = 0x4, fixed_abs, tag = 'smem constant byte address 0x4 - core index']
  #allocation1 [shape = 'u32[144,128]{1,0:T(1,128)}', space=vmem, size = 0x12000, scoped, tag = 'internal scratch']
  #allocation2 [shape = 'f32[1]{0:T(128)}', space=smem, size = 0x200, scoped, tag = 'scratch operand']
  %s0 = inlined_call_operand.vmem [shape: bf16[32,1152], index: 0, kind: input, shape index: {}]
  %s1 = inlined_call_operand.vmem [shape: bf16[1152,128], index: 1, kind: input, shape index: {}]
  %s2 = inlined_call_operand.vmem [shape: f32[1,128], index: 2, kind: input, shape index: {}]
  %s3 = inlined_call_operand.vmem [shape: f32[3,128], index: 3, kind: input, shape index: {}]
  %s4 = inlined_call_operand.vmem [shape: f32[1,128], index: 4, kind: input, shape index: {}]
  %s5 = inlined_call_operand.vmem [shape: f32[128,128], index: 5, kind: input, shape index: {}]
  %s6 = inlined_call_operand.vmem [shape: f32[1,128], index: 6, kind: input, shape index: {}]
  %s7 = inlined_call_operand.vmem [shape: bf16[32,128], index: 7, kind: output, shape index: {0}]
  %s8 = inlined_call_operand.hbm [shape: f32[1,1], index: 8, kind: output, shape index: {1}]
  %9 = xla_tuple %s7, %s8
  %s10 = sld [smem:[#allocation0]]
  $region54: #{vqvae_forward.8} parent=0
    _
  %s12 = ssub.s32 1, %s10
  %s13 = scalar_select 0, %s12, %s10
  $region1: #{vqvae_forward.8} parent=0
    #allocation3 [shape = 'u8[512]{0}', space=smem, size = 0x200, scoped, tag = 'output window, operand 1, single buffered']
    #allocation4 [shape = 's32[1]{0}', space=sflag, size = 0x4, scoped, tag = 'scoped memory for vqvae_forward.8']
    %14 = vsyncpa [#allocation4], 0
    // Predicated region
    $region2: #{vqvae_forward.8} parent=1 // pred_check
      _
    $region3: #{vqvae_forward.8} parent=1 // pred_check_branch
      %16 = sbr.rel (0) target = $region5
    $region4: #{vqvae_forward.8} parent=1 // pred_region
      _
    $region5: #{vqvae_forward.8} parent=1 // pred_fallthru
      _
    // Predicated region
    $region6: #{vqvae_forward.8} parent=1 // pred_check
      _
    $region7: #{vqvae_forward.8} parent=1 // pred_check_branch
      %18 = sbr.rel (0) target = $region9
    $region8: #{vqvae_forward.8} parent=1 // pred_region
      _
    $region9: #{vqvae_forward.8} parent=1 // pred_fallthru
      _
    // Predicated region
    $region10: #{vqvae_forward.8} parent=1 // pred_check
      _
    $region11: #{vqvae_forward.8} parent=1 // pred_check_branch
      %20 = sbr.rel (0) target = $region13
    $region12: #{vqvae_forward.8} parent=1 // pred_region
      _
    $region13: #{vqvae_forward.8} parent=1 // pred_fallthru
      _
    // Predicated region
    $region14: #{vqvae_forward.8} parent=1 // pred_check
      _
    $region15: #{vqvae_forward.8} parent=1 // pred_check_branch
      %22 = sbr.rel (0) target = $region17
    $region16: #{vqvae_forward.8} parent=1 // pred_region
      _
    $region17: #{vqvae_forward.8} parent=1 // pred_fallthru
      _
    // Predicated region
    $region18: #{vqvae_forward.8} parent=1 // pred_check
      _
    $region19: #{vqvae_forward.8} parent=1 // pred_check_branch
      %24 = sbr.rel (0) target = $region21
    $region20: #{vqvae_forward.8} parent=1 // pred_region
      _
    $region21: #{vqvae_forward.8} parent=1 // pred_fallthru
      _
    // Predicated region
    $region22: #{vqvae_forward.8} parent=1 // pred_check
      _
    $region23: #{vqvae_forward.8} parent=1 // pred_check_branch
      %26 = sbr.rel (0) target = $region25
    $region24: #{vqvae_forward.8} parent=1 // pred_region
      _
    $region25: #{vqvae_forward.8} parent=1 // pred_fallthru
      _
    // Predicated region
    $region26: #{vqvae_forward.8} parent=1 // pred_check
      _
    $region27: #{vqvae_forward.8} parent=1 // pred_check_branch
      %28 = sbr.rel (0) target = $region29
    $region28: #{vqvae_forward.8} parent=1 // pred_region
      _
    $region29: #{vqvae_forward.8} parent=1 // pred_fallthru
      _
    %p30 = scmp.eq.s32.totalorder 0, 0
    // Predicated region
    $region30: #{vqvae_forward.8} parent=1 // pred_check
      %p31 = pneg %p30
    $region31: #{vqvae_forward.8} parent=1 // pred_check_branch
      %33 = sbr.rel (%p31) target = $region33
    $region32: #{vqvae_forward.8} parent=1 // pred_region
      %s34 = scalar_lea.smem [#allocation2], 0
      %35 = sst [smem:[%s34]] 0.0
    $region33: #{vqvae_forward.8} parent=1 // pred_fallthru
      _
    %v36 = vld [vmem:[%s0] sm:$0xff]
    %v37 = vld [vmem:[%s0 + $0x8] sm:$0xff]
    %v38 = vld [vmem:[%s0 + $0x10] sm:$0xff]
    %v39 = vld [vmem:[%s0 + $0x18] sm:$0xff]
    %v40 = vld [vmem:[%s0 + $0x20] sm:$0xf]
    %v41 = vld [vmem:[%s0 + $0x24] sm:$0xff]
    %v42 = vld [vmem:[%s0 + $0x2c] sm:$0xff]
    %v43 = vld [vmem:[%s0 + $0x34] sm:$0xff]
    %v44 = vld [vmem:[%s0 + $0x3c] sm:$0xff]
    %v45 = vld [vmem:[%s0 + $0x44] sm:$0xf]
    %v46 = vld [vmem:[%s0 + $0x48] sm:$0xff]
    %v47 = vld [vmem:[%s0 + $0x50] sm:$0xff]
    %v48 = vld [vmem:[%s0 + $0x58] sm:$0xff]
    %v49 = vld [vmem:[%s0 + $0x60] sm:$0xff]
    %v50 = vld [vmem:[%s0 + $0x68] sm:$0xf]
    %v51 = vld [vmem:[%s0 + $0x6c] sm:$0xff]
    %v52 = vld [vmem:[%s0 + $0x74] sm:$0xff]
    %v53 = vld [vmem:[%s0 + $0x7c] sm:$0xff]
    %v54 = vld [vmem:[%s0 + $0x84] sm:$0xff]
    %v55 = vld [vmem:[%s0 + $0x8c] sm:$0xf]
    %v56 = vld [vmem:[%s1] sm:$0xf]
    %v57 = vld [vmem:[%s1 + $0x4] sm:$0xf]
    %v58 = vld [vmem:[%s1 + $0x8] sm:$0xf]
    %v59 = vld [vmem:[%s1 + $0xc] sm:$0xf]
    %v60 = vld [vmem:[%s1 + $0x10] sm:$0xf]
    %v61 = vld [vmem:[%s1 + $0x14] sm:$0xf]
    %v62 = vld [vmem:[%s1 + $0x18] sm:$0xf]
    %v63 = vld [vmem:[%s1 + $0x1c] sm:$0xf]
    %v64 = vld [vmem:[%s1 + $0x20] sm:$0xf]
    %v65 = vld [vmem:[%s1 + $0x24] sm:$0xf]
    %v66 = vld [vmem:[%s1 + $0x28] sm:$0xf]
    %v67 = vld [vmem:[%s1 + $0x2c] sm:$0xf]
    %v68 = vld [vmem:[%s1 + $0x30] sm:$0xf]
    %v69 = vld [vmem:[%s1 + $0x34] sm:$0xf]
    %v70 = vld [vmem:[%s1 + $0x38] sm:$0xf]
    %v71 = vld [vmem:[%s1 + $0x3c] sm:$0xf]
    %v72 = vld [vmem:[%s1 + $0x40] sm:$0xf]
    %v73 = vld [vmem:[%s1 + $0x44] sm:$0xf]
    %v74 = vld [vmem:[%s1 + $0x48] sm:$0xf]
    %v75 = vld [vmem:[%s1 + $0x4c] sm:$0xf]
    %v76 = vld [vmem:[%s1 + $0x50] sm:$0xf]
    %v77 = vld [vmem:[%s1 + $0x54] sm:$0xf]
    %v78 = vld [vmem:[%s1 + $0x58] sm:$0xf]
    %v79 = vld [vmem:[%s1 + $0x5c] sm:$0xf]
    %v80 = vld [vmem:[%s1 + $0x60] sm:$0xf]
    %v81 = vld [vmem:[%s1 + $0x64] sm:$0xf]
    %v82 = vld [vmem:[%s1 + $0x68] sm:$0xf]
    %v83 = vld [vmem:[%s1 + $0x6c] sm:$0xf]
    %v84 = vld [vmem:[%s1 + $0x70] sm:$0xf]
    %v85 = vld [vmem:[%s1 + $0x74] sm:$0xf]
    %v86 = vld [vmem:[%s1 + $0x78] sm:$0xf]
    %v87 = vld [vmem:[%s1 + $0x7c] sm:$0xf]
    %v88 = vld [vmem:[%s1 + $0x80] sm:$0xf]
    %v89 = vld [vmem:[%s1 + $0x84] sm:$0xf]
    %v90 = vld [vmem:[%s1 + $0x88] sm:$0xf]
    %v91 = vld [vmem:[%s1 + $0x8c] sm:$0xf]
    %v92 = vld [vmem:[%s1 + $0x90] sm:$0xf]
    %v93 = vld [vmem:[%s1 + $0x94] sm:$0xf]
    %v94 = vld [vmem:[%s1 + $0x98] sm:$0xf]
    %v95 = vld [vmem:[%s1 + $0x9c] sm:$0xf]
    %v96 = vld [vmem:[%s1 + $0xa0] sm:$0xf]
    %v97 = vld [vmem:[%s1 + $0xa4] sm:$0xf]
    %v98 = vld [vmem:[%s1 + $0xa8] sm:$0xf]
    %v99 = vld [vmem:[%s1 + $0xac] sm:$0xf]
    %v100 = vld [vmem:[%s1 + $0xb0] sm:$0xf]
    %v101 = vld [vmem:[%s1 + $0xb4] sm:$0xf]
    %v102 = vld [vmem:[%s1 + $0xb8] sm:$0xf]
    %v103 = vld [vmem:[%s1 + $0xbc] sm:$0xf]
    %v104 = vld [vmem:[%s1 + $0xc0] sm:$0xf]
    %v105 = vld [vmem:[%s1 + $0xc4] sm:$0xf]
    %v106 = vld [vmem:[%s1 + $0xc8] sm:$0xf]
    %v107 = vld [vmem:[%s1 + $0xcc] sm:$0xf]
    %v108 = vld [vmem:[%s1 + $0xd0] sm:$0xf]
    %v109 = vld [vmem:[%s1 + $0xd4] sm:$0xf]
    %v110 = vld [vmem:[%s1 + $0xd8] sm:$0xf]
    %v111 = vld [vmem:[%s1 + $0xdc] sm:$0xf]
    %v112 = vld [vmem:[%s1 + $0xe0] sm:$0xf]
    %v113 = vld [vmem:[%s1 + $0xe4] sm:$0xf]
    %v114 = vld [vmem:[%s1 + $0xe8] sm:$0xf]
    %v115 = vld [vmem:[%s1 + $0xec] sm:$0xf]
    %v116 = vld [vmem:[%s1 + $0xf0] sm:$0xf]
    %v117 = vld [vmem:[%s1 + $0xf4] sm:$0xf]
    %v118 = vld [vmem:[%s1 + $0xf8] sm:$0xf]
    %v119 = vld [vmem:[%s1 + $0xfc] sm:$0xf]
    %v120 = vld [vmem:[%s1 + $0x100] sm:$0xf]
    %v121 = vld [vmem:[%s1 + $0x104] sm:$0xf]
    %v122 = vld [vmem:[%s1 + $0x108] sm:$0xf]
    %v123 = vld [vmem:[%s1 + $0x10c] sm:$0xf]
    %v124 = vld [vmem:[%s1 + $0x110] sm:$0xf]
    %v125 = vld [vmem:[%s1 + $0x114] sm:$0xf]
    %v126 = vld [vmem:[%s1 + $0x118] sm:$0xf]
    %v127 = vld [vmem:[%s1 + $0x11c] sm:$0xf]
    %v128 = vld [vmem:[%s1 + $0x120] sm:$0xf]
    %v129 = vld [vmem:[%s1 + $0x124] sm:$0xf]
    %v130 = vld [vmem:[%s1 + $0x128] sm:$0xf]
    %v131 = vld [vmem:[%s1 + $0x12c] sm:$0xf]
    %v132 = vld [vmem:[%s1 + $0x130] sm:$0xf]
    %v133 = vld [vmem:[%s1 + $0x134] sm:$0xf]
    %v134 = vld [vmem:[%s1 + $0x138] sm:$0xf]
    %v135 = vld [vmem:[%s1 + $0x13c] sm:$0xf]
    %v136 = vld [vmem:[%s1 + $0x140] sm:$0xf]
    %v137 = vld [vmem:[%s1 + $0x144] sm:$0xf]
    %v138 = vld [vmem:[%s1 + $0x148] sm:$0xf]
    %v139 = vld [vmem:[%s1 + $0x14c] sm:$0xf]
    %v140 = vld [vmem:[%s1 + $0x150] sm:$0xf]
    %v141 = vld [vmem:[%s1 + $0x154] sm:$0xf]
    %v142 = vld [vmem:[%s1 + $0x158] sm:$0xf]
    %v143 = vld [vmem:[%s1 + $0x15c] sm:$0xf]
    %v144 = vld [vmem:[%s1 + $0x160] sm:$0xf]
    %v145 = vld [vmem:[%s1 + $0x164] sm:$0xf]
    %v146 = vld [vmem:[%s1 + $0x168] sm:$0xf]
    %v147 = vld [vmem:[%s1 + $0x16c] sm:$0xf]
    %v148 = vld [vmem:[%s1 + $0x170] sm:$0xf]
    %v149 = vld [vmem:[%s1 + $0x174] sm:$0xf]
    %v150 = vld [vmem:[%s1 + $0x178] sm:$0xf]
    %v151 = vld [vmem:[%s1 + $0x17c] sm:$0xf]
    %v152 = vld [vmem:[%s1 + $0x180] sm:$0xf]
    %v153 = vld [vmem:[%s1 + $0x184] sm:$0xf]
    %v154 = vld [vmem:[%s1 + $0x188] sm:$0xf]
    %v155 = vld [vmem:[%s1 + $0x18c] sm:$0xf]
    %v156 = vld [vmem:[%s1 + $0x190] sm:$0xf]
    %v157 = vld [vmem:[%s1 + $0x194] sm:$0xf]
    %v158 = vld [vmem:[%s1 + $0x198] sm:$0xf]
    %v159 = vld [vmem:[%s1 + $0x19c] sm:$0xf]
    %v160 = vld [vmem:[%s1 + $0x1a0] sm:$0xf]
    %v161 = vld [vmem:[%s1 + $0x1a4] sm:$0xf]
    %v162 = vld [vmem:[%s1 + $0x1a8] sm:$0xf]
    %v163 = vld [vmem:[%s1 + $0x1ac] sm:$0xf]
    %v164 = vld [vmem:[%s1 + $0x1b0] sm:$0xf]
    %v165 = vld [vmem:[%s1 + $0x1b4] sm:$0xf]
    %v166 = vld [vmem:[%s1 + $0x1b8] sm:$0xf]
    %v167 = vld [vmem:[%s1 + $0x1bc] sm:$0xf]
    %v168 = vld [vmem:[%s1 + $0x1c0] sm:$0xf]
    %v169 = vld [vmem:[%s1 + $0x1c4] sm:$0xf]
    %v170 = vld [vmem:[%s1 + $0x1c8] sm:$0xf]
    %v171 = vld [vmem:[%s1 + $0x1cc] sm:$0xf]
    %v172 = vld [vmem:[%s1 + $0x1d0] sm:$0xf]
    %v173 = vld [vmem:[%s1 + $0x1d4] sm:$0xf]
    %v174 = vld [vmem:[%s1 + $0x1d8] sm:$0xf]
    %v175 = vld [vmem:[%s1 + $0x1dc] sm:$0xf]
    %v176 = vld [vmem:[%s1 + $0x1e0] sm:$0xf]
    %v177 = vld [vmem:[%s1 + $0x1e4] sm:$0xf]
    %v178 = vld [vmem:[%s1 + $0x1e8] sm:$0xf]
    %v179 = vld [vmem:[%s1 + $0x1ec] sm:$0xf]
    %v180 = vld [vmem:[%s1 + $0x1f0] sm:$0xf]
    %v181 = vld [vmem:[%s1 + $0x1f4] sm:$0xf]
    %v182 = vld [vmem:[%s1 + $0x1f8] sm:$0xf]
    %v183 = vld [vmem:[%s1 + $0x1fc] sm:$0xf]
    %v184 = vld [vmem:[%s1 + $0x200] sm:$0xf]
    %v185 = vld [vmem:[%s1 + $0x204] sm:$0xf]
    %v186 = vld [vmem:[%s1 + $0x208] sm:$0xf]
    %v187 = vld [vmem:[%s1 + $0x20c] sm:$0xf]
    %v188 = vld [vmem:[%s1 + $0x210] sm:$0xf]
    %v189 = vld [vmem:[%s1 + $0x214] sm:$0xf]
    %v190 = vld [vmem:[%s1 + $0x218] sm:$0xf]
    %v191 = vld [vmem:[%s1 + $0x21c] sm:$0xf]
    %v192 = vld [vmem:[%s1 + $0x220] sm:$0xf]
    %v193 = vld [vmem:[%s1 + $0x224] sm:$0xf]
    %v194 = vld [vmem:[%s1 + $0x228] sm:$0xf]
    %v195 = vld [vmem:[%s1 + $0x22c] sm:$0xf]
    %v196 = vld [vmem:[%s1 + $0x230] sm:$0xf]
    %v197 = vld [vmem:[%s1 + $0x234] sm:$0xf]
    %v198 = vld [vmem:[%s1 + $0x238] sm:$0xf]
    %v199 = vld [vmem:[%s1 + $0x23c] sm:$0xf]
    %v200 = vld [vmem:[%s2] sm:$0x1]
    %v202 = vlaneseq
    %v203 = vshrl.u32 %v202, 7
    %v204 = vsub.s32 0, %v203
    %v205 = vrot.slane %v200, %v204
    %v227 = vunpack.c.l.b16 %v36
    %v228 = vunpack.c.h.b16 %v36
    %v229 = vunpack.c.l.b16 %v37
    %v230 = vunpack.c.h.b16 %v37
    %v231 = vunpack.c.l.b16 %v38
    %v232 = vunpack.c.h.b16 %v38
    %v233 = vunpack.c.l.b16 %v39
    %v234 = vunpack.c.h.b16 %v39
    %v235 = vunpack.c.l.b16 %v40
    %v236 = vunpack.c.l.b16 %v41
    %v237 = vunpack.c.h.b16 %v41
    %v238 = vunpack.c.l.b16 %v42
    %v239 = vunpack.c.h.b16 %v42
    %v240 = vunpack.c.l.b16 %v43
    %v241 = vunpack.c.h.b16 %v43
    %v242 = vunpack.c.l.b16 %v44
    %v243 = vunpack.c.h.b16 %v44
    %v244 = vunpack.c.l.b16 %v45
    %v245 = vunpack.c.l.b16 %v46
    %v246 = vunpack.c.h.b16 %v46
    %v247 = vunpack.c.l.b16 %v47
    %v248 = vunpack.c.h.b16 %v47
    %v249 = vunpack.c.l.b16 %v48
    %v250 = vunpack.c.h.b16 %v48
    %v251 = vunpack.c.l.b16 %v49
    %v252 = vunpack.c.h.b16 %v49
    %v253 = vunpack.c.l.b16 %v50
    %v254 = vunpack.c.l.b16 %v51
    %v255 = vunpack.c.h.b16 %v51
    %v256 = vunpack.c.l.b16 %v52
    %v257 = vunpack.c.h.b16 %v52
    %v258 = vunpack.c.l.b16 %v53
    %v259 = vunpack.c.h.b16 %v53
    %v260 = vunpack.c.l.b16 %v54
    %v261 = vunpack.c.h.b16 %v54
    %v262 = vunpack.c.l.b16 %v55
    %v263 = vpack.c.b16 %v236, %v227
    %v264 = vpack.c.b16 %v237, %v228
    %v265 = vpack.c.b16 %v238, %v229
    %v266 = vpack.c.b16 %v239, %v230
    %v267 = vpack.c.b16 %v240, %v231
    %v268 = vpack.c.b16 %v241, %v232
    %v269 = vpack.c.b16 %v242, %v233
    %v270 = vpack.c.b16 %v243, %v234
    %v271 = vpack.c.b16 %v244, %v235
    %v272 = vpack.c.b16 %v254, %v245
    %v273 = vpack.c.b16 %v255, %v246
    %v274 = vpack.c.b16 %v256, %v247
    %v275 = vpack.c.b16 %v257, %v248
    %v276 = vpack.c.b16 %v258, %v249
    %v277 = vpack.c.b16 %v259, %v250
    %v278 = vpack.c.b16 %v260, %v251
    %v279 = vpack.c.b16 %v261, %v252
    %v280 = vpack.c.b16 %v262, %v253
    %v443 = vunpack.c.l.b16 %v56
    %v444 = vunpack.c.l.b16 %v57
    %v445 = vunpack.c.l.b16 %v58
    %v446 = vunpack.c.l.b16 %v59
    %v447 = vunpack.c.l.b16 %v60
    %v448 = vunpack.c.l.b16 %v61
    %v449 = vunpack.c.l.b16 %v62
    %v450 = vunpack.c.l.b16 %v63
    %v451 = vunpack.c.l.b16 %v64
    %v452 = vunpack.c.l.b16 %v65
    %v453 = vunpack.c.l.b16 %v66
    %v454 = vunpack.c.l.b16 %v67
    %v455 = vunpack.c.l.b16 %v68
    %v456 = vunpack.c.l.b16 %v69
    %v457 = vunpack.c.l.b16 %v70
    %v458 = vunpack.c.l.b16 %v71
    %v459 = vunpack.c.l.b16 %v72
    %v460 = vunpack.c.l.b16 %v73
    %v461 = vunpack.c.l.b16 %v74
    %v462 = vunpack.c.l.b16 %v75
    %v463 = vunpack.c.l.b16 %v76
    %v464 = vunpack.c.l.b16 %v77
    %v465 = vunpack.c.l.b16 %v78
    %v466 = vunpack.c.l.b16 %v79
    %v467 = vunpack.c.l.b16 %v80
    %v468 = vunpack.c.l.b16 %v81
    %v469 = vunpack.c.l.b16 %v82
    %v470 = vunpack.c.l.b16 %v83
    %v471 = vunpack.c.l.b16 %v84
    %v472 = vunpack.c.l.b16 %v85
    %v473 = vunpack.c.l.b16 %v86
    %v474 = vunpack.c.l.b16 %v87
    %v475 = vunpack.c.l.b16 %v88
    %v476 = vunpack.c.l.b16 %v89
    %v477 = vunpack.c.l.b16 %v90
    %v478 = vunpack.c.l.b16 %v91
    %v479 = vunpack.c.l.b16 %v92
    %v480 = vunpack.c.l.b16 %v93
    %v481 = vunpack.c.l.b16 %v94
    %v482 = vunpack.c.l.b16 %v95
    %v483 = vunpack.c.l.b16 %v96
    %v484 = vunpack.c.l.b16 %v97
    %v485 = vunpack.c.l.b16 %v98
    %v486 = vunpack.c.l.b16 %v99
    %v487 = vunpack.c.l.b16 %v100
    %v488 = vunpack.c.l.b16 %v101
    %v489 = vunpack.c.l.b16 %v102
    %v490 = vunpack.c.l.b16 %v103
    %v491 = vunpack.c.l.b16 %v104
    %v492 = vunpack.c.l.b16 %v105
    %v493 = vunpack.c.l.b16 %v106
    %v494 = vunpack.c.l.b16 %v107
    %v495 = vunpack.c.l.b16 %v108
    %v496 = vunpack.c.l.b16 %v109
    %v497 = vunpack.c.l.b16 %v110
    %v498 = vunpack.c.l.b16 %v111
    %v499 = vunpack.c.l.b16 %v112
    %v500 = vunpack.c.l.b16 %v113
    %v501 = vunpack.c.l.b16 %v114
    %v502 = vunpack.c.l.b16 %v115
    %v503 = vunpack.c.l.b16 %v116
    %v504 = vunpack.c.l.b16 %v117
    %v505 = vunpack.c.l.b16 %v118
    %v506 = vunpack.c.l.b16 %v119
    %v507 = vunpack.c.l.b16 %v120
    %v508 = vunpack.c.l.b16 %v121
    %v509 = vunpack.c.l.b16 %v122
    %v510 = vunpack.c.l.b16 %v123
    %v511 = vunpack.c.l.b16 %v124
    %v512 = vunpack.c.l.b16 %v125
    %v513 = vunpack.c.l.b16 %v126
    %v514 = vunpack.c.l.b16 %v127
    %v515 = vunpack.c.l.b16 %v128
    %v516 = vunpack.c.l.b16 %v129
    %v517 = vunpack.c.l.b16 %v130
    %v518 = vunpack.c.l.b16 %v131
    %v519 = vunpack.c.l.b16 %v132
    %v520 = vunpack.c.l.b16 %v133
    %v521 = vunpack.c.l.b16 %v134
    %v522 = vunpack.c.l.b16 %v135
    %v523 = vunpack.c.l.b16 %v136
    %v524 = vunpack.c.l.b16 %v137
    %v525 = vunpack.c.l.b16 %v138
    %v526 = vunpack.c.l.b16 %v139
    %v527 = vunpack.c.l.b16 %v140
    %v528 = vunpack.c.l.b16 %v141
    %v529 = vunpack.c.l.b16 %v142
    %v530 = vunpack.c.l.b16 %v143
    %v531 = vunpack.c.l.b16 %v144
    %v532 = vunpack.c.l.b16 %v145
    %v533 = vunpack.c.l.b16 %v146
    %v534 = vunpack.c.l.b16 %v147
    %v535 = vunpack.c.l.b16 %v148
    %v536 = vunpack.c.l.b16 %v149
    %v537 = vunpack.c.l.b16 %v150
    %v538 = vunpack.c.l.b16 %v151
    %v539 = vunpack.c.l.b16 %v152
    %v540 = vunpack.c.l.b16 %v153
    %v541 = vunpack.c.l.b16 %v154
    %v542 = vunpack.c.l.b16 %v155
    %v543 = vunpack.c.l.b16 %v156
    %v544 = vunpack.c.l.b16 %v157
    %v545 = vunpack.c.l.b16 %v158
    %v546 = vunpack.c.l.b16 %v159
    %v547 = vunpack.c.l.b16 %v160
    %v548 = vunpack.c.l.b16 %v161
    %v549 = vunpack.c.l.b16 %v162
    %v550 = vunpack.c.l.b16 %v163
    %v551 = vunpack.c.l.b16 %v164
    %v552 = vunpack.c.l.b16 %v165
    %v553 = vunpack.c.l.b16 %v166
    %v554 = vunpack.c.l.b16 %v167
    %v555 = vunpack.c.l.b16 %v168
    %v556 = vunpack.c.l.b16 %v169
    %v557 = vunpack.c.l.b16 %v170
    %v558 = vunpack.c.l.b16 %v171
    %v559 = vunpack.c.l.b16 %v172
    %v560 = vunpack.c.l.b16 %v173
    %v561 = vunpack.c.l.b16 %v174
    %v562 = vunpack.c.l.b16 %v175
    %v563 = vunpack.c.l.b16 %v176
    %v564 = vunpack.c.l.b16 %v177
    %v565 = vunpack.c.l.b16 %v178
    %v566 = vunpack.c.l.b16 %v179
    %v567 = vunpack.c.l.b16 %v180
    %v568 = vunpack.c.l.b16 %v181
    %v569 = vunpack.c.l.b16 %v182
    %v570 = vunpack.c.l.b16 %v183
    %v571 = vunpack.c.l.b16 %v184
    %v572 = vunpack.c.l.b16 %v185
    %v573 = vunpack.c.l.b16 %v186
    %v574 = vunpack.c.l.b16 %v187
    %v575 = vunpack.c.l.b16 %v188
    %v576 = vunpack.c.l.b16 %v189
    %v577 = vunpack.c.l.b16 %v190
    %v578 = vunpack.c.l.b16 %v191
    %v579 = vunpack.c.l.b16 %v192
    %v580 = vunpack.c.l.b16 %v193
    %v581 = vunpack.c.l.b16 %v194
    %v582 = vunpack.c.l.b16 %v195
    %v583 = vunpack.c.l.b16 %v196
    %v584 = vunpack.c.l.b16 %v197
    %v585 = vunpack.c.l.b16 %v198
    %v586 = vunpack.c.l.b16 %v199
    %v587 = vpack.c.b16 %v444, %v443
    %v588 = vpack.c.b16 %v446, %v445
    %v589 = vpack.c.b16 %v448, %v447
    %v590 = vpack.c.b16 %v450, %v449
    %v591 = vpack.c.b16 %v452, %v451
    %v592 = vpack.c.b16 %v454, %v453
    %v593 = vpack.c.b16 %v456, %v455
    %v594 = vpack.c.b16 %v458, %v457
    %v595 = vpack.c.b16 %v460, %v459
    %v596 = vpack.c.b16 %v462, %v461
    %v597 = vpack.c.b16 %v464, %v463
    %v598 = vpack.c.b16 %v466, %v465
    %v599 = vpack.c.b16 %v468, %v467
    %v600 = vpack.c.b16 %v470, %v469
    %v601 = vpack.c.b16 %v472, %v471
    %v602 = vpack.c.b16 %v474, %v473
    %v603 = vpack.c.b16 %v476, %v475
    %v604 = vpack.c.b16 %v478, %v477
    %v605 = vpack.c.b16 %v480, %v479
    %v606 = vpack.c.b16 %v482, %v481
    %v607 = vpack.c.b16 %v484, %v483
    %v608 = vpack.c.b16 %v486, %v485
    %v609 = vpack.c.b16 %v488, %v487
    %v610 = vpack.c.b16 %v490, %v489
    %v611 = vpack.c.b16 %v492, %v491
    %v612 = vpack.c.b16 %v494, %v493
    %v613 = vpack.c.b16 %v496, %v495
    %v614 = vpack.c.b16 %v498, %v497
    %v615 = vpack.c.b16 %v500, %v499
    %v616 = vpack.c.b16 %v502, %v501
    %v617 = vpack.c.b16 %v504, %v503
    %v618 = vpack.c.b16 %v506, %v505
    %v619 = vpack.c.b16 %v508, %v507
    %v620 = vpack.c.b16 %v510, %v509
    %v621 = vpack.c.b16 %v512, %v511
    %v622 = vpack.c.b16 %v514, %v513
    %v623 = vpack.c.b16 %v516, %v515
    %v624 = vpack.c.b16 %v518, %v517
    %v625 = vpack.c.b16 %v520, %v519
    %v626 = vpack.c.b16 %v522, %v521
    %v627 = vpack.c.b16 %v524, %v523
    %v628 = vpack.c.b16 %v526, %v525
    %v629 = vpack.c.b16 %v528, %v527
    %v630 = vpack.c.b16 %v530, %v529
    %v631 = vpack.c.b16 %v532, %v531
    %v632 = vpack.c.b16 %v534, %v533
    %v633 = vpack.c.b16 %v536, %v535
    %v634 = vpack.c.b16 %v538, %v537
    %v635 = vpack.c.b16 %v540, %v539
    %v636 = vpack.c.b16 %v542, %v541
    %v637 = vpack.c.b16 %v544, %v543
    %v638 = vpack.c.b16 %v546, %v545
    %v639 = vpack.c.b16 %v548, %v547
    %v640 = vpack.c.b16 %v550, %v549
    %v641 = vpack.c.b16 %v552, %v551
    %v642 = vpack.c.b16 %v554, %v553
    %v643 = vpack.c.b16 %v556, %v555
    %v644 = vpack.c.b16 %v558, %v557
    %v645 = vpack.c.b16 %v560, %v559
    %v646 = vpack.c.b16 %v562, %v561
    %v647 = vpack.c.b16 %v564, %v563
    %v648 = vpack.c.b16 %v566, %v565
    %v649 = vpack.c.b16 %v568, %v567
    %v650 = vpack.c.b16 %v570, %v569
    %v651 = vpack.c.b16 %v572, %v571
    %v652 = vpack.c.b16 %v574, %v573
    %v653 = vpack.c.b16 %v576, %v575
    %v654 = vpack.c.b16 %v578, %v577
    %v655 = vpack.c.b16 %v580, %v579
    %v656 = vpack.c.b16 %v582, %v581
    %v657 = vpack.c.b16 %v584, %v583
    %v658 = vpack.c.b16 %v586, %v585
    %731 = vmatprep.subr.bf16.mxu0 0
    %732 = vmatpush1.bf16.msra.mxu0 %v587
    %733 = vmatprep.subr.bf16.mxu0 0
    %734 = vmatpush1.bf16.msra.mxu0 %v588
    %735 = vmatprep.subr.bf16.mxu0 0
    %736 = vmatpush1.bf16.msra.mxu0 %v589
    %737 = vmatprep.subr.bf16.mxu0 0
    %738 = vmatpush1.bf16.msra.mxu0 %v590
    %739 = vmatprep.subr.bf16.mxu0 0
    %740 = vmatpush1.bf16.msra.mxu0 %v591
    %741 = vmatprep.subr.bf16.mxu0 0
    %742 = vmatpush1.bf16.msra.mxu0 %v592
    %743 = vmatprep.subr.bf16.mxu0 0
    %744 = vmatpush1.bf16.msra.mxu0 %v593
    %745 = vmatprep.subr.bf16.mxu0 0
    %746 = vmatpush1.bf16.msra.mxu0 %v594
    %747 = vmatprep.subr.bf16.mxu0 0
    %748 = vmatpush1.bf16.msra.mxu0 %v595
    %749 = vmatprep.subr.bf16.mxu0 0
    %750 = vmatpush1.bf16.msra.mxu0 %v596
    %751 = vmatprep.subr.bf16.mxu0 0
    %752 = vmatpush1.bf16.msra.mxu0 %v597
    %753 = vmatprep.subr.bf16.mxu0 0
    %754 = vmatpush1.bf16.msra.mxu0 %v598
    %755 = vmatprep.subr.bf16.mxu0 0
    %756 = vmatpush1.bf16.msra.mxu0 %v599
    %757 = vmatprep.subr.bf16.mxu0 0
    %758 = vmatpush1.bf16.msra.mxu0 %v600
    %759 = vmatprep.subr.bf16.mxu0 0
    %760 = vmatpush1.bf16.msra.mxu0 %v601
    %761 = vmatprep.subr.bf16.mxu0 0
    %762 = vmatpush1.bf16.msra.mxu0 %v602
    %763 = vmatprep.mubr.bf16.mxu0 %v264
    %764 = vmatmul.mubr.bf16.gmra.mrb[0].mxu0 %v263
    %v765 = vpop.f32.mrb[0].mxu0
    %v766 = vadd.f32 %v205, %v765
    %v767 = vpop.f32.mrb[0].mxu0
    %v768 = vpop.f32.mrb[0].mxu0
    %v769 = vadd.f32 %v205, %v768
    %v770 = vpop.f32.mrb[0].mxu0
    %771 = vmatprep.mubr.bf16.mxu0 %v273
    %772 = vmatmul.mubr.bf16.gmra.mrb[0].mxu0 %v272
    %v773 = vpop.f32.mrb[0].mxu0
    %v774 = vadd.f32 %v205, %v773
    %v775 = vpop.f32.mrb[0].mxu0
    %v776 = vpop.f32.mrb[0].mxu0
    %v777 = vadd.f32 %v205, %v776
    %v778 = vpop.f32.mrb[0].mxu0
    %779 = vdwg.mxu0
    %780 = vmatprep.subr.bf16.mxu0 0
    %781 = vmatpush1.bf16.msra.mxu0 %v603
    %782 = vmatprep.subr.bf16.mxu0 0
    %783 = vmatpush1.bf16.msra.mxu0 %v604
    %784 = vmatprep.subr.bf16.mxu0 0
    %785 = vmatpush1.bf16.msra.mxu0 %v605
    %786 = vmatprep.subr.bf16.mxu0 0
    %787 = vmatpush1.bf16.msra.mxu0 %v606
    %788 = vmatprep.subr.bf16.mxu0 0
    %789 = vmatpush1.bf16.msra.mxu0 %v607
    %790 = vmatprep.subr.bf16.mxu0 0
    %791 = vmatpush1.bf16.msra.mxu0 %v608
    %792 = vmatprep.subr.bf16.mxu0 0
    %793 = vmatpush1.bf16.msra.mxu0 %v609
    %794 = vmatprep.subr.bf16.mxu0 0
    %795 = vmatpush1.bf16.msra.mxu0 %v610
    %796 = vmatprep.subr.bf16.mxu0 0
    %797 = vmatpush1.bf16.msra.mxu0 %v611
    %798 = vmatprep.subr.bf16.mxu0 0
    %799 = vmatpush1.bf16.msra.mxu0 %v612
    %800 = vmatprep.subr.bf16.mxu0 0
    %801 = vmatpush1.bf16.msra.mxu0 %v613
    %802 = vmatprep.subr.bf16.mxu0 0
    %803 = vmatpush1.bf16.msra.mxu0 %v614
    %804 = vmatprep.subr.bf16.mxu0 0
    %805 = vmatpush1.bf16.msra.mxu0 %v615
    %806 = vmatprep.subr.bf16.mxu0 0
    %807 = vmatpush1.bf16.msra.mxu0 %v616
    %808 = vmatprep.subr.bf16.mxu0 0
    %809 = vmatpush1.bf16.msra.mxu0 %v617
    %810 = vmatprep.subr.bf16.mxu0 0
    %811 = vmatpush1.bf16.msra.mxu0 %v618
    %812 = vmatprep.mubr.bf16.mxu0 %v266
    %813 = vmatmul.mubr.bf16.gmra.mrb[0].mxu0 %v265
    %v814 = vpop.f32.mrb[0].mxu0
    %v815 = vadd.f32 %v766, %v814
    %v816 = vpop.f32.mrb[0].mxu0
    %v817 = vpop.f32.mrb[0].mxu0
    %v818 = vadd.f32 %v769, %v817
    %v819 = vpop.f32.mrb[0].mxu0
    %820 = vmatprep.mubr.bf16.mxu0 %v275
    %821 = vmatmul.mubr.bf16.gmra.mrb[0].mxu0 %v274
    %v822 = vpop.f32.mrb[0].mxu0
    %v823 = vadd.f32 %v774, %v822
    %v824 = vpop.f32.mrb[0].mxu0
    %v825 = vpop.f32.mrb[0].mxu0
    %v826 = vadd.f32 %v777, %v825
    %v827 = vpop.f32.mrb[0].mxu0
    %828 = vdwg.mxu0
    %829 = vmatprep.subr.bf16.mxu0 0
    %830 = vmatpush1.bf16.msra.mxu0 %v619
    %831 = vmatprep.subr.bf16.mxu0 0
    %832 = vmatpush1.bf16.msra.mxu0 %v620
    %833 = vmatprep.subr.bf16.mxu0 0
    %834 = vmatpush1.bf16.msra.mxu0 %v621
    %835 = vmatprep.subr.bf16.mxu0 0
    %836 = vmatpush1.bf16.msra.mxu0 %v622
    %837 = vmatprep.subr.bf16.mxu0 0
    %838 = vmatpush1.bf16.msra.mxu0 %v623
    %839 = vmatprep.subr.bf16.mxu0 0
    %840 = vmatpush1.bf16.msra.mxu0 %v624
    %841 = vmatprep.subr.bf16.mxu0 0
    %842 = vmatpush1.bf16.msra.mxu0 %v625
    %843 = vmatprep.subr.bf16.mxu0 0
    %844 = vmatpush1.bf16.msra.mxu0 %v626
    %845 = vmatprep.subr.bf16.mxu0 0
    %846 = vmatpush1.bf16.msra.mxu0 %v627
    %847 = vmatprep.subr.bf16.mxu0 0
    %848 = vmatpush1.bf16.msra.mxu0 %v628
    %849 = vmatprep.subr.bf16.mxu0 0
    %850 = vmatpush1.bf16.msra.mxu0 %v629
    %851 = vmatprep.subr.bf16.mxu0 0
    %852 = vmatpush1.bf16.msra.mxu0 %v630
    %853 = vmatprep.subr.bf16.mxu0 0
    %854 = vmatpush1.bf16.msra.mxu0 %v631
    %855 = vmatprep.subr.bf16.mxu0 0
    %856 = vmatpush1.bf16.msra.mxu0 %v632
    %857 = vmatprep.subr.bf16.mxu0 0
    %858 = vmatpush1.bf16.msra.mxu0 %v633
    %859 = vmatprep.subr.bf16.mxu0 0
    %860 = vmatpush1.bf16.msra.mxu0 %v634
    %861 = vmatprep.mubr.bf16.mxu0 %v268
    %862 = vmatmul.mubr.bf16.gmra.mrb[0].mxu0 %v267
    %v863 = vpop.f32.mrb[0].mxu0
    %v864 = vadd.f32 %v815, %v863
    %v865 = vpop.f32.mrb[0].mxu0
    %v866 = vpop.f32.mrb[0].mxu0
    %v867 = vadd.f32 %v818, %v866
    %v868 = vpop.f32.mrb[0].mxu0
    %869 = vmatprep.mubr.bf16.mxu0 %v277
    %870 = vmatmul.mubr.bf16.gmra.mrb[0].mxu0 %v276
    %v871 = vpop.f32.mrb[0].mxu0
    %v872 = vadd.f32 %v823, %v871
    %v873 = vpop.f32.mrb[0].mxu0
    %v874 = vpop.f32.mrb[0].mxu0
    %v875 = vadd.f32 %v826, %v874
    %v876 = vpop.f32.mrb[0].mxu0
    %877 = vdwg.mxu0
    %878 = vmatprep.subr.bf16.mxu0 0
    %879 = vmatpush1.bf16.msra.mxu0 %v635
    %880 = vmatprep.subr.bf16.mxu0 0
    %881 = vmatpush1.bf16.msra.mxu0 %v636
    %882 = vmatprep.subr.bf16.mxu0 0
    %883 = vmatpush1.bf16.msra.mxu0 %v637
    %884 = vmatprep.subr.bf16.mxu0 0
    %885 = vmatpush1.bf16.msra.mxu0 %v638
    %886 = vmatprep.subr.bf16.mxu0 0
    %887 = vmatpush1.bf16.msra.mxu0 %v639
    %888 = vmatprep.subr.bf16.mxu0 0
    %889 = vmatpush1.bf16.msra.mxu0 %v640
    %890 = vmatprep.subr.bf16.mxu0 0
    %891 = vmatpush1.bf16.msra.mxu0 %v641
    %892 = vmatprep.subr.bf16.mxu0 0
    %893 = vmatpush1.bf16.msra.mxu0 %v642
    %894 = vmatprep.subr.bf16.mxu0 0
    %895 = vmatpush1.bf16.msra.mxu0 %v643
    %896 = vmatprep.subr.bf16.mxu0 0
    %897 = vmatpush1.bf16.msra.mxu0 %v644
    %898 = vmatprep.subr.bf16.mxu0 0
    %899 = vmatpush1.bf16.msra.mxu0 %v645
    %900 = vmatprep.subr.bf16.mxu0 0
    %901 = vmatpush1.bf16.msra.mxu0 %v646
    %902 = vmatprep.subr.bf16.mxu0 0
    %903 = vmatpush1.bf16.msra.mxu0 %v647
    %904 = vmatprep.subr.bf16.mxu0 0
    %905 = vmatpush1.bf16.msra.mxu0 %v648
    %906 = vmatprep.subr.bf16.mxu0 0
    %907 = vmatpush1.bf16.msra.mxu0 %v649
    %908 = vmatprep.subr.bf16.mxu0 0
    %909 = vmatpush1.bf16.msra.mxu0 %v650
    %910 = vmatprep.mubr.bf16.mxu0 %v270
    %911 = vmatmul.mubr.bf16.gmra.mrb[0].mxu0 %v269
    %v912 = vpop.f32.mrb[0].mxu0
    %v913 = vadd.f32 %v864, %v912
    %v914 = vpop.f32.mrb[0].mxu0
    %v915 = vpop.f32.mrb[0].mxu0
    %v916 = vadd.f32 %v867, %v915
    %v917 = vpop.f32.mrb[0].mxu0
    %918 = vmatprep.mubr.bf16.mxu0 %v279
    %919 = vmatmul.mubr.bf16.gmra.mrb[0].mxu0 %v278
    %v920 = vpop.f32.mrb[0].mxu0
    %v921 = vadd.f32 %v872, %v920
    %v922 = vpop.f32.mrb[0].mxu0
    %v923 = vpop.f32.mrb[0].mxu0
    %v924 = vadd.f32 %v875, %v923
    %v925 = vpop.f32.mrb[0].mxu0
    %926 = vdwg.mxu0
    %927 = vmatprep.subr.bf16.mxu0 0
    %928 = vmatpush1.bf16.msra.mxu0 %v651
    %929 = vmatprep.subr.bf16.mxu0 0
    %930 = vmatpush1.bf16.msra.mxu0 %v652
    %931 = vmatprep.subr.bf16.mxu0 0
    %932 = vmatpush1.bf16.msra.mxu0 %v653
    %933 = vmatprep.subr.bf16.mxu0 0
    %934 = vmatpush1.bf16.msra.mxu0 %v654
    %935 = vmatprep.subr.bf16.mxu0 0
    %936 = vmatpush1.bf16.msra.mxu0 %v655
    %937 = vmatprep.subr.bf16.mxu0 0
    %938 = vmatpush1.bf16.msra.mxu0 %v656
    %939 = vmatprep.subr.bf16.mxu0 0
    %940 = vmatpush1.bf16.msra.mxu0 %v657
    %941 = vmatprep.subr.bf16.mxu0 0
    %942 = vmatpush1.bf16.msra.mxu0 %v658
    %943 = vmatprep.subr.bf16.mxu0 0
    %944 = vmatpush1.bf16.msra.mxu0 0
    %945 = vmatprep.subr.bf16.mxu0 0
    %946 = vmatpush1.bf16.msra.mxu0 0
    %947 = vmatprep.subr.bf16.mxu0 0
    %948 = vmatpush1.bf16.msra.mxu0 0
    %949 = vmatprep.subr.bf16.mxu0 0
    %950 = vmatpush1.bf16.msra.mxu0 0
    %951 = vmatprep.subr.bf16.mxu0 0
    %952 = vmatpush1.bf16.msra.mxu0 0
    %953 = vmatprep.subr.bf16.mxu0 0
    %954 = vmatpush1.bf16.msra.mxu0 0
    %955 = vmatprep.subr.bf16.mxu0 0
    %956 = vmatpush1.bf16.msra.mxu0 0
    %957 = vmatprep.subr.bf16.mxu0 0
    %958 = vmatpush1.bf16.msra.mxu0 0
    %959 = vmatprep.mubr.bf16.mxu0 0
    %960 = vmatmul.mubr.bf16.gmra.mrb[0].mxu0 %v271
    %v961 = vpop.f32.mrb[0].mxu0
    %v962 = vadd.f32 %v913, %v961
    %v963 = vpop.f32.mrb[0].mxu0
    %v964 = vpop.f32.mrb[0].mxu0
    %v965 = vadd.f32 %v916, %v964
    %v966 = vpop.f32.mrb[0].mxu0
    %967 = vmatprep.mubr.bf16.mxu0 0
    %968 = vmatmul.mubr.bf16.gmra.mrb[0].mxu0 %v280
    %v969 = vpop.f32.mrb[0].mxu0
    %v970 = vadd.f32 %v921, %v969
    %v971 = vpop.f32.mrb[0].mxu0
    %v972 = vpop.f32.mrb[0].mxu0
    %v973 = vadd.f32 %v924, %v972
    %v974 = vpop.f32.mrb[0].mxu0
    %975 = vdwg.mxu0
    %v976 = vld [vmem:[%s4] sm:$0x1]
    %v977 = vmul.f32 %v962, 2.0
    %v978 = vmul.f32 %v965, 2.0
    %v979 = vmul.f32 %v970, 2.0
    %v980 = vmul.f32 %v973, 2.0
    %v981 = vld [vmem:[%s3] sm:$0x1]
    %983 = vset.pattern.permute.xlu0 0
    %984 = vperm.xlu0 %983, %v977
    %v985 = vpop.permute.xlu0 %984
    %988 = vset.pattern.permute.xlu0 0
    %989 = vperm.xlu0 %988, %v978
    %v990 = vpop.permute.xlu0 %989
    %993 = vset.pattern.permute.xlu0 0
    %994 = vperm.xlu0 %993, %v979
    %v995 = vpop.permute.xlu0 %994
    %998 = vset.pattern.permute.xlu0 0
    %999 = vperm.xlu0 %998, %v980
    %v1000 = vpop.permute.xlu0 %999
    %v1002 = vlaneseq
    %v1003 = vshrl.u32 %v1002, 7
    %v1004 = vsub.s32 0, %v1003
    %v1005 = vrot.slane %v981, %v1004
    %v1006 = vmul.f32 %v985, %v1005
    %v1007 = vmul.f32 %v990, %v1005
    %v1008 = vmul.f32 %v995, %v1005
    %v1009 = vmul.f32 %v1000, %v1005
    %v1011 = vlaneseq
    %v1012 = vshrl.u32 %v1011, 7
    %v1013 = vsub.s32 0, %v1012
    %v1014 = vrot.slane %v976, %v1013
    %v1016 = vsub.f32 %v1014, %v1006
    %v1017 = vsub.f32 %v1014, %v1007
    %v1018 = vsub.f32 %v1014, %v1008
    %v1019 = vsub.f32 %v1014, %v1009
    %v1020 = vld [vmem:[%s3 + $0x1] sm:$0x1]
    %1021 = vset.pattern.permute.xlu0 1
    %1022 = vperm.xlu0 %1021, %v977
    %v1023 = vpop.permute.xlu0 %1022
    %1025 = vset.pattern.permute.xlu0 1
    %1026 = vperm.xlu0 %1025, %v978
    %v1027 = vpop.permute.xlu0 %1026
    %1029 = vset.pattern.permute.xlu0 1
    %1030 = vperm.xlu0 %1029, %v979
    %v1031 = vpop.permute.xlu0 %1030
    %1033 = vset.pattern.permute.xlu0 1
    %1034 = vperm.xlu0 %1033, %v980
    %v1035 = vpop.permute.xlu0 %1034
    %v1037 = vlaneseq
    %v1038 = vshrl.u32 %v1037, 7
    %v1039 = vsub.s32 0, %v1038
    %v1040 = vrot.slane %v1020, %v1039
    %v1041 = vmul.f32 %v1023, %v1040
    %v1042 = vmul.f32 %v1027, %v1040
    %v1043 = vmul.f32 %v1031, %v1040
    %v1044 = vmul.f32 %v1035, %v1040
    %v1045 = vsub.f32 %v1016, %v1041
    %v1046 = vsub.f32 %v1017, %v1042
    %v1047 = vsub.f32 %v1018, %v1043
    %v1048 = vsub.f32 %v1019, %v1044
    %v1049 = vld [vmem:[%s3 + $0x2] sm:$0x1]
    %1050 = vset.pattern.permute.xlu0 2
    %1051 = vperm.xlu0 %1050, %v977
    %v1052 = vpop.permute.xlu0 %1051
    %1054 = vset.pattern.permute.xlu0 2
    %1055 = vperm.xlu0 %1054, %v978
    %v1056 = vpop.permute.xlu0 %1055
    %1058 = vset.pattern.permute.xlu0 2
    %1059 = vperm.xlu0 %1058, %v979
    %v1060 = vpop.permute.xlu0 %1059
    %1062 = vset.pattern.permute.xlu0 2
    %1063 = vperm.xlu0 %1062, %v980
    %v1064 = vpop.permute.xlu0 %1063
    %v1066 = vlaneseq
    %v1067 = vshrl.u32 %v1066, 7
    %v1068 = vsub.s32 0, %v1067
    %v1069 = vrot.slane %v1049, %v1068
    %v1070 = vmul.f32 %v1052, %v1069
    %v1071 = vmul.f32 %v1056, %v1069
    %v1072 = vmul.f32 %v1060, %v1069
    %v1073 = vmul.f32 %v1064, %v1069
    %v1074 = vsub.f32 %v1045, %v1070
    %v1075 = vsub.f32 %v1046, %v1071
    %v1076 = vsub.f32 %v1047, %v1072
    %v1077 = vsub.f32 %v1048, %v1073
    %1078 = vmin.xlane.f32.xlu0 %v1074
    %v1079 = vpop.xlane.xlu0 %1078
    %1080 = vmin.xlane.f32.xlu0 %v1075
    %v1081 = vpop.xlane.xlu0 %1080
    %1082 = vmin.xlane.f32.xlu0 %v1076
    %v1083 = vpop.xlane.xlu0 %1082
    %1084 = vmin.xlane.f32.xlu0 %v1077
    %v1085 = vpop.xlane.xlu0 %1084
    %v1086 = vlaneseq
    %v1087 = vand.u32 %v1086, 127
    %vm1088 = vcmp.le.f32.partialorder %v1074, %v1079
    %vm1089 = vcmp.le.f32.partialorder %v1075, %v1081
    %vm1090 = vcmp.le.f32.partialorder %v1076, %v1083
    %vm1091 = vcmp.le.f32.partialorder %v1077, %v1085
    %v1092 = vsel %vm1088, %v1087, 128
    %v1093 = vsel %vm1089, %v1087, 128
    %v1094 = vsel %vm1090, %v1087, 128
    %v1095 = vsel %vm1091, %v1087, 128
    %v1096 = vand.u32 %v1092, 65535
    %v1097 = vshra.s32 %v1092, 16
    %v1098 = vcvt.s32.f32 %v1096
    %v1099 = vcvt.s32.f32 %v1097
    %1100 = vmin.xlane.f32.xlu0 %v1099
    %v1101 = vpop.xlane.xlu0 %1100
    %vm1102 = vcmp.eq.f32.partialorder %v1099, %v1101
    %v1103 = vsel %vm1102, %v1098, inf
    %1104 = vmin.xlane.f32.xlu0 %v1103
    %v1105 = vpop.xlane.xlu0 %1104
    %v1106 = vcvt.f32.s32 %v1105
    %v1107 = vcvt.f32.s32 %v1101
    %v1108 = vshll.u32 %v1107, 16
    %v1109 = vadd.s32 %v1108, %v1106
    %v1110 = vand.u32 %v1093, 65535
    %v1111 = vshra.s32 %v1093, 16
    %v1112 = vcvt.s32.f32 %v1110
    %v1113 = vcvt.s32.f32 %v1111
    %1114 = vmin.xlane.f32.xlu0 %v1113
    %v1115 = vpop.xlane.xlu0 %1114
    %vm1116 = vcmp.eq.f32.partialorder %v1113, %v1115
    %v1117 = vsel %vm1116, %v1112, inf
    %1118 = vmin.xlane.f32.xlu0 %v1117
    %v1119 = vpop.xlane.xlu0 %1118
    %v1120 = vcvt.f32.s32 %v1119
    %v1121 = vcvt.f32.s32 %v1115
    %v1122 = vshll.u32 %v1121, 16
    %v1123 = vadd.s32 %v1122, %v1120
    %v1124 = vand.u32 %v1094, 65535
    %v1125 = vshra.s32 %v1094, 16
    %v1126 = vcvt.s32.f32 %v1124
    %v1127 = vcvt.s32.f32 %v1125
    %1128 = vmin.xlane.f32.xlu0 %v1127
    %v1129 = vpop.xlane.xlu0 %1128
    %vm1130 = vcmp.eq.f32.partialorder %v1127, %v1129
    %v1131 = vsel %vm1130, %v1126, inf
    %1132 = vmin.xlane.f32.xlu0 %v1131
    %v1133 = vpop.xlane.xlu0 %1132
    %v1134 = vcvt.f32.s32 %v1133
    %v1135 = vcvt.f32.s32 %v1129
    %v1136 = vshll.u32 %v1135, 16
    %v1137 = vadd.s32 %v1136, %v1134
    %v1138 = vand.u32 %v1095, 65535
    %v1139 = vshra.s32 %v1095, 16
    %v1140 = vcvt.s32.f32 %v1138
    %v1141 = vcvt.s32.f32 %v1139
    %1142 = vmin.xlane.f32.xlu0 %v1141
    %v1143 = vpop.xlane.xlu0 %1142
    %vm1144 = vcmp.eq.f32.partialorder %v1141, %v1143
    %v1145 = vsel %vm1144, %v1140, inf
    %1146 = vmin.xlane.f32.xlu0 %v1145
    %v1147 = vpop.xlane.xlu0 %1146
    %v1148 = vcvt.f32.s32 %v1147
    %v1149 = vcvt.f32.s32 %v1143
    %v1150 = vshll.u32 %v1149, 16
    %v1151 = vadd.s32 %v1150, %v1148
    %vm1152 = vcmp.eq.s32.totalorder %v1087, %v1109
    %vm1153 = vcmp.eq.s32.totalorder %v1087, %v1123
    %vm1154 = vcmp.eq.s32.totalorder %v1087, %v1137
    %vm1155 = vcmp.eq.s32.totalorder %v1087, %v1151
    %v1156 = vsel %vm1152, 1, 0
    %v1157 = vsel %vm1153, 1, 0
    %v1158 = vsel %vm1154, 1, 0
    %v1159 = vsel %vm1155, 1, 0
    %v1160 = vcvt.s32.f32 %v1156
    %v1161 = vcvt.s32.f32 %v1157
    %v1162 = vcvt.s32.f32 %v1158
    %v1163 = vcvt.s32.f32 %v1159
    %v1164 = vld [vmem:[%s5] sm:$0xff]
    %v1165 = vld [vmem:[%s5 + $0x8] sm:$0xff]
    %v1166 = vld [vmem:[%s5 + $0x10] sm:$0xff]
    %v1167 = vld [vmem:[%s5 + $0x18] sm:$0xff]
    %v1168 = vld [vmem:[%s5 + $0x20] sm:$0xff]
    %v1169 = vld [vmem:[%s5 + $0x28] sm:$0xff]
    %v1170 = vld [vmem:[%s5 + $0x30] sm:$0xff]
    %v1171 = vld [vmem:[%s5 + $0x38] sm:$0xff]
    %v1172 = vld [vmem:[%s5 + $0x40] sm:$0xff]
    %v1173 = vld [vmem:[%s5 + $0x48] sm:$0xff]
    %v1174 = vld [vmem:[%s5 + $0x50] sm:$0xff]
    %v1175 = vld [vmem:[%s5 + $0x58] sm:$0xff]
    %v1176 = vld [vmem:[%s5 + $0x60] sm:$0xff]
    %v1177 = vld [vmem:[%s5 + $0x68] sm:$0xff]
    %v1178 = vld [vmem:[%s5 + $0x70] sm:$0xff]
    %v1179 = vld [vmem:[%s5 + $0x78] sm:$0xff]
    %v1180 = vld [vmem:[%s6] sm:$0x1]
    %v1182 = vlaneseq
    %v1183 = vshrl.u32 %v1182, 7
    %v1184 = vsub.s32 0, %v1183
    %v1185 = vrot.slane %v1180, %v1184
    %1187 = vmatprep.subr.mxu0 0.0
    %1188 = vmatpush1.msra.mxu0 %v1164
    %1189 = vmatprep.subr.mxu0 0.0
    %1190 = vmatpush1.msra.mxu0 %v1165
    %1191 = vmatprep.subr.mxu0 0.0
    %1192 = vmatpush1.msra.mxu0 %v1166
    %1193 = vmatprep.subr.mxu0 0.0
    %1194 = vmatpush1.msra.mxu0 %v1167
    %1195 = vmatprep.subr.mxu0 0.0
    %1196 = vmatpush1.msra.mxu0 %v1168
    %1197 = vmatprep.subr.mxu0 0.0
    %1198 = vmatpush1.msra.mxu0 %v1169
    %1199 = vmatprep.subr.mxu0 0.0
    %1200 = vmatpush1.msra.mxu0 %v1170
    %1201 = vmatprep.subr.mxu0 0.0
    %1202 = vmatpush1.msra.mxu0 %v1171
    %1203 = vmatprep.subr.mxu0 0.0
    %1204 = vmatpush1.msra.mxu0 %v1172
    %1205 = vmatprep.subr.mxu0 0.0
    %1206 = vmatpush1.msra.mxu0 %v1173
    %1207 = vmatprep.subr.mxu0 0.0
    %1208 = vmatpush1.msra.mxu0 %v1174
    %1209 = vmatprep.subr.mxu0 0.0
    %1210 = vmatpush1.msra.mxu0 %v1175
    %1211 = vmatprep.subr.mxu0 0.0
    %1212 = vmatpush1.msra.mxu0 %v1176
    %1213 = vmatprep.subr.mxu0 0.0
    %1214 = vmatpush1.msra.mxu0 %v1177
    %1215 = vmatprep.subr.mxu0 0.0
    %1216 = vmatpush1.msra.mxu0 %v1178
    %1217 = vmatprep.subr.mxu0 0.0
    %1218 = vmatpush1.msra.mxu0 %v1179
    %1219 = vmatprep.subr.mxu0 0.0
    %1220 = vmatpush1.msra.mxu0 0.0
    %1221 = vmatprep.subr.mxu0 0.0
    %1222 = vmatpush1.msra.mxu0 0.0
    %1223 = vmatprep.subr.mxu0 0.0
    %1224 = vmatpush1.msra.mxu0 0.0
    %1225 = vmatprep.subr.mxu0 0.0
    %1226 = vmatpush1.msra.mxu0 0.0
    %1227 = vmatprep.subr.mxu0 0.0
    %1228 = vmatpush1.msra.mxu0 0.0
    %1229 = vmatprep.subr.mxu0 0.0
    %1230 = vmatpush1.msra.mxu0 0.0
    %1231 = vmatprep.subr.mxu0 0.0
    %1232 = vmatpush1.msra.mxu0 0.0
    %1233 = vmatprep.subr.mxu0 0.0
    %1234 = vmatpush1.msra.mxu0 0.0
    %1235 = vmatprep.subr.mxu0 0.0
    %1236 = vmatpush1.msra.mxu0 0.0
    %1237 = vmatprep.subr.mxu0 0.0
    %1238 = vmatpush1.msra.mxu0 0.0
    %1239 = vmatprep.subr.mxu0 0.0
    %1240 = vmatpush1.msra.mxu0 0.0
    %1241 = vmatprep.subr.mxu0 0.0
    %1242 = vmatpush1.msra.mxu0 0.0
    %1243 = vmatprep.subr.mxu0 0.0
    %1244 = vmatpush1.msra.mxu0 0.0
    %1245 = vmatprep.subr.mxu0 0.0
    %1246 = vmatpush1.msra.mxu0 0.0
    %1247 = vmatprep.subr.mxu0 0.0
    %1248 = vmatpush1.msra.mxu0 0.0
    %1249 = vmatprep.subr.mxu0 0.0
    %1250 = vmatpush1.msra.mxu0 0.0
    %1251 = vmatprep.mubr.f32.mxu0 0.0
    %1252 = vmatmul.mubr.f32.gmra.mrb[0].mxu0 %v1160
    %v1253 = vpop.f32.mrb[0].mxu0
    %v1254 = vadd.f32 %v1185, %v1253
    %v1255 = vpop.f32.mrb[0].mxu0
    %1256 = vmatprep.mubr.f32.mxu0 0.0
    %1257 = vmatmul.mubr.f32.gmra.mrb[0].mxu0 %v1161
    %v1258 = vpop.f32.mrb[0].mxu0
    %v1259 = vadd.f32 %v1185, %v1258
    %v1260 = vpop.f32.mrb[0].mxu0
    %1261 = vmatprep.mubr.f32.mxu0 0.0
    %1262 = vmatmul.mubr.f32.gmra.mrb[0].mxu0 %v1162
    %v1263 = vpop.f32.mrb[0].mxu0
    %v1264 = vadd.f32 %v1185, %v1263
    %v1265 = vpop.f32.mrb[0].mxu0
    %1266 = vmatprep.mubr.f32.mxu0 0.0
    %1267 = vmatmul.mubr.f32.gmra.mrb[0].mxu0 %v1163
    %v1268 = vpop.f32.mrb[0].mxu0
    %v1269 = vadd.f32 %v1185, %v1268
    %v1270 = vpop.f32.mrb[0].mxu0
    %1271 = vdwg.mxu0
    %s1272 = smul.u32 0, 32
    %v1273 = vlaneseq
    %v1274 = vshrl.u32 %v1273, 7
    %v1275 = vadd.s32 %v1274, 8
    %v1276 = vadd.s32 %v1274, 16
    %v1277 = vadd.s32 %v1274, 24
    %v1278 = vstv %s1272
    %v1279 = vadd.s32 %v1278, %v1274
    %v1280 = vadd.s32 %v1278, %v1275
    %v1281 = vadd.s32 %v1278, %v1276
    %v1282 = vadd.s32 %v1278, %v1277
    %vm1283 = vcmp.lt.s32.totalorder %v1279, 32
    %vm1284 = vcmp.lt.s32.totalorder %v1280, 32
    %vm1285 = vcmp.lt.s32.totalorder %v1281, 32
    %vm1286 = vcmp.lt.s32.totalorder %v1282, 32
    %v1287 = vsel %vm1283, 1, 0
    %v1288 = vsel %vm1284, 1, 0
    %v1289 = vsel %vm1285, 1, 0
    %v1290 = vsel %vm1286, 1, 0
    %v1291 = vcvt.s32.f32 %v1287
    %v1292 = vcvt.s32.f32 %v1288
    %v1293 = vcvt.s32.f32 %v1289
    %v1294 = vcvt.s32.f32 %v1290
    %v1295 = vsub.f32 %v1254, %v962
    %v1296 = vsub.f32 %v1259, %v965
    %v1297 = vsub.f32 %v1264, %v970
    %v1298 = vsub.f32 %v1269, %v973
    %v1299 = vmul.f32 %v1295, %v1291
    %v1300 = vmul.f32 %v1296, %v1292
    %v1301 = vmul.f32 %v1297, %v1293
    %v1302 = vmul.f32 %v1298, %v1294
    %s1303 = sld [smem:[#allocation2]]
    %v1304 = vmul.f32 %v1299, %v1299
    %v1305 = vmul.f32 %v1300, %v1300
    %v1306 = vmul.f32 %v1301, %v1301
    %v1307 = vmul.f32 %v1302, %v1302
    %v1308 = vadd.f32 %v1304, %v1305
    %v1309 = vadd.f32 %v1308, %v1306
    %v1310 = vadd.f32 %v1309, %v1307
    %1311 = vadd.xlane.f32.xlu0 %v1310
    %v1312 = vpop.xlane.xlu0 %1311
    %v1313 = vrot.slane %v1312, 4
    %v1314 = vadd.f32 %v1312, %v1313
    %v1315 = vrot.slane %v1314, 2
    %v1316 = vadd.f32 %v1314, %v1315
    %v1317 = vrot.slane %v1316, 1
    %v1318 = vadd.f32 %v1316, %v1317
    %s1319 = vtos %v1318
    %s1320 = sadd.f32 %s1303, %s1319
    %s1321 = scalar_lea.smem [#allocation2], 0
    %1322 = sst [smem:[%s1321]] %s1320
    %v1323 = vpack.c.bf16 %v1259, %v1254
    %v1324 = vpack.c.bf16 %v1269, %v1264
    %v1327 = vunpack.c.l.b16 %v1323
    %v1328 = vunpack.c.h.b16 %v1323
    %v1329 = vunpack.c.l.b16 %v1324
    %v1330 = vunpack.c.h.b16 %v1324
    %v1331 = vpack.c.b16 %v1327, %v1327
    %v1332 = vpack.c.b16 %v1328, %v1328
    %v1333 = vpack.c.b16 %v1329, %v1329
    %v1334 = vpack.c.b16 %v1330, %v1330
    %1339 = vst [vmem:[%s7] sm:$0xf] %v1331
    %1340 = vst [vmem:[%s7 + $0x4] sm:$0xf] %v1332
    %1341 = vst [vmem:[%s7 + $0x8] sm:$0xf] %v1333
    %1342 = vst [vmem:[%s7 + $0xc] sm:$0xf] %v1334
    // Predicated region
    $region34: #{vqvae_forward.8} parent=1 // pred_check
      %p1343 = pneg %p30
    $region35: #{vqvae_forward.8} parent=1 // pred_check_branch
      %1345 = sbr.rel (%p1343) target = $region37
    $region36: #{vqvae_forward.8} parent=1 // pred_region
      %s1346 = sld [smem:[#allocation2]]
      %v1347 = vrcp.pop 96.0
      %s1348 = vtos %v1347
      %s1349 = smul.f32 %s1346, %s1348
      %s1350 = scalar_lea.smem [#allocation3], 0
      %1351 = sst [smem:[%s1350]] %s1349
    $region37: #{vqvae_forward.8} parent=1 // pred_fallthru
      _
    // Predicated region
    $region38: #{vqvae_forward.8} parent=1 // pred_check
      _
    $region39: #{vqvae_forward.8} parent=1 // pred_check_branch
      %1353 = sbr.rel (0) target = $region41
    $region40: #{vqvae_forward.8} parent=1 // pred_region
      _
    $region41: #{vqvae_forward.8} parent=1 // pred_fallthru
      _
    // Predicated region
    $region42: #{vqvae_forward.8} parent=1 // pred_check
      _
    $region43: #{vqvae_forward.8} parent=1 // pred_check_branch
      %1355 = sbr.rel (0) target = $region45
    $region44: #{vqvae_forward.8} parent=1 // pred_region
      %s1357 = ssub.s32 16, 16
      %1358 = vsyncadd [#allocation4], %s1357
      %1361 = dma.smem_to_hbm [#allocation3], 16, %s8, [#allocation4]
    $region45: #{vqvae_forward.8} parent=1 // pred_fallthru
      _
    // Predicated region
    $region46: #{vqvae_forward.8} parent=1 // pred_check
      _
    $region47: #{vqvae_forward.8} parent=1 // pred_check_branch
      %1363 = sbr.rel (0) target = $region49
    $region48: #{vqvae_forward.8} parent=1 // pred_region
      _
    $region49: #{vqvae_forward.8} parent=1 // pred_fallthru
      _
    // Predicated region
    $region50: #{vqvae_forward.8} parent=1 // pred_check
      _
    $region51: #{vqvae_forward.8} parent=1 // pred_check_branch
      %1365 = sbr.rel (0) target = $region53
    $region52: #{vqvae_forward.8} parent=1 // pred_region
      %1366 = dma.done [#allocation4], 16
    $region53: #{vqvae_forward.8} parent=1 // pred_fallthru
      _
    %1367 = sfence
    %1368 = vsyncpa [#allocation4], 1

// kernel: tile.13
$region0: #{tile.13}
  #allocation0 [shape = 's32[1]{0}', space=sflag, size = 0x4, scoped, tag = 'scoped memory for tile.13']
  %s0 = inlined_call_operand.vmem [shape: f32[128], index: 0, kind: input, shape index: {}]
  %s1 = inlined_call_operand.vmem [shape: f32[4,128], index: 1, kind: output, shape index: {}]
  // Predicated region
  $region2: #{tile.13} parent=0 // pred_check
    _
  $region3: #{tile.13} parent=0 // pred_check_branch
    %3 = sbr.rel (0) target = $region5
  $region4: #{tile.13} parent=0 // pred_region
    _
  $region5: #{tile.13} parent=0 // pred_fallthru
    _
  %v4 = vld [vmem:[%s0] ss:$0 sm:$0xff]
  %5 = vst [vmem:[%s1] sm:$0xf] %v4

// kernel: vqvae_forward.9
$region0: #{vqvae_forward.9}
  #allocation0 [shape = 'u32[]', space=smem, size = 0x4, offset = 0x4, fixed_abs, tag = 'smem constant byte address 0x4 - core index']
  #allocation1 [shape = 'u32[144,128]{1,0:T(1,128)}', space=vmem, size = 0x12000, scoped, tag = 'internal scratch']
  %s0 = inlined_call_operand.vmem [shape: bf16[32,27], index: 0, kind: input, shape index: {}]
  %s1 = inlined_call_operand.vmem [shape: bf16[27,512], index: 1, kind: input, shape index: {}]
  %s2 = inlined_call_operand.vmem [shape: f32[1,512], index: 2, kind: input, shape index: {}]
  %s3 = inlined_call_operand.vmem [shape: bf16[32,512], index: 3, kind: output, shape index: {}]
  %s4 = sld [smem:[#allocation0]]
  $region22: #{vqvae_forward.9} parent=0
    _
  %s6 = ssub.s32 1, %s4
  %s7 = scalar_select 0, %s6, %s4
  // Predicated region
  $region2: #{vqvae_forward.9} parent=0 // pred_check
    _
  $region3: #{vqvae_forward.9} parent=0 // pred_check_branch
    %9 = sbr.rel (0) target = $region5
  $region4: #{vqvae_forward.9} parent=0 // pred_region
    _
  $region5: #{vqvae_forward.9} parent=0 // pred_fallthru
    _
  // Predicated region
  $region6: #{vqvae_forward.9} parent=0 // pred_check
    _
  $region7: #{vqvae_forward.9} parent=0 // pred_check_branch
    %11 = sbr.rel (0) target = $region9
  $region8: #{vqvae_forward.9} parent=0 // pred_region
    _
  $region9: #{vqvae_forward.9} parent=0 // pred_fallthru
    _
  // Predicated region
  $region10: #{vqvae_forward.9} parent=0 // pred_check
    _
  $region11: #{vqvae_forward.9} parent=0 // pred_check_branch
    %13 = sbr.rel (0) target = $region13
  $region12: #{vqvae_forward.9} parent=0 // pred_region
    _
  $region13: #{vqvae_forward.9} parent=0 // pred_fallthru
    _
  %v15 = vld [vmem:[%s0] sm:$0xf]
  %v16 = vld [vmem:[%s0 + $0x4] sm:$0xf]
  %v17 = vld [vmem:[%s0 + $0x8] sm:$0xf]
  %v18 = vld [vmem:[%s0 + $0xc] sm:$0xf]
  %v19 = vld [vmem:[%s1] sm:$0xff]
  %v20 = vld [vmem:[%s1 + $0x8] sm:$0xff]
  %v21 = vld [vmem:[%s1 + $0x10] sm:$0xff]
  %v22 = vld [vmem:[%s1 + $0x18] sm:$0xff]
  %v23 = vld [vmem:[%s1 + $0x20] sm:$0xff]
  %v24 = vld [vmem:[%s1 + $0x28] sm:$0xff]
  %v25 = vld [vmem:[%s1 + $0x30] sm:$0x33]
  %v26 = vld [vmem:[%s1 + $0x38] sm:$0x33]
  %v27 = vld [vmem:[%s2] sm:$0xf]
  %v29 = vlaneseq
  %v30 = vshrl.u32 %v29, 7
  %v31 = vsub.s32 0, %v30
  %v32 = vrot.slane %v27, %v31
  %v33 = vlaneseq
  %v34 = vshrl.u32 %v33, 7
  %v35 = vsub.s32 1, %v34
  %v36 = vrot.slane %v27, %v35
  %v37 = vlaneseq
  %v38 = vshrl.u32 %v37, 7
  %v39 = vsub.s32 2, %v38
  %v40 = vrot.slane %v27, %v39
  %v41 = vlaneseq
  %v42 = vshrl.u32 %v41, 7
  %v43 = vsub.s32 3, %v42
  %v44 = vrot.slane %v27, %v43
  %v53 = vunpack.c.l.b16 %v15
  %v54 = vunpack.c.l.b16 %v16
  %v55 = vunpack.c.l.b16 %v17
  %v56 = vunpack.c.l.b16 %v18
  %v57 = vpack.c.b16 %v54, %v53
  %v58 = vpack.c.b16 %v56, %v55
  %v67 = vunpack.c.l.b16 %v19
  %v68 = vunpack.c.h.b16 %v19
  %v69 = vunpack.c.l.b16 %v20
  %v70 = vunpack.c.h.b16 %v20
  %v71 = vunpack.c.l.b16 %v21
  %v72 = vunpack.c.h.b16 %v21
  %v73 = vunpack.c.l.b16 %v22
  %v74 = vunpack.c.h.b16 %v22
  %v75 = vunpack.c.l.b16 %v23
  %v76 = vunpack.c.h.b16 %v23
  %v77 = vunpack.c.l.b16 %v24
  %v78 = vunpack.c.h.b16 %v24
  %v79 = vunpack.c.l.b16 %v25
  %v80 = vunpack.c.h.b16 %v25
  %v81 = vunpack.c.l.b16 %v26
  %v82 = vunpack.c.h.b16 %v26
  %v83 = vpack.c.b16 %v71, %v67
  %v84 = vpack.c.b16 %v72, %v68
  %v85 = vpack.c.b16 %v73, %v69
  %v86 = vpack.c.b16 %v74, %v70
  %v87 = vpack.c.b16 %v79, %v75
  %v88 = vpack.c.b16 %v80, %v76
  %v89 = vpack.c.b16 %v81, %v77
  %v90 = vpack.c.b16 %v82, %v78
  %vm95 = vcmask 220160
  %v97 = vsel %vm95, %v57, 0
  %v100 = vsel %vm95, %v58, 0
  %vm102 = vcmask 1044480
  %vm103 = vcmask 1045504
  %v104 = vsel %vm102, 4294967295, 65535
  %v105 = vsel %vm103, %v104, 0
  %v107 = vand.u32 %v87, %v105
  %v110 = vand.u32 %v88, %v105
  %v113 = vand.u32 %v89, %v105
  %v116 = vand.u32 %v90, %v105
  %118 = vmatprep.subr.bf16.mxu0 %v84
  %119 = vmatpush1.bf16.msra.mxu0 %v83
  %120 = vmatprep.subr.bf16.mxu0 %v110
  %121 = vmatpush1.bf16.msra.mxu0 %v107
  %122 = vmatprep.subr.bf16.mxu0 0
  %123 = vmatpush1.bf16.msra.mxu0 0
  %124 = vmatprep.subr.bf16.mxu0 0
  %125 = vmatpush1.bf16.msra.mxu0 0
  %126 = vmatprep.subr.bf16.mxu0 0
  %127 = vmatpush1.bf16.msra.mxu0 0
  %128 = vmatprep.subr.bf16.mxu0 0
  %129 = vmatpush1.bf16.msra.mxu0 0
  %130 = vmatprep.subr.bf16.mxu0 0
  %131 = vmatpush1.bf16.msra.mxu0 0
  %132 = vmatprep.subr.bf16.mxu0 0
  %133 = vmatpush1.bf16.msra.mxu0 0
  %134 = vmatprep.subr.bf16.mxu0 0
  %135 = vmatpush1.bf16.msra.mxu0 0
  %136 = vmatprep.subr.bf16.mxu0 0
  %137 = vmatpush1.bf16.msra.mxu0 0
  %138 = vmatprep.subr.bf16.mxu0 0
  %139 = vmatpush1.bf16.msra.mxu0 0
  %140 = vmatprep.subr.bf16.mxu0 0
  %141 = vmatpush1.bf16.msra.mxu0 0
  %142 = vmatprep.subr.bf16.mxu0 0
  %143 = vmatpush1.bf16.msra.mxu0 0
  %144 = vmatprep.subr.bf16.mxu0 0
  %145 = vmatpush1.bf16.msra.mxu0 0
  %146 = vmatprep.subr.bf16.mxu0 0
  %147 = vmatpush1.bf16.msra.mxu0 0
  %148 = vmatprep.subr.bf16.mxu0 0
  %149 = vmatpush1.bf16.msra.mxu0 0
  %150 = vmatprep.mubr.bf16.mxu0 0
  %151 = vmatmul.mubr.bf16.gmra.mrb[0].mxu0 %v97
  %v152 = vpop.f32.mrb[0].mxu0
  %v153 = vadd.f32 %v32, %v152
  %v154 = vpop.f32.mrb[0].mxu0
  %v155 = vadd.f32 %v36, %v154
  %v156 = vpop.f32.mrb[0].mxu0
  %v157 = vadd.f32 %v32, %v156
  %v158 = vpop.f32.mrb[0].mxu0
  %v159 = vadd.f32 %v36, %v158
  %160 = vmatprep.mubr.bf16.mxu0 0
  %161 = vmatmul.mubr.bf16.gmra.mrb[0].mxu0 %v100
  %v162 = vpop.f32.mrb[0].mxu0
  %v163 = vadd.f32 %v32, %v162
  %v164 = vpop.f32.mrb[0].mxu0
  %v165 = vadd.f32 %v36, %v164
  %v166 = vpop.f32.mrb[0].mxu0
  %v167 = vadd.f32 %v32, %v166
  %v168 = vpop.f32.mrb[0].mxu0
  %v169 = vadd.f32 %v36, %v168
  %170 = vdwg.mxu0
  %171 = vmatprep.subr.bf16.mxu0 %v86
  %172 = vmatpush1.bf16.msra.mxu0 %v85
  %173 = vmatprep.subr.bf16.mxu0 %v116
  %174 = vmatpush1.bf16.msra.mxu0 %v113
  %175 = vmatprep.subr.bf16.mxu0 0
  %176 = vmatpush1.bf16.msra.mxu0 0
  %177 = vmatprep.subr.bf16.mxu0 0
  %178 = vmatpush1.bf16.msra.mxu0 0
  %179 = vmatprep.subr.bf16.mxu0 0
  %180 = vmatpush1.bf16.msra.mxu0 0
  %181 = vmatprep.subr.bf16.mxu0 0
  %182 = vmatpush1.bf16.msra.mxu0 0
  %183 = vmatprep.subr.bf16.mxu0 0
  %184 = vmatpush1.bf16.msra.mxu0 0
  %185 = vmatprep.subr.bf16.mxu0 0
  %186 = vmatpush1.bf16.msra.mxu0 0
  %187 = vmatprep.subr.bf16.mxu0 0
  %188 = vmatpush1.bf16.msra.mxu0 0
  %189 = vmatprep.subr.bf16.mxu0 0
  %190 = vmatpush1.bf16.msra.mxu0 0
  %191 = vmatprep.subr.bf16.mxu0 0
  %192 = vmatpush1.bf16.msra.mxu0 0
  %193 = vmatprep.subr.bf16.mxu0 0
  %194 = vmatpush1.bf16.msra.mxu0 0
  %195 = vmatprep.subr.bf16.mxu0 0
  %196 = vmatpush1.bf16.msra.mxu0 0
  %197 = vmatprep.subr.bf16.mxu0 0
  %198 = vmatpush1.bf16.msra.mxu0 0
  %199 = vmatprep.subr.bf16.mxu0 0
  %200 = vmatpush1.bf16.msra.mxu0 0
  %201 = vmatprep.subr.bf16.mxu0 0
  %202 = vmatpush1.bf16.msra.mxu0 0
  %203 = vmatprep.mubr.bf16.mxu0 0
  %204 = vmatmul.mubr.bf16.gmra.mrb[0].mxu0 %v97
  %v205 = vpop.f32.mrb[0].mxu0
  %v206 = vadd.f32 %v40, %v205
  %v207 = vpop.f32.mrb[0].mxu0
  %v208 = vadd.f32 %v44, %v207
  %v209 = vpop.f32.mrb[0].mxu0
  %v210 = vadd.f32 %v40, %v209
  %v211 = vpop.f32.mrb[0].mxu0
  %v212 = vadd.f32 %v44, %v211
  %213 = vmatprep.mubr.bf16.mxu0 0
  %214 = vmatmul.mubr.bf16.gmra.mrb[0].mxu0 %v100
  %v215 = vpop.f32.mrb[0].mxu0
  %v216 = vadd.f32 %v40, %v215
  %v217 = vpop.f32.mrb[0].mxu0
  %v218 = vadd.f32 %v44, %v217
  %v219 = vpop.f32.mrb[0].mxu0
  %v220 = vadd.f32 %v40, %v219
  %v221 = vpop.f32.mrb[0].mxu0
  %v222 = vadd.f32 %v44, %v221
  %223 = vdwg.mxu0
  %v224 = vmax.f32 %v153, 0.0
  %v225 = vmax.f32 %v155, 0.0
  %v226 = vmax.f32 %v206, 0.0
  %v227 = vmax.f32 %v208, 0.0
  %v228 = vmax.f32 %v157, 0.0
  %v229 = vmax.f32 %v159, 0.0
  %v230 = vmax.f32 %v210, 0.0
  %v231 = vmax.f32 %v212, 0.0
  %v232 = vmax.f32 %v163, 0.0
  %v233 = vmax.f32 %v165, 0.0
  %v234 = vmax.f32 %v216, 0.0
  %v235 = vmax.f32 %v218, 0.0
  %v236 = vmax.f32 %v167, 0.0
  %v237 = vmax.f32 %v169, 0.0
  %v238 = vmax.f32 %v220, 0.0
  %v239 = vmax.f32 %v222, 0.0
  %v240 = vpack.c.bf16 %v228, %v224
  %v241 = vpack.c.bf16 %v229, %v225
  %v242 = vpack.c.bf16 %v230, %v226
  %v243 = vpack.c.bf16 %v231, %v227
  %v244 = vpack.c.bf16 %v236, %v232
  %v245 = vpack.c.bf16 %v237, %v233
  %v246 = vpack.c.bf16 %v238, %v234
  %v247 = vpack.c.bf16 %v239, %v235
  %v256 = vunpack.c.l.b16 %v240
  %v257 = vunpack.c.l.b16 %v241
  %v258 = vunpack.c.l.b16 %v242
  %v259 = vunpack.c.l.b16 %v243
  %v260 = vunpack.c.h.b16 %v240
  %v261 = vunpack.c.h.b16 %v241
  %v262 = vunpack.c.h.b16 %v242
  %v263 = vunpack.c.h.b16 %v243
  %v264 = vunpack.c.l.b16 %v244
  %v265 = vunpack.c.l.b16 %v245
  %v266 = vunpack.c.l.b16 %v246
  %v267 = vunpack.c.l.b16 %v247
  %v268 = vunpack.c.h.b16 %v244
  %v269 = vunpack.c.h.b16 %v245
  %v270 = vunpack.c.h.b16 %v246
  %v271 = vunpack.c.h.b16 %v247
  %v272 = vpack.c.b16 %v257, %v256
  %v273 = vpack.c.b16 %v259, %v258
  %v274 = vpack.c.b16 %v261, %v260
  %v275 = vpack.c.b16 %v263, %v262
  %v276 = vpack.c.b16 %v265, %v264
  %v277 = vpack.c.b16 %v267, %v266
  %v278 = vpack.c.b16 %v269, %v268
  %v279 = vpack.c.b16 %v271, %v270
  %288 = vst [vmem:[%s3] sm:$0xff] %v272
  %289 = vst [vmem:[%s3 + $0x8] sm:$0xff] %v273
  %290 = vst [vmem:[%s3 + $0x10] sm:$0xff] %v274
  %291 = vst [vmem:[%s3 + $0x18] sm:$0xff] %v275
  %292 = vst [vmem:[%s3 + $0x20] sm:$0xff] %v276
  %293 = vst [vmem:[%s3 + $0x28] sm:$0xff] %v277
  %294 = vst [vmem:[%s3 + $0x30] sm:$0xff] %v278
  %295 = vst [vmem:[%s3 + $0x38] sm:$0xff] %v279
  // Predicated region
  $region14: #{vqvae_forward.9} parent=0 // pred_check
    _
  $region15: #{vqvae_forward.9} parent=0 // pred_check_branch
    %297 = sbr.rel (0) target = $region17
  $region16: #{vqvae_forward.9} parent=0 // pred_region
    _
  $region17: #{vqvae_forward.9} parent=0 // pred_fallthru
    _
  // Predicated region
  $region18: #{vqvae_forward.9} parent=0 // pred_check
    _
  $region19: #{vqvae_forward.9} parent=0 // pred_check_branch
    %299 = sbr.rel (0) target = $region21
  $region20: #{vqvae_forward.9} parent=0 // pred_region
    _
  $region21: #{vqvae_forward.9} parent=0 // pred_fallthru
    _

// kernel: vqvae_forward.10
$region0: #{vqvae_forward.10}
  #allocation0 [shape = 'u32[]', space=smem, size = 0x4, offset = 0x4, fixed_abs, tag = 'smem constant byte address 0x4 - core index']
  #allocation1 [shape = 'u32[144,128]{1,0:T(1,128)}', space=vmem, size = 0x12000, scoped, tag = 'internal scratch']
  %s0 = inlined_call_operand.vmem [shape: bf16[128,1152], index: 0, kind: input, shape index: {}]
  %s1 = inlined_call_operand.vmem [shape: bf16[1152,512], index: 1, kind: input, shape index: {}]
  %s2 = inlined_call_operand.vmem [shape: f32[1,512], index: 2, kind: input, shape index: {}]
  %s3 = inlined_call_operand.vmem [shape: bf16[128,512], index: 3, kind: output, shape index: {}]
  %s4 = sld [smem:[#allocation0]]
  $region22: #{vqvae_forward.10} parent=0
    _
  %s6 = ssub.s32 1, %s4
  %s7 = scalar_select 0, %s6, %s4
  // Predicated region
  $region2: #{vqvae_forward.10} parent=0 // pred_check
    _
  $region3: #{vqvae_forward.10} parent=0 // pred_check_branch
    %9 = sbr.rel (0) target = $region5
  $region4: #{vqvae_forward.10} parent=0 // pred_region
    _
  $region5: #{vqvae_forward.10} parent=0 // pred_fallthru
    _
  // Predicated region
  $region6: #{vqvae_forward.10} parent=0 // pred_check
    _
  $region7: #{vqvae_forward.10} parent=0 // pred_check_branch
    %11 = sbr.rel (0) target = $region9
  $region8: #{vqvae_forward.10} parent=0 // pred_region
    _
  $region9: #{vqvae_forward.10} parent=0 // pred_fallthru
    _
  // Predicated region
  $region10: #{vqvae_forward.10} parent=0 // pred_check
    _
  $region11: #{vqvae_forward.10} parent=0 // pred_check_branch
    %13 = sbr.rel (0) target = $region13
  $region12: #{vqvae_forward.10} parent=0 // pred_region
    _
  $region13: #{vqvae_forward.10} parent=0 // pred_fallthru
    _
  %v15 = vld [vmem:[%s0] sm:$0xff]
  %v16 = vld [vmem:[%s0 + $0x8] sm:$0xff]
  %v17 = vld [vmem:[%s0 + $0x10] sm:$0xff]
  %v18 = vld [vmem:[%s0 + $0x18] sm:$0xff]
  %v19 = vld [vmem:[%s0 + $0x20] sm:$0xf]
  %v20 = vld [vmem:[%s0 + $0x24] sm:$0xff]
  %v21 = vld [vmem:[%s0 + $0x2c] sm:$0xff]
  %v22 = vld [vmem:[%s0 + $0x34] sm:$0xff]
  %v23 = vld [vmem:[%s0 + $0x3c] sm:$0xff]
  %v24 = vld [vmem:[%s0 + $0x44] sm:$0xf]
  %v25 = vld [vmem:[%s0 + $0x48] sm:$0xff]
  %v26 = vld [vmem:[%s0 + $0x50] sm:$0xff]
  %v27 = vld [vmem:[%s0 + $0x58] sm:$0xff]
  %v28 = vld [vmem:[%s0 + $0x60] sm:$0xff]
  %v29 = vld [vmem:[%s0 + $0x68] sm:$0xf]
  %v30 = vld [vmem:[%s0 + $0x6c] sm:$0xff]
  %v31 = vld [vmem:[%s0 + $0x74] sm:$0xff]
  %v32 = vld [vmem:[%s0 + $0x7c] sm:$0xff]
  %v33 = vld [vmem:[%s0 + $0x84] sm:$0xff]
  %v34 = vld [vmem:[%s0 + $0x8c] sm:$0xf]
  %v35 = vld [vmem:[%s0 + $0x90] sm:$0xff]
  %v36 = vld [vmem:[%s0 + $0x98] sm:$0xff]
  %v37 = vld [vmem:[%s0 + $0xa0] sm:$0xff]
  %v38 = vld [vmem:[%s0 + $0xa8] sm:$0xff]
  %v39 = vld [vmem:[%s0 + $0xb0] sm:$0xf]
  %v40 = vld [vmem:[%s0 + $0xb4] sm:$0xff]
  %v41 = vld [vmem:[%s0 + $0xbc] sm:$0xff]
  %v42 = vld [vmem:[%s0 + $0xc4] sm:$0xff]
  %v43 = vld [vmem:[%s0 + $0xcc] sm:$0xff]
  %v44 = vld [vmem:[%s0 + $0xd4] sm:$0xf]
  %v45 = vld [vmem:[%s0 + $0xd8] sm:$0xff]
  %v46 = vld [vmem:[%s0 + $0xe0] sm:$0xff]
  %v47 = vld [vmem:[%s0 + $0xe8] sm:$0xff]
  %v48 = vld [vmem:[%s0 + $0xf0] sm:$0xff]
  %v49 = vld [vmem:[%s0 + $0xf8] sm:$0xf]
  %v50 = vld [vmem:[%s0 + $0xfc] sm:$0xff]
  %v51 = vld [vmem:[%s0 + $0x104] sm:$0xff]
  %v52 = vld [vmem:[%s0 + $0x10c] sm:$0xff]
  %v53 = vld [vmem:[%s0 + $0x114] sm:$0xff]
  %v54 = vld [vmem:[%s0 + $0x11c] sm:$0xf]
  %v55 = vld [vmem:[%s0 + $0x120] sm:$0xff]
  %v56 = vld [vmem:[%s0 + $0x128] sm:$0xff]
  %v57 = vld [vmem:[%s0 + $0x130] sm:$0xff]
  %v58 = vld [vmem:[%s0 + $0x138] sm:$0xff]
  %v59 = vld [vmem:[%s0 + $0x140] sm:$0xf]
  %v60 = vld [vmem:[%s0 + $0x144] sm:$0xff]
  %v61 = vld [vmem:[%s0 + $0x14c] sm:$0xff]
  %v62 = vld [vmem:[%s0 + $0x154] sm:$0xff]
  %v63 = vld [vmem:[%s0 + $0x15c] sm:$0xff]
  %v64 = vld [vmem:[%s0 + $0x164] sm:$0xf]
  %v65 = vld [vmem:[%s0 + $0x168] sm:$0xff]
  %v66 = vld [vmem:[%s0 + $0x170] sm:$0xff]
  %v67 = vld [vmem:[%s0 + $0x178] sm:$0xff]
  %v68 = vld [vmem:[%s0 + $0x180] sm:$0xff]
  %v69 = vld [vmem:[%s0 + $0x188] sm:$0xf]
  %v70 = vld [vmem:[%s0 + $0x18c] sm:$0xff]
  %v71 = vld [vmem:[%s0 + $0x194] sm:$0xff]
  %v72 = vld [vmem:[%s0 + $0x19c] sm:$0xff]
  %v73 = vld [vmem:[%s0 + $0x1a4] sm:$0xff]
  %v74 = vld [vmem:[%s0 + $0x1ac] sm:$0xf]
  %v75 = vld [vmem:[%s0 + $0x1b0] sm:$0xff]
  %v76 = vld [vmem:[%s0 + $0x1b8] sm:$0xff]
  %v77 = vld [vmem:[%s0 + $0x1c0] sm:$0xff]
  %v78 = vld [vmem:[%s0 + $0x1c8] sm:$0xff]
  %v79 = vld [vmem:[%s0 + $0x1d0] sm:$0xf]
  %v80 = vld [vmem:[%s0 + $0x1d4] sm:$0xff]
  %v81 = vld [vmem:[%s0 + $0x1dc] sm:$0xff]
  %v82 = vld [vmem:[%s0 + $0x1e4] sm:$0xff]
  %v83 = vld [vmem:[%s0 + $0x1ec] sm:$0xff]
  %v84 = vld [vmem:[%s0 + $0x1f4] sm:$0xf]
  %v85 = vld [vmem:[%s0 + $0x1f8] sm:$0xff]
  %v86 = vld [vmem:[%s0 + $0x200] sm:$0xff]
  %v87 = vld [vmem:[%s0 + $0x208] sm:$0xff]
  %v88 = vld [vmem:[%s0 + $0x210] sm:$0xff]
  %v89 = vld [vmem:[%s0 + $0x218] sm:$0xf]
  %v90 = vld [vmem:[%s0 + $0x21c] sm:$0xff]
  %v91 = vld [vmem:[%s0 + $0x224] sm:$0xff]
  %v92 = vld [vmem:[%s0 + $0x22c] sm:$0xff]
  %v93 = vld [vmem:[%s0 + $0x234] sm:$0xff]
  %v94 = vld [vmem:[%s0 + $0x23c] sm:$0xf]
  %v95 = vld [vmem:[%s1] sm:$0xff]
  %v96 = vld [vmem:[%s1 + $0x8] sm:$0xff]
  %v97 = vld [vmem:[%s1 + $0x10] sm:$0xff]
  %v98 = vld [vmem:[%s1 + $0x18] sm:$0xff]
  %v99 = vld [vmem:[%s1 + $0x20] sm:$0xff]
  %v100 = vld [vmem:[%s1 + $0x28] sm:$0xff]
  %v101 = vld [vmem:[%s1 + $0x30] sm:$0xff]
  %v102 = vld [vmem:[%s1 + $0x38] sm:$0xff]
  %v103 = vld [vmem:[%s1 + $0x40] sm:$0xff]
  %v104 = vld [vmem:[%s1 + $0x48] sm:$0xff]
  %v105 = vld [vmem:[%s1 + $0x50] sm:$0xff]
  %v106 = vld [vmem:[%s1 + $0x58] sm:$0xff]
  %v107 = vld [vmem:[%s1 + $0x60] sm:$0xff]
  %v108 = vld [vmem:[%s1 + $0x68] sm:$0xff]
  %v109 = vld [vmem:[%s1 + $0x70] sm:$0xff]
  %v110 = vld [vmem:[%s1 + $0x78] sm:$0xff]
  %v111 = vld [vmem:[%s1 + $0x80] sm:$0xff]
  %v112 = vld [vmem:[%s1 + $0x88] sm:$0xff]
  %v113 = vld [vmem:[%s1 + $0x90] sm:$0xff]
  %v114 = vld [vmem:[%s1 + $0x98] sm:$0xff]
  %v115 = vld [vmem:[%s1 + $0xa0] sm:$0xff]
  %v116 = vld [vmem:[%s1 + $0xa8] sm:$0xff]
  %v117 = vld [vmem:[%s1 + $0xb0] sm:$0xff]
  %v118 = vld [vmem:[%s1 + $0xb8] sm:$0xff]
  %v119 = vld [vmem:[%s1 + $0xc0] sm:$0xff]
  %v120 = vld [vmem:[%s1 + $0xc8] sm:$0xff]
  %v121 = vld [vmem:[%s1 + $0xd0] sm:$0xff]
  %v122 = vld [vmem:[%s1 + $0xd8] sm:$0xff]
  %v123 = vld [vmem:[%s1 + $0xe0] sm:$0xff]
  %v124 = vld [vmem:[%s1 + $0xe8] sm:$0xff]
  %v125 = vld [vmem:[%s1 + $0xf0] sm:$0xff]
  %v126 = vld [vmem:[%s1 + $0xf8] sm:$0xff]
  %v127 = vld [vmem:[%s1 + $0x100] sm:$0xff]
  %v128 = vld [vmem:[%s1 + $0x108] sm:$0xff]
  %v129 = vld [vmem:[%s1 + $0x110] sm:$0xff]
  %v130 = vld [vmem:[%s1 + $0x118] sm:$0xff]
  %v131 = vld [vmem:[%s1 + $0x120] sm:$0xff]
  %v132 = vld [vmem:[%s1 + $0x128] sm:$0xff]
  %v133 = vld [vmem:[%s1 + $0x130] sm:$0xff]
  %v134 = vld [vmem:[%s1 + $0x138] sm:$0xff]
  %v135 = vld [vmem:[%s1 + $0x140] sm:$0xff]
  %v136 = vld [vmem:[%s1 + $0x148] sm:$0xff]
  %v137 = vld [vmem:[%s1 + $0x150] sm:$0xff]
  %v138 = vld [vmem:[%s1 + $0x158] sm:$0xff]
  %v139 = vld [vmem:[%s1 + $0x160] sm:$0xff]
  %v140 = vld [vmem:[%s1 + $0x168] sm:$0xff]
  %v141 = vld [vmem:[%s1 + $0x170] sm:$0xff]
  %v142 = vld [vmem:[%s1 + $0x178] sm:$0xff]
  %v143 = vld [vmem:[%s1 + $0x180] sm:$0xff]
  %v144 = vld [vmem:[%s1 + $0x188] sm:$0xff]
  %v145 = vld [vmem:[%s1 + $0x190] sm:$0xff]
  %v146 = vld [vmem:[%s1 + $0x198] sm:$0xff]
  %v147 = vld [vmem:[%s1 + $0x1a0] sm:$0xff]
  %v148 = vld [vmem:[%s1 + $0x1a8] sm:$0xff]
  %v149 = vld [vmem:[%s1 + $0x1b0] sm:$0xff]
  %v150 = vld [vmem:[%s1 + $0x1b8] sm:$0xff]
  %v151 = vld [vmem:[%s1 + $0x1c0] sm:$0xff]
  %v152 = vld [vmem:[%s1 + $0x1c8] sm:$0xff]
  %v153 = vld [vmem:[%s1 + $0x1d0] sm:$0xff]
  %v154 = vld [vmem:[%s1 + $0x1d8] sm:$0xff]
  %v155 = vld [vmem:[%s1 + $0x1e0] sm:$0xff]
  %v156 = vld [vmem:[%s1 + $0x1e8] sm:$0xff]
  %v157 = vld [vmem:[%s1 + $0x1f0] sm:$0xff]
  %v158 = vld [vmem:[%s1 + $0x1f8] sm:$0xff]
  %v159 = vld [vmem:[%s1 + $0x200] sm:$0xff]
  %v160 = vld [vmem:[%s1 + $0x208] sm:$0xff]
  %v161 = vld [vmem:[%s1 + $0x210] sm:$0xff]
  %v162 = vld [vmem:[%s1 + $0x218] sm:$0xff]
  %v163 = vld [vmem:[%s1 + $0x220] sm:$0xff]
  %v164 = vld [vmem:[%s1 + $0x228] sm:$0xff]
  %v165 = vld [vmem:[%s1 + $0x230] sm:$0xff]
  %v166 = vld [vmem:[%s1 + $0x238] sm:$0xff]
  %v167 = vld [vmem:[%s1 + $0x240] sm:$0xff]
  %v168 = vld [vmem:[%s1 + $0x248] sm:$0xff]
  %v169 = vld [vmem:[%s1 + $0x250] sm:$0xff]
  %v170 = vld [vmem:[%s1 + $0x258] sm:$0xff]
  %v171 = vld [vmem:[%s1 + $0x260] sm:$0xff]
  %v172 = vld [vmem:[%s1 + $0x268] sm:$0xff]
  %v173 = vld [vmem:[%s1 + $0x270] sm:$0xff]
  %v174 = vld [vmem:[%s1 + $0x278] sm:$0xff]
  %v175 = vld [vmem:[%s1 + $0x280] sm:$0xff]
  %v176 = vld [vmem:[%s1 + $0x288] sm:$0xff]
  %v177 = vld [vmem:[%s1 + $0x290] sm:$0xff]
  %v178 = vld [vmem:[%s1 + $0x298] sm:$0xff]
  %v179 = vld [vmem:[%s1 + $0x2a0] sm:$0xff]
  %v180 = vld [vmem:[%s1 + $0x2a8] sm:$0xff]
  %v181 = vld [vmem:[%s1 + $0x2b0] sm:$0xff]
  %v182 = vld [vmem:[%s1 + $0x2b8] sm:$0xff]
  %v183 = vld [vmem:[%s1 + $0x2c0] sm:$0xff]
  %v184 = vld [vmem:[%s1 + $0x2c8] sm:$0xff]
  %v185 = vld [vmem:[%s1 + $0x2d0] sm:$0xff]
  %v186 = vld [vmem:[%s1 + $0x2d8] sm:$0xff]
  %v187 = vld [vmem:[%s1 + $0x2e0] sm:$0xff]
  %v188 = vld [vmem:[%s1 + $0x2e8] sm:$0xff]
  %v189 = vld [vmem:[%s1 + $0x2f0] sm:$0xff]
  %v190 = vld [vmem:[%s1 + $0x2f8] sm:$0xff]
  %v191 = vld [vmem:[%s1 + $0x300] sm:$0xff]
  %v192 = vld [vmem:[%s1 + $0x308] sm:$0xff]
  %v193 = vld [vmem:[%s1 + $0x310] sm:$0xff]
  %v194 = vld [vmem:[%s1 + $0x318] sm:$0xff]
  %v195 = vld [vmem:[%s1 + $0x320] sm:$0xff]
  %v196 = vld [vmem:[%s1 + $0x328] sm:$0xff]
  %v197 = vld [vmem:[%s1 + $0x330] sm:$0xff]
  %v198 = vld [vmem:[%s1 + $0x338] sm:$0xff]
  %v199 = vld [vmem:[%s1 + $0x340] sm:$0xff]
  %v200 = vld [vmem:[%s1 + $0x348] sm:$0xff]
  %v201 = vld [vmem:[%s1 + $0x350] sm:$0xff]
  %v202 = vld [vmem:[%s1 + $0x358] sm:$0xff]
  %v203 = vld [vmem:[%s1 + $0x360] sm:$0xff]
  %v204 = vld [vmem:[%s1 + $0x368] sm:$0xff]
  %v205 = vld [vmem:[%s1 + $0x370] sm:$0xff]
  %v206 = vld [vmem:[%s1 + $0x378] sm:$0xff]
  %v207 = vld [vmem:[%s1 + $0x380] sm:$0xff]
  %v208 = vld [vmem:[%s1 + $0x388] sm:$0xff]
  %v209 = vld [vmem:[%s1 + $0x390] sm:$0xff]
  %v210 = vld [vmem:[%s1 + $0x398] sm:$0xff]
  %v211 = vld [vmem:[%s1 + $0x3a0] sm:$0xff]
  %v212 = vld [vmem:[%s1 + $0x3a8] sm:$0xff]
  %v213 = vld [vmem:[%s1 + $0x3b0] sm:$0xff]
  %v214 = vld [vmem:[%s1 + $0x3b8] sm:$0xff]
  %v215 = vld [vmem:[%s1 + $0x3c0] sm:$0xff]
  %v216 = vld [vmem:[%s1 + $0x3c8] sm:$0xff]
  %v217 = vld [vmem:[%s1 + $0x3d0] sm:$0xff]
  %v218 = vld [vmem:[%s1 + $0x3d8] sm:$0xff]
  %v219 = vld [vmem:[%s1 + $0x3e0] sm:$0xff]
  %v220 = vld [vmem:[%s1 + $0x3e8] sm:$0xff]
  %v221 = vld [vmem:[%s1 + $0x3f0] sm:$0xff]
  %v222 = vld [vmem:[%s1 + $0x3f8] sm:$0xff]
  %v223 = vld [vmem:[%s1 + $0x400] sm:$0xff]
  %v224 = vld [vmem:[%s1 + $0x408] sm:$0xff]
  %v225 = vld [vmem:[%s1 + $0x410] sm:$0xff]
  %v226 = vld [vmem:[%s1 + $0x418] sm:$0xff]
  %v227 = vld [vmem:[%s1 + $0x420] sm:$0xff]
  %v228 = vld [vmem:[%s1 + $0x428] sm:$0xff]
  %v229 = vld [vmem:[%s1 + $0x430] sm:$0xff]
  %v230 = vld [vmem:[%s1 + $0x438] sm:$0xff]
  %v231 = vld [vmem:[%s1 + $0x440] sm:$0xff]
  %v232 = vld [vmem:[%s1 + $0x448] sm:$0xff]
  %v233 = vld [vmem:[%s1 + $0x450] sm:$0xff]
  %v234 = vld [vmem:[%s1 + $0x458] sm:$0xff]
  %v235 = vld [vmem:[%s1 + $0x460] sm:$0xff]
  %v236 = vld [vmem:[%s1 + $0x468] sm:$0xff]
  %v237 = vld [vmem:[%s1 + $0x470] sm:$0xff]
  %v238 = vld [vmem:[%s1 + $0x478] sm:$0xff]
  %v239 = vld [vmem:[%s1 + $0x480] sm:$0xff]
  %v240 = vld [vmem:[%s1 + $0x488] sm:$0xff]
  %v241 = vld [vmem:[%s1 + $0x490] sm:$0xff]
  %v242 = vld [vmem:[%s1 + $0x498] sm:$0xff]
  %v243 = vld [vmem:[%s1 + $0x4a0] sm:$0xff]
  %v244 = vld [vmem:[%s1 + $0x4a8] sm:$0xff]
  %v245 = vld [vmem:[%s1 + $0x4b0] sm:$0xff]
  %v246 = vld [vmem:[%s1 + $0x4b8] sm:$0xff]
  %v247 = vld [vmem:[%s1 + $0x4c0] sm:$0xff]
  %v248 = vld [vmem:[%s1 + $0x4c8] sm:$0xff]
  %v249 = vld [vmem:[%s1 + $0x4d0] sm:$0xff]
  %v250 = vld [vmem:[%s1 + $0x4d8] sm:$0xff]
  %v251 = vld [vmem:[%s1 + $0x4e0] sm:$0xff]
  %v252 = vld [vmem:[%s1 + $0x4e8] sm:$0xff]
  %v253 = vld [vmem:[%s1 + $0x4f0] sm:$0xff]
  %v254 = vld [vmem:[%s1 + $0x4f8] sm:$0xff]
  %v255 = vld [vmem:[%s1 + $0x500] sm:$0xff]
  %v256 = vld [vmem:[%s1 + $0x508] sm:$0xff]
  %v257 = vld [vmem:[%s1 + $0x510] sm:$0xff]
  %v258 = vld [vmem:[%s1 + $0x518] sm:$0xff]
  %v259 = vld [vmem:[%s1 + $0x520] sm:$0xff]
  %v260 = vld [vmem:[%s1 + $0x528] sm:$0xff]
  %v261 = vld [vmem:[%s1 + $0x530] sm:$0xff]
  %v262 = vld [vmem:[%s1 + $0x538] sm:$0xff]
  %v263 = vld [vmem:[%s1 + $0x540] sm:$0xff]
  %v264 = vld [vmem:[%s1 + $0x548] sm:$0xff]
  %v265 = vld [vmem:[%s1 + $0x550] sm:$0xff]
  %v266 = vld [vmem:[%s1 + $0x558] sm:$0xff]
  %v267 = vld [vmem:[%s1 + $0x560] sm:$0xff]
  %v268 = vld [vmem:[%s1 + $0x568] sm:$0xff]
  %v269 = vld [vmem:[%s1 + $0x570] sm:$0xff]
  %v270 = vld [vmem:[%s1 + $0x578] sm:$0xff]
  %v271 = vld [vmem:[%s1 + $0x580] sm:$0xff]
  %v272 = vld [vmem:[%s1 + $0x588] sm:$0xff]
  %v273 = vld [vmem:[%s1 + $0x590] sm:$0xff]
  %v274 = vld [vmem:[%s1 + $0x598] sm:$0xff]
  %v275 = vld [vmem:[%s1 + $0x5a0] sm:$0xff]
  %v276 = vld [vmem:[%s1 + $0x5a8] sm:$0xff]
  %v277 = vld [vmem:[%s1 + $0x5b0] sm:$0xff]
  %v278 = vld [vmem:[%s1 + $0x5b8] sm:$0xff]
  %v279 = vld [vmem:[%s1 + $0x5c0] sm:$0xff]
  %v280 = vld [vmem:[%s1 + $0x5c8] sm:$0xff]
  %v281 = vld [vmem:[%s1 + $0x5d0] sm:$0xff]
  %v282 = vld [vmem:[%s1 + $0x5d8] sm:$0xff]
  %v283 = vld [vmem:[%s1 + $0x5e0] sm:$0xff]
  %v284 = vld [vmem:[%s1 + $0x5e8] sm:$0xff]
  %v285 = vld [vmem:[%s1 + $0x5f0] sm:$0xff]
  %v286 = vld [vmem:[%s1 + $0x5f8] sm:$0xff]
  %v287 = vld [vmem:[%s1 + $0x600] sm:$0xff]
  %v288 = vld [vmem:[%s1 + $0x608] sm:$0xff]
  %v289 = vld [vmem:[%s1 + $0x610] sm:$0xff]
  %v290 = vld [vmem:[%s1 + $0x618] sm:$0xff]
  %v291 = vld [vmem:[%s1 + $0x620] sm:$0xff]
  %v292 = vld [vmem:[%s1 + $0x628] sm:$0xff]
  %v293 = vld [vmem:[%s1 + $0x630] sm:$0xff]
  %v294 = vld [vmem:[%s1 + $0x638] sm:$0xff]
  %v295 = vld [vmem:[%s1 + $0x640] sm:$0xff]
  %v296 = vld [vmem:[%s1 + $0x648] sm:$0xff]
  %v297 = vld [vmem:[%s1 + $0x650] sm:$0xff]
  %v298 = vld [vmem:[%s1 + $0x658] sm:$0xff]
  %v299 = vld [vmem:[%s1 + $0x660] sm:$0xff]
  %v300 = vld [vmem:[%s1 + $0x668] sm:$0xff]
  %v301 = vld [vmem:[%s1 + $0x670] sm:$0xff]
  %v302 = vld [vmem:[%s1 + $0x678] sm:$0xff]
  %v303 = vld [vmem:[%s1 + $0x680] sm:$0xff]
  %v304 = vld [vmem:[%s1 + $0x688] sm:$0xff]
  %v305 = vld [vmem:[%s1 + $0x690] sm:$0xff]
  %v306 = vld [vmem:[%s1 + $0x698] sm:$0xff]
  %v307 = vld [vmem:[%s1 + $0x6a0] sm:$0xff]
  %v308 = vld [vmem:[%s1 + $0x6a8] sm:$0xff]
  %v309 = vld [vmem:[%s1 + $0x6b0] sm:$0xff]
  %v310 = vld [vmem:[%s1 + $0x6b8] sm:$0xff]
  %v311 = vld [vmem:[%s1 + $0x6c0] sm:$0xff]
  %v312 = vld [vmem:[%s1 + $0x6c8] sm:$0xff]
  %v313 = vld [vmem:[%s1 + $0x6d0] sm:$0xff]
  %v314 = vld [vmem:[%s1 + $0x6d8] sm:$0xff]
  %v315 = vld [vmem:[%s1 + $0x6e0] sm:$0xff]
  %v316 = vld [vmem:[%s1 + $0x6e8] sm:$0xff]
  %v317 = vld [vmem:[%s1 + $0x6f0] sm:$0xff]
  %v318 = vld [vmem:[%s1 + $0x6f8] sm:$0xff]
  %v319 = vld [vmem:[%s1 + $0x700] sm:$0xff]
  %v320 = vld [vmem:[%s1 + $0x708] sm:$0xff]
  %v321 = vld [vmem:[%s1 + $0x710] sm:$0xff]
  %v322 = vld [vmem:[%s1 + $0x718] sm:$0xff]
  %v323 = vld [vmem:[%s1 + $0x720] sm:$0xff]
  %v324 = vld [vmem:[%s1 + $0x728] sm:$0xff]
  %v325 = vld [vmem:[%s1 + $0x730] sm:$0xff]
  %v326 = vld [vmem:[%s1 + $0x738] sm:$0xff]
  %v327 = vld [vmem:[%s1 + $0x740] sm:$0xff]
  %v328 = vld [vmem:[%s1 + $0x748] sm:$0xff]
  %v329 = vld [vmem:[%s1 + $0x750] sm:$0xff]
  %v330 = vld [vmem:[%s1 + $0x758] sm:$0xff]
  %v331 = vld [vmem:[%s1 + $0x760] sm:$0xff]
  %v332 = vld [vmem:[%s1 + $0x768] sm:$0xff]
  %v333 = vld [vmem:[%s1 + $0x770] sm:$0xff]
  %v334 = vld [vmem:[%s1 + $0x778] sm:$0xff]
  %v335 = vld [vmem:[%s1 + $0x780] sm:$0xff]
  %v336 = vld [vmem:[%s1 + $0x788] sm:$0xff]
  %v337 = vld [vmem:[%s1 + $0x790] sm:$0xff]
  %v338 = vld [vmem:[%s1 + $0x798] sm:$0xff]
  %v339 = vld [vmem:[%s1 + $0x7a0] sm:$0xff]
  %v340 = vld [vmem:[%s1 + $0x7a8] sm:$0xff]
  %v341 = vld [vmem:[%s1 + $0x7b0] sm:$0xff]
  %v342 = vld [vmem:[%s1 + $0x7b8] sm:$0xff]
  %v343 = vld [vmem:[%s1 + $0x7c0] sm:$0xff]
  %v344 = vld [vmem:[%s1 + $0x7c8] sm:$0xff]
  %v345 = vld [vmem:[%s1 + $0x7d0] sm:$0xff]
  %v346 = vld [vmem:[%s1 + $0x7d8] sm:$0xff]
  %v347 = vld [vmem:[%s1 + $0x7e0] sm:$0xff]
  %v348 = vld [vmem:[%s1 + $0x7e8] sm:$0xff]
  %v349 = vld [vmem:[%s1 + $0x7f0] sm:$0xff]
  %v350 = vld [vmem:[%s1 + $0x7f8] sm:$0xff]
  %v351 = vld [vmem:[%s1 + $0x800] sm:$0xff]
  %v352 = vld [vmem:[%s1 + $0x808] sm:$0xff]
  %v353 = vld [vmem:[%s1 + $0x810] sm:$0xff]
  %v354 = vld [vmem:[%s1 + $0x818] sm:$0xff]
  %v355 = vld [vmem:[%s1 + $0x820] sm:$0xff]
  %v356 = vld [vmem:[%s1 + $0x828] sm:$0xff]
  %v357 = vld [vmem:[%s1 + $0x830] sm:$0xff]
  %v358 = vld [vmem:[%s1 + $0x838] sm:$0xff]
  %v359 = vld [vmem:[%s1 + $0x840] sm:$0xff]
  %v360 = vld [vmem:[%s1 + $0x848] sm:$0xff]
  %v361 = vld [vmem:[%s1 + $0x850] sm:$0xff]
  %v362 = vld [vmem:[%s1 + $0x858] sm:$0xff]
  %v363 = vld [vmem:[%s1 + $0x860] sm:$0xff]
  %v364 = vld [vmem:[%s1 + $0x868] sm:$0xff]
  %v365 = vld [vmem:[%s1 + $0x870] sm:$0xff]
  %v366 = vld [vmem:[%s1 + $0x878] sm:$0xff]
  %v367 = vld [vmem:[%s1 + $0x880] sm:$0xff]
  %v368 = vld [vmem:[%s1 + $0x888] sm:$0xff]
  %v369 = vld [vmem:[%s1 + $0x890] sm:$0xff]
  %v370 = vld [vmem:[%s1 + $0x898] sm:$0xff]
  %v371 = vld [vmem:[%s1 + $0x8a0] sm:$0xff]
  %v372 = vld [vmem:[%s1 + $0x8a8] sm:$0xff]
  %v373 = vld [vmem:[%s1 + $0x8b0] sm:$0xff]
  %v374 = vld [vmem:[%s1 + $0x8b8] sm:$0xff]
  %v375 = vld [vmem:[%s1 + $0x8c0] sm:$0xff]
  %v376 = vld [vmem:[%s1 + $0x8c8] sm:$0xff]
  %v377 = vld [vmem:[%s1 + $0x8d0] sm:$0xff]
  %v378 = vld [vmem:[%s1 + $0x8d8] sm:$0xff]
  %v379 = vld [vmem:[%s1 + $0x8e0] sm:$0xff]
  %v380 = vld [vmem:[%s1 + $0x8e8] sm:$0xff]
  %v381 = vld [vmem:[%s1 + $0x8f0] sm:$0xff]
  %v382 = vld [vmem:[%s1 + $0x8f8] sm:$0xff]
  %v383 = vld [vmem:[%s2] sm:$0xf]
  %v385 = vlaneseq
  %v386 = vshrl.u32 %v385, 7
  %v387 = vsub.s32 0, %v386
  %v388 = vrot.slane %v383, %v387
  %v389 = vlaneseq
  %v390 = vshrl.u32 %v389, 7
  %v391 = vsub.s32 1, %v390
  %v392 = vrot.slane %v383, %v391
  %v393 = vlaneseq
  %v394 = vshrl.u32 %v393, 7
  %v395 = vsub.s32 2, %v394
  %v396 = vrot.slane %v383, %v395
  %v397 = vlaneseq
  %v398 = vshrl.u32 %v397, 7
  %v399 = vsub.s32 3, %v398
  %v400 = vrot.slane %v383, %v399
  %v485 = vunpack.c.l.b16 %v15
  %v486 = vunpack.c.h.b16 %v15
  %v487 = vunpack.c.l.b16 %v16
  %v488 = vunpack.c.h.b16 %v16
  %v489 = vunpack.c.l.b16 %v17
  %v490 = vunpack.c.h.b16 %v17
  %v491 = vunpack.c.l.b16 %v18
  %v492 = vunpack.c.h.b16 %v18
  %v493 = vunpack.c.l.b16 %v19
  %v494 = vunpack.c.l.b16 %v20
  %v495 = vunpack.c.h.b16 %v20
  %v496 = vunpack.c.l.b16 %v21
  %v497 = vunpack.c.h.b16 %v21
  %v498 = vunpack.c.l.b16 %v22
  %v499 = vunpack.c.h.b16 %v22
  %v500 = vunpack.c.l.b16 %v23
  %v501 = vunpack.c.h.b16 %v23
  %v502 = vunpack.c.l.b16 %v24
  %v503 = vunpack.c.l.b16 %v25
  %v504 = vunpack.c.h.b16 %v25
  %v505 = vunpack.c.l.b16 %v26
  %v506 = vunpack.c.h.b16 %v26
  %v507 = vunpack.c.l.b16 %v27
  %v508 = vunpack.c.h.b16 %v27
  %v509 = vunpack.c.l.b16 %v28
  %v510 = vunpack.c.h.b16 %v28
  %v511 = vunpack.c.l.b16 %v29
  %v512 = vunpack.c.l.b16 %v30
  %v513 = vunpack.c.h.b16 %v30
  %v514 = vunpack.c.l.b16 %v31
  %v515 = vunpack.c.h.b16 %v31
  %v516 = vunpack.c.l.b16 %v32
  %v517 = vunpack.c.h.b16 %v32
  %v518 = vunpack.c.l.b16 %v33
  %v519 = vunpack.c.h.b16 %v33
  %v520 = vunpack.c.l.b16 %v34
  %v521 = vunpack.c.l.b16 %v35
  %v522 = vunpack.c.h.b16 %v35
  %v523 = vunpack.c.l.b16 %v36
  %v524 = vunpack.c.h.b16 %v36
  %v525 = vunpack.c.l.b16 %v37
  %v526 = vunpack.c.h.b16 %v37
  %v527 = vunpack.c.l.b16 %v38
  %v528 = vunpack.c.h.b16 %v38
  %v529 = vunpack.c.l.b16 %v39
  %v530 = vunpack.c.l.b16 %v40
  %v531 = vunpack.c.h.b16 %v40
  %v532 = vunpack.c.l.b16 %v41
  %v533 = vunpack.c.h.b16 %v41
  %v534 = vunpack.c.l.b16 %v42
  %v535 = vunpack.c.h.b16 %v42
  %v536 = vunpack.c.l.b16 %v43
  %v537 = vunpack.c.h.b16 %v43
  %v538 = vunpack.c.l.b16 %v44
  %v539 = vunpack.c.l.b16 %v45
  %v540 = vunpack.c.h.b16 %v45
  %v541 = vunpack.c.l.b16 %v46
  %v542 = vunpack.c.h.b16 %v46
  %v543 = vunpack.c.l.b16 %v47
  %v544 = vunpack.c.h.b16 %v47
  %v545 = vunpack.c.l.b16 %v48
  %v546 = vunpack.c.h.b16 %v48
  %v547 = vunpack.c.l.b16 %v49
  %v548 = vunpack.c.l.b16 %v50
  %v549 = vunpack.c.h.b16 %v50
  %v550 = vunpack.c.l.b16 %v51
  %v551 = vunpack.c.h.b16 %v51
  %v552 = vunpack.c.l.b16 %v52
  %v553 = vunpack.c.h.b16 %v52
  %v554 = vunpack.c.l.b16 %v53
  %v555 = vunpack.c.h.b16 %v53
  %v556 = vunpack.c.l.b16 %v54
  %v557 = vunpack.c.l.b16 %v55
  %v558 = vunpack.c.h.b16 %v55
  %v559 = vunpack.c.l.b16 %v56
  %v560 = vunpack.c.h.b16 %v56
  %v561 = vunpack.c.l.b16 %v57
  %v562 = vunpack.c.h.b16 %v57
  %v563 = vunpack.c.l.b16 %v58
  %v564 = vunpack.c.h.b16 %v58
  %v565 = vunpack.c.l.b16 %v59
  %v566 = vunpack.c.l.b16 %v60
  %v567 = vunpack.c.h.b16 %v60
  %v568 = vunpack.c.l.b16 %v61
  %v569 = vunpack.c.h.b16 %v61
  %v570 = vunpack.c.l.b16 %v62
  %v571 = vunpack.c.h.b16 %v62
  %v572 = vunpack.c.l.b16 %v63
  %v573 = vunpack.c.h.b16 %v63
  %v574 = vunpack.c.l.b16 %v64
  %v575 = vunpack.c.l.b16 %v65
  %v576 = vunpack.c.h.b16 %v65
  %v577 = vunpack.c.l.b16 %v66
  %v578 = vunpack.c.h.b16 %v66
  %v579 = vunpack.c.l.b16 %v67
  %v580 = vunpack.c.h.b16 %v67
  %v581 = vunpack.c.l.b16 %v68
  %v582 = vunpack.c.h.b16 %v68
  %v583 = vunpack.c.l.b16 %v69
  %v584 = vunpack.c.l.b16 %v70
  %v585 = vunpack.c.h.b16 %v70
  %v586 = vunpack.c.l.b16 %v71
  %v587 = vunpack.c.h.b16 %v71
  %v588 = vunpack.c.l.b16 %v72
  %v589 = vunpack.c.h.b16 %v72
  %v590 = vunpack.c.l.b16 %v73
  %v591 = vunpack.c.h.b16 %v73
  %v592 = vunpack.c.l.b16 %v74
  %v593 = vunpack.c.l.b16 %v75
  %v594 = vunpack.c.h.b16 %v75
  %v595 = vunpack.c.l.b16 %v76
  %v596 = vunpack.c.h.b16 %v76
  %v597 = vunpack.c.l.b16 %v77
  %v598 = vunpack.c.h.b16 %v77
  %v599 = vunpack.c.l.b16 %v78
  %v600 = vunpack.c.h.b16 %v78
  %v601 = vunpack.c.l.b16 %v79
  %v602 = vunpack.c.l.b16 %v80
  %v603 = vunpack.c.h.b16 %v80
  %v604 = vunpack.c.l.b16 %v81
  %v605 = vunpack.c.h.b16 %v81
  %v606 = vunpack.c.l.b16 %v82
  %v607 = vunpack.c.h.b16 %v82
  %v608 = vunpack.c.l.b16 %v83
  %v609 = vunpack.c.h.b16 %v83
  %v610 = vunpack.c.l.b16 %v84
  %v611 = vunpack.c.l.b16 %v85
  %v612 = vunpack.c.h.b16 %v85
  %v613 = vunpack.c.l.b16 %v86
  %v614 = vunpack.c.h.b16 %v86
  %v615 = vunpack.c.l.b16 %v87
  %v616 = vunpack.c.h.b16 %v87
  %v617 = vunpack.c.l.b16 %v88
  %v618 = vunpack.c.h.b16 %v88
  %v619 = vunpack.c.l.b16 %v89
  %v620 = vunpack.c.l.b16 %v90
  %v621 = vunpack.c.h.b16 %v90
  %v622 = vunpack.c.l.b16 %v91
  %v623 = vunpack.c.h.b16 %v91
  %v624 = vunpack.c.l.b16 %v92
  %v625 = vunpack.c.h.b16 %v92
  %v626 = vunpack.c.l.b16 %v93
  %v627 = vunpack.c.h.b16 %v93
  %v628 = vunpack.c.l.b16 %v94
  %v629 = vpack.c.b16 %v494, %v485
  %v630 = vpack.c.b16 %v495, %v486
  %v631 = vpack.c.b16 %v496, %v487
  %v632 = vpack.c.b16 %v497, %v488
  %v633 = vpack.c.b16 %v498, %v489
  %v634 = vpack.c.b16 %v499, %v490
  %v635 = vpack.c.b16 %v500, %v491
  %v636 = vpack.c.b16 %v501, %v492
  %v637 = vpack.c.b16 %v502, %v493
  %v638 = vpack.c.b16 %v512, %v503
  %v639 = vpack.c.b16 %v513, %v504
  %v640 = vpack.c.b16 %v514, %v505
  %v641 = vpack.c.b16 %v515, %v506
  %v642 = vpack.c.b16 %v516, %v507
  %v643 = vpack.c.b16 %v517, %v508
  %v644 = vpack.c.b16 %v518, %v509
  %v645 = vpack.c.b16 %v519, %v510
  %v646 = vpack.c.b16 %v520, %v511
  %v647 = vpack.c.b16 %v530, %v521
  %v648 = vpack.c.b16 %v531, %v522
  %v649 = vpack.c.b16 %v532, %v523
  %v650 = vpack.c.b16 %v533, %v524
  %v651 = vpack.c.b16 %v534, %v525
  %v652 = vpack.c.b16 %v535, %v526
  %v653 = vpack.c.b16 %v536, %v527
  %v654 = vpack.c.b16 %v537, %v528
  %v655 = vpack.c.b16 %v538, %v529
  %v656 = vpack.c.b16 %v548, %v539
  %v657 = vpack.c.b16 %v549, %v540
  %v658 = vpack.c.b16 %v550, %v541
  %v659 = vpack.c.b16 %v551, %v542
  %v660 = vpack.c.b16 %v552, %v543
  %v661 = vpack.c.b16 %v553, %v544
  %v662 = vpack.c.b16 %v554, %v545
  %v663 = vpack.c.b16 %v555, %v546
  %v664 = vpack.c.b16 %v556, %v547
  %v665 = vpack.c.b16 %v566, %v557
  %v666 = vpack.c.b16 %v567, %v558
  %v667 = vpack.c.b16 %v568, %v559
  %v668 = vpack.c.b16 %v569, %v560
  %v669 = vpack.c.b16 %v570, %v561
  %v670 = vpack.c.b16 %v571, %v562
  %v671 = vpack.c.b16 %v572, %v563
  %v672 = vpack.c.b16 %v573, %v564
  %v673 = vpack.c.b16 %v574, %v565
  %v674 = vpack.c.b16 %v584, %v575
  %v675 = vpack.c.b16 %v585, %v576
  %v676 = vpack.c.b16 %v586, %v577
  %v677 = vpack.c.b16 %v587, %v578
  %v678 = vpack.c.b16 %v588, %v579
  %v679 = vpack.c.b16 %v589, %v580
  %v680 = vpack.c.b16 %v590, %v581
  %v681 = vpack.c.b16 %v591, %v582
  %v682 = vpack.c.b16 %v592, %v583
  %v683 = vpack.c.b16 %v602, %v593
  %v684 = vpack.c.b16 %v603, %v594
  %v685 = vpack.c.b16 %v604, %v595
  %v686 = vpack.c.b16 %v605, %v596
  %v687 = vpack.c.b16 %v606, %v597
  %v688 = vpack.c.b16 %v607, %v598
  %v689 = vpack.c.b16 %v608, %v599
  %v690 = vpack.c.b16 %v609, %v600
  %v691 = vpack.c.b16 %v610, %v601
  %v692 = vpack.c.b16 %v620, %v611
  %v693 = vpack.c.b16 %v621, %v612
  %v694 = vpack.c.b16 %v622, %v613
  %v695 = vpack.c.b16 %v623, %v614
  %v696 = vpack.c.b16 %v624, %v615
  %v697 = vpack.c.b16 %v625, %v616
  %v698 = vpack.c.b16 %v626, %v617
  %v699 = vpack.c.b16 %v627, %v618
  %v700 = vpack.c.b16 %v628, %v619
  %v1061 = vunpack.c.l.b16 %v95
  %v1062 = vunpack.c.h.b16 %v95
  %v1063 = vunpack.c.l.b16 %v96
  %v1064 = vunpack.c.h.b16 %v96
  %v1065 = vunpack.c.l.b16 %v97
  %v1066 = vunpack.c.h.b16 %v97
  %v1067 = vunpack.c.l.b16 %v98
  %v1068 = vunpack.c.h.b16 %v98
  %v1069 = vunpack.c.l.b16 %v99
  %v1070 = vunpack.c.h.b16 %v99
  %v1071 = vunpack.c.l.b16 %v100
  %v1072 = vunpack.c.h.b16 %v100
  %v1073 = vunpack.c.l.b16 %v101
  %v1074 = vunpack.c.h.b16 %v101
  %v1075 = vunpack.c.l.b16 %v102
  %v1076 = vunpack.c.h.b16 %v102
  %v1077 = vunpack.c.l.b16 %v103
  %v1078 = vunpack.c.h.b16 %v103
  %v1079 = vunpack.c.l.b16 %v104
  %v1080 = vunpack.c.h.b16 %v104
  %v1081 = vunpack.c.l.b16 %v105
  %v1082 = vunpack.c.h.b16 %v105
  %v1083 = vunpack.c.l.b16 %v106
  %v1084 = vunpack.c.h.b16 %v106
  %v1085 = vunpack.c.l.b16 %v107
  %v1086 = vunpack.c.h.b16 %v107
  %v1087 = vunpack.c.l.b16 %v108
  %v1088 = vunpack.c.h.b16 %v108
  %v1089 = vunpack.c.l.b16 %v109
  %v1090 = vunpack.c.h.b16 %v109
  %v1091 = vunpack.c.l.b16 %v110
  %v1092 = vunpack.c.h.b16 %v110
  %v1093 = vunpack.c.l.b16 %v111
  %v1094 = vunpack.c.h.b16 %v111
  %v1095 = vunpack.c.l.b16 %v112
  %v1096 = vunpack.c.h.b16 %v112
  %v1097 = vunpack.c.l.b16 %v113
  %v1098 = vunpack.c.h.b16 %v113
  %v1099 = vunpack.c.l.b16 %v114
  %v1100 = vunpack.c.h.b16 %v114
  %v1101 = vunpack.c.l.b16 %v115
  %v1102 = vunpack.c.h.b16 %v115
  %v1103 = vunpack.c.l.b16 %v116
  %v1104 = vunpack.c.h.b16 %v116
  %v1105 = vunpack.c.l.b16 %v117
  %v1106 = vunpack.c.h.b16 %v117
  %v1107 = vunpack.c.l.b16 %v118
  %v1108 = vunpack.c.h.b16 %v118
  %v1109 = vunpack.c.l.b16 %v119
  %v1110 = vunpack.c.h.b16 %v119
  %v1111 = vunpack.c.l.b16 %v120
  %v1112 = vunpack.c.h.b16 %v120
  %v1113 = vunpack.c.l.b16 %v121
  %v1114 = vunpack.c.h.b16 %v121
  %v1115 = vunpack.c.l.b16 %v122
  %v1116 = vunpack.c.h.b16 %v122
  %v1117 = vunpack.c.l.b16 %v123
  %v1118 = vunpack.c.h.b16 %v123
  %v1119 = vunpack.c.l.b16 %v124
  %v1120 = vunpack.c.h.b16 %v124
  %v1121 = vunpack.c.l.b16 %v125
  %v1122 = vunpack.c.h.b16 %v125
  %v1123 = vunpack.c.l.b16 %v126
  %v1124 = vunpack.c.h.b16 %v126
  %v1125 = vunpack.c.l.b16 %v127
  %v1126 = vunpack.c.h.b16 %v127
  %v1127 = vunpack.c.l.b16 %v128
  %v1128 = vunpack.c.h.b16 %v128
  %v1129 = vunpack.c.l.b16 %v129
  %v1130 = vunpack.c.h.b16 %v129
  %v1131 = vunpack.c.l.b16 %v130
  %v1132 = vunpack.c.h.b16 %v130
  %v1133 = vunpack.c.l.b16 %v131
  %v1134 = vunpack.c.h.b16 %v131
  %v1135 = vunpack.c.l.b16 %v132
  %v1136 = vunpack.c.h.b16 %v132
  %v1137 = vunpack.c.l.b16 %v133
  %v1138 = vunpack.c.h.b16 %v133
  %v1139 = vunpack.c.l.b16 %v134
  %v1140 = vunpack.c.h.b16 %v134
  %v1141 = vunpack.c.l.b16 %v135
  %v1142 = vunpack.c.h.b16 %v135
  %v1143 = vunpack.c.l.b16 %v136
  %v1144 = vunpack.c.h.b16 %v136
  %v1145 = vunpack.c.l.b16 %v137
  %v1146 = vunpack.c.h.b16 %v137
  %v1147 = vunpack.c.l.b16 %v138
  %v1148 = vunpack.c.h.b16 %v138
  %v1149 = vunpack.c.l.b16 %v139
  %v1150 = vunpack.c.h.b16 %v139
  %v1151 = vunpack.c.l.b16 %v140
  %v1152 = vunpack.c.h.b16 %v140
  %v1153 = vunpack.c.l.b16 %v141
  %v1154 = vunpack.c.h.b16 %v141
  %v1155 = vunpack.c.l.b16 %v142
  %v1156 = vunpack.c.h.b16 %v142
  %v1157 = vunpack.c.l.b16 %v143
  %v1158 = vunpack.c.h.b16 %v143
  %v1159 = vunpack.c.l.b16 %v144
  %v1160 = vunpack.c.h.b16 %v144
  %v1161 = vunpack.c.l.b16 %v145
  %v1162 = vunpack.c.h.b16 %v145
  %v1163 = vunpack.c.l.b16 %v146
  %v1164 = vunpack.c.h.b16 %v146
  %v1165 = vunpack.c.l.b16 %v147
  %v1166 = vunpack.c.h.b16 %v147
  %v1167 = vunpack.c.l.b16 %v148
  %v1168 = vunpack.c.h.b16 %v148
  %v1169 = vunpack.c.l.b16 %v149
  %v1170 = vunpack.c.h.b16 %v149
  %v1171 = vunpack.c.l.b16 %v150
  %v1172 = vunpack.c.h.b16 %v150
  %v1173 = vunpack.c.l.b16 %v151
  %v1174 = vunpack.c.h.b16 %v151
  %v1175 = vunpack.c.l.b16 %v152
  %v1176 = vunpack.c.h.b16 %v152
  %v1177 = vunpack.c.l.b16 %v153
  %v1178 = vunpack.c.h.b16 %v153
  %v1179 = vunpack.c.l.b16 %v154
  %v1180 = vunpack.c.h.b16 %v154
  %v1181 = vunpack.c.l.b16 %v155
  %v1182 = vunpack.c.h.b16 %v155
  %v1183 = vunpack.c.l.b16 %v156
  %v1184 = vunpack.c.h.b16 %v156
  %v1185 = vunpack.c.l.b16 %v157
  %v1186 = vunpack.c.h.b16 %v157
  %v1187 = vunpack.c.l.b16 %v158
  %v1188 = vunpack.c.h.b16 %v158
  %v1189 = vunpack.c.l.b16 %v159
  %v1190 = vunpack.c.h.b16 %v159
  %v1191 = vunpack.c.l.b16 %v160
  %v1192 = vunpack.c.h.b16 %v160
  %v1193 = vunpack.c.l.b16 %v161
  %v1194 = vunpack.c.h.b16 %v161
  %v1195 = vunpack.c.l.b16 %v162
  %v1196 = vunpack.c.h.b16 %v162
  %v1197 = vunpack.c.l.b16 %v163
  %v1198 = vunpack.c.h.b16 %v163
  %v1199 = vunpack.c.l.b16 %v164
  %v1200 = vunpack.c.h.b16 %v164
  %v1201 = vunpack.c.l.b16 %v165
  %v1202 = vunpack.c.h.b16 %v165
  %v1203 = vunpack.c.l.b16 %v166
  %v1204 = vunpack.c.h.b16 %v166
  %v1205 = vunpack.c.l.b16 %v167
  %v1206 = vunpack.c.h.b16 %v167
  %v1207 = vunpack.c.l.b16 %v168
  %v1208 = vunpack.c.h.b16 %v168
  %v1209 = vunpack.c.l.b16 %v169
  %v1210 = vunpack.c.h.b16 %v169
  %v1211 = vunpack.c.l.b16 %v170
  %v1212 = vunpack.c.h.b16 %v170
  %v1213 = vunpack.c.l.b16 %v171
  %v1214 = vunpack.c.h.b16 %v171
  %v1215 = vunpack.c.l.b16 %v172
  %v1216 = vunpack.c.h.b16 %v172
  %v1217 = vunpack.c.l.b16 %v173
  %v1218 = vunpack.c.h.b16 %v173
  %v1219 = vunpack.c.l.b16 %v174
  %v1220 = vunpack.c.h.b16 %v174
  %v1221 = vunpack.c.l.b16 %v175
  %v1222 = vunpack.c.h.b16 %v175
  %v1223 = vunpack.c.l.b16 %v176
  %v1224 = vunpack.c.h.b16 %v176
  %v1225 = vunpack.c.l.b16 %v177
  %v1226 = vunpack.c.h.b16 %v177
  %v1227 = vunpack.c.l.b16 %v178
  %v1228 = vunpack.c.h.b16 %v178
  %v1229 = vunpack.c.l.b16 %v179
  %v1230 = vunpack.c.h.b16 %v179
  %v1231 = vunpack.c.l.b16 %v180
  %v1232 = vunpack.c.h.b16 %v180
  %v1233 = vunpack.c.l.b16 %v181
  %v1234 = vunpack.c.h.b16 %v181
  %v1235 = vunpack.c.l.b16 %v182
  %v1236 = vunpack.c.h.b16 %v182
  %v1237 = vunpack.c.l.b16 %v183
  %v1238 = vunpack.c.h.b16 %v183
  %v1239 = vunpack.c.l.b16 %v184
  %v1240 = vunpack.c.h.b16 %v184
  %v1241 = vunpack.c.l.b16 %v185
  %v1242 = vunpack.c.h.b16 %v185
  %v1243 = vunpack.c.l.b16 %v186
  %v1244 = vunpack.c.h.b16 %v186
  %v1245 = vunpack.c.l.b16 %v187
  %v1246 = vunpack.c.h.b16 %v187
  %v1247 = vunpack.c.l.b16 %v188
  %v1248 = vunpack.c.h.b16 %v188
  %v1249 = vunpack.c.l.b16 %v189
  %v1250 = vunpack.c.h.b16 %v189
  %v1251 = vunpack.c.l.b16 %v190
  %v1252 = vunpack.c.h.b16 %v190
  %v1253 = vunpack.c.l.b16 %v191
  %v1254 = vunpack.c.h.b16 %v191
  %v1255 = vunpack.c.l.b16 %v192
  %v1256 = vunpack.c.h.b16 %v192
  %v1257 = vunpack.c.l.b16 %v193
  %v1258 = vunpack.c.h.b16 %v193
  %v1259 = vunpack.c.l.b16 %v194
  %v1260 = vunpack.c.h.b16 %v194
  %v1261 = vunpack.c.l.b16 %v195
  %v1262 = vunpack.c.h.b16 %v195
  %v1263 = vunpack.c.l.b16 %v196
  %v1264 = vunpack.c.h.b16 %v196
  %v1265 = vunpack.c.l.b16 %v197
  %v1266 = vunpack.c.h.b16 %v197
  %v1267 = vunpack.c.l.b16 %v198
  %v1268 = vunpack.c.h.b16 %v198
  %v1269 = vunpack.c.l.b16 %v199
  %v1270 = vunpack.c.h.b16 %v199
  %v1271 = vunpack.c.l.b16 %v200
  %v1272 = vunpack.c.h.b16 %v200
  %v1273 = vunpack.c.l.b16 %v201
  %v1274 = vunpack.c.h.b16 %v201
  %v1275 = vunpack.c.l.b16 %v202
  %v1276 = vunpack.c.h.b16 %v202
  %v1277 = vunpack.c.l.b16 %v203
  %v1278 = vunpack.c.h.b16 %v203
  %v1279 = vunpack.c.l.b16 %v204
  %v1280 = vunpack.c.h.b16 %v204
  %v1281 = vunpack.c.l.b16 %v205
  %v1282 = vunpack.c.h.b16 %v205
  %v1283 = vunpack.c.l.b16 %v206
  %v1284 = vunpack.c.h.b16 %v206
  %v1285 = vunpack.c.l.b16 %v207
  %v1286 = vunpack.c.h.b16 %v207
  %v1287 = vunpack.c.l.b16 %v208
  %v1288 = vunpack.c.h.b16 %v208
  %v1289 = vunpack.c.l.b16 %v209
  %v1290 = vunpack.c.h.b16 %v209
  %v1291 = vunpack.c.l.b16 %v210
  %v1292 = vunpack.c.h.b16 %v210
  %v1293 = vunpack.c.l.b16 %v211
  %v1294 = vunpack.c.h.b16 %v211
  %v1295 = vunpack.c.l.b16 %v212
  %v1296 = vunpack.c.h.b16 %v212
  %v1297 = vunpack.c.l.b16 %v213
  %v1298 = vunpack.c.h.b16 %v213
  %v1299 = vunpack.c.l.b16 %v214
  %v1300 = vunpack.c.h.b16 %v214
  %v1301 = vunpack.c.l.b16 %v215
  %v1302 = vunpack.c.h.b16 %v215
  %v1303 = vunpack.c.l.b16 %v216
  %v1304 = vunpack.c.h.b16 %v216
  %v1305 = vunpack.c.l.b16 %v217
  %v1306 = vunpack.c.h.b16 %v217
  %v1307 = vunpack.c.l.b16 %v218
  %v1308 = vunpack.c.h.b16 %v218
  %v1309 = vunpack.c.l.b16 %v219
  %v1310 = vunpack.c.h.b16 %v219
  %v1311 = vunpack.c.l.b16 %v220
  %v1312 = vunpack.c.h.b16 %v220
  %v1313 = vunpack.c.l.b16 %v221
  %v1314 = vunpack.c.h.b16 %v221
  %v1315 = vunpack.c.l.b16 %v222
  %v1316 = vunpack.c.h.b16 %v222
  %v1317 = vunpack.c.l.b16 %v223
  %v1318 = vunpack.c.h.b16 %v223
  %v1319 = vunpack.c.l.b16 %v224
  %v1320 = vunpack.c.h.b16 %v224
  %v1321 = vunpack.c.l.b16 %v225
  %v1322 = vunpack.c.h.b16 %v225
  %v1323 = vunpack.c.l.b16 %v226
  %v1324 = vunpack.c.h.b16 %v226
  %v1325 = vunpack.c.l.b16 %v227
  %v1326 = vunpack.c.h.b16 %v227
  %v1327 = vunpack.c.l.b16 %v228
  %v1328 = vunpack.c.h.b16 %v228
  %v1329 = vunpack.c.l.b16 %v229
  %v1330 = vunpack.c.h.b16 %v229
  %v1331 = vunpack.c.l.b16 %v230
  %v1332 = vunpack.c.h.b16 %v230
  %v1333 = vunpack.c.l.b16 %v231
  %v1334 = vunpack.c.h.b16 %v231
  %v1335 = vunpack.c.l.b16 %v232
  %v1336 = vunpack.c.h.b16 %v232
  %v1337 = vunpack.c.l.b16 %v233
  %v1338 = vunpack.c.h.b16 %v233
  %v1339 = vunpack.c.l.b16 %v234
  %v1340 = vunpack.c.h.b16 %v234
  %v1341 = vunpack.c.l.b16 %v235
  %v1342 = vunpack.c.h.b16 %v235
  %v1343 = vunpack.c.l.b16 %v236
  %v1344 = vunpack.c.h.b16 %v236
  %v1345 = vunpack.c.l.b16 %v237
  %v1346 = vunpack.c.h.b16 %v237
  %v1347 = vunpack.c.l.b16 %v238
  %v1348 = vunpack.c.h.b16 %v238
  %v1349 = vunpack.c.l.b16 %v239
  %v1350 = vunpack.c.h.b16 %v239
  %v1351 = vunpack.c.l.b16 %v240
  %v1352 = vunpack.c.h.b16 %v240
  %v1353 = vunpack.c.l.b16 %v241
  %v1354 = vunpack.c.h.b16 %v241
  %v1355 = vunpack.c.l.b16 %v242
  %v1356 = vunpack.c.h.b16 %v242
  %v1357 = vunpack.c.l.b16 %v243
  %v1358 = vunpack.c.h.b16 %v243
  %v1359 = vunpack.c.l.b16 %v244
  %v1360 = vunpack.c.h.b16 %v244
  %v1361 = vunpack.c.l.b16 %v245
  %v1362 = vunpack.c.h.b16 %v245
  %v1363 = vunpack.c.l.b16 %v246
  %v1364 = vunpack.c.h.b16 %v246
  %v1365 = vunpack.c.l.b16 %v247
  %v1366 = vunpack.c.h.b16 %v247
  %v1367 = vunpack.c.l.b16 %v248
  %v1368 = vunpack.c.h.b16 %v248
  %v1369 = vunpack.c.l.b16 %v249
  %v1370 = vunpack.c.h.b16 %v249
  %v1371 = vunpack.c.l.b16 %v250
  %v1372 = vunpack.c.h.b16 %v250
  %v1373 = vunpack.c.l.b16 %v251
  %v1374 = vunpack.c.h.b16 %v251
  %v1375 = vunpack.c.l.b16 %v252
  %v1376 = vunpack.c.h.b16 %v252
  %v1377 = vunpack.c.l.b16 %v253
  %v1378 = vunpack.c.h.b16 %v253
  %v1379 = vunpack.c.l.b16 %v254
  %v1380 = vunpack.c.h.b16 %v254
  %v1381 = vunpack.c.l.b16 %v255
  %v1382 = vunpack.c.h.b16 %v255
  %v1383 = vunpack.c.l.b16 %v256
  %v1384 = vunpack.c.h.b16 %v256
  %v1385 = vunpack.c.l.b16 %v257
  %v1386 = vunpack.c.h.b16 %v257
  %v1387 = vunpack.c.l.b16 %v258
  %v1388 = vunpack.c.h.b16 %v258
  %v1389 = vunpack.c.l.b16 %v259
  %v1390 = vunpack.c.h.b16 %v259
  %v1391 = vunpack.c.l.b16 %v260
  %v1392 = vunpack.c.h.b16 %v260
  %v1393 = vunpack.c.l.b16 %v261
  %v1394 = vunpack.c.h.b16 %v261
  %v1395 = vunpack.c.l.b16 %v262
  %v1396 = vunpack.c.h.b16 %v262
  %v1397 = vunpack.c.l.b16 %v263
  %v1398 = vunpack.c.h.b16 %v263
  %v1399 = vunpack.c.l.b16 %v264
  %v1400 = vunpack.c.h.b16 %v264
  %v1401 = vunpack.c.l.b16 %v265
  %v1402 = vunpack.c.h.b16 %v265
  %v1403 = vunpack.c.l.b16 %v266
  %v1404 = vunpack.c.h.b16 %v266
  %v1405 = vunpack.c.l.b16 %v267
  %v1406 = vunpack.c.h.b16 %v267
  %v1407 = vunpack.c.l.b16 %v268
  %v1408 = vunpack.c.h.b16 %v268
  %v1409 = vunpack.c.l.b16 %v269
  %v1410 = vunpack.c.h.b16 %v269
  %v1411 = vunpack.c.l.b16 %v270
  %v1412 = vunpack.c.h.b16 %v270
  %v1413 = vunpack.c.l.b16 %v271
  %v1414 = vunpack.c.h.b16 %v271
  %v1415 = vunpack.c.l.b16 %v272
  %v1416 = vunpack.c.h.b16 %v272
  %v1417 = vunpack.c.l.b16 %v273
  %v1418 = vunpack.c.h.b16 %v273
  %v1419 = vunpack.c.l.b16 %v274
  %v1420 = vunpack.c.h.b16 %v274
  %v1421 = vunpack.c.l.b16 %v275
  %v1422 = vunpack.c.h.b16 %v275
  %v1423 = vunpack.c.l.b16 %v276
  %v1424 = vunpack.c.h.b16 %v276
  %v1425 = vunpack.c.l.b16 %v277
  %v1426 = vunpack.c.h.b16 %v277
  %v1427 = vunpack.c.l.b16 %v278
  %v1428 = vunpack.c.h.b16 %v278
  %v1429 = vunpack.c.l.b16 %v279
  %v1430 = vunpack.c.h.b16 %v279
  %v1431 = vunpack.c.l.b16 %v280
  %v1432 = vunpack.c.h.b16 %v280
  %v1433 = vunpack.c.l.b16 %v281
  %v1434 = vunpack.c.h.b16 %v281
  %v1435 = vunpack.c.l.b16 %v282
  %v1436 = vunpack.c.h.b16 %v282
  %v1437 = vunpack.c.l.b16 %v283
  %v1438 = vunpack.c.h.b16 %v283
  %v1439 = vunpack.c.l.b16 %v284
  %v1440 = vunpack.c.h.b16 %v284
  %v1441 = vunpack.c.l.b16 %v285
  %v1442 = vunpack.c.h.b16 %v285
  %v1443 = vunpack.c.l.b16 %v286
  %v1444 = vunpack.c.h.b16 %v286
  %v1445 = vunpack.c.l.b16 %v287
  %v1446 = vunpack.c.h.b16 %v287
  %v1447 = vunpack.c.l.b16 %v288
  %v1448 = vunpack.c.h.b16 %v288
  %v1449 = vunpack.c.l.b16 %v289
  %v1450 = vunpack.c.h.b16 %v289
  %v1451 = vunpack.c.l.b16 %v290
  %v1452 = vunpack.c.h.b16 %v290
  %v1453 = vunpack.c.l.b16 %v291
  %v1454 = vunpack.c.h.b16 %v291
  %v1455 = vunpack.c.l.b16 %v292
  %v1456 = vunpack.c.h.b16 %v292
  %v1457 = vunpack.c.l.b16 %v293
  %v1458 = vunpack.c.h.b16 %v293
  %v1459 = vunpack.c.l.b16 %v294
  %v1460 = vunpack.c.h.b16 %v294
  %v1461 = vunpack.c.l.b16 %v295
  %v1462 = vunpack.c.h.b16 %v295
  %v1463 = vunpack.c.l.b16 %v296
  %v1464 = vunpack.c.h.b16 %v296
  %v1465 = vunpack.c.l.b16 %v297
  %v1466 = vunpack.c.h.b16 %v297
  %v1467 = vunpack.c.l.b16 %v298
  %v1468 = vunpack.c.h.b16 %v298
  %v1469 = vunpack.c.l.b16 %v299
  %v1470 = vunpack.c.h.b16 %v299
  %v1471 = vunpack.c.l.b16 %v300
  %v1472 = vunpack.c.h.b16 %v300
  %v1473 = vunpack.c.l.b16 %v301
  %v1474 = vunpack.c.h.b16 %v301
  %v1475 = vunpack.c.l.b16 %v302
  %v1476 = vunpack.c.h.b16 %v302
  %v1477 = vunpack.c.l.b16 %v303
  %v1478 = vunpack.c.h.b16 %v303
  %v1479 = vunpack.c.l.b16 %v304
  %v1480 = vunpack.c.h.b16 %v304
  %v1481 = vunpack.c.l.b16 %v305
  %v1482 = vunpack.c.h.b16 %v305
  %v1483 = vunpack.c.l.b16 %v306
  %v1484 = vunpack.c.h.b16 %v306
  %v1485 = vunpack.c.l.b16 %v307
  %v1486 = vunpack.c.h.b16 %v307
  %v1487 = vunpack.c.l.b16 %v308
  %v1488 = vunpack.c.h.b16 %v308
  %v1489 = vunpack.c.l.b16 %v309
  %v1490 = vunpack.c.h.b16 %v309
  %v1491 = vunpack.c.l.b16 %v310
  %v1492 = vunpack.c.h.b16 %v310
  %v1493 = vunpack.c.l.b16 %v311
  %v1494 = vunpack.c.h.b16 %v311
  %v1495 = vunpack.c.l.b16 %v312
  %v1496 = vunpack.c.h.b16 %v312
  %v1497 = vunpack.c.l.b16 %v313
  %v1498 = vunpack.c.h.b16 %v313
  %v1499 = vunpack.c.l.b16 %v314
  %v1500 = vunpack.c.h.b16 %v314
  %v1501 = vunpack.c.l.b16 %v315
  %v1502 = vunpack.c.h.b16 %v315
  %v1503 = vunpack.c.l.b16 %v316
  %v1504 = vunpack.c.h.b16 %v316
  %v1505 = vunpack.c.l.b16 %v317
  %v1506 = vunpack.c.h.b16 %v317
  %v1507 = vunpack.c.l.b16 %v318
  %v1508 = vunpack.c.h.b16 %v318
  %v1509 = vunpack.c.l.b16 %v319
  %v1510 = vunpack.c.h.b16 %v319
  %v1511 = vunpack.c.l.b16 %v320
  %v1512 = vunpack.c.h.b16 %v320
  %v1513 = vunpack.c.l.b16 %v321
  %v1514 = vunpack.c.h.b16 %v321
  %v1515 = vunpack.c.l.b16 %v322
  %v1516 = vunpack.c.h.b16 %v322
  %v1517 = vunpack.c.l.b16 %v323
  %v1518 = vunpack.c.h.b16 %v323
  %v1519 = vunpack.c.l.b16 %v324
  %v1520 = vunpack.c.h.b16 %v324
  %v1521 = vunpack.c.l.b16 %v325
  %v1522 = vunpack.c.h.b16 %v325
  %v1523 = vunpack.c.l.b16 %v326
  %v1524 = vunpack.c.h.b16 %v326
  %v1525 = vunpack.c.l.b16 %v327
  %v1526 = vunpack.c.h.b16 %v327
  %v1527 = vunpack.c.l.b16 %v328
  %v1528 = vunpack.c.h.b16 %v328
  %v1529 = vunpack.c.l.b16 %v329
  %v1530 = vunpack.c.h.b16 %v329
  %v1531 = vunpack.c.l.b16 %v330
  %v1532 = vunpack.c.h.b16 %v330
  %v1533 = vunpack.c.l.b16 %v331
  %v1534 = vunpack.c.h.b16 %v331
  %v1535 = vunpack.c.l.b16 %v332
  %v1536 = vunpack.c.h.b16 %v332
  %v1537 = vunpack.c.l.b16 %v333
  %v1538 = vunpack.c.h.b16 %v333
  %v1539 = vunpack.c.l.b16 %v334
  %v1540 = vunpack.c.h.b16 %v334
  %v1541 = vunpack.c.l.b16 %v335
  %v1542 = vunpack.c.h.b16 %v335
  %v1543 = vunpack.c.l.b16 %v336
  %v1544 = vunpack.c.h.b16 %v336
  %v1545 = vunpack.c.l.b16 %v337
  %v1546 = vunpack.c.h.b16 %v337
  %v1547 = vunpack.c.l.b16 %v338
  %v1548 = vunpack.c.h.b16 %v338
  %v1549 = vunpack.c.l.b16 %v339
  %v1550 = vunpack.c.h.b16 %v339
  %v1551 = vunpack.c.l.b16 %v340
  %v1552 = vunpack.c.h.b16 %v340
  %v1553 = vunpack.c.l.b16 %v341
  %v1554 = vunpack.c.h.b16 %v341
  %v1555 = vunpack.c.l.b16 %v342
  %v1556 = vunpack.c.h.b16 %v342
  %v1557 = vunpack.c.l.b16 %v343
  %v1558 = vunpack.c.h.b16 %v343
  %v1559 = vunpack.c.l.b16 %v344
  %v1560 = vunpack.c.h.b16 %v344
  %v1561 = vunpack.c.l.b16 %v345
  %v1562 = vunpack.c.h.b16 %v345
  %v1563 = vunpack.c.l.b16 %v346
  %v1564 = vunpack.c.h.b16 %v346
  %v1565 = vunpack.c.l.b16 %v347
  %v1566 = vunpack.c.h.b16 %v347
  %v1567 = vunpack.c.l.b16 %v348
  %v1568 = vunpack.c.h.b16 %v348
  %v1569 = vunpack.c.l.b16 %v349
  %v1570 = vunpack.c.h.b16 %v349
  %v1571 = vunpack.c.l.b16 %v350
  %v1572 = vunpack.c.h.b16 %v350
  %v1573 = vunpack.c.l.b16 %v351
  %v1574 = vunpack.c.h.b16 %v351
  %v1575 = vunpack.c.l.b16 %v352
  %v1576 = vunpack.c.h.b16 %v352
  %v1577 = vunpack.c.l.b16 %v353
  %v1578 = vunpack.c.h.b16 %v353
  %v1579 = vunpack.c.l.b16 %v354
  %v1580 = vunpack.c.h.b16 %v354
  %v1581 = vunpack.c.l.b16 %v355
  %v1582 = vunpack.c.h.b16 %v355
  %v1583 = vunpack.c.l.b16 %v356
  %v1584 = vunpack.c.h.b16 %v356
  %v1585 = vunpack.c.l.b16 %v357
  %v1586 = vunpack.c.h.b16 %v357
  %v1587 = vunpack.c.l.b16 %v358
  %v1588 = vunpack.c.h.b16 %v358
  %v1589 = vunpack.c.l.b16 %v359
  %v1590 = vunpack.c.h.b16 %v359
  %v1591 = vunpack.c.l.b16 %v360
  %v1592 = vunpack.c.h.b16 %v360
  %v1593 = vunpack.c.l.b16 %v361
  %v1594 = vunpack.c.h.b16 %v361
  %v1595 = vunpack.c.l.b16 %v362
  %v1596 = vunpack.c.h.b16 %v362
  %v1597 = vunpack.c.l.b16 %v363
  %v1598 = vunpack.c.h.b16 %v363
  %v1599 = vunpack.c.l.b16 %v364
  %v1600 = vunpack.c.h.b16 %v364
  %v1601 = vunpack.c.l.b16 %v365
  %v1602 = vunpack.c.h.b16 %v365
  %v1603 = vunpack.c.l.b16 %v366
  %v1604 = vunpack.c.h.b16 %v366
  %v1605 = vunpack.c.l.b16 %v367
  %v1606 = vunpack.c.h.b16 %v367
  %v1607 = vunpack.c.l.b16 %v368
  %v1608 = vunpack.c.h.b16 %v368
  %v1609 = vunpack.c.l.b16 %v369
  %v1610 = vunpack.c.h.b16 %v369
  %v1611 = vunpack.c.l.b16 %v370
  %v1612 = vunpack.c.h.b16 %v370
  %v1613 = vunpack.c.l.b16 %v371
  %v1614 = vunpack.c.h.b16 %v371
  %v1615 = vunpack.c.l.b16 %v372
  %v1616 = vunpack.c.h.b16 %v372
  %v1617 = vunpack.c.l.b16 %v373
  %v1618 = vunpack.c.h.b16 %v373
  %v1619 = vunpack.c.l.b16 %v374
  %v1620 = vunpack.c.h.b16 %v374
  %v1621 = vunpack.c.l.b16 %v375
  %v1622 = vunpack.c.h.b16 %v375
  %v1623 = vunpack.c.l.b16 %v376
  %v1624 = vunpack.c.h.b16 %v376
  %v1625 = vunpack.c.l.b16 %v377
  %v1626 = vunpack.c.h.b16 %v377
  %v1627 = vunpack.c.l.b16 %v378
  %v1628 = vunpack.c.h.b16 %v378
  %v1629 = vunpack.c.l.b16 %v379
  %v1630 = vunpack.c.h.b16 %v379
  %v1631 = vunpack.c.l.b16 %v380
  %v1632 = vunpack.c.h.b16 %v380
  %v1633 = vunpack.c.l.b16 %v381
  %v1634 = vunpack.c.h.b16 %v381
  %v1635 = vunpack.c.l.b16 %v382
  %v1636 = vunpack.c.h.b16 %v382
  %v1637 = vpack.c.b16 %v1065, %v1061
  %v1638 = vpack.c.b16 %v1066, %v1062
  %v1639 = vpack.c.b16 %v1067, %v1063
  %v1640 = vpack.c.b16 %v1068, %v1064
  %v1641 = vpack.c.b16 %v1073, %v1069
  %v1642 = vpack.c.b16 %v1074, %v1070
  %v1643 = vpack.c.b16 %v1075, %v1071
  %v1644 = vpack.c.b16 %v1076, %v1072
  %v1645 = vpack.c.b16 %v1081, %v1077
  %v1646 = vpack.c.b16 %v1082, %v1078
  %v1647 = vpack.c.b16 %v1083, %v1079
  %v1648 = vpack.c.b16 %v1084, %v1080
  %v1649 = vpack.c.b16 %v1089, %v1085
  %v1650 = vpack.c.b16 %v1090, %v1086
  %v1651 = vpack.c.b16 %v1091, %v1087
  %v1652 = vpack.c.b16 %v1092, %v1088
  %v1653 = vpack.c.b16 %v1097, %v1093
  %v1654 = vpack.c.b16 %v1098, %v1094
  %v1655 = vpack.c.b16 %v1099, %v1095
  %v1656 = vpack.c.b16 %v1100, %v1096
  %v1657 = vpack.c.b16 %v1105, %v1101
  %v1658 = vpack.c.b16 %v1106, %v1102
  %v1659 = vpack.c.b16 %v1107, %v1103
  %v1660 = vpack.c.b16 %v1108, %v1104
  %v1661 = vpack.c.b16 %v1113, %v1109
  %v1662 = vpack.c.b16 %v1114, %v1110
  %v1663 = vpack.c.b16 %v1115, %v1111
  %v1664 = vpack.c.b16 %v1116, %v1112
  %v1665 = vpack.c.b16 %v1121, %v1117
  %v1666 = vpack.c.b16 %v1122, %v1118
  %v1667 = vpack.c.b16 %v1123, %v1119
  %v1668 = vpack.c.b16 %v1124, %v1120
  %v1669 = vpack.c.b16 %v1129, %v1125
  %v1670 = vpack.c.b16 %v1130, %v1126
  %v1671 = vpack.c.b16 %v1131, %v1127
  %v1672 = vpack.c.b16 %v1132, %v1128
  %v1673 = vpack.c.b16 %v1137, %v1133
  %v1674 = vpack.c.b16 %v1138, %v1134
  %v1675 = vpack.c.b16 %v1139, %v1135
  %v1676 = vpack.c.b16 %v1140, %v1136
  %v1677 = vpack.c.b16 %v1145, %v1141
  %v1678 = vpack.c.b16 %v1146, %v1142
  %v1679 = vpack.c.b16 %v1147, %v1143
  %v1680 = vpack.c.b16 %v1148, %v1144
  %v1681 = vpack.c.b16 %v1153, %v1149
  %v1682 = vpack.c.b16 %v1154, %v1150
  %v1683 = vpack.c.b16 %v1155, %v1151
  %v1684 = vpack.c.b16 %v1156, %v1152
  %v1685 = vpack.c.b16 %v1161, %v1157
  %v1686 = vpack.c.b16 %v1162, %v1158
  %v1687 = vpack.c.b16 %v1163, %v1159
  %v1688 = vpack.c.b16 %v1164, %v1160
  %v1689 = vpack.c.b16 %v1169, %v1165
  %v1690 = vpack.c.b16 %v1170, %v1166
  %v1691 = vpack.c.b16 %v1171, %v1167
  %v1692 = vpack.c.b16 %v1172, %v1168
  %v1693 = vpack.c.b16 %v1177, %v1173
  %v1694 = vpack.c.b16 %v1178, %v1174
  %v1695 = vpack.c.b16 %v1179, %v1175
  %v1696 = vpack.c.b16 %v1180, %v1176
  %v1697 = vpack.c.b16 %v1185, %v1181
  %v1698 = vpack.c.b16 %v1186, %v1182
  %v1699 = vpack.c.b16 %v1187, %v1183
  %v1700 = vpack.c.b16 %v1188, %v1184
  %v1701 = vpack.c.b16 %v1193, %v1189
  %v1702 = vpack.c.b16 %v1194, %v1190
  %v1703 = vpack.c.b16 %v1195, %v1191
  %v1704 = vpack.c.b16 %v1196, %v1192
  %v1705 = vpack.c.b16 %v1201, %v1197
  %v1706 = vpack.c.b16 %v1202, %v1198
  %v1707 = vpack.c.b16 %v1203, %v1199
  %v1708 = vpack.c.b16 %v1204, %v1200
  %v1709 = vpack.c.b16 %v1209, %v1205
  %v1710 = vpack.c.b16 %v1210, %v1206
  %v1711 = vpack.c.b16 %v1211, %v1207
  %v1712 = vpack.c.b16 %v1212, %v1208
  %v1713 = vpack.c.b16 %v1217, %v1213
  %v1714 = vpack.c.b16 %v1218, %v1214
  %v1715 = vpack.c.b16 %v1219, %v1215
  %v1716 = vpack.c.b16 %v1220, %v1216
  %v1717 = vpack.c.b16 %v1225, %v1221
  %v1718 = vpack.c.b16 %v1226, %v1222
  %v1719 = vpack.c.b16 %v1227, %v1223
  %v1720 = vpack.c.b16 %v1228, %v1224
  %v1721 = vpack.c.b16 %v1233, %v1229
  %v1722 = vpack.c.b16 %v1234, %v1230
  %v1723 = vpack.c.b16 %v1235, %v1231
  %v1724 = vpack.c.b16 %v1236, %v1232
  %v1725 = vpack.c.b16 %v1241, %v1237
  %v1726 = vpack.c.b16 %v1242, %v1238
  %v1727 = vpack.c.b16 %v1243, %v1239
  %v1728 = vpack.c.b16 %v1244, %v1240
  %v1729 = vpack.c.b16 %v1249, %v1245
  %v1730 = vpack.c.b16 %v1250, %v1246
  %v1731 = vpack.c.b16 %v1251, %v1247
  %v1732 = vpack.c.b16 %v1252, %v1248
  %v1733 = vpack.c.b16 %v1257, %v1253
  %v1734 = vpack.c.b16 %v1258, %v1254
  %v1735 = vpack.c.b16 %v1259, %v1255
  %v1736 = vpack.c.b16 %v1260, %v1256
  %v1737 = vpack.c.b16 %v1265, %v1261
  %v1738 = vpack.c.b16 %v1266, %v1262
  %v1739 = vpack.c.b16 %v1267, %v1263
  %v1740 = vpack.c.b16 %v1268, %v1264
  %v1741 = vpack.c.b16 %v1273, %v1269
  %v1742 = vpack.c.b16 %v1274, %v1270
  %v1743 = vpack.c.b16 %v1275, %v1271
  %v1744 = vpack.c.b16 %v1276, %v1272
  %v1745 = vpack.c.b16 %v1281, %v1277
  %v1746 = vpack.c.b16 %v1282, %v1278
  %v1747 = vpack.c.b16 %v1283, %v1279
  %v1748 = vpack.c.b16 %v1284, %v1280
  %v1749 = vpack.c.b16 %v1289, %v1285
  %v1750 = vpack.c.b16 %v1290, %v1286
  %v1751 = vpack.c.b16 %v1291, %v1287
  %v1752 = vpack.c.b16 %v1292, %v1288
  %v1753 = vpack.c.b16 %v1297, %v1293
  %v1754 = vpack.c.b16 %v1298, %v1294
  %v1755 = vpack.c.b16 %v1299, %v1295
  %v1756 = vpack.c.b16 %v1300, %v1296
  %v1757 = vpack.c.b16 %v1305, %v1301
  %v1758 = vpack.c.b16 %v1306, %v1302
  %v1759 = vpack.c.b16 %v1307, %v1303
  %v1760 = vpack.c.b16 %v1308, %v1304
  %v1761 = vpack.c.b16 %v1313, %v1309
  %v1762 = vpack.c.b16 %v1314, %v1310
  %v1763 = vpack.c.b16 %v1315, %v1311
  %v1764 = vpack.c.b16 %v1316, %v1312
  %v1765 = vpack.c.b16 %v1321, %v1317
  %v1766 = vpack.c.b16 %v1322, %v1318
  %v1767 = vpack.c.b16 %v1323, %v1319
  %v1768 = vpack.c.b16 %v1324, %v1320
  %v1769 = vpack.c.b16 %v1329, %v1325
  %v1770 = vpack.c.b16 %v1330, %v1326
  %v1771 = vpack.c.b16 %v1331, %v1327
  %v1772 = vpack.c.b16 %v1332, %v1328
  %v1773 = vpack.c.b16 %v1337, %v1333
  %v1774 = vpack.c.b16 %v1338, %v1334
  %v1775 = vpack.c.b16 %v1339, %v1335
  %v1776 = vpack.c.b16 %v1340, %v1336
  %v1777 = vpack.c.b16 %v1345, %v1341
  %v1778 = vpack.c.b16 %v1346, %v1342
  %v1779 = vpack.c.b16 %v1347, %v1343
  %v1780 = vpack.c.b16 %v1348, %v1344
  %v1781 = vpack.c.b16 %v1353, %v1349
  %v1782 = vpack.c.b16 %v1354, %v1350
  %v1783 = vpack.c.b16 %v1355, %v1351
  %v1784 = vpack.c.b16 %v1356, %v1352
  %v1785 = vpack.c.b16 %v1361, %v1357
  %v1786 = vpack.c.b16 %v1362, %v1358
  %v1787 = vpack.c.b16 %v1363, %v1359
  %v1788 = vpack.c.b16 %v1364, %v1360
  %v1789 = vpack.c.b16 %v1369, %v1365
  %v1790 = vpack.c.b16 %v1370, %v1366
  %v1791 = vpack.c.b16 %v1371, %v1367
  %v1792 = vpack.c.b16 %v1372, %v1368
  %v1793 = vpack.c.b16 %v1377, %v1373
  %v1794 = vpack.c.b16 %v1378, %v1374
  %v1795 = vpack.c.b16 %v1379, %v1375
  %v1796 = vpack.c.b16 %v1380, %v1376
  %v1797 = vpack.c.b16 %v1385, %v1381
  %v1798 = vpack.c.b16 %v1386, %v1382
  %v1799 = vpack.c.b16 %v1387, %v1383
  %v1800 = vpack.c.b16 %v1388, %v1384
  %v1801 = vpack.c.b16 %v1393, %v1389
  %v1802 = vpack.c.b16 %v1394, %v1390
  %v1803 = vpack.c.b16 %v1395, %v1391
  %v1804 = vpack.c.b16 %v1396, %v1392
  %v1805 = vpack.c.b16 %v1401, %v1397
  %v1806 = vpack.c.b16 %v1402, %v1398
  %v1807 = vpack.c.b16 %v1403, %v1399
  %v1808 = vpack.c.b16 %v1404, %v1400
  %v1809 = vpack.c.b16 %v1409, %v1405
  %v1810 = vpack.c.b16 %v1410, %v1406
  %v1811 = vpack.c.b16 %v1411, %v1407
  %v1812 = vpack.c.b16 %v1412, %v1408
  %v1813 = vpack.c.b16 %v1417, %v1413
  %v1814 = vpack.c.b16 %v1418, %v1414
  %v1815 = vpack.c.b16 %v1419, %v1415
  %v1816 = vpack.c.b16 %v1420, %v1416
  %v1817 = vpack.c.b16 %v1425, %v1421
  %v1818 = vpack.c.b16 %v1426, %v1422
  %v1819 = vpack.c.b16 %v1427, %v1423
  %v1820 = vpack.c.b16 %v1428, %v1424
  %v1821 = vpack.c.b16 %v1433, %v1429
  %v1822 = vpack.c.b16 %v1434, %v1430
  %v1823 = vpack.c.b16 %v1435, %v1431
  %v1824 = vpack.c.b16 %v1436, %v1432
  %v1825 = vpack.c.b16 %v1441, %v1437
  %v1826 = vpack.c.b16 %v1442, %v1438
  %v1827 = vpack.c.b16 %v1443, %v1439
  %v1828 = vpack.c.b16 %v1444, %v1440
  %v1829 = vpack.c.b16 %v1449, %v1445
  %v1830 = vpack.c.b16 %v1450, %v1446
  %v1831 = vpack.c.b16 %v1451, %v1447
  %v1832 = vpack.c.b16 %v1452, %v1448
  %v1833 = vpack.c.b16 %v1457, %v1453
  %v1834 = vpack.c.b16 %v1458, %v1454
  %v1835 = vpack.c.b16 %v1459, %v1455
  %v1836 = vpack.c.b16 %v1460, %v1456
  %v1837 = vpack.c.b16 %v1465, %v1461
  %v1838 = vpack.c.b16 %v1466, %v1462
  %v1839 = vpack.c.b16 %v1467, %v1463
  %v1840 = vpack.c.b16 %v1468, %v1464
  %v1841 = vpack.c.b16 %v1473, %v1469
  %v1842 = vpack.c.b16 %v1474, %v1470
  %v1843 = vpack.c.b16 %v1475, %v1471
  %v1844 = vpack.c.b16 %v1476, %v1472
  %v1845 = vpack.c.b16 %v1481, %v1477
  %v1846 = vpack.c.b16 %v1482, %v1478
  %v1847 = vpack.c.b16 %v1483, %v1479
  %v1848 = vpack.c.b16 %v1484, %v1480
  %v1849 = vpack.c.b16 %v1489, %v1485
  %v1850 = vpack.c.b16 %v1490, %v1486
  %v1851 = vpack.c.b16 %v1491, %v1487
  %v1852 = vpack.c.b16 %v1492, %v1488
  %v1853 = vpack.c.b16 %v1497, %v1493
  %v1854 = vpack.c.b16 %v1498, %v1494
  %v1855 = vpack.c.b16 %v1499, %v1495
  %v1856 = vpack.c.b16 %v1500, %v1496
  %v1857 = vpack.c.b16 %v1505, %v1501
  %v1858 = vpack.c.b16 %v1506, %v1502
  %v1859 = vpack.c.b16 %v1507, %v1503
  %v1860 = vpack.c.b16 %v1508, %v1504
  %v1861 = vpack.c.b16 %v1513, %v1509
  %v1862 = vpack.c.b16 %v1514, %v1510
  %v1863 = vpack.c.b16 %v1515, %v1511
  %v1864 = vpack.c.b16 %v1516, %v1512
  %v1865 = vpack.c.b16 %v1521, %v1517
  %v1866 = vpack.c.b16 %v1522, %v1518
  %v1867 = vpack.c.b16 %v1523, %v1519
  %v1868 = vpack.c.b16 %v1524, %v1520
  %v1869 = vpack.c.b16 %v1529, %v1525
  %v1870 = vpack.c.b16 %v1530, %v1526
  %v1871 = vpack.c.b16 %v1531, %v1527
  %v1872 = vpack.c.b16 %v1532, %v1528
  %v1873 = vpack.c.b16 %v1537, %v1533
  %v1874 = vpack.c.b16 %v1538, %v1534
  %v1875 = vpack.c.b16 %v1539, %v1535
  %v1876 = vpack.c.b16 %v1540, %v1536
  %v1877 = vpack.c.b16 %v1545, %v1541
  %v1878 = vpack.c.b16 %v1546, %v1542
  %v1879 = vpack.c.b16 %v1547, %v1543
  %v1880 = vpack.c.b16 %v1548, %v1544
  %v1881 = vpack.c.b16 %v1553, %v1549
  %v1882 = vpack.c.b16 %v1554, %v1550
  %v1883 = vpack.c.b16 %v1555, %v1551
  %v1884 = vpack.c.b16 %v1556, %v1552
  %v1885 = vpack.c.b16 %v1561, %v1557
  %v1886 = vpack.c.b16 %v1562, %v1558
  %v1887 = vpack.c.b16 %v1563, %v1559
  %v1888 = vpack.c.b16 %v1564, %v1560
  %v1889 = vpack.c.b16 %v1569, %v1565
  %v1890 = vpack.c.b16 %v1570, %v1566
  %v1891 = vpack.c.b16 %v1571, %v1567
  %v1892 = vpack.c.b16 %v1572, %v1568
  %v1893 = vpack.c.b16 %v1577, %v1573
  %v1894 = vpack.c.b16 %v1578, %v1574
  %v1895 = vpack.c.b16 %v1579, %v1575
  %v1896 = vpack.c.b16 %v1580, %v1576
  %v1897 = vpack.c.b16 %v1585, %v1581
  %v1898 = vpack.c.b16 %v1586, %v1582
  %v1899 = vpack.c.b16 %v1587, %v1583
  %v1900 = vpack.c.b16 %v1588, %v1584
  %v1901 = vpack.c.b16 %v1593, %v1589
  %v1902 = vpack.c.b16 %v1594, %v1590
  %v1903 = vpack.c.b16 %v1595, %v1591
  %v1904 = vpack.c.b16 %v1596, %v1592
  %v1905 = vpack.c.b16 %v1601, %v1597
  %v1906 = vpack.c.b16 %v1602, %v1598
  %v1907 = vpack.c.b16 %v1603, %v1599
  %v1908 = vpack.c.b16 %v1604, %v1600
  %v1909 = vpack.c.b16 %v1609, %v1605
  %v1910 = vpack.c.b16 %v1610, %v1606
  %v1911 = vpack.c.b16 %v1611, %v1607
  %v1912 = vpack.c.b16 %v1612, %v1608
  %v1913 = vpack.c.b16 %v1617, %v1613
  %v1914 = vpack.c.b16 %v1618, %v1614
  %v1915 = vpack.c.b16 %v1619, %v1615
  %v1916 = vpack.c.b16 %v1620, %v1616
  %v1917 = vpack.c.b16 %v1625, %v1621
  %v1918 = vpack.c.b16 %v1626, %v1622
  %v1919 = vpack.c.b16 %v1627, %v1623
  %v1920 = vpack.c.b16 %v1628, %v1624
  %v1921 = vpack.c.b16 %v1633, %v1629
  %v1922 = vpack.c.b16 %v1634, %v1630
  %v1923 = vpack.c.b16 %v1635, %v1631
  %v1924 = vpack.c.b16 %v1636, %v1632
  %2213 = vmatprep.subr.bf16.mxu0 %v1638
  %2214 = vmatpush1.bf16.msra.mxu0 %v1637
  %2215 = vmatprep.subr.bf16.mxu0 %v1642
  %2216 = vmatpush1.bf16.msra.mxu0 %v1641
  %2217 = vmatprep.subr.bf16.mxu0 %v1646
  %2218 = vmatpush1.bf16.msra.mxu0 %v1645
  %2219 = vmatprep.subr.bf16.mxu0 %v1650
  %2220 = vmatpush1.bf16.msra.mxu0 %v1649
  %2221 = vmatprep.subr.bf16.mxu0 %v1654
  %2222 = vmatpush1.bf16.msra.mxu0 %v1653
  %2223 = vmatprep.subr.bf16.mxu0 %v1658
  %2224 = vmatpush1.bf16.msra.mxu0 %v1657
  %2225 = vmatprep.subr.bf16.mxu0 %v1662
  %2226 = vmatpush1.bf16.msra.mxu0 %v1661
  %2227 = vmatprep.subr.bf16.mxu0 %v1666
  %2228 = vmatpush1.bf16.msra.mxu0 %v1665
  %2229 = vmatprep.subr.bf16.mxu0 %v1670
  %2230 = vmatpush1.bf16.msra.mxu0 %v1669
  %2231 = vmatprep.subr.bf16.mxu0 %v1674
  %2232 = vmatpush1.bf16.msra.mxu0 %v1673
  %2233 = vmatprep.subr.bf16.mxu0 %v1678
  %2234 = vmatpush1.bf16.msra.mxu0 %v1677
  %2235 = vmatprep.subr.bf16.mxu0 %v1682
  %2236 = vmatpush1.bf16.msra.mxu0 %v1681
  %2237 = vmatprep.subr.bf16.mxu0 %v1686
  %2238 = vmatpush1.bf16.msra.mxu0 %v1685
  %2239 = vmatprep.subr.bf16.mxu0 %v1690
  %2240 = vmatpush1.bf16.msra.mxu0 %v1689
  %2241 = vmatprep.subr.bf16.mxu0 %v1694
  %2242 = vmatpush1.bf16.msra.mxu0 %v1693
  %2243 = vmatprep.subr.bf16.mxu0 %v1698
  %2244 = vmatpush1.bf16.msra.mxu0 %v1697
  %2245 = vmatprep.mubr.bf16.mxu0 %v630
  %2246 = vmatmul.mubr.bf16.gmra.mrb[0].mxu0 %v629
  %v2247 = vpop.f32.mrb[0].mxu0
  %v2248 = vadd.f32 %v388, %v2247
  %v2249 = vpop.f32.mrb[0].mxu0
  %v2250 = vadd.f32 %v392, %v2249
  %v2251 = vpop.f32.mrb[0].mxu0
  %v2252 = vadd.f32 %v388, %v2251
  %v2253 = vpop.f32.mrb[0].mxu0
  %v2254 = vadd.f32 %v392, %v2253
  %2255 = vmatprep.mubr.bf16.mxu0 %v639
  %2256 = vmatmul.mubr.bf16.gmra.mrb[0].mxu0 %v638
  %v2257 = vpop.f32.mrb[0].mxu0
  %v2258 = vadd.f32 %v388, %v2257
  %v2259 = vpop.f32.mrb[0].mxu0
  %v2260 = vadd.f32 %v392, %v2259
  %v2261 = vpop.f32.mrb[0].mxu0
  %v2262 = vadd.f32 %v388, %v2261
  %v2263 = vpop.f32.mrb[0].mxu0
  %v2264 = vadd.f32 %v392, %v2263
  %2265 = vmatprep.mubr.bf16.mxu0 %v648
  %2266 = vmatmul.mubr.bf16.gmra.mrb[0].mxu0 %v647
  %v2267 = vpop.f32.mrb[0].mxu0
  %v2268 = vadd.f32 %v388, %v2267
  %v2269 = vpop.f32.mrb[0].mxu0
  %v2270 = vadd.f32 %v392, %v2269
  %v2271 = vpop.f32.mrb[0].mxu0
  %v2272 = vadd.f32 %v388, %v2271
  %v2273 = vpop.f32.mrb[0].mxu0
  %v2274 = vadd.f32 %v392, %v2273
  %2275 = vmatprep.mubr.bf16.mxu0 %v657
  %2276 = vmatmul.mubr.bf16.gmra.mrb[0].mxu0 %v656
  %v2277 = vpop.f32.mrb[0].mxu0
  %v2278 = vadd.f32 %v388, %v2277
  %v2279 = vpop.f32.mrb[0].mxu0
  %v2280 = vadd.f32 %v392, %v2279
  %v2281 = vpop.f32.mrb[0].mxu0
  %v2282 = vadd.f32 %v388, %v2281
  %v2283 = vpop.f32.mrb[0].mxu0
  %v2284 = vadd.f32 %v392, %v2283
  %2285 = vmatprep.mubr.bf16.mxu0 %v666
  %2286 = vmatmul.mubr.bf16.gmra.mrb[0].mxu0 %v665
  %v2287 = vpop.f32.mrb[0].mxu0
  %v2288 = vadd.f32 %v388, %v2287
  %v2289 = vpop.f32.mrb[0].mxu0
  %v2290 = vadd.f32 %v392, %v2289
  %v2291 = vpop.f32.mrb[0].mxu0
  %v2292 = vadd.f32 %v388, %v2291
  %v2293 = vpop.f32.mrb[0].mxu0
  %v2294 = vadd.f32 %v392, %v2293
  %2295 = vmatprep.mubr.bf16.mxu0 %v675
  %2296 = vmatmul.mubr.bf16.gmra.mrb[0].mxu0 %v674
  %v2297 = vpop.f32.mrb[0].mxu0
  %v2298 = vadd.f32 %v388, %v2297
  %v2299 = vpop.f32.mrb[0].mxu0
  %v2300 = vadd.f32 %v392, %v2299
  %v2301 = vpop.f32.mrb[0].mxu0
  %v2302 = vadd.f32 %v388, %v2301
  %v2303 = vpop.f32.mrb[0].mxu0
  %v2304 = vadd.f32 %v392, %v2303
  %2305 = vmatprep.mubr.bf16.mxu0 %v684
  %2306 = vmatmul.mubr.bf16.gmra.mrb[0].mxu0 %v683
  %v2307 = vpop.f32.mrb[0].mxu0
  %v2308 = vadd.f32 %v388, %v2307
  %v2309 = vpop.f32.mrb[0].mxu0
  %v2310 = vadd.f32 %v392, %v2309
  %v2311 = vpop.f32.mrb[0].mxu0
  %v2312 = vadd.f32 %v388, %v2311
  %v2313 = vpop.f32.mrb[0].mxu0
  %v2314 = vadd.f32 %v392, %v2313
  %2315 = vmatprep.mubr.bf16.mxu0 %v693
  %2316 = vmatmul.mubr.bf16.gmra.mrb[0].mxu0 %v692
  %v2317 = vpop.f32.mrb[0].mxu0
  %v2318 = vadd.f32 %v388, %v2317
  %v2319 = vpop.f32.mrb[0].mxu0
  %v2320 = vadd.f32 %v392, %v2319
  %v2321 = vpop.f32.mrb[0].mxu0
  %v2322 = vadd.f32 %v388, %v2321
  %v2323 = vpop.f32.mrb[0].mxu0
  %v2324 = vadd.f32 %v392, %v2323
  %2325 = vdwg.mxu0
  %2326 = vmatprep.subr.bf16.mxu0 %v1702
  %2327 = vmatpush1.bf16.msra.mxu0 %v1701
  %2328 = vmatprep.subr.bf16.mxu0 %v1706
  %2329 = vmatpush1.bf16.msra.mxu0 %v1705
  %2330 = vmatprep.subr.bf16.mxu0 %v1710
  %2331 = vmatpush1.bf16.msra.mxu0 %v1709
  %2332 = vmatprep.subr.bf16.mxu0 %v1714
  %2333 = vmatpush1.bf16.msra.mxu0 %v1713
  %2334 = vmatprep.subr.bf16.mxu0 %v1718
  %2335 = vmatpush1.bf16.msra.mxu0 %v1717
  %2336 = vmatprep.subr.bf16.mxu0 %v1722
  %2337 = vmatpush1.bf16.msra.mxu0 %v1721
  %2338 = vmatprep.subr.bf16.mxu0 %v1726
  %2339 = vmatpush1.bf16.msra.mxu0 %v1725
  %2340 = vmatprep.subr.bf16.mxu0 %v1730
  %2341 = vmatpush1.bf16.msra.mxu0 %v1729
  %2342 = vmatprep.subr.bf16.mxu0 %v1734
  %2343 = vmatpush1.bf16.msra.mxu0 %v1733
  %2344 = vmatprep.subr.bf16.mxu0 %v1738
  %2345 = vmatpush1.bf16.msra.mxu0 %v1737
  %2346 = vmatprep.subr.bf16.mxu0 %v1742
  %2347 = vmatpush1.bf16.msra.mxu0 %v1741
  %2348 = vmatprep.subr.bf16.mxu0 %v1746
  %2349 = vmatpush1.bf16.msra.mxu0 %v1745
  %2350 = vmatprep.subr.bf16.mxu0 %v1750
  %2351 = vmatpush1.bf16.msra.mxu0 %v1749
  %2352 = vmatprep.subr.bf16.mxu0 %v1754
  %2353 = vmatpush1.bf16.msra.mxu0 %v1753
  %2354 = vmatprep.subr.bf16.mxu0 %v1758
  %2355 = vmatpush1.bf16.msra.mxu0 %v1757
  %2356 = vmatprep.subr.bf16.mxu0 %v1762
  %2357 = vmatpush1.bf16.msra.mxu0 %v1761
  %2358 = vmatprep.mubr.bf16.mxu0 %v632
  %2359 = vmatmul.mubr.bf16.gmra.mrb[0].mxu0 %v631
  %v2360 = vpop.f32.mrb[0].mxu0
  %v2361 = vadd.f32 %v2248, %v2360
  %v2362 = vpop.f32.mrb[0].mxu0
  %v2363 = vadd.f32 %v2250, %v2362
  %v2364 = vpop.f32.mrb[0].mxu0
  %v2365 = vadd.f32 %v2252, %v2364
  %v2366 = vpop.f32.mrb[0].mxu0
  %v2367 = vadd.f32 %v2254, %v2366
  %2368 = vmatprep.mubr.bf16.mxu0 %v641
  %2369 = vmatmul.mubr.bf16.gmra.mrb[0].mxu0 %v640
  %v2370 = vpop.f32.mrb[0].mxu0
  %v2371 = vadd.f32 %v2258, %v2370
  %v2372 = vpop.f32.mrb[0].mxu0
  %v2373 = vadd.f32 %v2260, %v2372
  %v2374 = vpop.f32.mrb[0].mxu0
  %v2375 = vadd.f32 %v2262, %v2374
  %v2376 = vpop.f32.mrb[0].mxu0
  %v2377 = vadd.f32 %v2264, %v2376
  %2378 = vmatprep.mubr.bf16.mxu0 %v650
  %2379 = vmatmul.mubr.bf16.gmra.mrb[0].mxu0 %v649
  %v2380 = vpop.f32.mrb[0].mxu0
  %v2381 = vadd.f32 %v2268, %v2380
  %v2382 = vpop.f32.mrb[0].mxu0
  %v2383 = vadd.f32 %v2270, %v2382
  %v2384 = vpop.f32.mrb[0].mxu0
  %v2385 = vadd.f32 %v2272, %v2384
  %v2386 = vpop.f32.mrb[0].mxu0
  %v2387 = vadd.f32 %v2274, %v2386
  %2388 = vmatprep.mubr.bf16.mxu0 %v659
  %2389 = vmatmul.mubr.bf16.gmra.mrb[0].mxu0 %v658
  %v2390 = vpop.f32.mrb[0].mxu0
  %v2391 = vadd.f32 %v2278, %v2390
  %v2392 = vpop.f32.mrb[0].mxu0
  %v2393 = vadd.f32 %v2280, %v2392
  %v2394 = vpop.f32.mrb[0].mxu0
  %v2395 = vadd.f32 %v2282, %v2394
  %v2396 = vpop.f32.mrb[0].mxu0
  %v2397 = vadd.f32 %v2284, %v2396
  %2398 = vmatprep.mubr.bf16.mxu0 %v668
  %2399 = vmatmul.mubr.bf16.gmra.mrb[0].mxu0 %v667
  %v2400 = vpop.f32.mrb[0].mxu0
  %v2401 = vadd.f32 %v2288, %v2400
  %v2402 = vpop.f32.mrb[0].mxu0
  %v2403 = vadd.f32 %v2290, %v2402
  %v2404 = vpop.f32.mrb[0].mxu0
  %v2405 = vadd.f32 %v2292, %v2404
  %v2406 = vpop.f32.mrb[0].mxu0
  %v2407 = vadd.f32 %v2294, %v2406
  %2408 = vmatprep.mubr.bf16.mxu0 %v677
  %2409 = vmatmul.mubr.bf16.gmra.mrb[0].mxu0 %v676
  %v2410 = vpop.f32.mrb[0].mxu0
  %v2411 = vadd.f32 %v2298, %v2410
  %v2412 = vpop.f32.mrb[0].mxu0
  %v2413 = vadd.f32 %v2300, %v2412
  %v2414 = vpop.f32.mrb[0].mxu0
  %v2415 = vadd.f32 %v2302, %v2414
  %v2416 = vpop.f32.mrb[0].mxu0
  %v2417 = vadd.f32 %v2304, %v2416
  %2418 = vmatprep.mubr.bf16.mxu0 %v686
  %2419 = vmatmul.mubr.bf16.gmra.mrb[0].mxu0 %v685
  %v2420 = vpop.f32.mrb[0].mxu0
  %v2421 = vadd.f32 %v2308, %v2420
  %v2422 = vpop.f32.mrb[0].mxu0
  %v2423 = vadd.f32 %v2310, %v2422
  %v2424 = vpop.f32.mrb[0].mxu0
  %v2425 = vadd.f32 %v2312, %v2424
  %v2426 = vpop.f32.mrb[0].mxu0
  %v2427 = vadd.f32 %v2314, %v2426
  %2428 = vmatprep.mubr.bf16.mxu0 %v695
  %2429 = vmatmul.mubr.bf16.gmra.mrb[0].mxu0 %v694
  %v2430 = vpop.f32.mrb[0].mxu0
  %v2431 = vadd.f32 %v2318, %v2430
  %v2432 = vpop.f32.mrb[0].mxu0
  %v2433 = vadd.f32 %v2320, %v2432
  %v2434 = vpop.f32.mrb[0].mxu0
  %v2435 = vadd.f32 %v2322, %v2434
  %v2436 = vpop.f32.mrb[0].mxu0
  %v2437 = vadd.f32 %v2324, %v2436
  %2438 = vdwg.mxu0
  %2439 = vmatprep.subr.bf16.mxu0 %v1766
  %2440 = vmatpush1.bf16.msra.mxu0 %v1765
  %2441 = vmatprep.subr.bf16.mxu0 %v1770
  %2442 = vmatpush1.bf16.msra.mxu0 %v1769
  %2443 = vmatprep.subr.bf16.mxu0 %v1774
  %2444 = vmatpush1.bf16.msra.mxu0 %v1773
  %2445 = vmatprep.subr.bf16.mxu0 %v1778
  %2446 = vmatpush1.bf16.msra.mxu0 %v1777
  %2447 = vmatprep.subr.bf16.mxu0 %v1782
  %2448 = vmatpush1.bf16.msra.mxu0 %v1781
  %2449 = vmatprep.subr.bf16.mxu0 %v1786
  %2450 = vmatpush1.bf16.msra.mxu0 %v1785
  %2451 = vmatprep.subr.bf16.mxu0 %v1790
  %2452 = vmatpush1.bf16.msra.mxu0 %v1789
  %2453 = vmatprep.subr.bf16.mxu0 %v1794
  %2454 = vmatpush1.bf16.msra.mxu0 %v1793
  %2455 = vmatprep.subr.bf16.mxu0 %v1798
  %2456 = vmatpush1.bf16.msra.mxu0 %v1797
  %2457 = vmatprep.subr.bf16.mxu0 %v1802
  %2458 = vmatpush1.bf16.msra.mxu0 %v1801
  %2459 = vmatprep.subr.bf16.mxu0 %v1806
  %2460 = vmatpush1.bf16.msra.mxu0 %v1805
  %2461 = vmatprep.subr.bf16.mxu0 %v1810
  %2462 = vmatpush1.bf16.msra.mxu0 %v1809
  %2463 = vmatprep.subr.bf16.mxu0 %v1814
  %2464 = vmatpush1.bf16.msra.mxu0 %v1813
  %2465 = vmatprep.subr.bf16.mxu0 %v1818
  %2466 = vmatpush1.bf16.msra.mxu0 %v1817
  %2467 = vmatprep.subr.bf16.mxu0 %v1822
  %2468 = vmatpush1.bf16.msra.mxu0 %v1821
  %2469 = vmatprep.subr.bf16.mxu0 %v1826
  %2470 = vmatpush1.bf16.msra.mxu0 %v1825
  %2471 = vmatprep.mubr.bf16.mxu0 %v634
  %2472 = vmatmul.mubr.bf16.gmra.mrb[0].mxu0 %v633
  %v2473 = vpop.f32.mrb[0].mxu0
  %v2474 = vadd.f32 %v2361, %v2473
  %v2475 = vpop.f32.mrb[0].mxu0
  %v2476 = vadd.f32 %v2363, %v2475
  %v2477 = vpop.f32.mrb[0].mxu0
  %v2478 = vadd.f32 %v2365, %v2477
  %v2479 = vpop.f32.mrb[0].mxu0
  %v2480 = vadd.f32 %v2367, %v2479
  %2481 = vmatprep.mubr.bf16.mxu0 %v643
  %2482 = vmatmul.mubr.bf16.gmra.mrb[0].mxu0 %v642
  %v2483 = vpop.f32.mrb[0].mxu0
  %v2484 = vadd.f32 %v2371, %v2483
  %v2485 = vpop.f32.mrb[0].mxu0
  %v2486 = vadd.f32 %v2373, %v2485
  %v2487 = vpop.f32.mrb[0].mxu0
  %v2488 = vadd.f32 %v2375, %v2487
  %v2489 = vpop.f32.mrb[0].mxu0
  %v2490 = vadd.f32 %v2377, %v2489
  %2491 = vmatprep.mubr.bf16.mxu0 %v652
  %2492 = vmatmul.mubr.bf16.gmra.mrb[0].mxu0 %v651
  %v2493 = vpop.f32.mrb[0].mxu0
  %v2494 = vadd.f32 %v2381, %v2493
  %v2495 = vpop.f32.mrb[0].mxu0
  %v2496 = vadd.f32 %v2383, %v2495
  %v2497 = vpop.f32.mrb[0].mxu0
  %v2498 = vadd.f32 %v2385, %v2497
  %v2499 = vpop.f32.mrb[0].mxu0
  %v2500 = vadd.f32 %v2387, %v2499
  %2501 = vmatprep.mubr.bf16.mxu0 %v661
  %2502 = vmatmul.mubr.bf16.gmra.mrb[0].mxu0 %v660
  %v2503 = vpop.f32.mrb[0].mxu0
  %v2504 = vadd.f32 %v2391, %v2503
  %v2505 = vpop.f32.mrb[0].mxu0
  %v2506 = vadd.f32 %v2393, %v2505
  %v2507 = vpop.f32.mrb[0].mxu0
  %v2508 = vadd.f32 %v2395, %v2507
  %v2509 = vpop.f32.mrb[0].mxu0
  %v2510 = vadd.f32 %v2397, %v2509
  %2511 = vmatprep.mubr.bf16.mxu0 %v670
  %2512 = vmatmul.mubr.bf16.gmra.mrb[0].mxu0 %v669
  %v2513 = vpop.f32.mrb[0].mxu0
  %v2514 = vadd.f32 %v2401, %v2513
  %v2515 = vpop.f32.mrb[0].mxu0
  %v2516 = vadd.f32 %v2403, %v2515
  %v2517 = vpop.f32.mrb[0].mxu0
  %v2518 = vadd.f32 %v2405, %v2517
  %v2519 = vpop.f32.mrb[0].mxu0
  %v2520 = vadd.f32 %v2407, %v2519
  %2521 = vmatprep.mubr.bf16.mxu0 %v679
  %2522 = vmatmul.mubr.bf16.gmra.mrb[0].mxu0 %v678
  %v2523 = vpop.f32.mrb[0].mxu0
  %v2524 = vadd.f32 %v2411, %v2523
  %v2525 = vpop.f32.mrb[0].mxu0
  %v2526 = vadd.f32 %v2413, %v2525
  %v2527 = vpop.f32.mrb[0].mxu0
  %v2528 = vadd.f32 %v2415, %v2527
  %v2529 = vpop.f32.mrb[0].mxu0
  %v2530 = vadd.f32 %v2417, %v2529
  %2531 = vmatprep.mubr.bf16.mxu0 %v688
  %2532 = vmatmul.mubr.bf16.gmra.mrb[0].mxu0 %v687
  %v2533 = vpop.f32.mrb[0].mxu0
  %v2534 = vadd.f32 %v2421, %v2533
  %v2535 = vpop.f32.mrb[0].mxu0
  %v2536 = vadd.f32 %v2423, %v2535
  %v2537 = vpop.f32.mrb[0].mxu0
  %v2538 = vadd.f32 %v2425, %v2537
  %v2539 = vpop.f32.mrb[0].mxu0
  %v2540 = vadd.f32 %v2427, %v2539
  %2541 = vmatprep.mubr.bf16.mxu0 %v697
  %2542 = vmatmul.mubr.bf16.gmra.mrb[0].mxu0 %v696
  %v2543 = vpop.f32.mrb[0].mxu0
  %v2544 = vadd.f32 %v2431, %v2543
  %v2545 = vpop.f32.mrb[0].mxu0
  %v2546 = vadd.f32 %v2433, %v2545
  %v2547 = vpop.f32.mrb[0].mxu0
  %v2548 = vadd.f32 %v2435, %v2547
  %v2549 = vpop.f32.mrb[0].mxu0
  %v2550 = vadd.f32 %v2437, %v2549
  %2551 = vdwg.mxu0
  %2552 = vmatprep.subr.bf16.mxu0 %v1830
  %2553 = vmatpush1.bf16.msra.mxu0 %v1829
  %2554 = vmatprep.subr.bf16.mxu0 %v1834
  %2555 = vmatpush1.bf16.msra.mxu0 %v1833
  %2556 = vmatprep.subr.bf16.mxu0 %v1838
  %2557 = vmatpush1.bf16.msra.mxu0 %v1837
  %2558 = vmatprep.subr.bf16.mxu0 %v1842
  %2559 = vmatpush1.bf16.msra.mxu0 %v1841
  %2560 = vmatprep.subr.bf16.mxu0 %v1846
  %2561 = vmatpush1.bf16.msra.mxu0 %v1845
  %2562 = vmatprep.subr.bf16.mxu0 %v1850
  %2563 = vmatpush1.bf16.msra.mxu0 %v1849
  %2564 = vmatprep.subr.bf16.mxu0 %v1854
  %2565 = vmatpush1.bf16.msra.mxu0 %v1853
  %2566 = vmatprep.subr.bf16.mxu0 %v1858
  %2567 = vmatpush1.bf16.msra.mxu0 %v1857
  %2568 = vmatprep.subr.bf16.mxu0 %v1862
  %2569 = vmatpush1.bf16.msra.mxu0 %v1861
  %2570 = vmatprep.subr.bf16.mxu0 %v1866
  %2571 = vmatpush1.bf16.msra.mxu0 %v1865
  %2572 = vmatprep.subr.bf16.mxu0 %v1870
  %2573 = vmatpush1.bf16.msra.mxu0 %v1869
  %2574 = vmatprep.subr.bf16.mxu0 %v1874
  %2575 = vmatpush1.bf16.msra.mxu0 %v1873
  %2576 = vmatprep.subr.bf16.mxu0 %v1878
  %2577 = vmatpush1.bf16.msra.mxu0 %v1877
  %2578 = vmatprep.subr.bf16.mxu0 %v1882
  %2579 = vmatpush1.bf16.msra.mxu0 %v1881
  %2580 = vmatprep.subr.bf16.mxu0 %v1886
  %2581 = vmatpush1.bf16.msra.mxu0 %v1885
  %2582 = vmatprep.subr.bf16.mxu0 %v1890
  %2583 = vmatpush1.bf16.msra.mxu0 %v1889
  %2584 = vmatprep.mubr.bf16.mxu0 %v636
  %2585 = vmatmul.mubr.bf16.gmra.mrb[0].mxu0 %v635
  %v2586 = vpop.f32.mrb[0].mxu0
  %v2587 = vadd.f32 %v2474, %v2586
  %v2588 = vpop.f32.mrb[0].mxu0
  %v2589 = vadd.f32 %v2476, %v2588
  %v2590 = vpop.f32.mrb[0].mxu0
  %v2591 = vadd.f32 %v2478, %v2590
  %v2592 = vpop.f32.mrb[0].mxu0
  %v2593 = vadd.f32 %v2480, %v2592
  %2594 = vmatprep.mubr.bf16.mxu0 %v645
  %2595 = vmatmul.mubr.bf16.gmra.mrb[0].mxu0 %v644
  %v2596 = vpop.f32.mrb[0].mxu0
  %v2597 = vadd.f32 %v2484, %v2596
  %v2598 = vpop.f32.mrb[0].mxu0
  %v2599 = vadd.f32 %v2486, %v2598
  %v2600 = vpop.f32.mrb[0].mxu0
  %v2601 = vadd.f32 %v2488, %v2600
  %v2602 = vpop.f32.mrb[0].mxu0
  %v2603 = vadd.f32 %v2490, %v2602
  %2604 = vmatprep.mubr.bf16.mxu0 %v654
  %2605 = vmatmul.mubr.bf16.gmra.mrb[0].mxu0 %v653
  %v2606 = vpop.f32.mrb[0].mxu0
  %v2607 = vadd.f32 %v2494, %v2606
  %v2608 = vpop.f32.mrb[0].mxu0
  %v2609 = vadd.f32 %v2496, %v2608
  %v2610 = vpop.f32.mrb[0].mxu0
  %v2611 = vadd.f32 %v2498, %v2610
  %v2612 = vpop.f32.mrb[0].mxu0
  %v2613 = vadd.f32 %v2500, %v2612
  %2614 = vmatprep.mubr.bf16.mxu0 %v663
  %2615 = vmatmul.mubr.bf16.gmra.mrb[0].mxu0 %v662
  %v2616 = vpop.f32.mrb[0].mxu0
  %v2617 = vadd.f32 %v2504, %v2616
  %v2618 = vpop.f32.mrb[0].mxu0
  %v2619 = vadd.f32 %v2506, %v2618
  %v2620 = vpop.f32.mrb[0].mxu0
  %v2621 = vadd.f32 %v2508, %v2620
  %v2622 = vpop.f32.mrb[0].mxu0
  %v2623 = vadd.f32 %v2510, %v2622
  %2624 = vmatprep.mubr.bf16.mxu0 %v672
  %2625 = vmatmul.mubr.bf16.gmra.mrb[0].mxu0 %v671
  %v2626 = vpop.f32.mrb[0].mxu0
  %v2627 = vadd.f32 %v2514, %v2626
  %v2628 = vpop.f32.mrb[0].mxu0
  %v2629 = vadd.f32 %v2516, %v2628
  %v2630 = vpop.f32.mrb[0].mxu0
  %v2631 = vadd.f32 %v2518, %v2630
  %v2632 = vpop.f32.mrb[0].mxu0
  %v2633 = vadd.f32 %v2520, %v2632
  %2634 = vmatprep.mubr.bf16.mxu0 %v681
  %2635 = vmatmul.mubr.bf16.gmra.mrb[0].mxu0 %v680
  %v2636 = vpop.f32.mrb[0].mxu0
  %v2637 = vadd.f32 %v2524, %v2636
  %v2638 = vpop.f32.mrb[0].mxu0
  %v2639 = vadd.f32 %v2526, %v2638
  %v2640 = vpop.f32.mrb[0].mxu0
  %v2641 = vadd.f32 %v2528, %v2640
  %v2642 = vpop.f32.mrb[0].mxu0
  %v2643 = vadd.f32 %v2530, %v2642
  %2644 = vmatprep.mubr.bf16.mxu0 %v690
  %2645 = vmatmul.mubr.bf16.gmra.mrb[0].mxu0 %v689
  %v2646 = vpop.f32.mrb[0].mxu0
  %v2647 = vadd.f32 %v2534, %v2646
  %v2648 = vpop.f32.mrb[0].mxu0
  %v2649 = vadd.f32 %v2536, %v2648
  %v2650 = vpop.f32.mrb[0].mxu0
  %v2651 = vadd.f32 %v2538, %v2650
  %v2652 = vpop.f32.mrb[0].mxu0
  %v2653 = vadd.f32 %v2540, %v2652
  %2654 = vmatprep.mubr.bf16.mxu0 %v699
  %2655 = vmatmul.mubr.bf16.gmra.mrb[0].mxu0 %v698
  %v2656 = vpop.f32.mrb[0].mxu0
  %v2657 = vadd.f32 %v2544, %v2656
  %v2658 = vpop.f32.mrb[0].mxu0
  %v2659 = vadd.f32 %v2546, %v2658
  %v2660 = vpop.f32.mrb[0].mxu0
  %v2661 = vadd.f32 %v2548, %v2660
  %v2662 = vpop.f32.mrb[0].mxu0
  %v2663 = vadd.f32 %v2550, %v2662
  %2664 = vdwg.mxu0
  %2665 = vmatprep.subr.bf16.mxu0 %v1894
  %2666 = vmatpush1.bf16.msra.mxu0 %v1893
  %2667 = vmatprep.subr.bf16.mxu0 %v1898
  %2668 = vmatpush1.bf16.msra.mxu0 %v1897
  %2669 = vmatprep.subr.bf16.mxu0 %v1902
  %2670 = vmatpush1.bf16.msra.mxu0 %v1901
  %2671 = vmatprep.subr.bf16.mxu0 %v1906
  %2672 = vmatpush1.bf16.msra.mxu0 %v1905
  %2673 = vmatprep.subr.bf16.mxu0 %v1910
  %2674 = vmatpush1.bf16.msra.mxu0 %v1909
  %2675 = vmatprep.subr.bf16.mxu0 %v1914
  %2676 = vmatpush1.bf16.msra.mxu0 %v1913
  %2677 = vmatprep.subr.bf16.mxu0 %v1918
  %2678 = vmatpush1.bf16.msra.mxu0 %v1917
  %2679 = vmatprep.subr.bf16.mxu0 %v1922
  %2680 = vmatpush1.bf16.msra.mxu0 %v1921
  %2681 = vmatprep.subr.bf16.mxu0 0
  %2682 = vmatpush1.bf16.msra.mxu0 0
  %2683 = vmatprep.subr.bf16.mxu0 0
  %2684 = vmatpush1.bf16.msra.mxu0 0
  %2685 = vmatprep.subr.bf16.mxu0 0
  %2686 = vmatpush1.bf16.msra.mxu0 0
  %2687 = vmatprep.subr.bf16.mxu0 0
  %2688 = vmatpush1.bf16.msra.mxu0 0
  %2689 = vmatprep.subr.bf16.mxu0 0
  %2690 = vmatpush1.bf16.msra.mxu0 0
  %2691 = vmatprep.subr.bf16.mxu0 0
  %2692 = vmatpush1.bf16.msra.mxu0 0
  %2693 = vmatprep.subr.bf16.mxu0 0
  %2694 = vmatpush1.bf16.msra.mxu0 0
  %2695 = vmatprep.subr.bf16.mxu0 0
  %2696 = vmatpush1.bf16.msra.mxu0 0
  %2697 = vmatprep.mubr.bf16.mxu0 0
  %2698 = vmatmul.mubr.bf16.gmra.mrb[0].mxu0 %v637
  %v2699 = vpop.f32.mrb[0].mxu0
  %v2700 = vadd.f32 %v2587, %v2699
  %v2701 = vpop.f32.mrb[0].mxu0
  %v2702 = vadd.f32 %v2589, %v2701
  %v2703 = vpop.f32.mrb[0].mxu0
  %v2704 = vadd.f32 %v2591, %v2703
  %v2705 = vpop.f32.mrb[0].mxu0
  %v2706 = vadd.f32 %v2593, %v2705
  %2707 = vmatprep.mubr.bf16.mxu0 0
  %2708 = vmatmul.mubr.bf16.gmra.mrb[0].mxu0 %v646
  %v2709 = vpop.f32.mrb[0].mxu0
  %v2710 = vadd.f32 %v2597, %v2709
  %v2711 = vpop.f32.mrb[0].mxu0
  %v2712 = vadd.f32 %v2599, %v2711
  %v2713 = vpop.f32.mrb[0].mxu0
  %v2714 = vadd.f32 %v2601, %v2713
  %v2715 = vpop.f32.mrb[0].mxu0
  %v2716 = vadd.f32 %v2603, %v2715
  %2717 = vmatprep.mubr.bf16.mxu0 0
  %2718 = vmatmul.mubr.bf16.gmra.mrb[0].mxu0 %v655
  %v2719 = vpop.f32.mrb[0].mxu0
  %v2720 = vadd.f32 %v2607, %v2719
  %v2721 = vpop.f32.mrb[0].mxu0
  %v2722 = vadd.f32 %v2609, %v2721
  %v2723 = vpop.f32.mrb[0].mxu0
  %v2724 = vadd.f32 %v2611, %v2723
  %v2725 = vpop.f32.mrb[0].mxu0
  %v2726 = vadd.f32 %v2613, %v2725
  %2727 = vmatprep.mubr.bf16.mxu0 0
  %2728 = vmatmul.mubr.bf16.gmra.mrb[0].mxu0 %v664
  %v2729 = vpop.f32.mrb[0].mxu0
  %v2730 = vadd.f32 %v2617, %v2729
  %v2731 = vpop.f32.mrb[0].mxu0
  %v2732 = vadd.f32 %v2619, %v2731
  %v2733 = vpop.f32.mrb[0].mxu0
  %v2734 = vadd.f32 %v2621, %v2733
  %v2735 = vpop.f32.mrb[0].mxu0
  %v2736 = vadd.f32 %v2623, %v2735
  %2737 = vmatprep.mubr.bf16.mxu0 0
  %2738 = vmatmul.mubr.bf16.gmra.mrb[0].mxu0 %v673
  %v2739 = vpop.f32.mrb[0].mxu0
  %v2740 = vadd.f32 %v2627, %v2739
  %v2741 = vpop.f32.mrb[0].mxu0
  %v2742 = vadd.f32 %v2629, %v2741
  %v2743 = vpop.f32.mrb[0].mxu0
  %v2744 = vadd.f32 %v2631, %v2743
  %v2745 = vpop.f32.mrb[0].mxu0
  %v2746 = vadd.f32 %v2633, %v2745
  %2747 = vmatprep.mubr.bf16.mxu0 0
  %2748 = vmatmul.mubr.bf16.gmra.mrb[0].mxu0 %v682
  %v2749 = vpop.f32.mrb[0].mxu0
  %v2750 = vadd.f32 %v2637, %v2749
  %v2751 = vpop.f32.mrb[0].mxu0
  %v2752 = vadd.f32 %v2639, %v2751
  %v2753 = vpop.f32.mrb[0].mxu0
  %v2754 = vadd.f32 %v2641, %v2753
  %v2755 = vpop.f32.mrb[0].mxu0
  %v2756 = vadd.f32 %v2643, %v2755
  %2757 = vmatprep.mubr.bf16.mxu0 0
  %2758 = vmatmul.mubr.bf16.gmra.mrb[0].mxu0 %v691
  %v2759 = vpop.f32.mrb[0].mxu0
  %v2760 = vadd.f32 %v2647, %v2759
  %v2761 = vpop.f32.mrb[0].mxu0
  %v2762 = vadd.f32 %v2649, %v2761
  %v2763 = vpop.f32.mrb[0].mxu0
  %v2764 = vadd.f32 %v2651, %v2763
  %v2765 = vpop.f32.mrb[0].mxu0
  %v2766 = vadd.f32 %v2653, %v2765
  %2767 = vmatprep.mubr.bf16.mxu0 0
  %2768 = vmatmul.mubr.bf16.gmra.mrb[0].mxu0 %v700
  %v2769 = vpop.f32.mrb[0].mxu0
  %v2770 = vadd.f32 %v2657, %v2769
  %v2771 = vpop.f32.mrb[0].mxu0
  %v2772 = vadd.f32 %v2659, %v2771
  %v2773 = vpop.f32.mrb[0].mxu0
  %v2774 = vadd.f32 %v2661, %v2773
  %v2775 = vpop.f32.mrb[0].mxu0
  %v2776 = vadd.f32 %v2663, %v2775
  %2777 = vdwg.mxu0
  %2778 = vmatprep.subr.bf16.mxu0 %v1640
  %2779 = vmatpush1.bf16.msra.mxu0 %v1639
  %2780 = vmatprep.subr.bf16.mxu0 %v1644
  %2781 = vmatpush1.bf16.msra.mxu0 %v1643
  %2782 = vmatprep.subr.bf16.mxu0 %v1648
  %2783 = vmatpush1.bf16.msra.mxu0 %v1647
  %2784 = vmatprep.subr.bf16.mxu0 %v1652
  %2785 = vmatpush1.bf16.msra.mxu0 %v1651
  %2786 = vmatprep.subr.bf16.mxu0 %v1656
  %2787 = vmatpush1.bf16.msra.mxu0 %v1655
  %2788 = vmatprep.subr.bf16.mxu0 %v1660
  %2789 = vmatpush1.bf16.msra.mxu0 %v1659
  %2790 = vmatprep.subr.bf16.mxu0 %v1664
  %2791 = vmatpush1.bf16.msra.mxu0 %v1663
  %2792 = vmatprep.subr.bf16.mxu0 %v1668
  %2793 = vmatpush1.bf16.msra.mxu0 %v1667
  %2794 = vmatprep.subr.bf16.mxu0 %v1672
  %2795 = vmatpush1.bf16.msra.mxu0 %v1671
  %2796 = vmatprep.subr.bf16.mxu0 %v1676
  %2797 = vmatpush1.bf16.msra.mxu0 %v1675
  %2798 = vmatprep.subr.bf16.mxu0 %v1680
  %2799 = vmatpush1.bf16.msra.mxu0 %v1679
  %2800 = vmatprep.subr.bf16.mxu0 %v1684
  %2801 = vmatpush1.bf16.msra.mxu0 %v1683
  %2802 = vmatprep.subr.bf16.mxu0 %v1688
  %2803 = vmatpush1.bf16.msra.mxu0 %v1687
  %2804 = vmatprep.subr.bf16.mxu0 %v1692
  %2805 = vmatpush1.bf16.msra.mxu0 %v1691
  %2806 = vmatprep.subr.bf16.mxu0 %v1696
  %2807 = vmatpush1.bf16.msra.mxu0 %v1695
  %2808 = vmatprep.subr.bf16.mxu0 %v1700
  %2809 = vmatpush1.bf16.msra.mxu0 %v1699
  %2810 = vmatprep.mubr.bf16.mxu0 %v630
  %2811 = vmatmul.mubr.bf16.gmra.mrb[0].mxu0 %v629
  %v2812 = vpop.f32.mrb[0].mxu0
  %v2813 = vadd.f32 %v396, %v2812
  %v2814 = vpop.f32.mrb[0].mxu0
  %v2815 = vadd.f32 %v400, %v2814
  %v2816 = vpop.f32.mrb[0].mxu0
  %v2817 = vadd.f32 %v396, %v2816
  %v2818 = vpop.f32.mrb[0].mxu0
  %v2819 = vadd.f32 %v400, %v2818
  %2820 = vmatprep.mubr.bf16.mxu0 %v639
  %2821 = vmatmul.mubr.bf16.gmra.mrb[0].mxu0 %v638
  %v2822 = vpop.f32.mrb[0].mxu0
  %v2823 = vadd.f32 %v396, %v2822
  %v2824 = vpop.f32.mrb[0].mxu0
  %v2825 = vadd.f32 %v400, %v2824
  %v2826 = vpop.f32.mrb[0].mxu0
  %v2827 = vadd.f32 %v396, %v2826
  %v2828 = vpop.f32.mrb[0].mxu0
  %v2829 = vadd.f32 %v400, %v2828
  %2830 = vmatprep.mubr.bf16.mxu0 %v648
  %2831 = vmatmul.mubr.bf16.gmra.mrb[0].mxu0 %v647
  %v2832 = vpop.f32.mrb[0].mxu0
  %v2833 = vadd.f32 %v396, %v2832
  %v2834 = vpop.f32.mrb[0].mxu0
  %v2835 = vadd.f32 %v400, %v2834
  %v2836 = vpop.f32.mrb[0].mxu0
  %v2837 = vadd.f32 %v396, %v2836
  %v2838 = vpop.f32.mrb[0].mxu0
  %v2839 = vadd.f32 %v400, %v2838
  %2840 = vmatprep.mubr.bf16.mxu0 %v657
  %2841 = vmatmul.mubr.bf16.gmra.mrb[0].mxu0 %v656
  %v2842 = vpop.f32.mrb[0].mxu0
  %v2843 = vadd.f32 %v396, %v2842
  %v2844 = vpop.f32.mrb[0].mxu0
  %v2845 = vadd.f32 %v400, %v2844
  %v2846 = vpop.f32.mrb[0].mxu0
  %v2847 = vadd.f32 %v396, %v2846
  %v2848 = vpop.f32.mrb[0].mxu0
  %v2849 = vadd.f32 %v400, %v2848
  %2850 = vmatprep.mubr.bf16.mxu0 %v666
  %2851 = vmatmul.mubr.bf16.gmra.mrb[0].mxu0 %v665
  %v2852 = vpop.f32.mrb[0].mxu0
  %v2853 = vadd.f32 %v396, %v2852
  %v2854 = vpop.f32.mrb[0].mxu0
  %v2855 = vadd.f32 %v400, %v2854
  %v2856 = vpop.f32.mrb[0].mxu0
  %v2857 = vadd.f32 %v396, %v2856
  %v2858 = vpop.f32.mrb[0].mxu0
  %v2859 = vadd.f32 %v400, %v2858
  %2860 = vmatprep.mubr.bf16.mxu0 %v675
  %2861 = vmatmul.mubr.bf16.gmra.mrb[0].mxu0 %v674
  %v2862 = vpop.f32.mrb[0].mxu0
  %v2863 = vadd.f32 %v396, %v2862
  %v2864 = vpop.f32.mrb[0].mxu0
  %v2865 = vadd.f32 %v400, %v2864
  %v2866 = vpop.f32.mrb[0].mxu0
  %v2867 = vadd.f32 %v396, %v2866
  %v2868 = vpop.f32.mrb[0].mxu0
  %v2869 = vadd.f32 %v400, %v2868
  %2870 = vmatprep.mubr.bf16.mxu0 %v684
  %2871 = vmatmul.mubr.bf16.gmra.mrb[0].mxu0 %v683
  %v2872 = vpop.f32.mrb[0].mxu0
  %v2873 = vadd.f32 %v396, %v2872
  %v2874 = vpop.f32.mrb[0].mxu0
  %v2875 = vadd.f32 %v400, %v2874
  %v2876 = vpop.f32.mrb[0].mxu0
  %v2877 = vadd.f32 %v396, %v2876
  %v2878 = vpop.f32.mrb[0].mxu0
  %v2879 = vadd.f32 %v400, %v2878
  %2880 = vmatprep.mubr.bf16.mxu0 %v693
  %2881 = vmatmul.mubr.bf16.gmra.mrb[0].mxu0 %v692
  %v2882 = vpop.f32.mrb[0].mxu0
  %v2883 = vadd.f32 %v396, %v2882
  %v2884 = vpop.f32.mrb[0].mxu0
  %v2885 = vadd.f32 %v400, %v2884
  %v2886 = vpop.f32.mrb[0].mxu0
  %v2887 = vadd.f32 %v396, %v2886
  %v2888 = vpop.f32.mrb[0].mxu0
  %v2889 = vadd.f32 %v400, %v2888
  %2890 = vdwg.mxu0
  %2891 = vmatprep.subr.bf16.mxu0 %v1704
  %2892 = vmatpush1.bf16.msra.mxu0 %v1703
  %2893 = vmatprep.subr.bf16.mxu0 %v1708
  %2894 = vmatpush1.bf16.msra.mxu0 %v1707
  %2895 = vmatprep.subr.bf16.mxu0 %v1712
  %2896 = vmatpush1.bf16.msra.mxu0 %v1711
  %2897 = vmatprep.subr.bf16.mxu0 %v1716
  %2898 = vmatpush1.bf16.msra.mxu0 %v1715
  %2899 = vmatprep.subr.bf16.mxu0 %v1720
  %2900 = vmatpush1.bf16.msra.mxu0 %v1719
  %2901 = vmatprep.subr.bf16.mxu0 %v1724
  %2902 = vmatpush1.bf16.msra.mxu0 %v1723
  %2903 = vmatprep.subr.bf16.mxu0 %v1728
  %2904 = vmatpush1.bf16.msra.mxu0 %v1727
  %2905 = vmatprep.subr.bf16.mxu0 %v1732
  %2906 = vmatpush1.bf16.msra.mxu0 %v1731
  %2907 = vmatprep.subr.bf16.mxu0 %v1736
  %2908 = vmatpush1.bf16.msra.mxu0 %v1735
  %2909 = vmatprep.subr.bf16.mxu0 %v1740
  %2910 = vmatpush1.bf16.msra.mxu0 %v1739
  %2911 = vmatprep.subr.bf16.mxu0 %v1744
  %2912 = vmatpush1.bf16.msra.mxu0 %v1743
  %2913 = vmatprep.subr.bf16.mxu0 %v1748
  %2914 = vmatpush1.bf16.msra.mxu0 %v1747
  %2915 = vmatprep.subr.bf16.mxu0 %v1752
  %2916 = vmatpush1.bf16.msra.mxu0 %v1751
  %2917 = vmatprep.subr.bf16.mxu0 %v1756
  %2918 = vmatpush1.bf16.msra.mxu0 %v1755
  %2919 = vmatprep.subr.bf16.mxu0 %v1760
  %2920 = vmatpush1.bf16.msra.mxu0 %v1759
  %2921 = vmatprep.subr.bf16.mxu0 %v1764
  %2922 = vmatpush1.bf16.msra.mxu0 %v1763
  %2923 = vmatprep.mubr.bf16.mxu0 %v632
  %2924 = vmatmul.mubr.bf16.gmra.mrb[0].mxu0 %v631
  %v2925 = vpop.f32.mrb[0].mxu0
  %v2926 = vadd.f32 %v2813, %v2925
  %v2927 = vpop.f32.mrb[0].mxu0
  %v2928 = vadd.f32 %v2815, %v2927
  %v2929 = vpop.f32.mrb[0].mxu0
  %v2930 = vadd.f32 %v2817, %v2929
  %v2931 = vpop.f32.mrb[0].mxu0
  %v2932 = vadd.f32 %v2819, %v2931
  %2933 = vmatprep.mubr.bf16.mxu0 %v641
  %2934 = vmatmul.mubr.bf16.gmra.mrb[0].mxu0 %v640
  %v2935 = vpop.f32.mrb[0].mxu0
  %v2936 = vadd.f32 %v2823, %v2935
  %v2937 = vpop.f32.mrb[0].mxu0
  %v2938 = vadd.f32 %v2825, %v2937
  %v2939 = vpop.f32.mrb[0].mxu0
  %v2940 = vadd.f32 %v2827, %v2939
  %v2941 = vpop.f32.mrb[0].mxu0
  %v2942 = vadd.f32 %v2829, %v2941
  %2943 = vmatprep.mubr.bf16.mxu0 %v650
  %2944 = vmatmul.mubr.bf16.gmra.mrb[0].mxu0 %v649
  %v2945 = vpop.f32.mrb[0].mxu0
  %v2946 = vadd.f32 %v2833, %v2945
  %v2947 = vpop.f32.mrb[0].mxu0
  %v2948 = vadd.f32 %v2835, %v2947
  %v2949 = vpop.f32.mrb[0].mxu0
  %v2950 = vadd.f32 %v2837, %v2949
  %v2951 = vpop.f32.mrb[0].mxu0
  %v2952 = vadd.f32 %v2839, %v2951
  %2953 = vmatprep.mubr.bf16.mxu0 %v659
  %2954 = vmatmul.mubr.bf16.gmra.mrb[0].mxu0 %v658
  %v2955 = vpop.f32.mrb[0].mxu0
  %v2956 = vadd.f32 %v2843, %v2955
  %v2957 = vpop.f32.mrb[0].mxu0
  %v2958 = vadd.f32 %v2845, %v2957
  %v2959 = vpop.f32.mrb[0].mxu0
  %v2960 = vadd.f32 %v2847, %v2959
  %v2961 = vpop.f32.mrb[0].mxu0
  %v2962 = vadd.f32 %v2849, %v2961
  %2963 = vmatprep.mubr.bf16.mxu0 %v668
  %2964 = vmatmul.mubr.bf16.gmra.mrb[0].mxu0 %v667
  %v2965 = vpop.f32.mrb[0].mxu0
  %v2966 = vadd.f32 %v2853, %v2965
  %v2967 = vpop.f32.mrb[0].mxu0
  %v2968 = vadd.f32 %v2855, %v2967
  %v2969 = vpop.f32.mrb[0].mxu0
  %v2970 = vadd.f32 %v2857, %v2969
  %v2971 = vpop.f32.mrb[0].mxu0
  %v2972 = vadd.f32 %v2859, %v2971
  %2973 = vmatprep.mubr.bf16.mxu0 %v677
  %2974 = vmatmul.mubr.bf16.gmra.mrb[0].mxu0 %v676
  %v2975 = vpop.f32.mrb[0].mxu0
  %v2976 = vadd.f32 %v2863, %v2975
  %v2977 = vpop.f32.mrb[0].mxu0
  %v2978 = vadd.f32 %v2865, %v2977
  %v2979 = vpop.f32.mrb[0].mxu0
  %v2980 = vadd.f32 %v2867, %v2979
  %v2981 = vpop.f32.mrb[0].mxu0
  %v2982 = vadd.f32 %v2869, %v2981
  %2983 = vmatprep.mubr.bf16.mxu0 %v686
  %2984 = vmatmul.mubr.bf16.gmra.mrb[0].mxu0 %v685
  %v2985 = vpop.f32.mrb[0].mxu0
  %v2986 = vadd.f32 %v2873, %v2985
  %v2987 = vpop.f32.mrb[0].mxu0
  %v2988 = vadd.f32 %v2875, %v2987
  %v2989 = vpop.f32.mrb[0].mxu0
  %v2990 = vadd.f32 %v2877, %v2989
  %v2991 = vpop.f32.mrb[0].mxu0
  %v2992 = vadd.f32 %v2879, %v2991
  %2993 = vmatprep.mubr.bf16.mxu0 %v695
  %2994 = vmatmul.mubr.bf16.gmra.mrb[0].mxu0 %v694
  %v2995 = vpop.f32.mrb[0].mxu0
  %v2996 = vadd.f32 %v2883, %v2995
  %v2997 = vpop.f32.mrb[0].mxu0
  %v2998 = vadd.f32 %v2885, %v2997
  %v2999 = vpop.f32.mrb[0].mxu0
  %v3000 = vadd.f32 %v2887, %v2999
  %v3001 = vpop.f32.mrb[0].mxu0
  %v3002 = vadd.f32 %v2889, %v3001
  %3003 = vdwg.mxu0
  %3004 = vmatprep.subr.bf16.mxu0 %v1768
  %3005 = vmatpush1.bf16.msra.mxu0 %v1767
  %3006 = vmatprep.subr.bf16.mxu0 %v1772
  %3007 = vmatpush1.bf16.msra.mxu0 %v1771
  %3008 = vmatprep.subr.bf16.mxu0 %v1776
  %3009 = vmatpush1.bf16.msra.mxu0 %v1775
  %3010 = vmatprep.subr.bf16.mxu0 %v1780
  %3011 = vmatpush1.bf16.msra.mxu0 %v1779
  %3012 = vmatprep.subr.bf16.mxu0 %v1784
  %3013 = vmatpush1.bf16.msra.mxu0 %v1783
  %3014 = vmatprep.subr.bf16.mxu0 %v1788
  %3015 = vmatpush1.bf16.msra.mxu0 %v1787
  %3016 = vmatprep.subr.bf16.mxu0 %v1792
  %3017 = vmatpush1.bf16.msra.mxu0 %v1791
  %3018 = vmatprep.subr.bf16.mxu0 %v1796
  %3019 = vmatpush1.bf16.msra.mxu0 %v1795
  %3020 = vmatprep.subr.bf16.mxu0 %v1800
  %3021 = vmatpush1.bf16.msra.mxu0 %v1799
  %3022 = vmatprep.subr.bf16.mxu0 %v1804
  %3023 = vmatpush1.bf16.msra.mxu0 %v1803
  %3024 = vmatprep.subr.bf16.mxu0 %v1808
  %3025 = vmatpush1.bf16.msra.mxu0 %v1807
  %3026 = vmatprep.subr.bf16.mxu0 %v1812
  %3027 = vmatpush1.bf16.msra.mxu0 %v1811
  %3028 = vmatprep.subr.bf16.mxu0 %v1816
  %3029 = vmatpush1.bf16.msra.mxu0 %v1815
  %3030 = vmatprep.subr.bf16.mxu0 %v1820
  %3031 = vmatpush1.bf16.msra.mxu0 %v1819
  %3032 = vmatprep.subr.bf16.mxu0 %v1824
  %3033 = vmatpush1.bf16.msra.mxu0 %v1823
  %3034 = vmatprep.subr.bf16.mxu0 %v1828
  %3035 = vmatpush1.bf16.msra.mxu0 %v1827
  %3036 = vmatprep.mubr.bf16.mxu0 %v634
  %3037 = vmatmul.mubr.bf16.gmra.mrb[0].mxu0 %v633
  %v3038 = vpop.f32.mrb[0].mxu0
  %v3039 = vadd.f32 %v2926, %v3038
  %v3040 = vpop.f32.mrb[0].mxu0
  %v3041 = vadd.f32 %v2928, %v3040
  %v3042 = vpop.f32.mrb[0].mxu0
  %v3043 = vadd.f32 %v2930, %v3042
  %v3044 = vpop.f32.mrb[0].mxu0
  %v3045 = vadd.f32 %v2932, %v3044
  %3046 = vmatprep.mubr.bf16.mxu0 %v643
  %3047 = vmatmul.mubr.bf16.gmra.mrb[0].mxu0 %v642
  %v3048 = vpop.f32.mrb[0].mxu0
  %v3049 = vadd.f32 %v2936, %v3048
  %v3050 = vpop.f32.mrb[0].mxu0
  %v3051 = vadd.f32 %v2938, %v3050
  %v3052 = vpop.f32.mrb[0].mxu0
  %v3053 = vadd.f32 %v2940, %v3052
  %v3054 = vpop.f32.mrb[0].mxu0
  %v3055 = vadd.f32 %v2942, %v3054
  %3056 = vmatprep.mubr.bf16.mxu0 %v652
  %3057 = vmatmul.mubr.bf16.gmra.mrb[0].mxu0 %v651
  %v3058 = vpop.f32.mrb[0].mxu0
  %v3059 = vadd.f32 %v2946, %v3058
  %v3060 = vpop.f32.mrb[0].mxu0
  %v3061 = vadd.f32 %v2948, %v3060
  %v3062 = vpop.f32.mrb[0].mxu0
  %v3063 = vadd.f32 %v2950, %v3062
  %v3064 = vpop.f32.mrb[0].mxu0
  %v3065 = vadd.f32 %v2952, %v3064
  %3066 = vmatprep.mubr.bf16.mxu0 %v661
  %3067 = vmatmul.mubr.bf16.gmra.mrb[0].mxu0 %v660
  %v3068 = vpop.f32.mrb[0].mxu0
  %v3069 = vadd.f32 %v2956, %v3068
  %v3070 = vpop.f32.mrb[0].mxu0
  %v3071 = vadd.f32 %v2958, %v3070
  %v3072 = vpop.f32.mrb[0].mxu0
  %v3073 = vadd.f32 %v2960, %v3072
  %v3074 = vpop.f32.mrb[0].mxu0
  %v3075 = vadd.f32 %v2962, %v3074
  %3076 = vmatprep.mubr.bf16.mxu0 %v670
  %3077 = vmatmul.mubr.bf16.gmra.mrb[0].mxu0 %v669
  %v3078 = vpop.f32.mrb[0].mxu0
  %v3079 = vadd.f32 %v2966, %v3078
  %v3080 = vpop.f32.mrb[0].mxu0
  %v3081 = vadd.f32 %v2968, %v3080
  %v3082 = vpop.f32.mrb[0].mxu0
  %v3083 = vadd.f32 %v2970, %v3082
  %v3084 = vpop.f32.mrb[0].mxu0
  %v3085 = vadd.f32 %v2972, %v3084
  %3086 = vmatprep.mubr.bf16.mxu0 %v679
  %3087 = vmatmul.mubr.bf16.gmra.mrb[0].mxu0 %v678
  %v3088 = vpop.f32.mrb[0].mxu0
  %v3089 = vadd.f32 %v2976, %v3088
  %v3090 = vpop.f32.mrb[0].mxu0
  %v3091 = vadd.f32 %v2978, %v3090
  %v3092 = vpop.f32.mrb[0].mxu0
  %v3093 = vadd.f32 %v2980, %v3092
  %v3094 = vpop.f32.mrb[0].mxu0
  %v3095 = vadd.f32 %v2982, %v3094
  %3096 = vmatprep.mubr.bf16.mxu0 %v688
  %3097 = vmatmul.mubr.bf16.gmra.mrb[0].mxu0 %v687
  %v3098 = vpop.f32.mrb[0].mxu0
  %v3099 = vadd.f32 %v2986, %v3098
  %v3100 = vpop.f32.mrb[0].mxu0
  %v3101 = vadd.f32 %v2988, %v3100
  %v3102 = vpop.f32.mrb[0].mxu0
  %v3103 = vadd.f32 %v2990, %v3102
  %v3104 = vpop.f32.mrb[0].mxu0
  %v3105 = vadd.f32 %v2992, %v3104
  %3106 = vmatprep.mubr.bf16.mxu0 %v697
  %3107 = vmatmul.mubr.bf16.gmra.mrb[0].mxu0 %v696
  %v3108 = vpop.f32.mrb[0].mxu0
  %v3109 = vadd.f32 %v2996, %v3108
  %v3110 = vpop.f32.mrb[0].mxu0
  %v3111 = vadd.f32 %v2998, %v3110
  %v3112 = vpop.f32.mrb[0].mxu0
  %v3113 = vadd.f32 %v3000, %v3112
  %v3114 = vpop.f32.mrb[0].mxu0
  %v3115 = vadd.f32 %v3002, %v3114
  %3116 = vdwg.mxu0
  %3117 = vmatprep.subr.bf16.mxu0 %v1832
  %3118 = vmatpush1.bf16.msra.mxu0 %v1831
  %3119 = vmatprep.subr.bf16.mxu0 %v1836
  %3120 = vmatpush1.bf16.msra.mxu0 %v1835
  %3121 = vmatprep.subr.bf16.mxu0 %v1840
  %3122 = vmatpush1.bf16.msra.mxu0 %v1839
  %3123 = vmatprep.subr.bf16.mxu0 %v1844
  %3124 = vmatpush1.bf16.msra.mxu0 %v1843
  %3125 = vmatprep.subr.bf16.mxu0 %v1848
  %3126 = vmatpush1.bf16.msra.mxu0 %v1847
  %3127 = vmatprep.subr.bf16.mxu0 %v1852
  %3128 = vmatpush1.bf16.msra.mxu0 %v1851
  %3129 = vmatprep.subr.bf16.mxu0 %v1856
  %3130 = vmatpush1.bf16.msra.mxu0 %v1855
  %3131 = vmatprep.subr.bf16.mxu0 %v1860
  %3132 = vmatpush1.bf16.msra.mxu0 %v1859
  %3133 = vmatprep.subr.bf16.mxu0 %v1864
  %3134 = vmatpush1.bf16.msra.mxu0 %v1863
  %3135 = vmatprep.subr.bf16.mxu0 %v1868
  %3136 = vmatpush1.bf16.msra.mxu0 %v1867
  %3137 = vmatprep.subr.bf16.mxu0 %v1872
  %3138 = vmatpush1.bf16.msra.mxu0 %v1871
  %3139 = vmatprep.subr.bf16.mxu0 %v1876
  %3140 = vmatpush1.bf16.msra.mxu0 %v1875
  %3141 = vmatprep.subr.bf16.mxu0 %v1880
  %3142 = vmatpush1.bf16.msra.mxu0 %v1879
  %3143 = vmatprep.subr.bf16.mxu0 %v1884
  %3144 = vmatpush1.bf16.msra.mxu0 %v1883
  %3145 = vmatprep.subr.bf16.mxu0 %v1888
  %3146 = vmatpush1.bf16.msra.mxu0 %v1887
  %3147 = vmatprep.subr.bf16.mxu0 %v1892
  %3148 = vmatpush1.bf16.msra.mxu0 %v1891
  %3149 = vmatprep.mubr.bf16.mxu0 %v636
  %3150 = vmatmul.mubr.bf16.gmra.mrb[0].mxu0 %v635
  %v3151 = vpop.f32.mrb[0].mxu0
  %v3152 = vadd.f32 %v3039, %v3151
  %v3153 = vpop.f32.mrb[0].mxu0
  %v3154 = vadd.f32 %v3041, %v3153
  %v3155 = vpop.f32.mrb[0].mxu0
  %v3156 = vadd.f32 %v3043, %v3155
  %v3157 = vpop.f32.mrb[0].mxu0
  %v3158 = vadd.f32 %v3045, %v3157
  %3159 = vmatprep.mubr.bf16.mxu0 %v645
  %3160 = vmatmul.mubr.bf16.gmra.mrb[0].mxu0 %v644
  %v3161 = vpop.f32.mrb[0].mxu0
  %v3162 = vadd.f32 %v3049, %v3161
  %v3163 = vpop.f32.mrb[0].mxu0
  %v3164 = vadd.f32 %v3051, %v3163
  %v3165 = vpop.f32.mrb[0].mxu0
  %v3166 = vadd.f32 %v3053, %v3165
  %v3167 = vpop.f32.mrb[0].mxu0
  %v3168 = vadd.f32 %v3055, %v3167
  %3169 = vmatprep.mubr.bf16.mxu0 %v654
  %3170 = vmatmul.mubr.bf16.gmra.mrb[0].mxu0 %v653
  %v3171 = vpop.f32.mrb[0].mxu0
  %v3172 = vadd.f32 %v3059, %v3171
  %v3173 = vpop.f32.mrb[0].mxu0
  %v3174 = vadd.f32 %v3061, %v3173
  %v3175 = vpop.f32.mrb[0].mxu0
  %v3176 = vadd.f32 %v3063, %v3175
  %v3177 = vpop.f32.mrb[0].mxu0
  %v3178 = vadd.f32 %v3065, %v3177
  %3179 = vmatprep.mubr.bf16.mxu0 %v663
  %3180 = vmatmul.mubr.bf16.gmra.mrb[0].mxu0 %v662
  %v3181 = vpop.f32.mrb[0].mxu0
  %v3182 = vadd.f32 %v3069, %v3181
  %v3183 = vpop.f32.mrb[0].mxu0
  %v3184 = vadd.f32 %v3071, %v3183
  %v3185 = vpop.f32.mrb[0].mxu0
  %v3186 = vadd.f32 %v3073, %v3185
  %v3187 = vpop.f32.mrb[0].mxu0
  %v3188 = vadd.f32 %v3075, %v3187
  %3189 = vmatprep.mubr.bf16.mxu0 %v672
  %3190 = vmatmul.mubr.bf16.gmra.mrb[0].mxu0 %v671
  %v3191 = vpop.f32.mrb[0].mxu0
  %v3192 = vadd.f32 %v3079, %v3191
  %v3193 = vpop.f32.mrb[0].mxu0
  %v3194 = vadd.f32 %v3081, %v3193
  %v3195 = vpop.f32.mrb[0].mxu0
  %v3196 = vadd.f32 %v3083, %v3195
  %v3197 = vpop.f32.mrb[0].mxu0
  %v3198 = vadd.f32 %v3085, %v3197
  %3199 = vmatprep.mubr.bf16.mxu0 %v681
  %3200 = vmatmul.mubr.bf16.gmra.mrb[0].mxu0 %v680
  %v3201 = vpop.f32.mrb[0].mxu0
  %v3202 = vadd.f32 %v3089, %v3201
  %v3203 = vpop.f32.mrb[0].mxu0
  %v3204 = vadd.f32 %v3091, %v3203
  %v3205 = vpop.f32.mrb[0].mxu0
  %v3206 = vadd.f32 %v3093, %v3205
  %v3207 = vpop.f32.mrb[0].mxu0
  %v3208 = vadd.f32 %v3095, %v3207
  %3209 = vmatprep.mubr.bf16.mxu0 %v690
  %3210 = vmatmul.mubr.bf16.gmra.mrb[0].mxu0 %v689
  %v3211 = vpop.f32.mrb[0].mxu0
  %v3212 = vadd.f32 %v3099, %v3211
  %v3213 = vpop.f32.mrb[0].mxu0
  %v3214 = vadd.f32 %v3101, %v3213
  %v3215 = vpop.f32.mrb[0].mxu0
  %v3216 = vadd.f32 %v3103, %v3215
  %v3217 = vpop.f32.mrb[0].mxu0
  %v3218 = vadd.f32 %v3105, %v3217
  %3219 = vmatprep.mubr.bf16.mxu0 %v699
  %3220 = vmatmul.mubr.bf16.gmra.mrb[0].mxu0 %v698
  %v3221 = vpop.f32.mrb[0].mxu0
  %v3222 = vadd.f32 %v3109, %v3221
  %v3223 = vpop.f32.mrb[0].mxu0
  %v3224 = vadd.f32 %v3111, %v3223
  %v3225 = vpop.f32.mrb[0].mxu0
  %v3226 = vadd.f32 %v3113, %v3225
  %v3227 = vpop.f32.mrb[0].mxu0
  %v3228 = vadd.f32 %v3115, %v3227
  %3229 = vdwg.mxu0
  %3230 = vmatprep.subr.bf16.mxu0 %v1896
  %3231 = vmatpush1.bf16.msra.mxu0 %v1895
  %3232 = vmatprep.subr.bf16.mxu0 %v1900
  %3233 = vmatpush1.bf16.msra.mxu0 %v1899
  %3234 = vmatprep.subr.bf16.mxu0 %v1904
  %3235 = vmatpush1.bf16.msra.mxu0 %v1903
  %3236 = vmatprep.subr.bf16.mxu0 %v1908
  %3237 = vmatpush1.bf16.msra.mxu0 %v1907
  %3238 = vmatprep.subr.bf16.mxu0 %v1912
  %3239 = vmatpush1.bf16.msra.mxu0 %v1911
  %3240 = vmatprep.subr.bf16.mxu0 %v1916
  %3241 = vmatpush1.bf16.msra.mxu0 %v1915
  %3242 = vmatprep.subr.bf16.mxu0 %v1920
  %3243 = vmatpush1.bf16.msra.mxu0 %v1919
  %3244 = vmatprep.subr.bf16.mxu0 %v1924
  %3245 = vmatpush1.bf16.msra.mxu0 %v1923
  %3246 = vmatprep.subr.bf16.mxu0 0
  %3247 = vmatpush1.bf16.msra.mxu0 0
  %3248 = vmatprep.subr.bf16.mxu0 0
  %3249 = vmatpush1.bf16.msra.mxu0 0
  %3250 = vmatprep.subr.bf16.mxu0 0
  %3251 = vmatpush1.bf16.msra.mxu0 0
  %3252 = vmatprep.subr.bf16.mxu0 0
  %3253 = vmatpush1.bf16.msra.mxu0 0
  %3254 = vmatprep.subr.bf16.mxu0 0
  %3255 = vmatpush1.bf16.msra.mxu0 0
  %3256 = vmatprep.subr.bf16.mxu0 0
  %3257 = vmatpush1.bf16.msra.mxu0 0
  %3258 = vmatprep.subr.bf16.mxu0 0
  %3259 = vmatpush1.bf16.msra.mxu0 0
  %3260 = vmatprep.subr.bf16.mxu0 0
  %3261 = vmatpush1.bf16.msra.mxu0 0
  %3262 = vmatprep.mubr.bf16.mxu0 0
  %3263 = vmatmul.mubr.bf16.gmra.mrb[0].mxu0 %v637
  %v3264 = vpop.f32.mrb[0].mxu0
  %v3265 = vadd.f32 %v3152, %v3264
  %v3266 = vpop.f32.mrb[0].mxu0
  %v3267 = vadd.f32 %v3154, %v3266
  %v3268 = vpop.f32.mrb[0].mxu0
  %v3269 = vadd.f32 %v3156, %v3268
  %v3270 = vpop.f32.mrb[0].mxu0
  %v3271 = vadd.f32 %v3158, %v3270
  %3272 = vmatprep.mubr.bf16.mxu0 0
  %3273 = vmatmul.mubr.bf16.gmra.mrb[0].mxu0 %v646
  %v3274 = vpop.f32.mrb[0].mxu0
  %v3275 = vadd.f32 %v3162, %v3274
  %v3276 = vpop.f32.mrb[0].mxu0
  %v3277 = vadd.f32 %v3164, %v3276
  %v3278 = vpop.f32.mrb[0].mxu0
  %v3279 = vadd.f32 %v3166, %v3278
  %v3280 = vpop.f32.mrb[0].mxu0
  %v3281 = vadd.f32 %v3168, %v3280
  %3282 = vmatprep.mubr.bf16.mxu0 0
  %3283 = vmatmul.mubr.bf16.gmra.mrb[0].mxu0 %v655
  %v3284 = vpop.f32.mrb[0].mxu0
  %v3285 = vadd.f32 %v3172, %v3284
  %v3286 = vpop.f32.mrb[0].mxu0
  %v3287 = vadd.f32 %v3174, %v3286
  %v3288 = vpop.f32.mrb[0].mxu0
  %v3289 = vadd.f32 %v3176, %v3288
  %v3290 = vpop.f32.mrb[0].mxu0
  %v3291 = vadd.f32 %v3178, %v3290
  %3292 = vmatprep.mubr.bf16.mxu0 0
  %3293 = vmatmul.mubr.bf16.gmra.mrb[0].mxu0 %v664
  %v3294 = vpop.f32.mrb[0].mxu0
  %v3295 = vadd.f32 %v3182, %v3294
  %v3296 = vpop.f32.mrb[0].mxu0
  %v3297 = vadd.f32 %v3184, %v3296
  %v3298 = vpop.f32.mrb[0].mxu0
  %v3299 = vadd.f32 %v3186, %v3298
  %v3300 = vpop.f32.mrb[0].mxu0
  %v3301 = vadd.f32 %v3188, %v3300
  %3302 = vmatprep.mubr.bf16.mxu0 0
  %3303 = vmatmul.mubr.bf16.gmra.mrb[0].mxu0 %v673
  %v3304 = vpop.f32.mrb[0].mxu0
  %v3305 = vadd.f32 %v3192, %v3304
  %v3306 = vpop.f32.mrb[0].mxu0
  %v3307 = vadd.f32 %v3194, %v3306
  %v3308 = vpop.f32.mrb[0].mxu0
  %v3309 = vadd.f32 %v3196, %v3308
  %v3310 = vpop.f32.mrb[0].mxu0
  %v3311 = vadd.f32 %v3198, %v3310
  %3312 = vmatprep.mubr.bf16.mxu0 0
  %3313 = vmatmul.mubr.bf16.gmra.mrb[0].mxu0 %v682
  %v3314 = vpop.f32.mrb[0].mxu0
  %v3315 = vadd.f32 %v3202, %v3314
  %v3316 = vpop.f32.mrb[0].mxu0
  %v3317 = vadd.f32 %v3204, %v3316
  %v3318 = vpop.f32.mrb[0].mxu0
  %v3319 = vadd.f32 %v3206, %v3318
  %v3320 = vpop.f32.mrb[0].mxu0
  %v3321 = vadd.f32 %v3208, %v3320
  %3322 = vmatprep.mubr.bf16.mxu0 0
  %3323 = vmatmul.mubr.bf16.gmra.mrb[0].mxu0 %v691
  %v3324 = vpop.f32.mrb[0].mxu0
  %v3325 = vadd.f32 %v3212, %v3324
  %v3326 = vpop.f32.mrb[0].mxu0
  %v3327 = vadd.f32 %v3214, %v3326
  %v3328 = vpop.f32.mrb[0].mxu0
  %v3329 = vadd.f32 %v3216, %v3328
  %v3330 = vpop.f32.mrb[0].mxu0
  %v3331 = vadd.f32 %v3218, %v3330
  %3332 = vmatprep.mubr.bf16.mxu0 0
  %3333 = vmatmul.mubr.bf16.gmra.mrb[0].mxu0 %v700
  %v3334 = vpop.f32.mrb[0].mxu0
  %v3335 = vadd.f32 %v3222, %v3334
  %v3336 = vpop.f32.mrb[0].mxu0
  %v3337 = vadd.f32 %v3224, %v3336
  %v3338 = vpop.f32.mrb[0].mxu0
  %v3339 = vadd.f32 %v3226, %v3338
  %v3340 = vpop.f32.mrb[0].mxu0
  %v3341 = vadd.f32 %v3228, %v3340
  %3342 = vdwg.mxu0
  %v3343 = vmax.f32 %v2700, 0.0
  %v3344 = vmax.f32 %v2702, 0.0
  %v3345 = vmax.f32 %v3265, 0.0
  %v3346 = vmax.f32 %v3267, 0.0
  %v3347 = vmax.f32 %v2704, 0.0
  %v3348 = vmax.f32 %v2706, 0.0
  %v3349 = vmax.f32 %v3269, 0.0
  %v3350 = vmax.f32 %v3271, 0.0
  %v3351 = vmax.f32 %v2710, 0.0
  %v3352 = vmax.f32 %v2712, 0.0
  %v3353 = vmax.f32 %v3275, 0.0
  %v3354 = vmax.f32 %v3277, 0.0
  %v3355 = vmax.f32 %v2714, 0.0
  %v3356 = vmax.f32 %v2716, 0.0
  %v3357 = vmax.f32 %v3279, 0.0
  %v3358 = vmax.f32 %v3281, 0.0
  %v3359 = vmax.f32 %v2720, 0.0
  %v3360 = vmax.f32 %v2722, 0.0
  %v3361 = vmax.f32 %v3285, 0.0
  %v3362 = vmax.f32 %v3287, 0.0
  %v3363 = vmax.f32 %v2724, 0.0
  %v3364 = vmax.f32 %v2726, 0.0
  %v3365 = vmax.f32 %v3289, 0.0
  %v3366 = vmax.f32 %v3291, 0.0
  %v3367 = vmax.f32 %v2730, 0.0
  %v3368 = vmax.f32 %v2732, 0.0
  %v3369 = vmax.f32 %v3295, 0.0
  %v3370 = vmax.f32 %v3297, 0.0
  %v3371 = vmax.f32 %v2734, 0.0
  %v3372 = vmax.f32 %v2736, 0.0
  %v3373 = vmax.f32 %v3299, 0.0
  %v3374 = vmax.f32 %v3301, 0.0
  %v3375 = vmax.f32 %v2740, 0.0
  %v3376 = vmax.f32 %v2742, 0.0
  %v3377 = vmax.f32 %v3305, 0.0
  %v3378 = vmax.f32 %v3307, 0.0
  %v3379 = vmax.f32 %v2744, 0.0
  %v3380 = vmax.f32 %v2746, 0.0
  %v3381 = vmax.f32 %v3309, 0.0
  %v3382 = vmax.f32 %v3311, 0.0
  %v3383 = vmax.f32 %v2750, 0.0
  %v3384 = vmax.f32 %v2752, 0.0
  %v3385 = vmax.f32 %v3315, 0.0
  %v3386 = vmax.f32 %v3317, 0.0
  %v3387 = vmax.f32 %v2754, 0.0
  %v3388 = vmax.f32 %v2756, 0.0
  %v3389 = vmax.f32 %v3319, 0.0
  %v3390 = vmax.f32 %v3321, 0.0
  %v3391 = vmax.f32 %v2760, 0.0
  %v3392 = vmax.f32 %v2762, 0.0
  %v3393 = vmax.f32 %v3325, 0.0
  %v3394 = vmax.f32 %v3327, 0.0
  %v3395 = vmax.f32 %v2764, 0.0
  %v3396 = vmax.f32 %v2766, 0.0
  %v3397 = vmax.f32 %v3329, 0.0
  %v3398 = vmax.f32 %v3331, 0.0
  %v3399 = vmax.f32 %v2770, 0.0
  %v3400 = vmax.f32 %v2772, 0.0
  %v3401 = vmax.f32 %v3335, 0.0
  %v3402 = vmax.f32 %v3337, 0.0
  %v3403 = vmax.f32 %v2774, 0.0
  %v3404 = vmax.f32 %v2776, 0.0
  %v3405 = vmax.f32 %v3339, 0.0
  %v3406 = vmax.f32 %v3341, 0.0
  %v3407 = vpack.c.bf16 %v3347, %v3343
  %v3408 = vpack.c.bf16 %v3348, %v3344
  %v3409 = vpack.c.bf16 %v3349, %v3345
  %v3410 = vpack.c.bf16 %v3350, %v3346
  %v3411 = vpack.c.bf16 %v3355, %v3351
  %v3412 = vpack.c.bf16 %v3356, %v3352
  %v3413 = vpack.c.bf16 %v3357, %v3353
  %v3414 = vpack.c.bf16 %v3358, %v3354
  %v3415 = vpack.c.bf16 %v3363, %v3359
  %v3416 = vpack.c.bf16 %v3364, %v3360
  %v3417 = vpack.c.bf16 %v3365, %v3361
  %v3418 = vpack.c.bf16 %v3366, %v3362
  %v3419 = vpack.c.bf16 %v3371, %v3367
  %v3420 = vpack.c.bf16 %v3372, %v3368
  %v3421 = vpack.c.bf16 %v3373, %v3369
  %v3422 = vpack.c.bf16 %v3374, %v3370
  %v3423 = vpack.c.bf16 %v3379, %v3375
  %v3424 = vpack.c.bf16 %v3380, %v3376
  %v3425 = vpack.c.bf16 %v3381, %v3377
  %v3426 = vpack.c.bf16 %v3382, %v3378
  %v3427 = vpack.c.bf16 %v3387, %v3383
  %v3428 = vpack.c.bf16 %v3388, %v3384
  %v3429 = vpack.c.bf16 %v3389, %v3385
  %v3430 = vpack.c.bf16 %v3390, %v3386
  %v3431 = vpack.c.bf16 %v3395, %v3391
  %v3432 = vpack.c.bf16 %v3396, %v3392
  %v3433 = vpack.c.bf16 %v3397, %v3393
  %v3434 = vpack.c.bf16 %v3398, %v3394
  %v3435 = vpack.c.bf16 %v3403, %v3399
  %v3436 = vpack.c.bf16 %v3404, %v3400
  %v3437 = vpack.c.bf16 %v3405, %v3401
  %v3438 = vpack.c.bf16 %v3406, %v3402
  %v3471 = vunpack.c.l.b16 %v3407
  %v3472 = vunpack.c.l.b16 %v3408
  %v3473 = vunpack.c.l.b16 %v3409
  %v3474 = vunpack.c.l.b16 %v3410
  %v3475 = vunpack.c.h.b16 %v3407
  %v3476 = vunpack.c.h.b16 %v3408
  %v3477 = vunpack.c.h.b16 %v3409
  %v3478 = vunpack.c.h.b16 %v3410
  %v3479 = vunpack.c.l.b16 %v3411
  %v3480 = vunpack.c.l.b16 %v3412
  %v3481 = vunpack.c.l.b16 %v3413
  %v3482 = vunpack.c.l.b16 %v3414
  %v3483 = vunpack.c.h.b16 %v3411
  %v3484 = vunpack.c.h.b16 %v3412
  %v3485 = vunpack.c.h.b16 %v3413
  %v3486 = vunpack.c.h.b16 %v3414
  %v3487 = vunpack.c.l.b16 %v3415
  %v3488 = vunpack.c.l.b16 %v3416
  %v3489 = vunpack.c.l.b16 %v3417
  %v3490 = vunpack.c.l.b16 %v3418
  %v3491 = vunpack.c.h.b16 %v3415
  %v3492 = vunpack.c.h.b16 %v3416
  %v3493 = vunpack.c.h.b16 %v3417
  %v3494 = vunpack.c.h.b16 %v3418
  %v3495 = vunpack.c.l.b16 %v3419
  %v3496 = vunpack.c.l.b16 %v3420
  %v3497 = vunpack.c.l.b16 %v3421
  %v3498 = vunpack.c.l.b16 %v3422
  %v3499 = vunpack.c.h.b16 %v3419
  %v3500 = vunpack.c.h.b16 %v3420
  %v3501 = vunpack.c.h.b16 %v3421
  %v3502 = vunpack.c.h.b16 %v3422
  %v3503 = vunpack.c.l.b16 %v3423
  %v3504 = vunpack.c.l.b16 %v3424
  %v3505 = vunpack.c.l.b16 %v3425
  %v3506 = vunpack.c.l.b16 %v3426
  %v3507 = vunpack.c.h.b16 %v3423
  %v3508 = vunpack.c.h.b16 %v3424
  %v3509 = vunpack.c.h.b16 %v3425
  %v3510 = vunpack.c.h.b16 %v3426
  %v3511 = vunpack.c.l.b16 %v3427
  %v3512 = vunpack.c.l.b16 %v3428
  %v3513 = vunpack.c.l.b16 %v3429
  %v3514 = vunpack.c.l.b16 %v3430
  %v3515 = vunpack.c.h.b16 %v3427
  %v3516 = vunpack.c.h.b16 %v3428
  %v3517 = vunpack.c.h.b16 %v3429
  %v3518 = vunpack.c.h.b16 %v3430
  %v3519 = vunpack.c.l.b16 %v3431
  %v3520 = vunpack.c.l.b16 %v3432
  %v3521 = vunpack.c.l.b16 %v3433
  %v3522 = vunpack.c.l.b16 %v3434
  %v3523 = vunpack.c.h.b16 %v3431
  %v3524 = vunpack.c.h.b16 %v3432
  %v3525 = vunpack.c.h.b16 %v3433
  %v3526 = vunpack.c.h.b16 %v3434
  %v3527 = vunpack.c.l.b16 %v3435
  %v3528 = vunpack.c.l.b16 %v3436
  %v3529 = vunpack.c.l.b16 %v3437
  %v3530 = vunpack.c.l.b16 %v3438
  %v3531 = vunpack.c.h.b16 %v3435
  %v3532 = vunpack.c.h.b16 %v3436
  %v3533 = vunpack.c.h.b16 %v3437
  %v3534 = vunpack.c.h.b16 %v3438
  %v3535 = vpack.c.b16 %v3472, %v3471
  %v3536 = vpack.c.b16 %v3474, %v3473
  %v3537 = vpack.c.b16 %v3476, %v3475
  %v3538 = vpack.c.b16 %v3478, %v3477
  %v3539 = vpack.c.b16 %v3480, %v3479
  %v3540 = vpack.c.b16 %v3482, %v3481
  %v3541 = vpack.c.b16 %v3484, %v3483
  %v3542 = vpack.c.b16 %v3486, %v3485
  %v3543 = vpack.c.b16 %v3488, %v3487
  %v3544 = vpack.c.b16 %v3490, %v3489
  %v3545 = vpack.c.b16 %v3492, %v3491
  %v3546 = vpack.c.b16 %v3494, %v3493
  %v3547 = vpack.c.b16 %v3496, %v3495
  %v3548 = vpack.c.b16 %v3498, %v3497
  %v3549 = vpack.c.b16 %v3500, %v3499
  %v3550 = vpack.c.b16 %v3502, %v3501
  %v3551 = vpack.c.b16 %v3504, %v3503
  %v3552 = vpack.c.b16 %v3506, %v3505
  %v3553 = vpack.c.b16 %v3508, %v3507
  %v3554 = vpack.c.b16 %v3510, %v3509
  %v3555 = vpack.c.b16 %v3512, %v3511
  %v3556 = vpack.c.b16 %v3514, %v3513
  %v3557 = vpack.c.b16 %v3516, %v3515
  %v3558 = vpack.c.b16 %v3518, %v3517
  %v3559 = vpack.c.b16 %v3520, %v3519
  %v3560 = vpack.c.b16 %v3522, %v3521
  %v3561 = vpack.c.b16 %v3524, %v3523
  %v3562 = vpack.c.b16 %v3526, %v3525
  %v3563 = vpack.c.b16 %v3528, %v3527
  %v3564 = vpack.c.b16 %v3530, %v3529
  %v3565 = vpack.c.b16 %v3532, %v3531
  %v3566 = vpack.c.b16 %v3534, %v3533
  %3599 = vst [vmem:[%s3] sm:$0xff] %v3535
  %3600 = vst [vmem:[%s3 + $0x8] sm:$0xff] %v3536
  %3601 = vst [vmem:[%s3 + $0x10] sm:$0xff] %v3537
  %3602 = vst [vmem:[%s3 + $0x18] sm:$0xff] %v3538
  %3603 = vst [vmem:[%s3 + $0x20] sm:$0xff] %v3539
  %3604 = vst [vmem:[%s3 + $0x28] sm:$0xff] %v3540
  %3605 = vst [vmem:[%s3 + $0x30] sm:$0xff] %v3541
  %3606 = vst [vmem:[%s3 + $0x38] sm:$0xff] %v3542
  %3607 = vst [vmem:[%s3 + $0x40] sm:$0xff] %v3543
  %3608 = vst [vmem:[%s3 + $0x48] sm:$0xff] %v3544
  %3609 = vst [vmem:[%s3 + $0x50] sm:$0xff] %v3545
  %3610 = vst [vmem:[%s3 + $0x58] sm:$0xff] %v3546
  %3611 = vst [vmem:[%s3 + $0x60] sm:$0xff] %v3547
  %3612 = vst [vmem:[%s3 + $0x68] sm:$0xff] %v3548
  %3613 = vst [vmem:[%s3 + $0x70] sm:$0xff] %v3549
  %3614 = vst [vmem:[%s3 + $0x78] sm:$0xff] %v3550
  %3615 = vst [vmem:[%s3 + $0x80] sm:$0xff] %v3551
  %3616 = vst [vmem:[%s3 + $0x88] sm:$0xff] %v3552
  %3617 = vst [vmem:[%s3 + $0x90] sm:$0xff] %v3553
  %3618 = vst [vmem:[%s3 + $0x98] sm:$0xff] %v3554
  %3619 = vst [vmem:[%s3 + $0xa0] sm:$0xff] %v3555
  %3620 = vst [vmem:[%s3 + $0xa8] sm:$0xff] %v3556
  %3621 = vst [vmem:[%s3 + $0xb0] sm:$0xff] %v3557
  %3622 = vst [vmem:[%s3 + $0xb8] sm:$0xff] %v3558
  %3623 = vst [vmem:[%s3 + $0xc0] sm:$0xff] %v3559
  %3624 = vst [vmem:[%s3 + $0xc8] sm:$0xff] %v3560
  %3625 = vst [vmem:[%s3 + $0xd0] sm:$0xff] %v3561
  %3626 = vst [vmem:[%s3 + $0xd8] sm:$0xff] %v3562
  %3627 = vst [vmem:[%s3 + $0xe0] sm:$0xff] %v3563
  %3628 = vst [vmem:[%s3 + $0xe8] sm:$0xff] %v3564
  %3629 = vst [vmem:[%s3 + $0xf0] sm:$0xff] %v3565
  %3630 = vst [vmem:[%s3 + $0xf8] sm:$0xff] %v3566
  // Predicated region
  $region14: #{vqvae_forward.10} parent=0 // pred_check
    _
  $region15: #{vqvae_forward.10} parent=0 // pred_check_branch
    %3632 = sbr.rel (0) target = $region17
  $region16: #{vqvae_forward.10} parent=0 // pred_region
    _
  $region17: #{vqvae_forward.10} parent=0 // pred_fallthru
    _
  // Predicated region
  $region18: #{vqvae_forward.10} parent=0 // pred_check
    _
  $region19: #{vqvae_forward.10} parent=0 // pred_check_branch
    %3634 = sbr.rel (0) target = $region21
  $region20: #{vqvae_forward.10} parent=0 // pred_region
    _
  $region21: #{vqvae_forward.10} parent=0 // pred_fallthru
    _

// kernel: vqvae_forward.11
$region0: #{vqvae_forward.11}
  #allocation0 [shape = 'u32[]', space=smem, size = 0x4, offset = 0x4, fixed_abs, tag = 'smem constant byte address 0x4 - core index']
  #allocation1 [shape = 'u32[144,128]{1,0:T(1,128)}', space=vmem, size = 0x12000, scoped, tag = 'internal scratch']
  %s0 = inlined_call_operand.vmem [shape: bf16[512,1152], index: 0, kind: input, shape index: {}]
  %s1 = inlined_call_operand.vmem [shape: bf16[1152,128], index: 1, kind: input, shape index: {}]
  %s2 = inlined_call_operand.vmem [shape: f32[1,128], index: 2, kind: input, shape index: {}]
  %s3 = inlined_call_operand.vmem [shape: f32[512,128], index: 3, kind: output, shape index: {}]
  %s4 = sld [smem:[#allocation0]]
  $region22: #{vqvae_forward.11} parent=0
    _
  %s6 = ssub.s32 1, %s4
  %s7 = scalar_select 0, %s6, %s4
  // Predicated region
  $region2: #{vqvae_forward.11} parent=0 // pred_check
    _
  $region3: #{vqvae_forward.11} parent=0 // pred_check_branch
    %9 = sbr.rel (0) target = $region5
  $region4: #{vqvae_forward.11} parent=0 // pred_region
    _
  $region5: #{vqvae_forward.11} parent=0 // pred_fallthru
    _
  // Predicated region
  $region6: #{vqvae_forward.11} parent=0 // pred_check
    _
  $region7: #{vqvae_forward.11} parent=0 // pred_check_branch
    %11 = sbr.rel (0) target = $region9
  $region8: #{vqvae_forward.11} parent=0 // pred_region
    _
  $region9: #{vqvae_forward.11} parent=0 // pred_fallthru
    _
  // Predicated region
  $region10: #{vqvae_forward.11} parent=0 // pred_check
    _
  $region11: #{vqvae_forward.11} parent=0 // pred_check_branch
    %13 = sbr.rel (0) target = $region13
  $region12: #{vqvae_forward.11} parent=0 // pred_region
    _
  $region13: #{vqvae_forward.11} parent=0 // pred_fallthru
    _
  %v15 = vld [vmem:[%s0] sm:$0xff]
  %v16 = vld [vmem:[%s0 + $0x8] sm:$0xff]
  %v17 = vld [vmem:[%s0 + $0x10] sm:$0xff]
  %v18 = vld [vmem:[%s0 + $0x18] sm:$0xff]
  %v19 = vld [vmem:[%s0 + $0x20] sm:$0xf]
  %v20 = vld [vmem:[%s0 + $0x24] sm:$0xff]
  %v21 = vld [vmem:[%s0 + $0x2c] sm:$0xff]
  %v22 = vld [vmem:[%s0 + $0x34] sm:$0xff]
  %v23 = vld [vmem:[%s0 + $0x3c] sm:$0xff]
  %v24 = vld [vmem:[%s0 + $0x44] sm:$0xf]
  %v25 = vld [vmem:[%s0 + $0x48] sm:$0xff]
  %v26 = vld [vmem:[%s0 + $0x50] sm:$0xff]
  %v27 = vld [vmem:[%s0 + $0x58] sm:$0xff]
  %v28 = vld [vmem:[%s0 + $0x60] sm:$0xff]
  %v29 = vld [vmem:[%s0 + $0x68] sm:$0xf]
  %v30 = vld [vmem:[%s0 + $0x6c] sm:$0xff]
  %v31 = vld [vmem:[%s0 + $0x74] sm:$0xff]
  %v32 = vld [vmem:[%s0 + $0x7c] sm:$0xff]
  %v33 = vld [vmem:[%s0 + $0x84] sm:$0xff]
  %v34 = vld [vmem:[%s0 + $0x8c] sm:$0xf]
  %v35 = vld [vmem:[%s0 + $0x90] sm:$0xff]
  %v36 = vld [vmem:[%s0 + $0x98] sm:$0xff]
  %v37 = vld [vmem:[%s0 + $0xa0] sm:$0xff]
  %v38 = vld [vmem:[%s0 + $0xa8] sm:$0xff]
  %v39 = vld [vmem:[%s0 + $0xb0] sm:$0xf]
  %v40 = vld [vmem:[%s0 + $0xb4] sm:$0xff]
  %v41 = vld [vmem:[%s0 + $0xbc] sm:$0xff]
  %v42 = vld [vmem:[%s0 + $0xc4] sm:$0xff]
  %v43 = vld [vmem:[%s0 + $0xcc] sm:$0xff]
  %v44 = vld [vmem:[%s0 + $0xd4] sm:$0xf]
  %v45 = vld [vmem:[%s0 + $0xd8] sm:$0xff]
  %v46 = vld [vmem:[%s0 + $0xe0] sm:$0xff]
  %v47 = vld [vmem:[%s0 + $0xe8] sm:$0xff]
  %v48 = vld [vmem:[%s0 + $0xf0] sm:$0xff]
  %v49 = vld [vmem:[%s0 + $0xf8] sm:$0xf]
  %v50 = vld [vmem:[%s0 + $0xfc] sm:$0xff]
  %v51 = vld [vmem:[%s0 + $0x104] sm:$0xff]
  %v52 = vld [vmem:[%s0 + $0x10c] sm:$0xff]
  %v53 = vld [vmem:[%s0 + $0x114] sm:$0xff]
  %v54 = vld [vmem:[%s0 + $0x11c] sm:$0xf]
  %v55 = vld [vmem:[%s0 + $0x120] sm:$0xff]
  %v56 = vld [vmem:[%s0 + $0x128] sm:$0xff]
  %v57 = vld [vmem:[%s0 + $0x130] sm:$0xff]
  %v58 = vld [vmem:[%s0 + $0x138] sm:$0xff]
  %v59 = vld [vmem:[%s0 + $0x140] sm:$0xf]
  %v60 = vld [vmem:[%s0 + $0x144] sm:$0xff]
  %v61 = vld [vmem:[%s0 + $0x14c] sm:$0xff]
  %v62 = vld [vmem:[%s0 + $0x154] sm:$0xff]
  %v63 = vld [vmem:[%s0 + $0x15c] sm:$0xff]
  %v64 = vld [vmem:[%s0 + $0x164] sm:$0xf]
  %v65 = vld [vmem:[%s0 + $0x168] sm:$0xff]
  %v66 = vld [vmem:[%s0 + $0x170] sm:$0xff]
  %v67 = vld [vmem:[%s0 + $0x178] sm:$0xff]
  %v68 = vld [vmem:[%s0 + $0x180] sm:$0xff]
  %v69 = vld [vmem:[%s0 + $0x188] sm:$0xf]
  %v70 = vld [vmem:[%s0 + $0x18c] sm:$0xff]
  %v71 = vld [vmem:[%s0 + $0x194] sm:$0xff]
  %v72 = vld [vmem:[%s0 + $0x19c] sm:$0xff]
  %v73 = vld [vmem:[%s0 + $0x1a4] sm:$0xff]
  %v74 = vld [vmem:[%s0 + $0x1ac] sm:$0xf]
  %v75 = vld [vmem:[%s0 + $0x1b0] sm:$0xff]
  %v76 = vld [vmem:[%s0 + $0x1b8] sm:$0xff]
  %v77 = vld [vmem:[%s0 + $0x1c0] sm:$0xff]
  %v78 = vld [vmem:[%s0 + $0x1c8] sm:$0xff]
  %v79 = vld [vmem:[%s0 + $0x1d0] sm:$0xf]
  %v80 = vld [vmem:[%s0 + $0x1d4] sm:$0xff]
  %v81 = vld [vmem:[%s0 + $0x1dc] sm:$0xff]
  %v82 = vld [vmem:[%s0 + $0x1e4] sm:$0xff]
  %v83 = vld [vmem:[%s0 + $0x1ec] sm:$0xff]
  %v84 = vld [vmem:[%s0 + $0x1f4] sm:$0xf]
  %v85 = vld [vmem:[%s0 + $0x1f8] sm:$0xff]
  %v86 = vld [vmem:[%s0 + $0x200] sm:$0xff]
  %v87 = vld [vmem:[%s0 + $0x208] sm:$0xff]
  %v88 = vld [vmem:[%s0 + $0x210] sm:$0xff]
  %v89 = vld [vmem:[%s0 + $0x218] sm:$0xf]
  %v90 = vld [vmem:[%s0 + $0x21c] sm:$0xff]
  %v91 = vld [vmem:[%s0 + $0x224] sm:$0xff]
  %v92 = vld [vmem:[%s0 + $0x22c] sm:$0xff]
  %v93 = vld [vmem:[%s0 + $0x234] sm:$0xff]
  %v94 = vld [vmem:[%s0 + $0x23c] sm:$0xf]
  %v95 = vld [vmem:[%s0 + $0x240] sm:$0xff]
  %v96 = vld [vmem:[%s0 + $0x248] sm:$0xff]
  %v97 = vld [vmem:[%s0 + $0x250] sm:$0xff]
  %v98 = vld [vmem:[%s0 + $0x258] sm:$0xff]
  %v99 = vld [vmem:[%s0 + $0x260] sm:$0xf]
  %v100 = vld [vmem:[%s0 + $0x264] sm:$0xff]
  %v101 = vld [vmem:[%s0 + $0x26c] sm:$0xff]
  %v102 = vld [vmem:[%s0 + $0x274] sm:$0xff]
  %v103 = vld [vmem:[%s0 + $0x27c] sm:$0xff]
  %v104 = vld [vmem:[%s0 + $0x284] sm:$0xf]
  %v105 = vld [vmem:[%s0 + $0x288] sm:$0xff]
  %v106 = vld [vmem:[%s0 + $0x290] sm:$0xff]
  %v107 = vld [vmem:[%s0 + $0x298] sm:$0xff]
  %v108 = vld [vmem:[%s0 + $0x2a0] sm:$0xff]
  %v109 = vld [vmem:[%s0 + $0x2a8] sm:$0xf]
  %v110 = vld [vmem:[%s0 + $0x2ac] sm:$0xff]
  %v111 = vld [vmem:[%s0 + $0x2b4] sm:$0xff]
  %v112 = vld [vmem:[%s0 + $0x2bc] sm:$0xff]
  %v113 = vld [vmem:[%s0 + $0x2c4] sm:$0xff]
  %v114 = vld [vmem:[%s0 + $0x2cc] sm:$0xf]
  %v115 = vld [vmem:[%s0 + $0x2d0] sm:$0xff]
  %v116 = vld [vmem:[%s0 + $0x2d8] sm:$0xff]
  %v117 = vld [vmem:[%s0 + $0x2e0] sm:$0xff]
  %v118 = vld [vmem:[%s0 + $0x2e8] sm:$0xff]
  %v119 = vld [vmem:[%s0 + $0x2f0] sm:$0xf]
  %v120 = vld [vmem:[%s0 + $0x2f4] sm:$0xff]
  %v121 = vld [vmem:[%s0 + $0x2fc] sm:$0xff]
  %v122 = vld [vmem:[%s0 + $0x304] sm:$0xff]
  %v123 = vld [vmem:[%s0 + $0x30c] sm:$0xff]
  %v124 = vld [vmem:[%s0 + $0x314] sm:$0xf]
  %v125 = vld [vmem:[%s0 + $0x318] sm:$0xff]
  %v126 = vld [vmem:[%s0 + $0x320] sm:$0xff]
  %v127 = vld [vmem:[%s0 + $0x328] sm:$0xff]
  %v128 = vld [vmem:[%s0 + $0x330] sm:$0xff]
  %v129 = vld [vmem:[%s0 + $0x338] sm:$0xf]
  %v130 = vld [vmem:[%s0 + $0x33c] sm:$0xff]
  %v131 = vld [vmem:[%s0 + $0x344] sm:$0xff]
  %v132 = vld [vmem:[%s0 + $0x34c] sm:$0xff]
  %v133 = vld [vmem:[%s0 + $0x354] sm:$0xff]
  %v134 = vld [vmem:[%s0 + $0x35c] sm:$0xf]
  %v135 = vld [vmem:[%s0 + $0x360] sm:$0xff]
  %v136 = vld [vmem:[%s0 + $0x368] sm:$0xff]
  %v137 = vld [vmem:[%s0 + $0x370] sm:$0xff]
  %v138 = vld [vmem:[%s0 + $0x378] sm:$0xff]
  %v139 = vld [vmem:[%s0 + $0x380] sm:$0xf]
  %v140 = vld [vmem:[%s0 + $0x384] sm:$0xff]
  %v141 = vld [vmem:[%s0 + $0x38c] sm:$0xff]
  %v142 = vld [vmem:[%s0 + $0x394] sm:$0xff]
  %v143 = vld [vmem:[%s0 + $0x39c] sm:$0xff]
  %v144 = vld [vmem:[%s0 + $0x3a4] sm:$0xf]
  %v145 = vld [vmem:[%s0 + $0x3a8] sm:$0xff]
  %v146 = vld [vmem:[%s0 + $0x3b0] sm:$0xff]
  %v147 = vld [vmem:[%s0 + $0x3b8] sm:$0xff]
  %v148 = vld [vmem:[%s0 + $0x3c0] sm:$0xff]
  %v149 = vld [vmem:[%s0 + $0x3c8] sm:$0xf]
  %v150 = vld [vmem:[%s0 + $0x3cc] sm:$0xff]
  %v151 = vld [vmem:[%s0 + $0x3d4] sm:$0xff]
  %v152 = vld [vmem:[%s0 + $0x3dc] sm:$0xff]
  %v153 = vld [vmem:[%s0 + $0x3e4] sm:$0xff]
  %v154 = vld [vmem:[%s0 + $0x3ec] sm:$0xf]
  %v155 = vld [vmem:[%s0 + $0x3f0] sm:$0xff]
  %v156 = vld [vmem:[%s0 + $0x3f8] sm:$0xff]
  %v157 = vld [vmem:[%s0 + $0x400] sm:$0xff]
  %v158 = vld [vmem:[%s0 + $0x408] sm:$0xff]
  %v159 = vld [vmem:[%s0 + $0x410] sm:$0xf]
  %v160 = vld [vmem:[%s0 + $0x414] sm:$0xff]
  %v161 = vld [vmem:[%s0 + $0x41c] sm:$0xff]
  %v162 = vld [vmem:[%s0 + $0x424] sm:$0xff]
  %v163 = vld [vmem:[%s0 + $0x42c] sm:$0xff]
  %v164 = vld [vmem:[%s0 + $0x434] sm:$0xf]
  %v165 = vld [vmem:[%s0 + $0x438] sm:$0xff]
  %v166 = vld [vmem:[%s0 + $0x440] sm:$0xff]
  %v167 = vld [vmem:[%s0 + $0x448] sm:$0xff]
  %v168 = vld [vmem:[%s0 + $0x450] sm:$0xff]
  %v169 = vld [vmem:[%s0 + $0x458] sm:$0xf]
  %v170 = vld [vmem:[%s0 + $0x45c] sm:$0xff]
  %v171 = vld [vmem:[%s0 + $0x464] sm:$0xff]
  %v172 = vld [vmem:[%s0 + $0x46c] sm:$0xff]
  %v173 = vld [vmem:[%s0 + $0x474] sm:$0xff]
  %v174 = vld [vmem:[%s0 + $0x47c] sm:$0xf]
  %v175 = vld [vmem:[%s0 + $0x480] sm:$0xff]
  %v176 = vld [vmem:[%s0 + $0x488] sm:$0xff]
  %v177 = vld [vmem:[%s0 + $0x490] sm:$0xff]
  %v178 = vld [vmem:[%s0 + $0x498] sm:$0xff]
  %v179 = vld [vmem:[%s0 + $0x4a0] sm:$0xf]
  %v180 = vld [vmem:[%s0 + $0x4a4] sm:$0xff]
  %v181 = vld [vmem:[%s0 + $0x4ac] sm:$0xff]
  %v182 = vld [vmem:[%s0 + $0x4b4] sm:$0xff]
  %v183 = vld [vmem:[%s0 + $0x4bc] sm:$0xff]
  %v184 = vld [vmem:[%s0 + $0x4c4] sm:$0xf]
  %v185 = vld [vmem:[%s0 + $0x4c8] sm:$0xff]
  %v186 = vld [vmem:[%s0 + $0x4d0] sm:$0xff]
  %v187 = vld [vmem:[%s0 + $0x4d8] sm:$0xff]
  %v188 = vld [vmem:[%s0 + $0x4e0] sm:$0xff]
  %v189 = vld [vmem:[%s0 + $0x4e8] sm:$0xf]
  %v190 = vld [vmem:[%s0 + $0x4ec] sm:$0xff]
  %v191 = vld [vmem:[%s0 + $0x4f4] sm:$0xff]
  %v192 = vld [vmem:[%s0 + $0x4fc] sm:$0xff]
  %v193 = vld [vmem:[%s0 + $0x504] sm:$0xff]
  %v194 = vld [vmem:[%s0 + $0x50c] sm:$0xf]
  %v195 = vld [vmem:[%s0 + $0x510] sm:$0xff]
  %v196 = vld [vmem:[%s0 + $0x518] sm:$0xff]
  %v197 = vld [vmem:[%s0 + $0x520] sm:$0xff]
  %v198 = vld [vmem:[%s0 + $0x528] sm:$0xff]
  %v199 = vld [vmem:[%s0 + $0x530] sm:$0xf]
  %v200 = vld [vmem:[%s0 + $0x534] sm:$0xff]
  %v201 = vld [vmem:[%s0 + $0x53c] sm:$0xff]
  %v202 = vld [vmem:[%s0 + $0x544] sm:$0xff]
  %v203 = vld [vmem:[%s0 + $0x54c] sm:$0xff]
  %v204 = vld [vmem:[%s0 + $0x554] sm:$0xf]
  %v205 = vld [vmem:[%s0 + $0x558] sm:$0xff]
  %v206 = vld [vmem:[%s0 + $0x560] sm:$0xff]
  %v207 = vld [vmem:[%s0 + $0x568] sm:$0xff]
  %v208 = vld [vmem:[%s0 + $0x570] sm:$0xff]
  %v209 = vld [vmem:[%s0 + $0x578] sm:$0xf]
  %v210 = vld [vmem:[%s0 + $0x57c] sm:$0xff]
  %v211 = vld [vmem:[%s0 + $0x584] sm:$0xff]
  %v212 = vld [vmem:[%s0 + $0x58c] sm:$0xff]
  %v213 = vld [vmem:[%s0 + $0x594] sm:$0xff]
  %v214 = vld [vmem:[%s0 + $0x59c] sm:$0xf]
  %v215 = vld [vmem:[%s0 + $0x5a0] sm:$0xff]
  %v216 = vld [vmem:[%s0 + $0x5a8] sm:$0xff]
  %v217 = vld [vmem:[%s0 + $0x5b0] sm:$0xff]
  %v218 = vld [vmem:[%s0 + $0x5b8] sm:$0xff]
  %v219 = vld [vmem:[%s0 + $0x5c0] sm:$0xf]
  %v220 = vld [vmem:[%s0 + $0x5c4] sm:$0xff]
  %v221 = vld [vmem:[%s0 + $0x5cc] sm:$0xff]
  %v222 = vld [vmem:[%s0 + $0x5d4] sm:$0xff]
  %v223 = vld [vmem:[%s0 + $0x5dc] sm:$0xff]
  %v224 = vld [vmem:[%s0 + $0x5e4] sm:$0xf]
  %v225 = vld [vmem:[%s0 + $0x5e8] sm:$0xff]
  %v226 = vld [vmem:[%s0 + $0x5f0] sm:$0xff]
  %v227 = vld [vmem:[%s0 + $0x5f8] sm:$0xff]
  %v228 = vld [vmem:[%s0 + $0x600] sm:$0xff]
  %v229 = vld [vmem:[%s0 + $0x608] sm:$0xf]
  %v230 = vld [vmem:[%s0 + $0x60c] sm:$0xff]
  %v231 = vld [vmem:[%s0 + $0x614] sm:$0xff]
  %v232 = vld [vmem:[%s0 + $0x61c] sm:$0xff]
  %v233 = vld [vmem:[%s0 + $0x624] sm:$0xff]
  %v234 = vld [vmem:[%s0 + $0x62c] sm:$0xf]
  %v235 = vld [vmem:[%s0 + $0x630] sm:$0xff]
  %v236 = vld [vmem:[%s0 + $0x638] sm:$0xff]
  %v237 = vld [vmem:[%s0 + $0x640] sm:$0xff]
  %v238 = vld [vmem:[%s0 + $0x648] sm:$0xff]
  %v239 = vld [vmem:[%s0 + $0x650] sm:$0xf]
  %v240 = vld [vmem:[%s0 + $0x654] sm:$0xff]
  %v241 = vld [vmem:[%s0 + $0x65c] sm:$0xff]
  %v242 = vld [vmem:[%s0 + $0x664] sm:$0xff]
  %v243 = vld [vmem:[%s0 + $0x66c] sm:$0xff]
  %v244 = vld [vmem:[%s0 + $0x674] sm:$0xf]
  %v245 = vld [vmem:[%s0 + $0x678] sm:$0xff]
  %v246 = vld [vmem:[%s0 + $0x680] sm:$0xff]
  %v247 = vld [vmem:[%s0 + $0x688] sm:$0xff]
  %v248 = vld [vmem:[%s0 + $0x690] sm:$0xff]
  %v249 = vld [vmem:[%s0 + $0x698] sm:$0xf]
  %v250 = vld [vmem:[%s0 + $0x69c] sm:$0xff]
  %v251 = vld [vmem:[%s0 + $0x6a4] sm:$0xff]
  %v252 = vld [vmem:[%s0 + $0x6ac] sm:$0xff]
  %v253 = vld [vmem:[%s0 + $0x6b4] sm:$0xff]
  %v254 = vld [vmem:[%s0 + $0x6bc] sm:$0xf]
  %v255 = vld [vmem:[%s0 + $0x6c0] sm:$0xff]
  %v256 = vld [vmem:[%s0 + $0x6c8] sm:$0xff]
  %v257 = vld [vmem:[%s0 + $0x6d0] sm:$0xff]
  %v258 = vld [vmem:[%s0 + $0x6d8] sm:$0xff]
  %v259 = vld [vmem:[%s0 + $0x6e0] sm:$0xf]
  %v260 = vld [vmem:[%s0 + $0x6e4] sm:$0xff]
  %v261 = vld [vmem:[%s0 + $0x6ec] sm:$0xff]
  %v262 = vld [vmem:[%s0 + $0x6f4] sm:$0xff]
  %v263 = vld [vmem:[%s0 + $0x6fc] sm:$0xff]
  %v264 = vld [vmem:[%s0 + $0x704] sm:$0xf]
  %v265 = vld [vmem:[%s0 + $0x708] sm:$0xff]
  %v266 = vld [vmem:[%s0 + $0x710] sm:$0xff]
  %v267 = vld [vmem:[%s0 + $0x718] sm:$0xff]
  %v268 = vld [vmem:[%s0 + $0x720] sm:$0xff]
  %v269 = vld [vmem:[%s0 + $0x728] sm:$0xf]
  %v270 = vld [vmem:[%s0 + $0x72c] sm:$0xff]
  %v271 = vld [vmem:[%s0 + $0x734] sm:$0xff]
  %v272 = vld [vmem:[%s0 + $0x73c] sm:$0xff]
  %v273 = vld [vmem:[%s0 + $0x744] sm:$0xff]
  %v274 = vld [vmem:[%s0 + $0x74c] sm:$0xf]
  %v275 = vld [vmem:[%s0 + $0x750] sm:$0xff]
  %v276 = vld [vmem:[%s0 + $0x758] sm:$0xff]
  %v277 = vld [vmem:[%s0 + $0x760] sm:$0xff]
  %v278 = vld [vmem:[%s0 + $0x768] sm:$0xff]
  %v279 = vld [vmem:[%s0 + $0x770] sm:$0xf]
  %v280 = vld [vmem:[%s0 + $0x774] sm:$0xff]
  %v281 = vld [vmem:[%s0 + $0x77c] sm:$0xff]
  %v282 = vld [vmem:[%s0 + $0x784] sm:$0xff]
  %v283 = vld [vmem:[%s0 + $0x78c] sm:$0xff]
  %v284 = vld [vmem:[%s0 + $0x794] sm:$0xf]
  %v285 = vld [vmem:[%s0 + $0x798] sm:$0xff]
  %v286 = vld [vmem:[%s0 + $0x7a0] sm:$0xff]
  %v287 = vld [vmem:[%s0 + $0x7a8] sm:$0xff]
  %v288 = vld [vmem:[%s0 + $0x7b0] sm:$0xff]
  %v289 = vld [vmem:[%s0 + $0x7b8] sm:$0xf]
  %v290 = vld [vmem:[%s0 + $0x7bc] sm:$0xff]
  %v291 = vld [vmem:[%s0 + $0x7c4] sm:$0xff]
  %v292 = vld [vmem:[%s0 + $0x7cc] sm:$0xff]
  %v293 = vld [vmem:[%s0 + $0x7d4] sm:$0xff]
  %v294 = vld [vmem:[%s0 + $0x7dc] sm:$0xf]
  %v295 = vld [vmem:[%s0 + $0x7e0] sm:$0xff]
  %v296 = vld [vmem:[%s0 + $0x7e8] sm:$0xff]
  %v297 = vld [vmem:[%s0 + $0x7f0] sm:$0xff]
  %v298 = vld [vmem:[%s0 + $0x7f8] sm:$0xff]
  %v299 = vld [vmem:[%s0 + $0x800] sm:$0xf]
  %v300 = vld [vmem:[%s0 + $0x804] sm:$0xff]
  %v301 = vld [vmem:[%s0 + $0x80c] sm:$0xff]
  %v302 = vld [vmem:[%s0 + $0x814] sm:$0xff]
  %v303 = vld [vmem:[%s0 + $0x81c] sm:$0xff]
  %v304 = vld [vmem:[%s0 + $0x824] sm:$0xf]
  %v305 = vld [vmem:[%s0 + $0x828] sm:$0xff]
  %v306 = vld [vmem:[%s0 + $0x830] sm:$0xff]
  %v307 = vld [vmem:[%s0 + $0x838] sm:$0xff]
  %v308 = vld [vmem:[%s0 + $0x840] sm:$0xff]
  %v309 = vld [vmem:[%s0 + $0x848] sm:$0xf]
  %v310 = vld [vmem:[%s0 + $0x84c] sm:$0xff]
  %v311 = vld [vmem:[%s0 + $0x854] sm:$0xff]
  %v312 = vld [vmem:[%s0 + $0x85c] sm:$0xff]
  %v313 = vld [vmem:[%s0 + $0x864] sm:$0xff]
  %v314 = vld [vmem:[%s0 + $0x86c] sm:$0xf]
  %v315 = vld [vmem:[%s0 + $0x870] sm:$0xff]
  %v316 = vld [vmem:[%s0 + $0x878] sm:$0xff]
  %v317 = vld [vmem:[%s0 + $0x880] sm:$0xff]
  %v318 = vld [vmem:[%s0 + $0x888] sm:$0xff]
  %v319 = vld [vmem:[%s0 + $0x890] sm:$0xf]
  %v320 = vld [vmem:[%s0 + $0x894] sm:$0xff]
  %v321 = vld [vmem:[%s0 + $0x89c] sm:$0xff]
  %v322 = vld [vmem:[%s0 + $0x8a4] sm:$0xff]
  %v323 = vld [vmem:[%s0 + $0x8ac] sm:$0xff]
  %v324 = vld [vmem:[%s0 + $0x8b4] sm:$0xf]
  %v325 = vld [vmem:[%s0 + $0x8b8] sm:$0xff]
  %v326 = vld [vmem:[%s0 + $0x8c0] sm:$0xff]
  %v327 = vld [vmem:[%s0 + $0x8c8] sm:$0xff]
  %v328 = vld [vmem:[%s0 + $0x8d0] sm:$0xff]
  %v329 = vld [vmem:[%s0 + $0x8d8] sm:$0xf]
  %v330 = vld [vmem:[%s0 + $0x8dc] sm:$0xff]
  %v331 = vld [vmem:[%s0 + $0x8e4] sm:$0xff]
  %v332 = vld [vmem:[%s0 + $0x8ec] sm:$0xff]
  %v333 = vld [vmem:[%s0 + $0x8f4] sm:$0xff]
  %v334 = vld [vmem:[%s0 + $0x8fc] sm:$0xf]
  %v335 = vld [vmem:[%s1] sm:$0xf]
  %v336 = vld [vmem:[%s1 + $0x4] sm:$0xf]
  %v337 = vld [vmem:[%s1 + $0x8] sm:$0xf]
  %v338 = vld [vmem:[%s1 + $0xc] sm:$0xf]
  %v339 = vld [vmem:[%s1 + $0x10] sm:$0xf]
  %v340 = vld [vmem:[%s1 + $0x14] sm:$0xf]
  %v341 = vld [vmem:[%s1 + $0x18] sm:$0xf]
  %v342 = vld [vmem:[%s1 + $0x1c] sm:$0xf]
  %v343 = vld [vmem:[%s1 + $0x20] sm:$0xf]
  %v344 = vld [vmem:[%s1 + $0x24] sm:$0xf]
  %v345 = vld [vmem:[%s1 + $0x28] sm:$0xf]
  %v346 = vld [vmem:[%s1 + $0x2c] sm:$0xf]
  %v347 = vld [vmem:[%s1 + $0x30] sm:$0xf]
  %v348 = vld [vmem:[%s1 + $0x34] sm:$0xf]
  %v349 = vld [vmem:[%s1 + $0x38] sm:$0xf]
  %v350 = vld [vmem:[%s1 + $0x3c] sm:$0xf]
  %v351 = vld [vmem:[%s1 + $0x40] sm:$0xf]
  %v352 = vld [vmem:[%s1 + $0x44] sm:$0xf]
  %v353 = vld [vmem:[%s1 + $0x48] sm:$0xf]
  %v354 = vld [vmem:[%s1 + $0x4c] sm:$0xf]
  %v355 = vld [vmem:[%s1 + $0x50] sm:$0xf]
  %v356 = vld [vmem:[%s1 + $0x54] sm:$0xf]
  %v357 = vld [vmem:[%s1 + $0x58] sm:$0xf]
  %v358 = vld [vmem:[%s1 + $0x5c] sm:$0xf]
  %v359 = vld [vmem:[%s1 + $0x60] sm:$0xf]
  %v360 = vld [vmem:[%s1 + $0x64] sm:$0xf]
  %v361 = vld [vmem:[%s1 + $0x68] sm:$0xf]
  %v362 = vld [vmem:[%s1 + $0x6c] sm:$0xf]
  %v363 = vld [vmem:[%s1 + $0x70] sm:$0xf]
  %v364 = vld [vmem:[%s1 + $0x74] sm:$0xf]
  %v365 = vld [vmem:[%s1 + $0x78] sm:$0xf]
  %v366 = vld [vmem:[%s1 + $0x7c] sm:$0xf]
  %v367 = vld [vmem:[%s1 + $0x80] sm:$0xf]
  %v368 = vld [vmem:[%s1 + $0x84] sm:$0xf]
  %v369 = vld [vmem:[%s1 + $0x88] sm:$0xf]
  %v370 = vld [vmem:[%s1 + $0x8c] sm:$0xf]
  %v371 = vld [vmem:[%s1 + $0x90] sm:$0xf]
  %v372 = vld [vmem:[%s1 + $0x94] sm:$0xf]
  %v373 = vld [vmem:[%s1 + $0x98] sm:$0xf]
  %v374 = vld [vmem:[%s1 + $0x9c] sm:$0xf]
  %v375 = vld [vmem:[%s1 + $0xa0] sm:$0xf]
  %v376 = vld [vmem:[%s1 + $0xa4] sm:$0xf]
  %v377 = vld [vmem:[%s1 + $0xa8] sm:$0xf]
  %v378 = vld [vmem:[%s1 + $0xac] sm:$0xf]
  %v379 = vld [vmem:[%s1 + $0xb0] sm:$0xf]
  %v380 = vld [vmem:[%s1 + $0xb4] sm:$0xf]
  %v381 = vld [vmem:[%s1 + $0xb8] sm:$0xf]
  %v382 = vld [vmem:[%s1 + $0xbc] sm:$0xf]
  %v383 = vld [vmem:[%s1 + $0xc0] sm:$0xf]
  %v384 = vld [vmem:[%s1 + $0xc4] sm:$0xf]
  %v385 = vld [vmem:[%s1 + $0xc8] sm:$0xf]
  %v386 = vld [vmem:[%s1 + $0xcc] sm:$0xf]
  %v387 = vld [vmem:[%s1 + $0xd0] sm:$0xf]
  %v388 = vld [vmem:[%s1 + $0xd4] sm:$0xf]
  %v389 = vld [vmem:[%s1 + $0xd8] sm:$0xf]
  %v390 = vld [vmem:[%s1 + $0xdc] sm:$0xf]
  %v391 = vld [vmem:[%s1 + $0xe0] sm:$0xf]
  %v392 = vld [vmem:[%s1 + $0xe4] sm:$0xf]
  %v393 = vld [vmem:[%s1 + $0xe8] sm:$0xf]
  %v394 = vld [vmem:[%s1 + $0xec] sm:$0xf]
  %v395 = vld [vmem:[%s1 + $0xf0] sm:$0xf]
  %v396 = vld [vmem:[%s1 + $0xf4] sm:$0xf]
  %v397 = vld [vmem:[%s1 + $0xf8] sm:$0xf]
  %v398 = vld [vmem:[%s1 + $0xfc] sm:$0xf]
  %v399 = vld [vmem:[%s1 + $0x100] sm:$0xf]
  %v400 = vld [vmem:[%s1 + $0x104] sm:$0xf]
  %v401 = vld [vmem:[%s1 + $0x108] sm:$0xf]
  %v402 = vld [vmem:[%s1 + $0x10c] sm:$0xf]
  %v403 = vld [vmem:[%s1 + $0x110] sm:$0xf]
  %v404 = vld [vmem:[%s1 + $0x114] sm:$0xf]
  %v405 = vld [vmem:[%s1 + $0x118] sm:$0xf]
  %v406 = vld [vmem:[%s1 + $0x11c] sm:$0xf]
  %v407 = vld [vmem:[%s1 + $0x120] sm:$0xf]
  %v408 = vld [vmem:[%s1 + $0x124] sm:$0xf]
  %v409 = vld [vmem:[%s1 + $0x128] sm:$0xf]
  %v410 = vld [vmem:[%s1 + $0x12c] sm:$0xf]
  %v411 = vld [vmem:[%s1 + $0x130] sm:$0xf]
  %v412 = vld [vmem:[%s1 + $0x134] sm:$0xf]
  %v413 = vld [vmem:[%s1 + $0x138] sm:$0xf]
  %v414 = vld [vmem:[%s1 + $0x13c] sm:$0xf]
  %v415 = vld [vmem:[%s1 + $0x140] sm:$0xf]
  %v416 = vld [vmem:[%s1 + $0x144] sm:$0xf]
  %v417 = vld [vmem:[%s1 + $0x148] sm:$0xf]
  %v418 = vld [vmem:[%s1 + $0x14c] sm:$0xf]
  %v419 = vld [vmem:[%s1 + $0x150] sm:$0xf]
  %v420 = vld [vmem:[%s1 + $0x154] sm:$0xf]
  %v421 = vld [vmem:[%s1 + $0x158] sm:$0xf]
  %v422 = vld [vmem:[%s1 + $0x15c] sm:$0xf]
  %v423 = vld [vmem:[%s1 + $0x160] sm:$0xf]
  %v424 = vld [vmem:[%s1 + $0x164] sm:$0xf]
  %v425 = vld [vmem:[%s1 + $0x168] sm:$0xf]
  %v426 = vld [vmem:[%s1 + $0x16c] sm:$0xf]
  %v427 = vld [vmem:[%s1 + $0x170] sm:$0xf]
  %v428 = vld [vmem:[%s1 + $0x174] sm:$0xf]
  %v429 = vld [vmem:[%s1 + $0x178] sm:$0xf]
  %v430 = vld [vmem:[%s1 + $0x17c] sm:$0xf]
  %v431 = vld [vmem:[%s1 + $0x180] sm:$0xf]
  %v432 = vld [vmem:[%s1 + $0x184] sm:$0xf]
  %v433 = vld [vmem:[%s1 + $0x188] sm:$0xf]
  %v434 = vld [vmem:[%s1 + $0x18c] sm:$0xf]
  %v435 = vld [vmem:[%s1 + $0x190] sm:$0xf]
  %v436 = vld [vmem:[%s1 + $0x194] sm:$0xf]
  %v437 = vld [vmem:[%s1 + $0x198] sm:$0xf]
  %v438 = vld [vmem:[%s1 + $0x19c] sm:$0xf]
  %v439 = vld [vmem:[%s1 + $0x1a0] sm:$0xf]
  %v440 = vld [vmem:[%s1 + $0x1a4] sm:$0xf]
  %v441 = vld [vmem:[%s1 + $0x1a8] sm:$0xf]
  %v442 = vld [vmem:[%s1 + $0x1ac] sm:$0xf]
  %v443 = vld [vmem:[%s1 + $0x1b0] sm:$0xf]
  %v444 = vld [vmem:[%s1 + $0x1b4] sm:$0xf]
  %v445 = vld [vmem:[%s1 + $0x1b8] sm:$0xf]
  %v446 = vld [vmem:[%s1 + $0x1bc] sm:$0xf]
  %v447 = vld [vmem:[%s1 + $0x1c0] sm:$0xf]
  %v448 = vld [vmem:[%s1 + $0x1c4] sm:$0xf]
  %v449 = vld [vmem:[%s1 + $0x1c8] sm:$0xf]
  %v450 = vld [vmem:[%s1 + $0x1cc] sm:$0xf]
  %v451 = vld [vmem:[%s1 + $0x1d0] sm:$0xf]
  %v452 = vld [vmem:[%s1 + $0x1d4] sm:$0xf]
  %v453 = vld [vmem:[%s1 + $0x1d8] sm:$0xf]
  %v454 = vld [vmem:[%s1 + $0x1dc] sm:$0xf]
  %v455 = vld [vmem:[%s1 + $0x1e0] sm:$0xf]
  %v456 = vld [vmem:[%s1 + $0x1e4] sm:$0xf]
  %v457 = vld [vmem:[%s1 + $0x1e8] sm:$0xf]
  %v458 = vld [vmem:[%s1 + $0x1ec] sm:$0xf]
  %v459 = vld [vmem:[%s1 + $0x1f0] sm:$0xf]
  %v460 = vld [vmem:[%s1 + $0x1f4] sm:$0xf]
  %v461 = vld [vmem:[%s1 + $0x1f8] sm:$0xf]
  %v462 = vld [vmem:[%s1 + $0x1fc] sm:$0xf]
  %v463 = vld [vmem:[%s1 + $0x200] sm:$0xf]
  %v464 = vld [vmem:[%s1 + $0x204] sm:$0xf]
  %v465 = vld [vmem:[%s1 + $0x208] sm:$0xf]
  %v466 = vld [vmem:[%s1 + $0x20c] sm:$0xf]
  %v467 = vld [vmem:[%s1 + $0x210] sm:$0xf]
  %v468 = vld [vmem:[%s1 + $0x214] sm:$0xf]
  %v469 = vld [vmem:[%s1 + $0x218] sm:$0xf]
  %v470 = vld [vmem:[%s1 + $0x21c] sm:$0xf]
  %v471 = vld [vmem:[%s1 + $0x220] sm:$0xf]
  %v472 = vld [vmem:[%s1 + $0x224] sm:$0xf]
  %v473 = vld [vmem:[%s1 + $0x228] sm:$0xf]
  %v474 = vld [vmem:[%s1 + $0x22c] sm:$0xf]
  %v475 = vld [vmem:[%s1 + $0x230] sm:$0xf]
  %v476 = vld [vmem:[%s1 + $0x234] sm:$0xf]
  %v477 = vld [vmem:[%s1 + $0x238] sm:$0xf]
  %v478 = vld [vmem:[%s1 + $0x23c] sm:$0xf]
  %v479 = vld [vmem:[%s2] sm:$0x1]
  %v481 = vlaneseq
  %v482 = vshrl.u32 %v481, 7
  %v483 = vsub.s32 0, %v482
  %v484 = vrot.slane %v479, %v483
  %v806 = vunpack.c.l.b16 %v15
  %v807 = vunpack.c.h.b16 %v15
  %v808 = vunpack.c.l.b16 %v16
  %v809 = vunpack.c.h.b16 %v16
  %v810 = vunpack.c.l.b16 %v17
  %v811 = vunpack.c.h.b16 %v17
  %v812 = vunpack.c.l.b16 %v18
  %v813 = vunpack.c.h.b16 %v18
  %v814 = vunpack.c.l.b16 %v19
  %v815 = vunpack.c.l.b16 %v20
  %v816 = vunpack.c.h.b16 %v20
  %v817 = vunpack.c.l.b16 %v21
  %v818 = vunpack.c.h.b16 %v21
  %v819 = vunpack.c.l.b16 %v22
  %v820 = vunpack.c.h.b16 %v22
  %v821 = vunpack.c.l.b16 %v23
  %v822 = vunpack.c.h.b16 %v23
  %v823 = vunpack.c.l.b16 %v24
  %v824 = vunpack.c.l.b16 %v25
  %v825 = vunpack.c.h.b16 %v25
  %v826 = vunpack.c.l.b16 %v26
  %v827 = vunpack.c.h.b16 %v26
  %v828 = vunpack.c.l.b16 %v27
  %v829 = vunpack.c.h.b16 %v27
  %v830 = vunpack.c.l.b16 %v28
  %v831 = vunpack.c.h.b16 %v28
  %v832 = vunpack.c.l.b16 %v29
  %v833 = vunpack.c.l.b16 %v30
  %v834 = vunpack.c.h.b16 %v30
  %v835 = vunpack.c.l.b16 %v31
  %v836 = vunpack.c.h.b16 %v31
  %v837 = vunpack.c.l.b16 %v32
  %v838 = vunpack.c.h.b16 %v32
  %v839 = vunpack.c.l.b16 %v33
  %v840 = vunpack.c.h.b16 %v33
  %v841 = vunpack.c.l.b16 %v34
  %v842 = vunpack.c.l.b16 %v35
  %v843 = vunpack.c.h.b16 %v35
  %v844 = vunpack.c.l.b16 %v36
  %v845 = vunpack.c.h.b16 %v36
  %v846 = vunpack.c.l.b16 %v37
  %v847 = vunpack.c.h.b16 %v37
  %v848 = vunpack.c.l.b16 %v38
  %v849 = vunpack.c.h.b16 %v38
  %v850 = vunpack.c.l.b16 %v39
  %v851 = vunpack.c.l.b16 %v40
  %v852 = vunpack.c.h.b16 %v40
  %v853 = vunpack.c.l.b16 %v41
  %v854 = vunpack.c.h.b16 %v41
  %v855 = vunpack.c.l.b16 %v42
  %v856 = vunpack.c.h.b16 %v42
  %v857 = vunpack.c.l.b16 %v43
  %v858 = vunpack.c.h.b16 %v43
  %v859 = vunpack.c.l.b16 %v44
  %v860 = vunpack.c.l.b16 %v45
  %v861 = vunpack.c.h.b16 %v45
  %v862 = vunpack.c.l.b16 %v46
  %v863 = vunpack.c.h.b16 %v46
  %v864 = vunpack.c.l.b16 %v47
  %v865 = vunpack.c.h.b16 %v47
  %v866 = vunpack.c.l.b16 %v48
  %v867 = vunpack.c.h.b16 %v48
  %v868 = vunpack.c.l.b16 %v49
  %v869 = vunpack.c.l.b16 %v50
  %v870 = vunpack.c.h.b16 %v50
  %v871 = vunpack.c.l.b16 %v51
  %v872 = vunpack.c.h.b16 %v51
  %v873 = vunpack.c.l.b16 %v52
  %v874 = vunpack.c.h.b16 %v52
  %v875 = vunpack.c.l.b16 %v53
  %v876 = vunpack.c.h.b16 %v53
  %v877 = vunpack.c.l.b16 %v54
  %v878 = vunpack.c.l.b16 %v55
  %v879 = vunpack.c.h.b16 %v55
  %v880 = vunpack.c.l.b16 %v56
  %v881 = vunpack.c.h.b16 %v56
  %v882 = vunpack.c.l.b16 %v57
  %v883 = vunpack.c.h.b16 %v57
  %v884 = vunpack.c.l.b16 %v58
  %v885 = vunpack.c.h.b16 %v58
  %v886 = vunpack.c.l.b16 %v59
  %v887 = vunpack.c.l.b16 %v60
  %v888 = vunpack.c.h.b16 %v60
  %v889 = vunpack.c.l.b16 %v61
  %v890 = vunpack.c.h.b16 %v61
  %v891 = vunpack.c.l.b16 %v62
  %v892 = vunpack.c.h.b16 %v62
  %v893 = vunpack.c.l.b16 %v63
  %v894 = vunpack.c.h.b16 %v63
  %v895 = vunpack.c.l.b16 %v64
  %v896 = vunpack.c.l.b16 %v65
  %v897 = vunpack.c.h.b16 %v65
  %v898 = vunpack.c.l.b16 %v66
  %v899 = vunpack.c.h.b16 %v66
  %v900 = vunpack.c.l.b16 %v67
  %v901 = vunpack.c.h.b16 %v67
  %v902 = vunpack.c.l.b16 %v68
  %v903 = vunpack.c.h.b16 %v68
  %v904 = vunpack.c.l.b16 %v69
  %v905 = vunpack.c.l.b16 %v70
  %v906 = vunpack.c.h.b16 %v70
  %v907 = vunpack.c.l.b16 %v71
  %v908 = vunpack.c.h.b16 %v71
  %v909 = vunpack.c.l.b16 %v72
  %v910 = vunpack.c.h.b16 %v72
  %v911 = vunpack.c.l.b16 %v73
  %v912 = vunpack.c.h.b16 %v73
  %v913 = vunpack.c.l.b16 %v74
  %v914 = vunpack.c.l.b16 %v75
  %v915 = vunpack.c.h.b16 %v75
  %v916 = vunpack.c.l.b16 %v76
  %v917 = vunpack.c.h.b16 %v76
  %v918 = vunpack.c.l.b16 %v77
  %v919 = vunpack.c.h.b16 %v77
  %v920 = vunpack.c.l.b16 %v78
  %v921 = vunpack.c.h.b16 %v78
  %v922 = vunpack.c.l.b16 %v79
  %v923 = vunpack.c.l.b16 %v80
  %v924 = vunpack.c.h.b16 %v80
  %v925 = vunpack.c.l.b16 %v81
  %v926 = vunpack.c.h.b16 %v81
  %v927 = vunpack.c.l.b16 %v82
  %v928 = vunpack.c.h.b16 %v82
  %v929 = vunpack.c.l.b16 %v83
  %v930 = vunpack.c.h.b16 %v83
  %v931 = vunpack.c.l.b16 %v84
  %v932 = vunpack.c.l.b16 %v85
  %v933 = vunpack.c.h.b16 %v85
  %v934 = vunpack.c.l.b16 %v86
  %v935 = vunpack.c.h.b16 %v86
  %v936 = vunpack.c.l.b16 %v87
  %v937 = vunpack.c.h.b16 %v87
  %v938 = vunpack.c.l.b16 %v88
  %v939 = vunpack.c.h.b16 %v88
  %v940 = vunpack.c.l.b16 %v89
  %v941 = vunpack.c.l.b16 %v90
  %v942 = vunpack.c.h.b16 %v90
  %v943 = vunpack.c.l.b16 %v91
  %v944 = vunpack.c.h.b16 %v91
  %v945 = vunpack.c.l.b16 %v92
  %v946 = vunpack.c.h.b16 %v92
  %v947 = vunpack.c.l.b16 %v93
  %v948 = vunpack.c.h.b16 %v93
  %v949 = vunpack.c.l.b16 %v94
  %v950 = vunpack.c.l.b16 %v95
  %v951 = vunpack.c.h.b16 %v95
  %v952 = vunpack.c.l.b16 %v96
  %v953 = vunpack.c.h.b16 %v96
  %v954 = vunpack.c.l.b16 %v97
  %v955 = vunpack.c.h.b16 %v97
  %v956 = vunpack.c.l.b16 %v98
  %v957 = vunpack.c.h.b16 %v98
  %v958 = vunpack.c.l.b16 %v99
  %v959 = vunpack.c.l.b16 %v100
  %v960 = vunpack.c.h.b16 %v100
  %v961 = vunpack.c.l.b16 %v101
  %v962 = vunpack.c.h.b16 %v101
  %v963 = vunpack.c.l.b16 %v102
  %v964 = vunpack.c.h.b16 %v102
  %v965 = vunpack.c.l.b16 %v103
  %v966 = vunpack.c.h.b16 %v103
  %v967 = vunpack.c.l.b16 %v104
  %v968 = vunpack.c.l.b16 %v105
  %v969 = vunpack.c.h.b16 %v105
  %v970 = vunpack.c.l.b16 %v106
  %v971 = vunpack.c.h.b16 %v106
  %v972 = vunpack.c.l.b16 %v107
  %v973 = vunpack.c.h.b16 %v107
  %v974 = vunpack.c.l.b16 %v108
  %v975 = vunpack.c.h.b16 %v108
  %v976 = vunpack.c.l.b16 %v109
  %v977 = vunpack.c.l.b16 %v110
  %v978 = vunpack.c.h.b16 %v110
  %v979 = vunpack.c.l.b16 %v111
  %v980 = vunpack.c.h.b16 %v111
  %v981 = vunpack.c.l.b16 %v112
  %v982 = vunpack.c.h.b16 %v112
  %v983 = vunpack.c.l.b16 %v113
  %v984 = vunpack.c.h.b16 %v113
  %v985 = vunpack.c.l.b16 %v114
  %v986 = vunpack.c.l.b16 %v115
  %v987 = vunpack.c.h.b16 %v115
  %v988 = vunpack.c.l.b16 %v116
  %v989 = vunpack.c.h.b16 %v116
  %v990 = vunpack.c.l.b16 %v117
  %v991 = vunpack.c.h.b16 %v117
  %v992 = vunpack.c.l.b16 %v118
  %v993 = vunpack.c.h.b16 %v118
  %v994 = vunpack.c.l.b16 %v119
  %v995 = vunpack.c.l.b16 %v120
  %v996 = vunpack.c.h.b16 %v120
  %v997 = vunpack.c.l.b16 %v121
  %v998 = vunpack.c.h.b16 %v121
  %v999 = vunpack.c.l.b16 %v122
  %v1000 = vunpack.c.h.b16 %v122
  %v1001 = vunpack.c.l.b16 %v123
  %v1002 = vunpack.c.h.b16 %v123
  %v1003 = vunpack.c.l.b16 %v124
  %v1004 = vunpack.c.l.b16 %v125
  %v1005 = vunpack.c.h.b16 %v125
  %v1006 = vunpack.c.l.b16 %v126
  %v1007 = vunpack.c.h.b16 %v126
  %v1008 = vunpack.c.l.b16 %v127
  %v1009 = vunpack.c.h.b16 %v127
  %v1010 = vunpack.c.l.b16 %v128
  %v1011 = vunpack.c.h.b16 %v128
  %v1012 = vunpack.c.l.b16 %v129
  %v1013 = vunpack.c.l.b16 %v130
  %v1014 = vunpack.c.h.b16 %v130
  %v1015 = vunpack.c.l.b16 %v131
  %v1016 = vunpack.c.h.b16 %v131
  %v1017 = vunpack.c.l.b16 %v132
  %v1018 = vunpack.c.h.b16 %v132
  %v1019 = vunpack.c.l.b16 %v133
  %v1020 = vunpack.c.h.b16 %v133
  %v1021 = vunpack.c.l.b16 %v134
  %v1022 = vunpack.c.l.b16 %v135
  %v1023 = vunpack.c.h.b16 %v135
  %v1024 = vunpack.c.l.b16 %v136
  %v1025 = vunpack.c.h.b16 %v136
  %v1026 = vunpack.c.l.b16 %v137
  %v1027 = vunpack.c.h.b16 %v137
  %v1028 = vunpack.c.l.b16 %v138
  %v1029 = vunpack.c.h.b16 %v138
  %v1030 = vunpack.c.l.b16 %v139
  %v1031 = vunpack.c.l.b16 %v140
  %v1032 = vunpack.c.h.b16 %v140
  %v1033 = vunpack.c.l.b16 %v141
  %v1034 = vunpack.c.h.b16 %v141
  %v1035 = vunpack.c.l.b16 %v142
  %v1036 = vunpack.c.h.b16 %v142
  %v1037 = vunpack.c.l.b16 %v143
  %v1038 = vunpack.c.h.b16 %v143
  %v1039 = vunpack.c.l.b16 %v144
  %v1040 = vunpack.c.l.b16 %v145
  %v1041 = vunpack.c.h.b16 %v145
  %v1042 = vunpack.c.l.b16 %v146
  %v1043 = vunpack.c.h.b16 %v146
  %v1044 = vunpack.c.l.b16 %v147
  %v1045 = vunpack.c.h.b16 %v147
  %v1046 = vunpack.c.l.b16 %v148
  %v1047 = vunpack.c.h.b16 %v148
  %v1048 = vunpack.c.l.b16 %v149
  %v1049 = vunpack.c.l.b16 %v150
  %v1050 = vunpack.c.h.b16 %v150
  %v1051 = vunpack.c.l.b16 %v151
  %v1052 = vunpack.c.h.b16 %v151
  %v1053 = vunpack.c.l.b16 %v152
  %v1054 = vunpack.c.h.b16 %v152
  %v1055 = vunpack.c.l.b16 %v153
  %v1056 = vunpack.c.h.b16 %v153
  %v1057 = vunpack.c.l.b16 %v154
  %v1058 = vunpack.c.l.b16 %v155
  %v1059 = vunpack.c.h.b16 %v155
  %v1060 = vunpack.c.l.b16 %v156
  %v1061 = vunpack.c.h.b16 %v156
  %v1062 = vunpack.c.l.b16 %v157
  %v1063 = vunpack.c.h.b16 %v157
  %v1064 = vunpack.c.l.b16 %v158
  %v1065 = vunpack.c.h.b16 %v158
  %v1066 = vunpack.c.l.b16 %v159
  %v1067 = vunpack.c.l.b16 %v160
  %v1068 = vunpack.c.h.b16 %v160
  %v1069 = vunpack.c.l.b16 %v161
  %v1070 = vunpack.c.h.b16 %v161
  %v1071 = vunpack.c.l.b16 %v162
  %v1072 = vunpack.c.h.b16 %v162
  %v1073 = vunpack.c.l.b16 %v163
  %v1074 = vunpack.c.h.b16 %v163
  %v1075 = vunpack.c.l.b16 %v164
  %v1076 = vunpack.c.l.b16 %v165
  %v1077 = vunpack.c.h.b16 %v165
  %v1078 = vunpack.c.l.b16 %v166
  %v1079 = vunpack.c.h.b16 %v166
  %v1080 = vunpack.c.l.b16 %v167
  %v1081 = vunpack.c.h.b16 %v167
  %v1082 = vunpack.c.l.b16 %v168
  %v1083 = vunpack.c.h.b16 %v168
  %v1084 = vunpack.c.l.b16 %v169
  %v1085 = vunpack.c.l.b16 %v170
  %v1086 = vunpack.c.h.b16 %v170
  %v1087 = vunpack.c.l.b16 %v171
  %v1088 = vunpack.c.h.b16 %v171
  %v1089 = vunpack.c.l.b16 %v172
  %v1090 = vunpack.c.h.b16 %v172
  %v1091 = vunpack.c.l.b16 %v173
  %v1092 = vunpack.c.h.b16 %v173
  %v1093 = vunpack.c.l.b16 %v174
  %v1094 = vunpack.c.l.b16 %v175
  %v1095 = vunpack.c.h.b16 %v175
  %v1096 = vunpack.c.l.b16 %v176
  %v1097 = vunpack.c.h.b16 %v176
  %v1098 = vunpack.c.l.b16 %v177
  %v1099 = vunpack.c.h.b16 %v177
  %v1100 = vunpack.c.l.b16 %v178
  %v1101 = vunpack.c.h.b16 %v178
  %v1102 = vunpack.c.l.b16 %v179
  %v1103 = vunpack.c.l.b16 %v180
  %v1104 = vunpack.c.h.b16 %v180
  %v1105 = vunpack.c.l.b16 %v181
  %v1106 = vunpack.c.h.b16 %v181
  %v1107 = vunpack.c.l.b16 %v182
  %v1108 = vunpack.c.h.b16 %v182
  %v1109 = vunpack.c.l.b16 %v183
  %v1110 = vunpack.c.h.b16 %v183
  %v1111 = vunpack.c.l.b16 %v184
  %v1112 = vunpack.c.l.b16 %v185
  %v1113 = vunpack.c.h.b16 %v185
  %v1114 = vunpack.c.l.b16 %v186
  %v1115 = vunpack.c.h.b16 %v186
  %v1116 = vunpack.c.l.b16 %v187
  %v1117 = vunpack.c.h.b16 %v187
  %v1118 = vunpack.c.l.b16 %v188
  %v1119 = vunpack.c.h.b16 %v188
  %v1120 = vunpack.c.l.b16 %v189
  %v1121 = vunpack.c.l.b16 %v190
  %v1122 = vunpack.c.h.b16 %v190
  %v1123 = vunpack.c.l.b16 %v191
  %v1124 = vunpack.c.h.b16 %v191
  %v1125 = vunpack.c.l.b16 %v192
  %v1126 = vunpack.c.h.b16 %v192
  %v1127 = vunpack.c.l.b16 %v193
  %v1128 = vunpack.c.h.b16 %v193
  %v1129 = vunpack.c.l.b16 %v194
  %v1130 = vunpack.c.l.b16 %v195
  %v1131 = vunpack.c.h.b16 %v195
  %v1132 = vunpack.c.l.b16 %v196
  %v1133 = vunpack.c.h.b16 %v196
  %v1134 = vunpack.c.l.b16 %v197
  %v1135 = vunpack.c.h.b16 %v197
  %v1136 = vunpack.c.l.b16 %v198
  %v1137 = vunpack.c.h.b16 %v198
  %v1138 = vunpack.c.l.b16 %v199
  %v1139 = vunpack.c.l.b16 %v200
  %v1140 = vunpack.c.h.b16 %v200
  %v1141 = vunpack.c.l.b16 %v201
  %v1142 = vunpack.c.h.b16 %v201
  %v1143 = vunpack.c.l.b16 %v202
  %v1144 = vunpack.c.h.b16 %v202
  %v1145 = vunpack.c.l.b16 %v203
  %v1146 = vunpack.c.h.b16 %v203
  %v1147 = vunpack.c.l.b16 %v204
  %v1148 = vunpack.c.l.b16 %v205
  %v1149 = vunpack.c.h.b16 %v205
  %v1150 = vunpack.c.l.b16 %v206
  %v1151 = vunpack.c.h.b16 %v206
  %v1152 = vunpack.c.l.b16 %v207
  %v1153 = vunpack.c.h.b16 %v207
  %v1154 = vunpack.c.l.b16 %v208
  %v1155 = vunpack.c.h.b16 %v208
  %v1156 = vunpack.c.l.b16 %v209
  %v1157 = vunpack.c.l.b16 %v210
  %v1158 = vunpack.c.h.b16 %v210
  %v1159 = vunpack.c.l.b16 %v211
  %v1160 = vunpack.c.h.b16 %v211
  %v1161 = vunpack.c.l.b16 %v212
  %v1162 = vunpack.c.h.b16 %v212
  %v1163 = vunpack.c.l.b16 %v213
  %v1164 = vunpack.c.h.b16 %v213
  %v1165 = vunpack.c.l.b16 %v214
  %v1166 = vunpack.c.l.b16 %v215
  %v1167 = vunpack.c.h.b16 %v215
  %v1168 = vunpack.c.l.b16 %v216
  %v1169 = vunpack.c.h.b16 %v216
  %v1170 = vunpack.c.l.b16 %v217
  %v1171 = vunpack.c.h.b16 %v217
  %v1172 = vunpack.c.l.b16 %v218
  %v1173 = vunpack.c.h.b16 %v218
  %v1174 = vunpack.c.l.b16 %v219
  %v1175 = vunpack.c.l.b16 %v220
  %v1176 = vunpack.c.h.b16 %v220
  %v1177 = vunpack.c.l.b16 %v221
  %v1178 = vunpack.c.h.b16 %v221
  %v1179 = vunpack.c.l.b16 %v222
  %v1180 = vunpack.c.h.b16 %v222
  %v1181 = vunpack.c.l.b16 %v223
  %v1182 = vunpack.c.h.b16 %v223
  %v1183 = vunpack.c.l.b16 %v224
  %v1184 = vunpack.c.l.b16 %v225
  %v1185 = vunpack.c.h.b16 %v225
  %v1186 = vunpack.c.l.b16 %v226
  %v1187 = vunpack.c.h.b16 %v226
  %v1188 = vunpack.c.l.b16 %v227
  %v1189 = vunpack.c.h.b16 %v227
  %v1190 = vunpack.c.l.b16 %v228
  %v1191 = vunpack.c.h.b16 %v228
  %v1192 = vunpack.c.l.b16 %v229
  %v1193 = vunpack.c.l.b16 %v230
  %v1194 = vunpack.c.h.b16 %v230
  %v1195 = vunpack.c.l.b16 %v231
  %v1196 = vunpack.c.h.b16 %v231
  %v1197 = vunpack.c.l.b16 %v232
  %v1198 = vunpack.c.h.b16 %v232
  %v1199 = vunpack.c.l.b16 %v233
  %v1200 = vunpack.c.h.b16 %v233
  %v1201 = vunpack.c.l.b16 %v234
  %v1202 = vunpack.c.l.b16 %v235
  %v1203 = vunpack.c.h.b16 %v235
  %v1204 = vunpack.c.l.b16 %v236
  %v1205 = vunpack.c.h.b16 %v236
  %v1206 = vunpack.c.l.b16 %v237
  %v1207 = vunpack.c.h.b16 %v237
  %v1208 = vunpack.c.l.b16 %v238
  %v1209 = vunpack.c.h.b16 %v238
  %v1210 = vunpack.c.l.b16 %v239
  %v1211 = vunpack.c.l.b16 %v240
  %v1212 = vunpack.c.h.b16 %v240
  %v1213 = vunpack.c.l.b16 %v241
  %v1214 = vunpack.c.h.b16 %v241
  %v1215 = vunpack.c.l.b16 %v242
  %v1216 = vunpack.c.h.b16 %v242
  %v1217 = vunpack.c.l.b16 %v243
  %v1218 = vunpack.c.h.b16 %v243
  %v1219 = vunpack.c.l.b16 %v244
  %v1220 = vunpack.c.l.b16 %v245
  %v1221 = vunpack.c.h.b16 %v245
  %v1222 = vunpack.c.l.b16 %v246
  %v1223 = vunpack.c.h.b16 %v246
  %v1224 = vunpack.c.l.b16 %v247
  %v1225 = vunpack.c.h.b16 %v247
  %v1226 = vunpack.c.l.b16 %v248
  %v1227 = vunpack.c.h.b16 %v248
  %v1228 = vunpack.c.l.b16 %v249
  %v1229 = vunpack.c.l.b16 %v250
  %v1230 = vunpack.c.h.b16 %v250
  %v1231 = vunpack.c.l.b16 %v251
  %v1232 = vunpack.c.h.b16 %v251
  %v1233 = vunpack.c.l.b16 %v252
  %v1234 = vunpack.c.h.b16 %v252
  %v1235 = vunpack.c.l.b16 %v253
  %v1236 = vunpack.c.h.b16 %v253
  %v1237 = vunpack.c.l.b16 %v254
  %v1238 = vunpack.c.l.b16 %v255
  %v1239 = vunpack.c.h.b16 %v255
  %v1240 = vunpack.c.l.b16 %v256
  %v1241 = vunpack.c.h.b16 %v256
  %v1242 = vunpack.c.l.b16 %v257
  %v1243 = vunpack.c.h.b16 %v257
  %v1244 = vunpack.c.l.b16 %v258
  %v1245 = vunpack.c.h.b16 %v258
  %v1246 = vunpack.c.l.b16 %v259
  %v1247 = vunpack.c.l.b16 %v260
  %v1248 = vunpack.c.h.b16 %v260
  %v1249 = vunpack.c.l.b16 %v261
  %v1250 = vunpack.c.h.b16 %v261
  %v1251 = vunpack.c.l.b16 %v262
  %v1252 = vunpack.c.h.b16 %v262
  %v1253 = vunpack.c.l.b16 %v263
  %v1254 = vunpack.c.h.b16 %v263
  %v1255 = vunpack.c.l.b16 %v264
  %v1256 = vunpack.c.l.b16 %v265
  %v1257 = vunpack.c.h.b16 %v265
  %v1258 = vunpack.c.l.b16 %v266
  %v1259 = vunpack.c.h.b16 %v266
  %v1260 = vunpack.c.l.b16 %v267
  %v1261 = vunpack.c.h.b16 %v267
  %v1262 = vunpack.c.l.b16 %v268
  %v1263 = vunpack.c.h.b16 %v268
  %v1264 = vunpack.c.l.b16 %v269
  %v1265 = vunpack.c.l.b16 %v270
  %v1266 = vunpack.c.h.b16 %v270
  %v1267 = vunpack.c.l.b16 %v271
  %v1268 = vunpack.c.h.b16 %v271
  %v1269 = vunpack.c.l.b16 %v272
  %v1270 = vunpack.c.h.b16 %v272
  %v1271 = vunpack.c.l.b16 %v273
  %v1272 = vunpack.c.h.b16 %v273
  %v1273 = vunpack.c.l.b16 %v274
  %v1274 = vunpack.c.l.b16 %v275
  %v1275 = vunpack.c.h.b16 %v275
  %v1276 = vunpack.c.l.b16 %v276
  %v1277 = vunpack.c.h.b16 %v276
  %v1278 = vunpack.c.l.b16 %v277
  %v1279 = vunpack.c.h.b16 %v277
  %v1280 = vunpack.c.l.b16 %v278
  %v1281 = vunpack.c.h.b16 %v278
  %v1282 = vunpack.c.l.b16 %v279
  %v1283 = vunpack.c.l.b16 %v280
  %v1284 = vunpack.c.h.b16 %v280
  %v1285 = vunpack.c.l.b16 %v281
  %v1286 = vunpack.c.h.b16 %v281
  %v1287 = vunpack.c.l.b16 %v282
  %v1288 = vunpack.c.h.b16 %v282
  %v1289 = vunpack.c.l.b16 %v283
  %v1290 = vunpack.c.h.b16 %v283
  %v1291 = vunpack.c.l.b16 %v284
  %v1292 = vunpack.c.l.b16 %v285
  %v1293 = vunpack.c.h.b16 %v285
  %v1294 = vunpack.c.l.b16 %v286
  %v1295 = vunpack.c.h.b16 %v286
  %v1296 = vunpack.c.l.b16 %v287
  %v1297 = vunpack.c.h.b16 %v287
  %v1298 = vunpack.c.l.b16 %v288
  %v1299 = vunpack.c.h.b16 %v288
  %v1300 = vunpack.c.l.b16 %v289
  %v1301 = vunpack.c.l.b16 %v290
  %v1302 = vunpack.c.h.b16 %v290
  %v1303 = vunpack.c.l.b16 %v291
  %v1304 = vunpack.c.h.b16 %v291
  %v1305 = vunpack.c.l.b16 %v292
  %v1306 = vunpack.c.h.b16 %v292
  %v1307 = vunpack.c.l.b16 %v293
  %v1308 = vunpack.c.h.b16 %v293
  %v1309 = vunpack.c.l.b16 %v294
  %v1310 = vunpack.c.l.b16 %v295
  %v1311 = vunpack.c.h.b16 %v295
  %v1312 = vunpack.c.l.b16 %v296
  %v1313 = vunpack.c.h.b16 %v296
  %v1314 = vunpack.c.l.b16 %v297
  %v1315 = vunpack.c.h.b16 %v297
  %v1316 = vunpack.c.l.b16 %v298
  %v1317 = vunpack.c.h.b16 %v298
  %v1318 = vunpack.c.l.b16 %v299
  %v1319 = vunpack.c.l.b16 %v300
  %v1320 = vunpack.c.h.b16 %v300
  %v1321 = vunpack.c.l.b16 %v301
  %v1322 = vunpack.c.h.b16 %v301
  %v1323 = vunpack.c.l.b16 %v302
  %v1324 = vunpack.c.h.b16 %v302
  %v1325 = vunpack.c.l.b16 %v303
  %v1326 = vunpack.c.h.b16 %v303
  %v1327 = vunpack.c.l.b16 %v304
  %v1328 = vunpack.c.l.b16 %v305
  %v1329 = vunpack.c.h.b16 %v305
  %v1330 = vunpack.c.l.b16 %v306
  %v1331 = vunpack.c.h.b16 %v306
  %v1332 = vunpack.c.l.b16 %v307
  %v1333 = vunpack.c.h.b16 %v307
  %v1334 = vunpack.c.l.b16 %v308
  %v1335 = vunpack.c.h.b16 %v308
  %v1336 = vunpack.c.l.b16 %v309
  %v1337 = vunpack.c.l.b16 %v310
  %v1338 = vunpack.c.h.b16 %v310
  %v1339 = vunpack.c.l.b16 %v311
  %v1340 = vunpack.c.h.b16 %v311
  %v1341 = vunpack.c.l.b16 %v312
  %v1342 = vunpack.c.h.b16 %v312
  %v1343 = vunpack.c.l.b16 %v313
  %v1344 = vunpack.c.h.b16 %v313
  %v1345 = vunpack.c.l.b16 %v314
  %v1346 = vunpack.c.l.b16 %v315
  %v1347 = vunpack.c.h.b16 %v315
  %v1348 = vunpack.c.l.b16 %v316
  %v1349 = vunpack.c.h.b16 %v316
  %v1350 = vunpack.c.l.b16 %v317
  %v1351 = vunpack.c.h.b16 %v317
  %v1352 = vunpack.c.l.b16 %v318
  %v1353 = vunpack.c.h.b16 %v318
  %v1354 = vunpack.c.l.b16 %v319
  %v1355 = vunpack.c.l.b16 %v320
  %v1356 = vunpack.c.h.b16 %v320
  %v1357 = vunpack.c.l.b16 %v321
  %v1358 = vunpack.c.h.b16 %v321
  %v1359 = vunpack.c.l.b16 %v322
  %v1360 = vunpack.c.h.b16 %v322
  %v1361 = vunpack.c.l.b16 %v323
  %v1362 = vunpack.c.h.b16 %v323
  %v1363 = vunpack.c.l.b16 %v324
  %v1364 = vunpack.c.l.b16 %v325
  %v1365 = vunpack.c.h.b16 %v325
  %v1366 = vunpack.c.l.b16 %v326
  %v1367 = vunpack.c.h.b16 %v326
  %v1368 = vunpack.c.l.b16 %v327
  %v1369 = vunpack.c.h.b16 %v327
  %v1370 = vunpack.c.l.b16 %v328
  %v1371 = vunpack.c.h.b16 %v328
  %v1372 = vunpack.c.l.b16 %v329
  %v1373 = vunpack.c.l.b16 %v330
  %v1374 = vunpack.c.h.b16 %v330
  %v1375 = vunpack.c.l.b16 %v331
  %v1376 = vunpack.c.h.b16 %v331
  %v1377 = vunpack.c.l.b16 %v332
  %v1378 = vunpack.c.h.b16 %v332
  %v1379 = vunpack.c.l.b16 %v333
  %v1380 = vunpack.c.h.b16 %v333
  %v1381 = vunpack.c.l.b16 %v334
  %v1382 = vpack.c.b16 %v815, %v806
  %v1383 = vpack.c.b16 %v816, %v807
  %v1384 = vpack.c.b16 %v817, %v808
  %v1385 = vpack.c.b16 %v818, %v809
  %v1386 = vpack.c.b16 %v819, %v810
  %v1387 = vpack.c.b16 %v820, %v811
  %v1388 = vpack.c.b16 %v821, %v812
  %v1389 = vpack.c.b16 %v822, %v813
  %v1390 = vpack.c.b16 %v823, %v814
  %v1391 = vpack.c.b16 %v833, %v824
  %v1392 = vpack.c.b16 %v834, %v825
  %v1393 = vpack.c.b16 %v835, %v826
  %v1394 = vpack.c.b16 %v836, %v827
  %v1395 = vpack.c.b16 %v837, %v828
  %v1396 = vpack.c.b16 %v838, %v829
  %v1397 = vpack.c.b16 %v839, %v830
  %v1398 = vpack.c.b16 %v840, %v831
  %v1399 = vpack.c.b16 %v841, %v832
  %v1400 = vpack.c.b16 %v851, %v842
  %v1401 = vpack.c.b16 %v852, %v843
  %v1402 = vpack.c.b16 %v853, %v844
  %v1403 = vpack.c.b16 %v854, %v845
  %v1404 = vpack.c.b16 %v855, %v846
  %v1405 = vpack.c.b16 %v856, %v847
  %v1406 = vpack.c.b16 %v857, %v848
  %v1407 = vpack.c.b16 %v858, %v849
  %v1408 = vpack.c.b16 %v859, %v850
  %v1409 = vpack.c.b16 %v869, %v860
  %v1410 = vpack.c.b16 %v870, %v861
  %v1411 = vpack.c.b16 %v871, %v862
  %v1412 = vpack.c.b16 %v872, %v863
  %v1413 = vpack.c.b16 %v873, %v864
  %v1414 = vpack.c.b16 %v874, %v865
  %v1415 = vpack.c.b16 %v875, %v866
  %v1416 = vpack.c.b16 %v876, %v867
  %v1417 = vpack.c.b16 %v877, %v868
  %v1418 = vpack.c.b16 %v887, %v878
  %v1419 = vpack.c.b16 %v888, %v879
  %v1420 = vpack.c.b16 %v889, %v880
  %v1421 = vpack.c.b16 %v890, %v881
  %v1422 = vpack.c.b16 %v891, %v882
  %v1423 = vpack.c.b16 %v892, %v883
  %v1424 = vpack.c.b16 %v893, %v884
  %v1425 = vpack.c.b16 %v894, %v885
  %v1426 = vpack.c.b16 %v895, %v886
  %v1427 = vpack.c.b16 %v905, %v896
  %v1428 = vpack.c.b16 %v906, %v897
  %v1429 = vpack.c.b16 %v907, %v898
  %v1430 = vpack.c.b16 %v908, %v899
  %v1431 = vpack.c.b16 %v909, %v900
  %v1432 = vpack.c.b16 %v910, %v901
  %v1433 = vpack.c.b16 %v911, %v902
  %v1434 = vpack.c.b16 %v912, %v903
  %v1435 = vpack.c.b16 %v913, %v904
  %v1436 = vpack.c.b16 %v923, %v914
  %v1437 = vpack.c.b16 %v924, %v915
  %v1438 = vpack.c.b16 %v925, %v916
  %v1439 = vpack.c.b16 %v926, %v917
  %v1440 = vpack.c.b16 %v927, %v918
  %v1441 = vpack.c.b16 %v928, %v919
  %v1442 = vpack.c.b16 %v929, %v920
  %v1443 = vpack.c.b16 %v930, %v921
  %v1444 = vpack.c.b16 %v931, %v922
  %v1445 = vpack.c.b16 %v941, %v932
  %v1446 = vpack.c.b16 %v942, %v933
  %v1447 = vpack.c.b16 %v943, %v934
  %v1448 = vpack.c.b16 %v944, %v935
  %v1449 = vpack.c.b16 %v945, %v936
  %v1450 = vpack.c.b16 %v946, %v937
  %v1451 = vpack.c.b16 %v947, %v938
  %v1452 = vpack.c.b16 %v948, %v939
  %v1453 = vpack.c.b16 %v949, %v940
  %v1454 = vpack.c.b16 %v959, %v950
  %v1455 = vpack.c.b16 %v960, %v951
  %v1456 = vpack.c.b16 %v961, %v952
  %v1457 = vpack.c.b16 %v962, %v953
  %v1458 = vpack.c.b16 %v963, %v954
  %v1459 = vpack.c.b16 %v964, %v955
  %v1460 = vpack.c.b16 %v965, %v956
  %v1461 = vpack.c.b16 %v966, %v957
  %v1462 = vpack.c.b16 %v967, %v958
  %v1463 = vpack.c.b16 %v977, %v968
  %v1464 = vpack.c.b16 %v978, %v969
  %v1465 = vpack.c.b16 %v979, %v970
  %v1466 = vpack.c.b16 %v980, %v971
  %v1467 = vpack.c.b16 %v981, %v972
  %v1468 = vpack.c.b16 %v982, %v973
  %v1469 = vpack.c.b16 %v983, %v974
  %v1470 = vpack.c.b16 %v984, %v975
  %v1471 = vpack.c.b16 %v985, %v976
  %v1472 = vpack.c.b16 %v995, %v986
  %v1473 = vpack.c.b16 %v996, %v987
  %v1474 = vpack.c.b16 %v997, %v988
  %v1475 = vpack.c.b16 %v998, %v989
  %v1476 = vpack.c.b16 %v999, %v990
  %v1477 = vpack.c.b16 %v1000, %v991
  %v1478 = vpack.c.b16 %v1001, %v992
  %v1479 = vpack.c.b16 %v1002, %v993
  %v1480 = vpack.c.b16 %v1003, %v994
  %v1481 = vpack.c.b16 %v1013, %v1004
  %v1482 = vpack.c.b16 %v1014, %v1005
  %v1483 = vpack.c.b16 %v1015, %v1006
  %v1484 = vpack.c.b16 %v1016, %v1007
  %v1485 = vpack.c.b16 %v1017, %v1008
  %v1486 = vpack.c.b16 %v1018, %v1009
  %v1487 = vpack.c.b16 %v1019, %v1010
  %v1488 = vpack.c.b16 %v1020, %v1011
  %v1489 = vpack.c.b16 %v1021, %v1012
  %v1490 = vpack.c.b16 %v1031, %v1022
  %v1491 = vpack.c.b16 %v1032, %v1023
  %v1492 = vpack.c.b16 %v1033, %v1024
  %v1493 = vpack.c.b16 %v1034, %v1025
  %v1494 = vpack.c.b16 %v1035, %v1026
  %v1495 = vpack.c.b16 %v1036, %v1027
  %v1496 = vpack.c.b16 %v1037, %v1028
  %v1497 = vpack.c.b16 %v1038, %v1029
  %v1498 = vpack.c.b16 %v1039, %v1030
  %v1499 = vpack.c.b16 %v1049, %v1040
  %v1500 = vpack.c.b16 %v1050, %v1041
  %v1501 = vpack.c.b16 %v1051, %v1042
  %v1502 = vpack.c.b16 %v1052, %v1043
  %v1503 = vpack.c.b16 %v1053, %v1044
  %v1504 = vpack.c.b16 %v1054, %v1045
  %v1505 = vpack.c.b16 %v1055, %v1046
  %v1506 = vpack.c.b16 %v1056, %v1047
  %v1507 = vpack.c.b16 %v1057, %v1048
  %v1508 = vpack.c.b16 %v1067, %v1058
  %v1509 = vpack.c.b16 %v1068, %v1059
  %v1510 = vpack.c.b16 %v1069, %v1060
  %v1511 = vpack.c.b16 %v1070, %v1061
  %v1512 = vpack.c.b16 %v1071, %v1062
  %v1513 = vpack.c.b16 %v1072, %v1063
  %v1514 = vpack.c.b16 %v1073, %v1064
  %v1515 = vpack.c.b16 %v1074, %v1065
  %v1516 = vpack.c.b16 %v1075, %v1066
  %v1517 = vpack.c.b16 %v1085, %v1076
  %v1518 = vpack.c.b16 %v1086, %v1077
  %v1519 = vpack.c.b16 %v1087, %v1078
  %v1520 = vpack.c.b16 %v1088, %v1079
  %v1521 = vpack.c.b16 %v1089, %v1080
  %v1522 = vpack.c.b16 %v1090, %v1081
  %v1523 = vpack.c.b16 %v1091, %v1082
  %v1524 = vpack.c.b16 %v1092, %v1083
  %v1525 = vpack.c.b16 %v1093, %v1084
  %v1526 = vpack.c.b16 %v1103, %v1094
  %v1527 = vpack.c.b16 %v1104, %v1095
  %v1528 = vpack.c.b16 %v1105, %v1096
  %v1529 = vpack.c.b16 %v1106, %v1097
  %v1530 = vpack.c.b16 %v1107, %v1098
  %v1531 = vpack.c.b16 %v1108, %v1099
  %v1532 = vpack.c.b16 %v1109, %v1100
  %v1533 = vpack.c.b16 %v1110, %v1101
  %v1534 = vpack.c.b16 %v1111, %v1102
  %v1535 = vpack.c.b16 %v1121, %v1112
  %v1536 = vpack.c.b16 %v1122, %v1113
  %v1537 = vpack.c.b16 %v1123, %v1114
  %v1538 = vpack.c.b16 %v1124, %v1115
  %v1539 = vpack.c.b16 %v1125, %v1116
  %v1540 = vpack.c.b16 %v1126, %v1117
  %v1541 = vpack.c.b16 %v1127, %v1118
  %v1542 = vpack.c.b16 %v1128, %v1119
  %v1543 = vpack.c.b16 %v1129, %v1120
  %v1544 = vpack.c.b16 %v1139, %v1130
  %v1545 = vpack.c.b16 %v1140, %v1131
  %v1546 = vpack.c.b16 %v1141, %v1132
  %v1547 = vpack.c.b16 %v1142, %v1133
  %v1548 = vpack.c.b16 %v1143, %v1134
  %v1549 = vpack.c.b16 %v1144, %v1135
  %v1550 = vpack.c.b16 %v1145, %v1136
  %v1551 = vpack.c.b16 %v1146, %v1137
  %v1552 = vpack.c.b16 %v1147, %v1138
  %v1553 = vpack.c.b16 %v1157, %v1148
  %v1554 = vpack.c.b16 %v1158, %v1149
  %v1555 = vpack.c.b16 %v1159, %v1150
  %v1556 = vpack.c.b16 %v1160, %v1151
  %v1557 = vpack.c.b16 %v1161, %v1152
  %v1558 = vpack.c.b16 %v1162, %v1153
  %v1559 = vpack.c.b16 %v1163, %v1154
  %v1560 = vpack.c.b16 %v1164, %v1155
  %v1561 = vpack.c.b16 %v1165, %v1156
  %v1562 = vpack.c.b16 %v1175, %v1166
  %v1563 = vpack.c.b16 %v1176, %v1167
  %v1564 = vpack.c.b16 %v1177, %v1168
  %v1565 = vpack.c.b16 %v1178, %v1169
  %v1566 = vpack.c.b16 %v1179, %v1170
  %v1567 = vpack.c.b16 %v1180, %v1171
  %v1568 = vpack.c.b16 %v1181, %v1172
  %v1569 = vpack.c.b16 %v1182, %v1173
  %v1570 = vpack.c.b16 %v1183, %v1174
  %v1571 = vpack.c.b16 %v1193, %v1184
  %v1572 = vpack.c.b16 %v1194, %v1185
  %v1573 = vpack.c.b16 %v1195, %v1186
  %v1574 = vpack.c.b16 %v1196, %v1187
  %v1575 = vpack.c.b16 %v1197, %v1188
  %v1576 = vpack.c.b16 %v1198, %v1189
  %v1577 = vpack.c.b16 %v1199, %v1190
  %v1578 = vpack.c.b16 %v1200, %v1191
  %v1579 = vpack.c.b16 %v1201, %v1192
  %v1580 = vpack.c.b16 %v1211, %v1202
  %v1581 = vpack.c.b16 %v1212, %v1203
  %v1582 = vpack.c.b16 %v1213, %v1204
  %v1583 = vpack.c.b16 %v1214, %v1205
  %v1584 = vpack.c.b16 %v1215, %v1206
  %v1585 = vpack.c.b16 %v1216, %v1207
  %v1586 = vpack.c.b16 %v1217, %v1208
  %v1587 = vpack.c.b16 %v1218, %v1209
  %v1588 = vpack.c.b16 %v1219, %v1210
  %v1589 = vpack.c.b16 %v1229, %v1220
  %v1590 = vpack.c.b16 %v1230, %v1221
  %v1591 = vpack.c.b16 %v1231, %v1222
  %v1592 = vpack.c.b16 %v1232, %v1223
  %v1593 = vpack.c.b16 %v1233, %v1224
  %v1594 = vpack.c.b16 %v1234, %v1225
  %v1595 = vpack.c.b16 %v1235, %v1226
  %v1596 = vpack.c.b16 %v1236, %v1227
  %v1597 = vpack.c.b16 %v1237, %v1228
  %v1598 = vpack.c.b16 %v1247, %v1238
  %v1599 = vpack.c.b16 %v1248, %v1239
  %v1600 = vpack.c.b16 %v1249, %v1240
  %v1601 = vpack.c.b16 %v1250, %v1241
  %v1602 = vpack.c.b16 %v1251, %v1242
  %v1603 = vpack.c.b16 %v1252, %v1243
  %v1604 = vpack.c.b16 %v1253, %v1244
  %v1605 = vpack.c.b16 %v1254, %v1245
  %v1606 = vpack.c.b16 %v1255, %v1246
  %v1607 = vpack.c.b16 %v1265, %v1256
  %v1608 = vpack.c.b16 %v1266, %v1257
  %v1609 = vpack.c.b16 %v1267, %v1258
  %v1610 = vpack.c.b16 %v1268, %v1259
  %v1611 = vpack.c.b16 %v1269, %v1260
  %v1612 = vpack.c.b16 %v1270, %v1261
  %v1613 = vpack.c.b16 %v1271, %v1262
  %v1614 = vpack.c.b16 %v1272, %v1263
  %v1615 = vpack.c.b16 %v1273, %v1264
  %v1616 = vpack.c.b16 %v1283, %v1274
  %v1617 = vpack.c.b16 %v1284, %v1275
  %v1618 = vpack.c.b16 %v1285, %v1276
  %v1619 = vpack.c.b16 %v1286, %v1277
  %v1620 = vpack.c.b16 %v1287, %v1278
  %v1621 = vpack.c.b16 %v1288, %v1279
  %v1622 = vpack.c.b16 %v1289, %v1280
  %v1623 = vpack.c.b16 %v1290, %v1281
  %v1624 = vpack.c.b16 %v1291, %v1282
  %v1625 = vpack.c.b16 %v1301, %v1292
  %v1626 = vpack.c.b16 %v1302, %v1293
  %v1627 = vpack.c.b16 %v1303, %v1294
  %v1628 = vpack.c.b16 %v1304, %v1295
  %v1629 = vpack.c.b16 %v1305, %v1296
  %v1630 = vpack.c.b16 %v1306, %v1297
  %v1631 = vpack.c.b16 %v1307, %v1298
  %v1632 = vpack.c.b16 %v1308, %v1299
  %v1633 = vpack.c.b16 %v1309, %v1300
  %v1634 = vpack.c.b16 %v1319, %v1310
  %v1635 = vpack.c.b16 %v1320, %v1311
  %v1636 = vpack.c.b16 %v1321, %v1312
  %v1637 = vpack.c.b16 %v1322, %v1313
  %v1638 = vpack.c.b16 %v1323, %v1314
  %v1639 = vpack.c.b16 %v1324, %v1315
  %v1640 = vpack.c.b16 %v1325, %v1316
  %v1641 = vpack.c.b16 %v1326, %v1317
  %v1642 = vpack.c.b16 %v1327, %v1318
  %v1643 = vpack.c.b16 %v1337, %v1328
  %v1644 = vpack.c.b16 %v1338, %v1329
  %v1645 = vpack.c.b16 %v1339, %v1330
  %v1646 = vpack.c.b16 %v1340, %v1331
  %v1647 = vpack.c.b16 %v1341, %v1332
  %v1648 = vpack.c.b16 %v1342, %v1333
  %v1649 = vpack.c.b16 %v1343, %v1334
  %v1650 = vpack.c.b16 %v1344, %v1335
  %v1651 = vpack.c.b16 %v1345, %v1336
  %v1652 = vpack.c.b16 %v1355, %v1346
  %v1653 = vpack.c.b16 %v1356, %v1347
  %v1654 = vpack.c.b16 %v1357, %v1348
  %v1655 = vpack.c.b16 %v1358, %v1349
  %v1656 = vpack.c.b16 %v1359, %v1350
  %v1657 = vpack.c.b16 %v1360, %v1351
  %v1658 = vpack.c.b16 %v1361, %v1352
  %v1659 = vpack.c.b16 %v1362, %v1353
  %v1660 = vpack.c.b16 %v1363, %v1354
  %v1661 = vpack.c.b16 %v1373, %v1364
  %v1662 = vpack.c.b16 %v1374, %v1365
  %v1663 = vpack.c.b16 %v1375, %v1366
  %v1664 = vpack.c.b16 %v1376, %v1367
  %v1665 = vpack.c.b16 %v1377, %v1368
  %v1666 = vpack.c.b16 %v1378, %v1369
  %v1667 = vpack.c.b16 %v1379, %v1370
  %v1668 = vpack.c.b16 %v1380, %v1371
  %v1669 = vpack.c.b16 %v1381, %v1372
  %v2102 = vunpack.c.l.b16 %v335
  %v2103 = vunpack.c.l.b16 %v336
  %v2104 = vunpack.c.l.b16 %v337
  %v2105 = vunpack.c.l.b16 %v338
  %v2106 = vunpack.c.l.b16 %v339
  %v2107 = vunpack.c.l.b16 %v340
  %v2108 = vunpack.c.l.b16 %v341
  %v2109 = vunpack.c.l.b16 %v342
  %v2110 = vunpack.c.l.b16 %v343
  %v2111 = vunpack.c.l.b16 %v344
  %v2112 = vunpack.c.l.b16 %v345
  %v2113 = vunpack.c.l.b16 %v346
  %v2114 = vunpack.c.l.b16 %v347
  %v2115 = vunpack.c.l.b16 %v348
  %v2116 = vunpack.c.l.b16 %v349
  %v2117 = vunpack.c.l.b16 %v350
  %v2118 = vunpack.c.l.b16 %v351
  %v2119 = vunpack.c.l.b16 %v352
  %v2120 = vunpack.c.l.b16 %v353
  %v2121 = vunpack.c.l.b16 %v354
  %v2122 = vunpack.c.l.b16 %v355
  %v2123 = vunpack.c.l.b16 %v356
  %v2124 = vunpack.c.l.b16 %v357
  %v2125 = vunpack.c.l.b16 %v358
  %v2126 = vunpack.c.l.b16 %v359
  %v2127 = vunpack.c.l.b16 %v360
  %v2128 = vunpack.c.l.b16 %v361
  %v2129 = vunpack.c.l.b16 %v362
  %v2130 = vunpack.c.l.b16 %v363
  %v2131 = vunpack.c.l.b16 %v364
  %v2132 = vunpack.c.l.b16 %v365
  %v2133 = vunpack.c.l.b16 %v366
  %v2134 = vunpack.c.l.b16 %v367
  %v2135 = vunpack.c.l.b16 %v368
  %v2136 = vunpack.c.l.b16 %v369
  %v2137 = vunpack.c.l.b16 %v370
  %v2138 = vunpack.c.l.b16 %v371
  %v2139 = vunpack.c.l.b16 %v372
  %v2140 = vunpack.c.l.b16 %v373
  %v2141 = vunpack.c.l.b16 %v374
  %v2142 = vunpack.c.l.b16 %v375
  %v2143 = vunpack.c.l.b16 %v376
  %v2144 = vunpack.c.l.b16 %v377
  %v2145 = vunpack.c.l.b16 %v378
  %v2146 = vunpack.c.l.b16 %v379
  %v2147 = vunpack.c.l.b16 %v380
  %v2148 = vunpack.c.l.b16 %v381
  %v2149 = vunpack.c.l.b16 %v382
  %v2150 = vunpack.c.l.b16 %v383
  %v2151 = vunpack.c.l.b16 %v384
  %v2152 = vunpack.c.l.b16 %v385
  %v2153 = vunpack.c.l.b16 %v386
  %v2154 = vunpack.c.l.b16 %v387
  %v2155 = vunpack.c.l.b16 %v388
  %v2156 = vunpack.c.l.b16 %v389
  %v2157 = vunpack.c.l.b16 %v390
  %v2158 = vunpack.c.l.b16 %v391
  %v2159 = vunpack.c.l.b16 %v392
  %v2160 = vunpack.c.l.b16 %v393
  %v2161 = vunpack.c.l.b16 %v394
  %v2162 = vunpack.c.l.b16 %v395
  %v2163 = vunpack.c.l.b16 %v396
  %v2164 = vunpack.c.l.b16 %v397
  %v2165 = vunpack.c.l.b16 %v398
  %v2166 = vunpack.c.l.b16 %v399
  %v2167 = vunpack.c.l.b16 %v400
  %v2168 = vunpack.c.l.b16 %v401
  %v2169 = vunpack.c.l.b16 %v402
  %v2170 = vunpack.c.l.b16 %v403
  %v2171 = vunpack.c.l.b16 %v404
  %v2172 = vunpack.c.l.b16 %v405
  %v2173 = vunpack.c.l.b16 %v406
  %v2174 = vunpack.c.l.b16 %v407
  %v2175 = vunpack.c.l.b16 %v408
  %v2176 = vunpack.c.l.b16 %v409
  %v2177 = vunpack.c.l.b16 %v410
  %v2178 = vunpack.c.l.b16 %v411
  %v2179 = vunpack.c.l.b16 %v412
  %v2180 = vunpack.c.l.b16 %v413
  %v2181 = vunpack.c.l.b16 %v414
  %v2182 = vunpack.c.l.b16 %v415
  %v2183 = vunpack.c.l.b16 %v416
  %v2184 = vunpack.c.l.b16 %v417
  %v2185 = vunpack.c.l.b16 %v418
  %v2186 = vunpack.c.l.b16 %v419
  %v2187 = vunpack.c.l.b16 %v420
  %v2188 = vunpack.c.l.b16 %v421
  %v2189 = vunpack.c.l.b16 %v422
  %v2190 = vunpack.c.l.b16 %v423
  %v2191 = vunpack.c.l.b16 %v424
  %v2192 = vunpack.c.l.b16 %v425
  %v2193 = vunpack.c.l.b16 %v426
  %v2194 = vunpack.c.l.b16 %v427
  %v2195 = vunpack.c.l.b16 %v428
  %v2196 = vunpack.c.l.b16 %v429
  %v2197 = vunpack.c.l.b16 %v430
  %v2198 = vunpack.c.l.b16 %v431
  %v2199 = vunpack.c.l.b16 %v432
  %v2200 = vunpack.c.l.b16 %v433
  %v2201 = vunpack.c.l.b16 %v434
  %v2202 = vunpack.c.l.b16 %v435
  %v2203 = vunpack.c.l.b16 %v436
  %v2204 = vunpack.c.l.b16 %v437
  %v2205 = vunpack.c.l.b16 %v438
  %v2206 = vunpack.c.l.b16 %v439
  %v2207 = vunpack.c.l.b16 %v440
  %v2208 = vunpack.c.l.b16 %v441
  %v2209 = vunpack.c.l.b16 %v442
  %v2210 = vunpack.c.l.b16 %v443
  %v2211 = vunpack.c.l.b16 %v444
  %v2212 = vunpack.c.l.b16 %v445
  %v2213 = vunpack.c.l.b16 %v446
  %v2214 = vunpack.c.l.b16 %v447
  %v2215 = vunpack.c.l.b16 %v448
  %v2216 = vunpack.c.l.b16 %v449
  %v2217 = vunpack.c.l.b16 %v450
  %v2218 = vunpack.c.l.b16 %v451
  %v2219 = vunpack.c.l.b16 %v452
  %v2220 = vunpack.c.l.b16 %v453
  %v2221 = vunpack.c.l.b16 %v454
  %v2222 = vunpack.c.l.b16 %v455
  %v2223 = vunpack.c.l.b16 %v456
  %v2224 = vunpack.c.l.b16 %v457
  %v2225 = vunpack.c.l.b16 %v458
  %v2226 = vunpack.c.l.b16 %v459
  %v2227 = vunpack.c.l.b16 %v460
  %v2228 = vunpack.c.l.b16 %v461
  %v2229 = vunpack.c.l.b16 %v462
  %v2230 = vunpack.c.l.b16 %v463
  %v2231 = vunpack.c.l.b16 %v464
  %v2232 = vunpack.c.l.b16 %v465
  %v2233 = vunpack.c.l.b16 %v466
  %v2234 = vunpack.c.l.b16 %v467
  %v2235 = vunpack.c.l.b16 %v468
  %v2236 = vunpack.c.l.b16 %v469
  %v2237 = vunpack.c.l.b16 %v470
  %v2238 = vunpack.c.l.b16 %v471
  %v2239 = vunpack.c.l.b16 %v472
  %v2240 = vunpack.c.l.b16 %v473
  %v2241 = vunpack.c.l.b16 %v474
  %v2242 = vunpack.c.l.b16 %v475
  %v2243 = vunpack.c.l.b16 %v476
  %v2244 = vunpack.c.l.b16 %v477
  %v2245 = vunpack.c.l.b16 %v478
  %v2246 = vpack.c.b16 %v2103, %v2102
  %v2247 = vpack.c.b16 %v2105, %v2104
  %v2248 = vpack.c.b16 %v2107, %v2106
  %v2249 = vpack.c.b16 %v2109, %v2108
  %v2250 = vpack.c.b16 %v2111, %v2110
  %v2251 = vpack.c.b16 %v2113, %v2112
  %v2252 = vpack.c.b16 %v2115, %v2114
  %v2253 = vpack.c.b16 %v2117, %v2116
  %v2254 = vpack.c.b16 %v2119, %v2118
  %v2255 = vpack.c.b16 %v2121, %v2120
  %v2256 = vpack.c.b16 %v2123, %v2122
  %v2257 = vpack.c.b16 %v2125, %v2124
  %v2258 = vpack.c.b16 %v2127, %v2126
  %v2259 = vpack.c.b16 %v2129, %v2128
  %v2260 = vpack.c.b16 %v2131, %v2130
  %v2261 = vpack.c.b16 %v2133, %v2132
  %v2262 = vpack.c.b16 %v2135, %v2134
  %v2263 = vpack.c.b16 %v2137, %v2136
  %v2264 = vpack.c.b16 %v2139, %v2138
  %v2265 = vpack.c.b16 %v2141, %v2140
  %v2266 = vpack.c.b16 %v2143, %v2142
  %v2267 = vpack.c.b16 %v2145, %v2144
  %v2268 = vpack.c.b16 %v2147, %v2146
  %v2269 = vpack.c.b16 %v2149, %v2148
  %v2270 = vpack.c.b16 %v2151, %v2150
  %v2271 = vpack.c.b16 %v2153, %v2152
  %v2272 = vpack.c.b16 %v2155, %v2154
  %v2273 = vpack.c.b16 %v2157, %v2156
  %v2274 = vpack.c.b16 %v2159, %v2158
  %v2275 = vpack.c.b16 %v2161, %v2160
  %v2276 = vpack.c.b16 %v2163, %v2162
  %v2277 = vpack.c.b16 %v2165, %v2164
  %v2278 = vpack.c.b16 %v2167, %v2166
  %v2279 = vpack.c.b16 %v2169, %v2168
  %v2280 = vpack.c.b16 %v2171, %v2170
  %v2281 = vpack.c.b16 %v2173, %v2172
  %v2282 = vpack.c.b16 %v2175, %v2174
  %v2283 = vpack.c.b16 %v2177, %v2176
  %v2284 = vpack.c.b16 %v2179, %v2178
  %v2285 = vpack.c.b16 %v2181, %v2180
  %v2286 = vpack.c.b16 %v2183, %v2182
  %v2287 = vpack.c.b16 %v2185, %v2184
  %v2288 = vpack.c.b16 %v2187, %v2186
  %v2289 = vpack.c.b16 %v2189, %v2188
  %v2290 = vpack.c.b16 %v2191, %v2190
  %v2291 = vpack.c.b16 %v2193, %v2192
  %v2292 = vpack.c.b16 %v2195, %v2194
  %v2293 = vpack.c.b16 %v2197, %v2196
  %v2294 = vpack.c.b16 %v2199, %v2198
  %v2295 = vpack.c.b16 %v2201, %v2200
  %v2296 = vpack.c.b16 %v2203, %v2202
  %v2297 = vpack.c.b16 %v2205, %v2204
  %v2298 = vpack.c.b16 %v2207, %v2206
  %v2299 = vpack.c.b16 %v2209, %v2208
  %v2300 = vpack.c.b16 %v2211, %v2210
  %v2301 = vpack.c.b16 %v2213, %v2212
  %v2302 = vpack.c.b16 %v2215, %v2214
  %v2303 = vpack.c.b16 %v2217, %v2216
  %v2304 = vpack.c.b16 %v2219, %v2218
  %v2305 = vpack.c.b16 %v2221, %v2220
  %v2306 = vpack.c.b16 %v2223, %v2222
  %v2307 = vpack.c.b16 %v2225, %v2224
  %v2308 = vpack.c.b16 %v2227, %v2226
  %v2309 = vpack.c.b16 %v2229, %v2228
  %v2310 = vpack.c.b16 %v2231, %v2230
  %v2311 = vpack.c.b16 %v2233, %v2232
  %v2312 = vpack.c.b16 %v2235, %v2234
  %v2313 = vpack.c.b16 %v2237, %v2236
  %v2314 = vpack.c.b16 %v2239, %v2238
  %v2315 = vpack.c.b16 %v2241, %v2240
  %v2316 = vpack.c.b16 %v2243, %v2242
  %v2317 = vpack.c.b16 %v2245, %v2244
  %2390 = vmatprep.subr.bf16.mxu0 0
  %2391 = vmatpush1.bf16.msra.mxu0 %v2246
  %2392 = vmatprep.subr.bf16.mxu0 0
  %2393 = vmatpush1.bf16.msra.mxu0 %v2247
  %2394 = vmatprep.subr.bf16.mxu0 0
  %2395 = vmatpush1.bf16.msra.mxu0 %v2248
  %2396 = vmatprep.subr.bf16.mxu0 0
  %2397 = vmatpush1.bf16.msra.mxu0 %v2249
  %2398 = vmatprep.subr.bf16.mxu0 0
  %2399 = vmatpush1.bf16.msra.mxu0 %v2250
  %2400 = vmatprep.subr.bf16.mxu0 0
  %2401 = vmatpush1.bf16.msra.mxu0 %v2251
  %2402 = vmatprep.subr.bf16.mxu0 0
  %2403 = vmatpush1.bf16.msra.mxu0 %v2252
  %2404 = vmatprep.subr.bf16.mxu0 0
  %2405 = vmatpush1.bf16.msra.mxu0 %v2253
  %2406 = vmatprep.subr.bf16.mxu0 0
  %2407 = vmatpush1.bf16.msra.mxu0 %v2254
  %2408 = vmatprep.subr.bf16.mxu0 0
  %2409 = vmatpush1.bf16.msra.mxu0 %v2255
  %2410 = vmatprep.subr.bf16.mxu0 0
  %2411 = vmatpush1.bf16.msra.mxu0 %v2256
  %2412 = vmatprep.subr.bf16.mxu0 0
  %2413 = vmatpush1.bf16.msra.mxu0 %v2257
  %2414 = vmatprep.subr.bf16.mxu0 0
  %2415 = vmatpush1.bf16.msra.mxu0 %v2258
  %2416 = vmatprep.subr.bf16.mxu0 0
  %2417 = vmatpush1.bf16.msra.mxu0 %v2259
  %2418 = vmatprep.subr.bf16.mxu0 0
  %2419 = vmatpush1.bf16.msra.mxu0 %v2260
  %2420 = vmatprep.subr.bf16.mxu0 0
  %2421 = vmatpush1.bf16.msra.mxu0 %v2261
  %2422 = vmatprep.mubr.bf16.mxu0 %v1383
  %2423 = vmatmul.mubr.bf16.gmra.mrb[0].mxu0 %v1382
  %v2424 = vpop.f32.mrb[0].mxu0
  %v2425 = vadd.f32 %v484, %v2424
  %v2426 = vpop.f32.mrb[0].mxu0
  %v2427 = vpop.f32.mrb[0].mxu0
  %v2428 = vadd.f32 %v484, %v2427
  %v2429 = vpop.f32.mrb[0].mxu0
  %2430 = vmatprep.mubr.bf16.mxu0 %v1392
  %2431 = vmatmul.mubr.bf16.gmra.mrb[0].mxu0 %v1391
  %v2432 = vpop.f32.mrb[0].mxu0
  %v2433 = vadd.f32 %v484, %v2432
  %v2434 = vpop.f32.mrb[0].mxu0
  %v2435 = vpop.f32.mrb[0].mxu0
  %v2436 = vadd.f32 %v484, %v2435
  %v2437 = vpop.f32.mrb[0].mxu0
  %2438 = vmatprep.mubr.bf16.mxu0 %v1401
  %2439 = vmatmul.mubr.bf16.gmra.mrb[0].mxu0 %v1400
  %v2440 = vpop.f32.mrb[0].mxu0
  %v2441 = vadd.f32 %v484, %v2440
  %v2442 = vpop.f32.mrb[0].mxu0
  %v2443 = vpop.f32.mrb[0].mxu0
  %v2444 = vadd.f32 %v484, %v2443
  %v2445 = vpop.f32.mrb[0].mxu0
  %2446 = vmatprep.mubr.bf16.mxu0 %v1410
  %2447 = vmatmul.mubr.bf16.gmra.mrb[0].mxu0 %v1409
  %v2448 = vpop.f32.mrb[0].mxu0
  %v2449 = vadd.f32 %v484, %v2448
  %v2450 = vpop.f32.mrb[0].mxu0
  %v2451 = vpop.f32.mrb[0].mxu0
  %v2452 = vadd.f32 %v484, %v2451
  %v2453 = vpop.f32.mrb[0].mxu0
  %2454 = vmatprep.mubr.bf16.mxu0 %v1419
  %2455 = vmatmul.mubr.bf16.gmra.mrb[0].mxu0 %v1418
  %v2456 = vpop.f32.mrb[0].mxu0
  %v2457 = vadd.f32 %v484, %v2456
  %v2458 = vpop.f32.mrb[0].mxu0
  %v2459 = vpop.f32.mrb[0].mxu0
  %v2460 = vadd.f32 %v484, %v2459
  %v2461 = vpop.f32.mrb[0].mxu0
  %2462 = vmatprep.mubr.bf16.mxu0 %v1428
  %2463 = vmatmul.mubr.bf16.gmra.mrb[0].mxu0 %v1427
  %v2464 = vpop.f32.mrb[0].mxu0
  %v2465 = vadd.f32 %v484, %v2464
  %v2466 = vpop.f32.mrb[0].mxu0
  %v2467 = vpop.f32.mrb[0].mxu0
  %v2468 = vadd.f32 %v484, %v2467
  %v2469 = vpop.f32.mrb[0].mxu0
  %2470 = vmatprep.mubr.bf16.mxu0 %v1437
  %2471 = vmatmul.mubr.bf16.gmra.mrb[0].mxu0 %v1436
  %v2472 = vpop.f32.mrb[0].mxu0
  %v2473 = vadd.f32 %v484, %v2472
  %v2474 = vpop.f32.mrb[0].mxu0
  %v2475 = vpop.f32.mrb[0].mxu0
  %v2476 = vadd.f32 %v484, %v2475
  %v2477 = vpop.f32.mrb[0].mxu0
  %2478 = vmatprep.mubr.bf16.mxu0 %v1446
  %2479 = vmatmul.mubr.bf16.gmra.mrb[0].mxu0 %v1445
  %v2480 = vpop.f32.mrb[0].mxu0
  %v2481 = vadd.f32 %v484, %v2480
  %v2482 = vpop.f32.mrb[0].mxu0
  %v2483 = vpop.f32.mrb[0].mxu0
  %v2484 = vadd.f32 %v484, %v2483
  %v2485 = vpop.f32.mrb[0].mxu0
  %2486 = vmatprep.mubr.bf16.mxu0 %v1455
  %2487 = vmatmul.mubr.bf16.gmra.mrb[0].mxu0 %v1454
  %v2488 = vpop.f32.mrb[0].mxu0
  %v2489 = vadd.f32 %v484, %v2488
  %v2490 = vpop.f32.mrb[0].mxu0
  %v2491 = vpop.f32.mrb[0].mxu0
  %v2492 = vadd.f32 %v484, %v2491
  %v2493 = vpop.f32.mrb[0].mxu0
  %2494 = vmatprep.mubr.bf16.mxu0 %v1464
  %2495 = vmatmul.mubr.bf16.gmra.mrb[0].mxu0 %v1463
  %v2496 = vpop.f32.mrb[0].mxu0
  %v2497 = vadd.f32 %v484, %v2496
  %v2498 = vpop.f32.mrb[0].mxu0
  %v2499 = vpop.f32.mrb[0].mxu0
  %v2500 = vadd.f32 %v484, %v2499
  %v2501 = vpop.f32.mrb[0].mxu0
  %2502 = vmatprep.mubr.bf16.mxu0 %v1473
  %2503 = vmatmul.mubr.bf16.gmra.mrb[0].mxu0 %v1472
  %v2504 = vpop.f32.mrb[0].mxu0
  %v2505 = vadd.f32 %v484, %v2504
  %v2506 = vpop.f32.mrb[0].mxu0
  %v2507 = vpop.f32.mrb[0].mxu0
  %v2508 = vadd.f32 %v484, %v2507
  %v2509 = vpop.f32.mrb[0].mxu0
  %2510 = vmatprep.mubr.bf16.mxu0 %v1482
  %2511 = vmatmul.mubr.bf16.gmra.mrb[0].mxu0 %v1481
  %v2512 = vpop.f32.mrb[0].mxu0
  %v2513 = vadd.f32 %v484, %v2512
  %v2514 = vpop.f32.mrb[0].mxu0
  %v2515 = vpop.f32.mrb[0].mxu0
  %v2516 = vadd.f32 %v484, %v2515
  %v2517 = vpop.f32.mrb[0].mxu0
  %2518 = vmatprep.mubr.bf16.mxu0 %v1491
  %2519 = vmatmul.mubr.bf16.gmra.mrb[0].mxu0 %v1490
  %v2520 = vpop.f32.mrb[0].mxu0
  %v2521 = vadd.f32 %v484, %v2520
  %v2522 = vpop.f32.mrb[0].mxu0
  %v2523 = vpop.f32.mrb[0].mxu0
  %v2524 = vadd.f32 %v484, %v2523
  %v2525 = vpop.f32.mrb[0].mxu0
  %2526 = vmatprep.mubr.bf16.mxu0 %v1500
  %2527 = vmatmul.mubr.bf16.gmra.mrb[0].mxu0 %v1499
  %v2528 = vpop.f32.mrb[0].mxu0
  %v2529 = vadd.f32 %v484, %v2528
  %v2530 = vpop.f32.mrb[0].mxu0
  %v2531 = vpop.f32.mrb[0].mxu0
  %v2532 = vadd.f32 %v484, %v2531
  %v2533 = vpop.f32.mrb[0].mxu0
  %2534 = vmatprep.mubr.bf16.mxu0 %v1509
  %2535 = vmatmul.mubr.bf16.gmra.mrb[0].mxu0 %v1508
  %v2536 = vpop.f32.mrb[0].mxu0
  %v2537 = vadd.f32 %v484, %v2536
  %v2538 = vpop.f32.mrb[0].mxu0
  %v2539 = vpop.f32.mrb[0].mxu0
  %v2540 = vadd.f32 %v484, %v2539
  %v2541 = vpop.f32.mrb[0].mxu0
  %2542 = vmatprep.mubr.bf16.mxu0 %v1518
  %2543 = vmatmul.mubr.bf16.gmra.mrb[0].mxu0 %v1517
  %v2544 = vpop.f32.mrb[0].mxu0
  %v2545 = vadd.f32 %v484, %v2544
  %v2546 = vpop.f32.mrb[0].mxu0
  %v2547 = vpop.f32.mrb[0].mxu0
  %v2548 = vadd.f32 %v484, %v2547
  %v2549 = vpop.f32.mrb[0].mxu0
  %2550 = vmatprep.mubr.bf16.mxu0 %v1527
  %2551 = vmatmul.mubr.bf16.gmra.mrb[0].mxu0 %v1526
  %v2552 = vpop.f32.mrb[0].mxu0
  %v2553 = vadd.f32 %v484, %v2552
  %v2554 = vpop.f32.mrb[0].mxu0
  %v2555 = vpop.f32.mrb[0].mxu0
  %v2556 = vadd.f32 %v484, %v2555
  %v2557 = vpop.f32.mrb[0].mxu0
  %2558 = vmatprep.mubr.bf16.mxu0 %v1536
  %2559 = vmatmul.mubr.bf16.gmra.mrb[0].mxu0 %v1535
  %v2560 = vpop.f32.mrb[0].mxu0
  %v2561 = vadd.f32 %v484, %v2560
  %v2562 = vpop.f32.mrb[0].mxu0
  %v2563 = vpop.f32.mrb[0].mxu0
  %v2564 = vadd.f32 %v484, %v2563
  %v2565 = vpop.f32.mrb[0].mxu0
  %2566 = vmatprep.mubr.bf16.mxu0 %v1545
  %2567 = vmatmul.mubr.bf16.gmra.mrb[0].mxu0 %v1544
  %v2568 = vpop.f32.mrb[0].mxu0
  %v2569 = vadd.f32 %v484, %v2568
  %v2570 = vpop.f32.mrb[0].mxu0
  %v2571 = vpop.f32.mrb[0].mxu0
  %v2572 = vadd.f32 %v484, %v2571
  %v2573 = vpop.f32.mrb[0].mxu0
  %2574 = vmatprep.mubr.bf16.mxu0 %v1554
  %2575 = vmatmul.mubr.bf16.gmra.mrb[0].mxu0 %v1553
  %v2576 = vpop.f32.mrb[0].mxu0
  %v2577 = vadd.f32 %v484, %v2576
  %v2578 = vpop.f32.mrb[0].mxu0
  %v2579 = vpop.f32.mrb[0].mxu0
  %v2580 = vadd.f32 %v484, %v2579
  %v2581 = vpop.f32.mrb[0].mxu0
  %2582 = vmatprep.mubr.bf16.mxu0 %v1563
  %2583 = vmatmul.mubr.bf16.gmra.mrb[0].mxu0 %v1562
  %v2584 = vpop.f32.mrb[0].mxu0
  %v2585 = vadd.f32 %v484, %v2584
  %v2586 = vpop.f32.mrb[0].mxu0
  %v2587 = vpop.f32.mrb[0].mxu0
  %v2588 = vadd.f32 %v484, %v2587
  %v2589 = vpop.f32.mrb[0].mxu0
  %2590 = vmatprep.mubr.bf16.mxu0 %v1572
  %2591 = vmatmul.mubr.bf16.gmra.mrb[0].mxu0 %v1571
  %v2592 = vpop.f32.mrb[0].mxu0
  %v2593 = vadd.f32 %v484, %v2592
  %v2594 = vpop.f32.mrb[0].mxu0
  %v2595 = vpop.f32.mrb[0].mxu0
  %v2596 = vadd.f32 %v484, %v2595
  %v2597 = vpop.f32.mrb[0].mxu0
  %2598 = vmatprep.mubr.bf16.mxu0 %v1581
  %2599 = vmatmul.mubr.bf16.gmra.mrb[0].mxu0 %v1580
  %v2600 = vpop.f32.mrb[0].mxu0
  %v2601 = vadd.f32 %v484, %v2600
  %v2602 = vpop.f32.mrb[0].mxu0
  %v2603 = vpop.f32.mrb[0].mxu0
  %v2604 = vadd.f32 %v484, %v2603
  %v2605 = vpop.f32.mrb[0].mxu0
  %2606 = vmatprep.mubr.bf16.mxu0 %v1590
  %2607 = vmatmul.mubr.bf16.gmra.mrb[0].mxu0 %v1589
  %v2608 = vpop.f32.mrb[0].mxu0
  %v2609 = vadd.f32 %v484, %v2608
  %v2610 = vpop.f32.mrb[0].mxu0
  %v2611 = vpop.f32.mrb[0].mxu0
  %v2612 = vadd.f32 %v484, %v2611
  %v2613 = vpop.f32.mrb[0].mxu0
  %2614 = vmatprep.mubr.bf16.mxu0 %v1599
  %2615 = vmatmul.mubr.bf16.gmra.mrb[0].mxu0 %v1598
  %v2616 = vpop.f32.mrb[0].mxu0
  %v2617 = vadd.f32 %v484, %v2616
  %v2618 = vpop.f32.mrb[0].mxu0
  %v2619 = vpop.f32.mrb[0].mxu0
  %v2620 = vadd.f32 %v484, %v2619
  %v2621 = vpop.f32.mrb[0].mxu0
  %2622 = vmatprep.mubr.bf16.mxu0 %v1608
  %2623 = vmatmul.mubr.bf16.gmra.mrb[0].mxu0 %v1607
  %v2624 = vpop.f32.mrb[0].mxu0
  %v2625 = vadd.f32 %v484, %v2624
  %v2626 = vpop.f32.mrb[0].mxu0
  %v2627 = vpop.f32.mrb[0].mxu0
  %v2628 = vadd.f32 %v484, %v2627
  %v2629 = vpop.f32.mrb[0].mxu0
  %2630 = vmatprep.mubr.bf16.mxu0 %v1617
  %2631 = vmatmul.mubr.bf16.gmra.mrb[0].mxu0 %v1616
  %v2632 = vpop.f32.mrb[0].mxu0
  %v2633 = vadd.f32 %v484, %v2632
  %v2634 = vpop.f32.mrb[0].mxu0
  %v2635 = vpop.f32.mrb[0].mxu0
  %v2636 = vadd.f32 %v484, %v2635
  %v2637 = vpop.f32.mrb[0].mxu0
  %2638 = vmatprep.mubr.bf16.mxu0 %v1626
  %2639 = vmatmul.mubr.bf16.gmra.mrb[0].mxu0 %v1625
  %v2640 = vpop.f32.mrb[0].mxu0
  %v2641 = vadd.f32 %v484, %v2640
  %v2642 = vpop.f32.mrb[0].mxu0
  %v2643 = vpop.f32.mrb[0].mxu0
  %v2644 = vadd.f32 %v484, %v2643
  %v2645 = vpop.f32.mrb[0].mxu0
  %2646 = vmatprep.mubr.bf16.mxu0 %v1635
  %2647 = vmatmul.mubr.bf16.gmra.mrb[0].mxu0 %v1634
  %v2648 = vpop.f32.mrb[0].mxu0
  %v2649 = vadd.f32 %v484, %v2648
  %v2650 = vpop.f32.mrb[0].mxu0
  %v2651 = vpop.f32.mrb[0].mxu0
  %v2652 = vadd.f32 %v484, %v2651
  %v2653 = vpop.f32.mrb[0].mxu0
  %2654 = vmatprep.mubr.bf16.mxu0 %v1644
  %2655 = vmatmul.mubr.bf16.gmra.mrb[0].mxu0 %v1643
  %v2656 = vpop.f32.mrb[0].mxu0
  %v2657 = vadd.f32 %v484, %v2656
  %v2658 = vpop.f32.mrb[0].mxu0
  %v2659 = vpop.f32.mrb[0].mxu0
  %v2660 = vadd.f32 %v484, %v2659
  %v2661 = vpop.f32.mrb[0].mxu0
  %2662 = vmatprep.mubr.bf16.mxu0 %v1653
  %2663 = vmatmul.mubr.bf16.gmra.mrb[0].mxu0 %v1652
  %v2664 = vpop.f32.mrb[0].mxu0
  %v2665 = vadd.f32 %v484, %v2664
  %v2666 = vpop.f32.mrb[0].mxu0
  %v2667 = vpop.f32.mrb[0].mxu0
  %v2668 = vadd.f32 %v484, %v2667
  %v2669 = vpop.f32.mrb[0].mxu0
  %2670 = vmatprep.mubr.bf16.mxu0 %v1662
  %2671 = vmatmul.mubr.bf16.gmra.mrb[0].mxu0 %v1661
  %v2672 = vpop.f32.mrb[0].mxu0
  %v2673 = vadd.f32 %v484, %v2672
  %v2674 = vpop.f32.mrb[0].mxu0
  %v2675 = vpop.f32.mrb[0].mxu0
  %v2676 = vadd.f32 %v484, %v2675
  %v2677 = vpop.f32.mrb[0].mxu0
  %2678 = vdwg.mxu0
  %2679 = vmatprep.subr.bf16.mxu0 0
  %2680 = vmatpush1.bf16.msra.mxu0 %v2262
  %2681 = vmatprep.subr.bf16.mxu0 0
  %2682 = vmatpush1.bf16.msra.mxu0 %v2263
  %2683 = vmatprep.subr.bf16.mxu0 0
  %2684 = vmatpush1.bf16.msra.mxu0 %v2264
  %2685 = vmatprep.subr.bf16.mxu0 0
  %2686 = vmatpush1.bf16.msra.mxu0 %v2265
  %2687 = vmatprep.subr.bf16.mxu0 0
  %2688 = vmatpush1.bf16.msra.mxu0 %v2266
  %2689 = vmatprep.subr.bf16.mxu0 0
  %2690 = vmatpush1.bf16.msra.mxu0 %v2267
  %2691 = vmatprep.subr.bf16.mxu0 0
  %2692 = vmatpush1.bf16.msra.mxu0 %v2268
  %2693 = vmatprep.subr.bf16.mxu0 0
  %2694 = vmatpush1.bf16.msra.mxu0 %v2269
  %2695 = vmatprep.subr.bf16.mxu0 0
  %2696 = vmatpush1.bf16.msra.mxu0 %v2270
  %2697 = vmatprep.subr.bf16.mxu0 0
  %2698 = vmatpush1.bf16.msra.mxu0 %v2271
  %2699 = vmatprep.subr.bf16.mxu0 0
  %2700 = vmatpush1.bf16.msra.mxu0 %v2272
  %2701 = vmatprep.subr.bf16.mxu0 0
  %2702 = vmatpush1.bf16.msra.mxu0 %v2273
  %2703 = vmatprep.subr.bf16.mxu0 0
  %2704 = vmatpush1.bf16.msra.mxu0 %v2274
  %2705 = vmatprep.subr.bf16.mxu0 0
  %2706 = vmatpush1.bf16.msra.mxu0 %v2275
  %2707 = vmatprep.subr.bf16.mxu0 0
  %2708 = vmatpush1.bf16.msra.mxu0 %v2276
  %2709 = vmatprep.subr.bf16.mxu0 0
  %2710 = vmatpush1.bf16.msra.mxu0 %v2277
  %2711 = vmatprep.mubr.bf16.mxu0 %v1385
  %2712 = vmatmul.mubr.bf16.gmra.mrb[0].mxu0 %v1384
  %v2713 = vpop.f32.mrb[0].mxu0
  %v2714 = vadd.f32 %v2425, %v2713
  %v2715 = vpop.f32.mrb[0].mxu0
  %v2716 = vpop.f32.mrb[0].mxu0
  %v2717 = vadd.f32 %v2428, %v2716
  %v2718 = vpop.f32.mrb[0].mxu0
  %2719 = vmatprep.mubr.bf16.mxu0 %v1394
  %2720 = vmatmul.mubr.bf16.gmra.mrb[0].mxu0 %v1393
  %v2721 = vpop.f32.mrb[0].mxu0
  %v2722 = vadd.f32 %v2433, %v2721
  %v2723 = vpop.f32.mrb[0].mxu0
  %v2724 = vpop.f32.mrb[0].mxu0
  %v2725 = vadd.f32 %v2436, %v2724
  %v2726 = vpop.f32.mrb[0].mxu0
  %2727 = vmatprep.mubr.bf16.mxu0 %v1403
  %2728 = vmatmul.mubr.bf16.gmra.mrb[0].mxu0 %v1402
  %v2729 = vpop.f32.mrb[0].mxu0
  %v2730 = vadd.f32 %v2441, %v2729
  %v2731 = vpop.f32.mrb[0].mxu0
  %v2732 = vpop.f32.mrb[0].mxu0
  %v2733 = vadd.f32 %v2444, %v2732
  %v2734 = vpop.f32.mrb[0].mxu0
  %2735 = vmatprep.mubr.bf16.mxu0 %v1412
  %2736 = vmatmul.mubr.bf16.gmra.mrb[0].mxu0 %v1411
  %v2737 = vpop.f32.mrb[0].mxu0
  %v2738 = vadd.f32 %v2449, %v2737
  %v2739 = vpop.f32.mrb[0].mxu0
  %v2740 = vpop.f32.mrb[0].mxu0
  %v2741 = vadd.f32 %v2452, %v2740
  %v2742 = vpop.f32.mrb[0].mxu0
  %2743 = vmatprep.mubr.bf16.mxu0 %v1421
  %2744 = vmatmul.mubr.bf16.gmra.mrb[0].mxu0 %v1420
  %v2745 = vpop.f32.mrb[0].mxu0
  %v2746 = vadd.f32 %v2457, %v2745
  %v2747 = vpop.f32.mrb[0].mxu0
  %v2748 = vpop.f32.mrb[0].mxu0
  %v2749 = vadd.f32 %v2460, %v2748
  %v2750 = vpop.f32.mrb[0].mxu0
  %2751 = vmatprep.mubr.bf16.mxu0 %v1430
  %2752 = vmatmul.mubr.bf16.gmra.mrb[0].mxu0 %v1429
  %v2753 = vpop.f32.mrb[0].mxu0
  %v2754 = vadd.f32 %v2465, %v2753
  %v2755 = vpop.f32.mrb[0].mxu0
  %v2756 = vpop.f32.mrb[0].mxu0
  %v2757 = vadd.f32 %v2468, %v2756
  %v2758 = vpop.f32.mrb[0].mxu0
  %2759 = vmatprep.mubr.bf16.mxu0 %v1439
  %2760 = vmatmul.mubr.bf16.gmra.mrb[0].mxu0 %v1438
  %v2761 = vpop.f32.mrb[0].mxu0
  %v2762 = vadd.f32 %v2473, %v2761
  %v2763 = vpop.f32.mrb[0].mxu0
  %v2764 = vpop.f32.mrb[0].mxu0
  %v2765 = vadd.f32 %v2476, %v2764
  %v2766 = vpop.f32.mrb[0].mxu0
  %2767 = vmatprep.mubr.bf16.mxu0 %v1448
  %2768 = vmatmul.mubr.bf16.gmra.mrb[0].mxu0 %v1447
  %v2769 = vpop.f32.mrb[0].mxu0
  %v2770 = vadd.f32 %v2481, %v2769
  %v2771 = vpop.f32.mrb[0].mxu0
  %v2772 = vpop.f32.mrb[0].mxu0
  %v2773 = vadd.f32 %v2484, %v2772
  %v2774 = vpop.f32.mrb[0].mxu0
  %2775 = vmatprep.mubr.bf16.mxu0 %v1457
  %2776 = vmatmul.mubr.bf16.gmra.mrb[0].mxu0 %v1456
  %v2777 = vpop.f32.mrb[0].mxu0
  %v2778 = vadd.f32 %v2489, %v2777
  %v2779 = vpop.f32.mrb[0].mxu0
  %v2780 = vpop.f32.mrb[0].mxu0
  %v2781 = vadd.f32 %v2492, %v2780
  %v2782 = vpop.f32.mrb[0].mxu0
  %2783 = vmatprep.mubr.bf16.mxu0 %v1466
  %2784 = vmatmul.mubr.bf16.gmra.mrb[0].mxu0 %v1465
  %v2785 = vpop.f32.mrb[0].mxu0
  %v2786 = vadd.f32 %v2497, %v2785
  %v2787 = vpop.f32.mrb[0].mxu0
  %v2788 = vpop.f32.mrb[0].mxu0
  %v2789 = vadd.f32 %v2500, %v2788
  %v2790 = vpop.f32.mrb[0].mxu0
  %2791 = vmatprep.mubr.bf16.mxu0 %v1475
  %2792 = vmatmul.mubr.bf16.gmra.mrb[0].mxu0 %v1474
  %v2793 = vpop.f32.mrb[0].mxu0
  %v2794 = vadd.f32 %v2505, %v2793
  %v2795 = vpop.f32.mrb[0].mxu0
  %v2796 = vpop.f32.mrb[0].mxu0
  %v2797 = vadd.f32 %v2508, %v2796
  %v2798 = vpop.f32.mrb[0].mxu0
  %2799 = vmatprep.mubr.bf16.mxu0 %v1484
  %2800 = vmatmul.mubr.bf16.gmra.mrb[0].mxu0 %v1483
  %v2801 = vpop.f32.mrb[0].mxu0
  %v2802 = vadd.f32 %v2513, %v2801
  %v2803 = vpop.f32.mrb[0].mxu0
  %v2804 = vpop.f32.mrb[0].mxu0
  %v2805 = vadd.f32 %v2516, %v2804
  %v2806 = vpop.f32.mrb[0].mxu0
  %2807 = vmatprep.mubr.bf16.mxu0 %v1493
  %2808 = vmatmul.mubr.bf16.gmra.mrb[0].mxu0 %v1492
  %v2809 = vpop.f32.mrb[0].mxu0
  %v2810 = vadd.f32 %v2521, %v2809
  %v2811 = vpop.f32.mrb[0].mxu0
  %v2812 = vpop.f32.mrb[0].mxu0
  %v2813 = vadd.f32 %v2524, %v2812
  %v2814 = vpop.f32.mrb[0].mxu0
  %2815 = vmatprep.mubr.bf16.mxu0 %v1502
  %2816 = vmatmul.mubr.bf16.gmra.mrb[0].mxu0 %v1501
  %v2817 = vpop.f32.mrb[0].mxu0
  %v2818 = vadd.f32 %v2529, %v2817
  %v2819 = vpop.f32.mrb[0].mxu0
  %v2820 = vpop.f32.mrb[0].mxu0
  %v2821 = vadd.f32 %v2532, %v2820
  %v2822 = vpop.f32.mrb[0].mxu0
  %2823 = vmatprep.mubr.bf16.mxu0 %v1511
  %2824 = vmatmul.mubr.bf16.gmra.mrb[0].mxu0 %v1510
  %v2825 = vpop.f32.mrb[0].mxu0
  %v2826 = vadd.f32 %v2537, %v2825
  %v2827 = vpop.f32.mrb[0].mxu0
  %v2828 = vpop.f32.mrb[0].mxu0
  %v2829 = vadd.f32 %v2540, %v2828
  %v2830 = vpop.f32.mrb[0].mxu0
  %2831 = vmatprep.mubr.bf16.mxu0 %v1520
  %2832 = vmatmul.mubr.bf16.gmra.mrb[0].mxu0 %v1519
  %v2833 = vpop.f32.mrb[0].mxu0
  %v2834 = vadd.f32 %v2545, %v2833
  %v2835 = vpop.f32.mrb[0].mxu0
  %v2836 = vpop.f32.mrb[0].mxu0
  %v2837 = vadd.f32 %v2548, %v2836
  %v2838 = vpop.f32.mrb[0].mxu0
  %2839 = vmatprep.mubr.bf16.mxu0 %v1529
  %2840 = vmatmul.mubr.bf16.gmra.mrb[0].mxu0 %v1528
  %v2841 = vpop.f32.mrb[0].mxu0
  %v2842 = vadd.f32 %v2553, %v2841
  %v2843 = vpop.f32.mrb[0].mxu0
  %v2844 = vpop.f32.mrb[0].mxu0
  %v2845 = vadd.f32 %v2556, %v2844
  %v2846 = vpop.f32.mrb[0].mxu0
  %2847 = vmatprep.mubr.bf16.mxu0 %v1538
  %2848 = vmatmul.mubr.bf16.gmra.mrb[0].mxu0 %v1537
  %v2849 = vpop.f32.mrb[0].mxu0
  %v2850 = vadd.f32 %v2561, %v2849
  %v2851 = vpop.f32.mrb[0].mxu0
  %v2852 = vpop.f32.mrb[0].mxu0
  %v2853 = vadd.f32 %v2564, %v2852
  %v2854 = vpop.f32.mrb[0].mxu0
  %2855 = vmatprep.mubr.bf16.mxu0 %v1547
  %2856 = vmatmul.mubr.bf16.gmra.mrb[0].mxu0 %v1546
  %v2857 = vpop.f32.mrb[0].mxu0
  %v2858 = vadd.f32 %v2569, %v2857
  %v2859 = vpop.f32.mrb[0].mxu0
  %v2860 = vpop.f32.mrb[0].mxu0
  %v2861 = vadd.f32 %v2572, %v2860
  %v2862 = vpop.f32.mrb[0].mxu0
  %2863 = vmatprep.mubr.bf16.mxu0 %v1556
  %2864 = vmatmul.mubr.bf16.gmra.mrb[0].mxu0 %v1555
  %v2865 = vpop.f32.mrb[0].mxu0
  %v2866 = vadd.f32 %v2577, %v2865
  %v2867 = vpop.f32.mrb[0].mxu0
  %v2868 = vpop.f32.mrb[0].mxu0
  %v2869 = vadd.f32 %v2580, %v2868
  %v2870 = vpop.f32.mrb[0].mxu0
  %2871 = vmatprep.mubr.bf16.mxu0 %v1565
  %2872 = vmatmul.mubr.bf16.gmra.mrb[0].mxu0 %v1564
  %v2873 = vpop.f32.mrb[0].mxu0
  %v2874 = vadd.f32 %v2585, %v2873
  %v2875 = vpop.f32.mrb[0].mxu0
  %v2876 = vpop.f32.mrb[0].mxu0
  %v2877 = vadd.f32 %v2588, %v2876
  %v2878 = vpop.f32.mrb[0].mxu0
  %2879 = vmatprep.mubr.bf16.mxu0 %v1574
  %2880 = vmatmul.mubr.bf16.gmra.mrb[0].mxu0 %v1573
  %v2881 = vpop.f32.mrb[0].mxu0
  %v2882 = vadd.f32 %v2593, %v2881
  %v2883 = vpop.f32.mrb[0].mxu0
  %v2884 = vpop.f32.mrb[0].mxu0
  %v2885 = vadd.f32 %v2596, %v2884
  %v2886 = vpop.f32.mrb[0].mxu0
  %2887 = vmatprep.mubr.bf16.mxu0 %v1583
  %2888 = vmatmul.mubr.bf16.gmra.mrb[0].mxu0 %v1582
  %v2889 = vpop.f32.mrb[0].mxu0
  %v2890 = vadd.f32 %v2601, %v2889
  %v2891 = vpop.f32.mrb[0].mxu0
  %v2892 = vpop.f32.mrb[0].mxu0
  %v2893 = vadd.f32 %v2604, %v2892
  %v2894 = vpop.f32.mrb[0].mxu0
  %2895 = vmatprep.mubr.bf16.mxu0 %v1592
  %2896 = vmatmul.mubr.bf16.gmra.mrb[0].mxu0 %v1591
  %v2897 = vpop.f32.mrb[0].mxu0
  %v2898 = vadd.f32 %v2609, %v2897
  %v2899 = vpop.f32.mrb[0].mxu0
  %v2900 = vpop.f32.mrb[0].mxu0
  %v2901 = vadd.f32 %v2612, %v2900
  %v2902 = vpop.f32.mrb[0].mxu0
  %2903 = vmatprep.mubr.bf16.mxu0 %v1601
  %2904 = vmatmul.mubr.bf16.gmra.mrb[0].mxu0 %v1600
  %v2905 = vpop.f32.mrb[0].mxu0
  %v2906 = vadd.f32 %v2617, %v2905
  %v2907 = vpop.f32.mrb[0].mxu0
  %v2908 = vpop.f32.mrb[0].mxu0
  %v2909 = vadd.f32 %v2620, %v2908
  %v2910 = vpop.f32.mrb[0].mxu0
  %2911 = vmatprep.mubr.bf16.mxu0 %v1610
  %2912 = vmatmul.mubr.bf16.gmra.mrb[0].mxu0 %v1609
  %v2913 = vpop.f32.mrb[0].mxu0
  %v2914 = vadd.f32 %v2625, %v2913
  %v2915 = vpop.f32.mrb[0].mxu0
  %v2916 = vpop.f32.mrb[0].mxu0
  %v2917 = vadd.f32 %v2628, %v2916
  %v2918 = vpop.f32.mrb[0].mxu0
  %2919 = vmatprep.mubr.bf16.mxu0 %v1619
  %2920 = vmatmul.mubr.bf16.gmra.mrb[0].mxu0 %v1618
  %v2921 = vpop.f32.mrb[0].mxu0
  %v2922 = vadd.f32 %v2633, %v2921
  %v2923 = vpop.f32.mrb[0].mxu0
  %v2924 = vpop.f32.mrb[0].mxu0
  %v2925 = vadd.f32 %v2636, %v2924
  %v2926 = vpop.f32.mrb[0].mxu0
  %2927 = vmatprep.mubr.bf16.mxu0 %v1628
  %2928 = vmatmul.mubr.bf16.gmra.mrb[0].mxu0 %v1627
  %v2929 = vpop.f32.mrb[0].mxu0
  %v2930 = vadd.f32 %v2641, %v2929
  %v2931 = vpop.f32.mrb[0].mxu0
  %v2932 = vpop.f32.mrb[0].mxu0
  %v2933 = vadd.f32 %v2644, %v2932
  %v2934 = vpop.f32.mrb[0].mxu0
  %2935 = vmatprep.mubr.bf16.mxu0 %v1637
  %2936 = vmatmul.mubr.bf16.gmra.mrb[0].mxu0 %v1636
  %v2937 = vpop.f32.mrb[0].mxu0
  %v2938 = vadd.f32 %v2649, %v2937
  %v2939 = vpop.f32.mrb[0].mxu0
  %v2940 = vpop.f32.mrb[0].mxu0
  %v2941 = vadd.f32 %v2652, %v2940
  %v2942 = vpop.f32.mrb[0].mxu0
  %2943 = vmatprep.mubr.bf16.mxu0 %v1646
  %2944 = vmatmul.mubr.bf16.gmra.mrb[0].mxu0 %v1645
  %v2945 = vpop.f32.mrb[0].mxu0
  %v2946 = vadd.f32 %v2657, %v2945
  %v2947 = vpop.f32.mrb[0].mxu0
  %v2948 = vpop.f32.mrb[0].mxu0
  %v2949 = vadd.f32 %v2660, %v2948
  %v2950 = vpop.f32.mrb[0].mxu0
  %2951 = vmatprep.mubr.bf16.mxu0 %v1655
  %2952 = vmatmul.mubr.bf16.gmra.mrb[0].mxu0 %v1654
  %v2953 = vpop.f32.mrb[0].mxu0
  %v2954 = vadd.f32 %v2665, %v2953
  %v2955 = vpop.f32.mrb[0].mxu0
  %v2956 = vpop.f32.mrb[0].mxu0
  %v2957 = vadd.f32 %v2668, %v2956
  %v2958 = vpop.f32.mrb[0].mxu0
  %2959 = vmatprep.mubr.bf16.mxu0 %v1664
  %2960 = vmatmul.mubr.bf16.gmra.mrb[0].mxu0 %v1663
  %v2961 = vpop.f32.mrb[0].mxu0
  %v2962 = vadd.f32 %v2673, %v2961
  %v2963 = vpop.f32.mrb[0].mxu0
  %v2964 = vpop.f32.mrb[0].mxu0
  %v2965 = vadd.f32 %v2676, %v2964
  %v2966 = vpop.f32.mrb[0].mxu0
  %2967 = vdwg.mxu0
  %2968 = vmatprep.subr.bf16.mxu0 0
  %2969 = vmatpush1.bf16.msra.mxu0 %v2278
  %2970 = vmatprep.subr.bf16.mxu0 0
  %2971 = vmatpush1.bf16.msra.mxu0 %v2279
  %2972 = vmatprep.subr.bf16.mxu0 0
  %2973 = vmatpush1.bf16.msra.mxu0 %v2280
  %2974 = vmatprep.subr.bf16.mxu0 0
  %2975 = vmatpush1.bf16.msra.mxu0 %v2281
  %2976 = vmatprep.subr.bf16.mxu0 0
  %2977 = vmatpush1.bf16.msra.mxu0 %v2282
  %2978 = vmatprep.subr.bf16.mxu0 0
  %2979 = vmatpush1.bf16.msra.mxu0 %v2283
  %2980 = vmatprep.subr.bf16.mxu0 0
  %2981 = vmatpush1.bf16.msra.mxu0 %v2284
  %2982 = vmatprep.subr.bf16.mxu0 0
  %2983 = vmatpush1.bf16.msra.mxu0 %v2285
  %2984 = vmatprep.subr.bf16.mxu0 0
  %2985 = vmatpush1.bf16.msra.mxu0 %v2286
  %2986 = vmatprep.subr.bf16.mxu0 0
  %2987 = vmatpush1.bf16.msra.mxu0 %v2287
  %2988 = vmatprep.subr.bf16.mxu0 0
  %2989 = vmatpush1.bf16.msra.mxu0 %v2288
  %2990 = vmatprep.subr.bf16.mxu0 0
  %2991 = vmatpush1.bf16.msra.mxu0 %v2289
  %2992 = vmatprep.subr.bf16.mxu0 0
  %2993 = vmatpush1.bf16.msra.mxu0 %v2290
  %2994 = vmatprep.subr.bf16.mxu0 0
  %2995 = vmatpush1.bf16.msra.mxu0 %v2291
  %2996 = vmatprep.subr.bf16.mxu0 0
  %2997 = vmatpush1.bf16.msra.mxu0 %v2292
  %2998 = vmatprep.subr.bf16.mxu0 0
  %2999 = vmatpush1.bf16.msra.mxu0 %v2293
  %3000 = vmatprep.mubr.bf16.mxu0 %v1387
  %3001 = vmatmul.mubr.bf16.gmra.mrb[0].mxu0 %v1386
  %v3002 = vpop.f32.mrb[0].mxu0
  %v3003 = vadd.f32 %v2714, %v3002
  %v3004 = vpop.f32.mrb[0].mxu0
  %v3005 = vpop.f32.mrb[0].mxu0
  %v3006 = vadd.f32 %v2717, %v3005
  %v3007 = vpop.f32.mrb[0].mxu0
  %3008 = vmatprep.mubr.bf16.mxu0 %v1396
  %3009 = vmatmul.mubr.bf16.gmra.mrb[0].mxu0 %v1395
  %v3010 = vpop.f32.mrb[0].mxu0
  %v3011 = vadd.f32 %v2722, %v3010
  %v3012 = vpop.f32.mrb[0].mxu0
  %v3013 = vpop.f32.mrb[0].mxu0
  %v3014 = vadd.f32 %v2725, %v3013
  %v3015 = vpop.f32.mrb[0].mxu0
  %3016 = vmatprep.mubr.bf16.mxu0 %v1405
  %3017 = vmatmul.mubr.bf16.gmra.mrb[0].mxu0 %v1404
  %v3018 = vpop.f32.mrb[0].mxu0
  %v3019 = vadd.f32 %v2730, %v3018
  %v3020 = vpop.f32.mrb[0].mxu0
  %v3021 = vpop.f32.mrb[0].mxu0
  %v3022 = vadd.f32 %v2733, %v3021
  %v3023 = vpop.f32.mrb[0].mxu0
  %3024 = vmatprep.mubr.bf16.mxu0 %v1414
  %3025 = vmatmul.mubr.bf16.gmra.mrb[0].mxu0 %v1413
  %v3026 = vpop.f32.mrb[0].mxu0
  %v3027 = vadd.f32 %v2738, %v3026
  %v3028 = vpop.f32.mrb[0].mxu0
  %v3029 = vpop.f32.mrb[0].mxu0
  %v3030 = vadd.f32 %v2741, %v3029
  %v3031 = vpop.f32.mrb[0].mxu0
  %3032 = vmatprep.mubr.bf16.mxu0 %v1423
  %3033 = vmatmul.mubr.bf16.gmra.mrb[0].mxu0 %v1422
  %v3034 = vpop.f32.mrb[0].mxu0
  %v3035 = vadd.f32 %v2746, %v3034
  %v3036 = vpop.f32.mrb[0].mxu0
  %v3037 = vpop.f32.mrb[0].mxu0
  %v3038 = vadd.f32 %v2749, %v3037
  %v3039 = vpop.f32.mrb[0].mxu0
  %3040 = vmatprep.mubr.bf16.mxu0 %v1432
  %3041 = vmatmul.mubr.bf16.gmra.mrb[0].mxu0 %v1431
  %v3042 = vpop.f32.mrb[0].mxu0
  %v3043 = vadd.f32 %v2754, %v3042
  %v3044 = vpop.f32.mrb[0].mxu0
  %v3045 = vpop.f32.mrb[0].mxu0
  %v3046 = vadd.f32 %v2757, %v3045
  %v3047 = vpop.f32.mrb[0].mxu0
  %3048 = vmatprep.mubr.bf16.mxu0 %v1441
  %3049 = vmatmul.mubr.bf16.gmra.mrb[0].mxu0 %v1440
  %v3050 = vpop.f32.mrb[0].mxu0
  %v3051 = vadd.f32 %v2762, %v3050
  %v3052 = vpop.f32.mrb[0].mxu0
  %v3053 = vpop.f32.mrb[0].mxu0
  %v3054 = vadd.f32 %v2765, %v3053
  %v3055 = vpop.f32.mrb[0].mxu0
  %3056 = vmatprep.mubr.bf16.mxu0 %v1450
  %3057 = vmatmul.mubr.bf16.gmra.mrb[0].mxu0 %v1449
  %v3058 = vpop.f32.mrb[0].mxu0
  %v3059 = vadd.f32 %v2770, %v3058
  %v3060 = vpop.f32.mrb[0].mxu0
  %v3061 = vpop.f32.mrb[0].mxu0
  %v3062 = vadd.f32 %v2773, %v3061
  %v3063 = vpop.f32.mrb[0].mxu0
  %3064 = vmatprep.mubr.bf16.mxu0 %v1459
  %3065 = vmatmul.mubr.bf16.gmra.mrb[0].mxu0 %v1458
  %v3066 = vpop.f32.mrb[0].mxu0
  %v3067 = vadd.f32 %v2778, %v3066
  %v3068 = vpop.f32.mrb[0].mxu0
  %v3069 = vpop.f32.mrb[0].mxu0
  %v3070 = vadd.f32 %v2781, %v3069
  %v3071 = vpop.f32.mrb[0].mxu0
  %3072 = vmatprep.mubr.bf16.mxu0 %v1468
  %3073 = vmatmul.mubr.bf16.gmra.mrb[0].mxu0 %v1467
  %v3074 = vpop.f32.mrb[0].mxu0
  %v3075 = vadd.f32 %v2786, %v3074
  %v3076 = vpop.f32.mrb[0].mxu0
  %v3077 = vpop.f32.mrb[0].mxu0
  %v3078 = vadd.f32 %v2789, %v3077
  %v3079 = vpop.f32.mrb[0].mxu0
  %3080 = vmatprep.mubr.bf16.mxu0 %v1477
  %3081 = vmatmul.mubr.bf16.gmra.mrb[0].mxu0 %v1476
  %v3082 = vpop.f32.mrb[0].mxu0
  %v3083 = vadd.f32 %v2794, %v3082
  %v3084 = vpop.f32.mrb[0].mxu0
  %v3085 = vpop.f32.mrb[0].mxu0
  %v3086 = vadd.f32 %v2797, %v3085
  %v3087 = vpop.f32.mrb[0].mxu0
  %3088 = vmatprep.mubr.bf16.mxu0 %v1486
  %3089 = vmatmul.mubr.bf16.gmra.mrb[0].mxu0 %v1485
  %v3090 = vpop.f32.mrb[0].mxu0
  %v3091 = vadd.f32 %v2802, %v3090
  %v3092 = vpop.f32.mrb[0].mxu0
  %v3093 = vpop.f32.mrb[0].mxu0
  %v3094 = vadd.f32 %v2805, %v3093
  %v3095 = vpop.f32.mrb[0].mxu0
  %3096 = vmatprep.mubr.bf16.mxu0 %v1495
  %3097 = vmatmul.mubr.bf16.gmra.mrb[0].mxu0 %v1494
  %v3098 = vpop.f32.mrb[0].mxu0
  %v3099 = vadd.f32 %v2810, %v3098
  %v3100 = vpop.f32.mrb[0].mxu0
  %v3101 = vpop.f32.mrb[0].mxu0
  %v3102 = vadd.f32 %v2813, %v3101
  %v3103 = vpop.f32.mrb[0].mxu0
  %3104 = vmatprep.mubr.bf16.mxu0 %v1504
  %3105 = vmatmul.mubr.bf16.gmra.mrb[0].mxu0 %v1503
  %v3106 = vpop.f32.mrb[0].mxu0
  %v3107 = vadd.f32 %v2818, %v3106
  %v3108 = vpop.f32.mrb[0].mxu0
  %v3109 = vpop.f32.mrb[0].mxu0
  %v3110 = vadd.f32 %v2821, %v3109
  %v3111 = vpop.f32.mrb[0].mxu0
  %3112 = vmatprep.mubr.bf16.mxu0 %v1513
  %3113 = vmatmul.mubr.bf16.gmra.mrb[0].mxu0 %v1512
  %v3114 = vpop.f32.mrb[0].mxu0
  %v3115 = vadd.f32 %v2826, %v3114
  %v3116 = vpop.f32.mrb[0].mxu0
  %v3117 = vpop.f32.mrb[0].mxu0
  %v3118 = vadd.f32 %v2829, %v3117
  %v3119 = vpop.f32.mrb[0].mxu0
  %3120 = vmatprep.mubr.bf16.mxu0 %v1522
  %3121 = vmatmul.mubr.bf16.gmra.mrb[0].mxu0 %v1521
  %v3122 = vpop.f32.mrb[0].mxu0
  %v3123 = vadd.f32 %v2834, %v3122
  %v3124 = vpop.f32.mrb[0].mxu0
  %v3125 = vpop.f32.mrb[0].mxu0
  %v3126 = vadd.f32 %v2837, %v3125
  %v3127 = vpop.f32.mrb[0].mxu0
  %3128 = vmatprep.mubr.bf16.mxu0 %v1531
  %3129 = vmatmul.mubr.bf16.gmra.mrb[0].mxu0 %v1530
  %v3130 = vpop.f32.mrb[0].mxu0
  %v3131 = vadd.f32 %v2842, %v3130
  %v3132 = vpop.f32.mrb[0].mxu0
  %v3133 = vpop.f32.mrb[0].mxu0
  %v3134 = vadd.f32 %v2845, %v3133
  %v3135 = vpop.f32.mrb[0].mxu0
  %3136 = vmatprep.mubr.bf16.mxu0 %v1540
  %3137 = vmatmul.mubr.bf16.gmra.mrb[0].mxu0 %v1539
  %v3138 = vpop.f32.mrb[0].mxu0
  %v3139 = vadd.f32 %v2850, %v3138
  %v3140 = vpop.f32.mrb[0].mxu0
  %v3141 = vpop.f32.mrb[0].mxu0
  %v3142 = vadd.f32 %v2853, %v3141
  %v3143 = vpop.f32.mrb[0].mxu0
  %3144 = vmatprep.mubr.bf16.mxu0 %v1549
  %3145 = vmatmul.mubr.bf16.gmra.mrb[0].mxu0 %v1548
  %v3146 = vpop.f32.mrb[0].mxu0
  %v3147 = vadd.f32 %v2858, %v3146
  %v3148 = vpop.f32.mrb[0].mxu0
  %v3149 = vpop.f32.mrb[0].mxu0
  %v3150 = vadd.f32 %v2861, %v3149
  %v3151 = vpop.f32.mrb[0].mxu0
  %3152 = vmatprep.mubr.bf16.mxu0 %v1558
  %3153 = vmatmul.mubr.bf16.gmra.mrb[0].mxu0 %v1557
  %v3154 = vpop.f32.mrb[0].mxu0
  %v3155 = vadd.f32 %v2866, %v3154
  %v3156 = vpop.f32.mrb[0].mxu0
  %v3157 = vpop.f32.mrb[0].mxu0
  %v3158 = vadd.f32 %v2869, %v3157
  %v3159 = vpop.f32.mrb[0].mxu0
  %3160 = vmatprep.mubr.bf16.mxu0 %v1567
  %3161 = vmatmul.mubr.bf16.gmra.mrb[0].mxu0 %v1566
  %v3162 = vpop.f32.mrb[0].mxu0
  %v3163 = vadd.f32 %v2874, %v3162
  %v3164 = vpop.f32.mrb[0].mxu0
  %v3165 = vpop.f32.mrb[0].mxu0
  %v3166 = vadd.f32 %v2877, %v3165
  %v3167 = vpop.f32.mrb[0].mxu0
  %3168 = vmatprep.mubr.bf16.mxu0 %v1576
  %3169 = vmatmul.mubr.bf16.gmra.mrb[0].mxu0 %v1575
  %v3170 = vpop.f32.mrb[0].mxu0
  %v3171 = vadd.f32 %v2882, %v3170
  %v3172 = vpop.f32.mrb[0].mxu0
  %v3173 = vpop.f32.mrb[0].mxu0
  %v3174 = vadd.f32 %v2885, %v3173
  %v3175 = vpop.f32.mrb[0].mxu0
  %3176 = vmatprep.mubr.bf16.mxu0 %v1585
  %3177 = vmatmul.mubr.bf16.gmra.mrb[0].mxu0 %v1584
  %v3178 = vpop.f32.mrb[0].mxu0
  %v3179 = vadd.f32 %v2890, %v3178
  %v3180 = vpop.f32.mrb[0].mxu0
  %v3181 = vpop.f32.mrb[0].mxu0
  %v3182 = vadd.f32 %v2893, %v3181
  %v3183 = vpop.f32.mrb[0].mxu0
  %3184 = vmatprep.mubr.bf16.mxu0 %v1594
  %3185 = vmatmul.mubr.bf16.gmra.mrb[0].mxu0 %v1593
  %v3186 = vpop.f32.mrb[0].mxu0
  %v3187 = vadd.f32 %v2898, %v3186
  %v3188 = vpop.f32.mrb[0].mxu0
  %v3189 = vpop.f32.mrb[0].mxu0
  %v3190 = vadd.f32 %v2901, %v3189
  %v3191 = vpop.f32.mrb[0].mxu0
  %3192 = vmatprep.mubr.bf16.mxu0 %v1603
  %3193 = vmatmul.mubr.bf16.gmra.mrb[0].mxu0 %v1602
  %v3194 = vpop.f32.mrb[0].mxu0
  %v3195 = vadd.f32 %v2906, %v3194
  %v3196 = vpop.f32.mrb[0].mxu0
  %v3197 = vpop.f32.mrb[0].mxu0
  %v3198 = vadd.f32 %v2909, %v3197
  %v3199 = vpop.f32.mrb[0].mxu0
  %3200 = vmatprep.mubr.bf16.mxu0 %v1612
  %3201 = vmatmul.mubr.bf16.gmra.mrb[0].mxu0 %v1611
  %v3202 = vpop.f32.mrb[0].mxu0
  %v3203 = vadd.f32 %v2914, %v3202
  %v3204 = vpop.f32.mrb[0].mxu0
  %v3205 = vpop.f32.mrb[0].mxu0
  %v3206 = vadd.f32 %v2917, %v3205
  %v3207 = vpop.f32.mrb[0].mxu0
  %3208 = vmatprep.mubr.bf16.mxu0 %v1621
  %3209 = vmatmul.mubr.bf16.gmra.mrb[0].mxu0 %v1620
  %v3210 = vpop.f32.mrb[0].mxu0
  %v3211 = vadd.f32 %v2922, %v3210
  %v3212 = vpop.f32.mrb[0].mxu0
  %v3213 = vpop.f32.mrb[0].mxu0
  %v3214 = vadd.f32 %v2925, %v3213
  %v3215 = vpop.f32.mrb[0].mxu0
  %3216 = vmatprep.mubr.bf16.mxu0 %v1630
  %3217 = vmatmul.mubr.bf16.gmra.mrb[0].mxu0 %v1629
  %v3218 = vpop.f32.mrb[0].mxu0
  %v3219 = vadd.f32 %v2930, %v3218
  %v3220 = vpop.f32.mrb[0].mxu0
  %v3221 = vpop.f32.mrb[0].mxu0
  %v3222 = vadd.f32 %v2933, %v3221
  %v3223 = vpop.f32.mrb[0].mxu0
  %3224 = vmatprep.mubr.bf16.mxu0 %v1639
  %3225 = vmatmul.mubr.bf16.gmra.mrb[0].mxu0 %v1638
  %v3226 = vpop.f32.mrb[0].mxu0
  %v3227 = vadd.f32 %v2938, %v3226
  %v3228 = vpop.f32.mrb[0].mxu0
  %v3229 = vpop.f32.mrb[0].mxu0
  %v3230 = vadd.f32 %v2941, %v3229
  %v3231 = vpop.f32.mrb[0].mxu0
  %3232 = vmatprep.mubr.bf16.mxu0 %v1648
  %3233 = vmatmul.mubr.bf16.gmra.mrb[0].mxu0 %v1647
  %v3234 = vpop.f32.mrb[0].mxu0
  %v3235 = vadd.f32 %v2946, %v3234
  %v3236 = vpop.f32.mrb[0].mxu0
  %v3237 = vpop.f32.mrb[0].mxu0
  %v3238 = vadd.f32 %v2949, %v3237
  %v3239 = vpop.f32.mrb[0].mxu0
  %3240 = vmatprep.mubr.bf16.mxu0 %v1657
  %3241 = vmatmul.mubr.bf16.gmra.mrb[0].mxu0 %v1656
  %v3242 = vpop.f32.mrb[0].mxu0
  %v3243 = vadd.f32 %v2954, %v3242
  %v3244 = vpop.f32.mrb[0].mxu0
  %v3245 = vpop.f32.mrb[0].mxu0
  %v3246 = vadd.f32 %v2957, %v3245
  %v3247 = vpop.f32.mrb[0].mxu0
  %3248 = vmatprep.mubr.bf16.mxu0 %v1666
  %3249 = vmatmul.mubr.bf16.gmra.mrb[0].mxu0 %v1665
  %v3250 = vpop.f32.mrb[0].mxu0
  %v3251 = vadd.f32 %v2962, %v3250
  %v3252 = vpop.f32.mrb[0].mxu0
  %v3253 = vpop.f32.mrb[0].mxu0
  %v3254 = vadd.f32 %v2965, %v3253
  %v3255 = vpop.f32.mrb[0].mxu0
  %3256 = vdwg.mxu0
  %3257 = vmatprep.subr.bf16.mxu0 0
  %3258 = vmatpush1.bf16.msra.mxu0 %v2294
  %3259 = vmatprep.subr.bf16.mxu0 0
  %3260 = vmatpush1.bf16.msra.mxu0 %v2295
  %3261 = vmatprep.subr.bf16.mxu0 0
  %3262 = vmatpush1.bf16.msra.mxu0 %v2296
  %3263 = vmatprep.subr.bf16.mxu0 0
  %3264 = vmatpush1.bf16.msra.mxu0 %v2297
  %3265 = vmatprep.subr.bf16.mxu0 0
  %3266 = vmatpush1.bf16.msra.mxu0 %v2298
  %3267 = vmatprep.subr.bf16.mxu0 0
  %3268 = vmatpush1.bf16.msra.mxu0 %v2299
  %3269 = vmatprep.subr.bf16.mxu0 0
  %3270 = vmatpush1.bf16.msra.mxu0 %v2300
  %3271 = vmatprep.subr.bf16.mxu0 0
  %3272 = vmatpush1.bf16.msra.mxu0 %v2301
  %3273 = vmatprep.subr.bf16.mxu0 0
  %3274 = vmatpush1.bf16.msra.mxu0 %v2302
  %3275 = vmatprep.subr.bf16.mxu0 0
  %3276 = vmatpush1.bf16.msra.mxu0 %v2303
  %3277 = vmatprep.subr.bf16.mxu0 0
  %3278 = vmatpush1.bf16.msra.mxu0 %v2304
  %3279 = vmatprep.subr.bf16.mxu0 0
  %3280 = vmatpush1.bf16.msra.mxu0 %v2305
  %3281 = vmatprep.subr.bf16.mxu0 0
  %3282 = vmatpush1.bf16.msra.mxu0 %v2306
  %3283 = vmatprep.subr.bf16.mxu0 0
  %3284 = vmatpush1.bf16.msra.mxu0 %v2307
  %3285 = vmatprep.subr.bf16.mxu0 0
  %3286 = vmatpush1.bf16.msra.mxu0 %v2308
  %3287 = vmatprep.subr.bf16.mxu0 0
  %3288 = vmatpush1.bf16.msra.mxu0 %v2309
  %3289 = vmatprep.mubr.bf16.mxu0 %v1389
  %3290 = vmatmul.mubr.bf16.gmra.mrb[0].mxu0 %v1388
  %v3291 = vpop.f32.mrb[0].mxu0
  %v3292 = vadd.f32 %v3003, %v3291
  %v3293 = vpop.f32.mrb[0].mxu0
  %v3294 = vpop.f32.mrb[0].mxu0
  %v3295 = vadd.f32 %v3006, %v3294
  %v3296 = vpop.f32.mrb[0].mxu0
  %3297 = vmatprep.mubr.bf16.mxu0 %v1398
  %3298 = vmatmul.mubr.bf16.gmra.mrb[0].mxu0 %v1397
  %v3299 = vpop.f32.mrb[0].mxu0
  %v3300 = vadd.f32 %v3011, %v3299
  %v3301 = vpop.f32.mrb[0].mxu0
  %v3302 = vpop.f32.mrb[0].mxu0
  %v3303 = vadd.f32 %v3014, %v3302
  %v3304 = vpop.f32.mrb[0].mxu0
  %3305 = vmatprep.mubr.bf16.mxu0 %v1407
  %3306 = vmatmul.mubr.bf16.gmra.mrb[0].mxu0 %v1406
  %v3307 = vpop.f32.mrb[0].mxu0
  %v3308 = vadd.f32 %v3019, %v3307
  %v3309 = vpop.f32.mrb[0].mxu0
  %v3310 = vpop.f32.mrb[0].mxu0
  %v3311 = vadd.f32 %v3022, %v3310
  %v3312 = vpop.f32.mrb[0].mxu0
  %3313 = vmatprep.mubr.bf16.mxu0 %v1416
  %3314 = vmatmul.mubr.bf16.gmra.mrb[0].mxu0 %v1415
  %v3315 = vpop.f32.mrb[0].mxu0
  %v3316 = vadd.f32 %v3027, %v3315
  %v3317 = vpop.f32.mrb[0].mxu0
  %v3318 = vpop.f32.mrb[0].mxu0
  %v3319 = vadd.f32 %v3030, %v3318
  %v3320 = vpop.f32.mrb[0].mxu0
  %3321 = vmatprep.mubr.bf16.mxu0 %v1425
  %3322 = vmatmul.mubr.bf16.gmra.mrb[0].mxu0 %v1424
  %v3323 = vpop.f32.mrb[0].mxu0
  %v3324 = vadd.f32 %v3035, %v3323
  %v3325 = vpop.f32.mrb[0].mxu0
  %v3326 = vpop.f32.mrb[0].mxu0
  %v3327 = vadd.f32 %v3038, %v3326
  %v3328 = vpop.f32.mrb[0].mxu0
  %3329 = vmatprep.mubr.bf16.mxu0 %v1434
  %3330 = vmatmul.mubr.bf16.gmra.mrb[0].mxu0 %v1433
  %v3331 = vpop.f32.mrb[0].mxu0
  %v3332 = vadd.f32 %v3043, %v3331
  %v3333 = vpop.f32.mrb[0].mxu0
  %v3334 = vpop.f32.mrb[0].mxu0
  %v3335 = vadd.f32 %v3046, %v3334
  %v3336 = vpop.f32.mrb[0].mxu0
  %3337 = vmatprep.mubr.bf16.mxu0 %v1443
  %3338 = vmatmul.mubr.bf16.gmra.mrb[0].mxu0 %v1442
  %v3339 = vpop.f32.mrb[0].mxu0
  %v3340 = vadd.f32 %v3051, %v3339
  %v3341 = vpop.f32.mrb[0].mxu0
  %v3342 = vpop.f32.mrb[0].mxu0
  %v3343 = vadd.f32 %v3054, %v3342
  %v3344 = vpop.f32.mrb[0].mxu0
  %3345 = vmatprep.mubr.bf16.mxu0 %v1452
  %3346 = vmatmul.mubr.bf16.gmra.mrb[0].mxu0 %v1451
  %v3347 = vpop.f32.mrb[0].mxu0
  %v3348 = vadd.f32 %v3059, %v3347
  %v3349 = vpop.f32.mrb[0].mxu0
  %v3350 = vpop.f32.mrb[0].mxu0
  %v3351 = vadd.f32 %v3062, %v3350
  %v3352 = vpop.f32.mrb[0].mxu0
  %3353 = vmatprep.mubr.bf16.mxu0 %v1461
  %3354 = vmatmul.mubr.bf16.gmra.mrb[0].mxu0 %v1460
  %v3355 = vpop.f32.mrb[0].mxu0
  %v3356 = vadd.f32 %v3067, %v3355
  %v3357 = vpop.f32.mrb[0].mxu0
  %v3358 = vpop.f32.mrb[0].mxu0
  %v3359 = vadd.f32 %v3070, %v3358
  %v3360 = vpop.f32.mrb[0].mxu0
  %3361 = vmatprep.mubr.bf16.mxu0 %v1470
  %3362 = vmatmul.mubr.bf16.gmra.mrb[0].mxu0 %v1469
  %v3363 = vpop.f32.mrb[0].mxu0
  %v3364 = vadd.f32 %v3075, %v3363
  %v3365 = vpop.f32.mrb[0].mxu0
  %v3366 = vpop.f32.mrb[0].mxu0
  %v3367 = vadd.f32 %v3078, %v3366
  %v3368 = vpop.f32.mrb[0].mxu0
  %3369 = vmatprep.mubr.bf16.mxu0 %v1479
  %3370 = vmatmul.mubr.bf16.gmra.mrb[0].mxu0 %v1478
  %v3371 = vpop.f32.mrb[0].mxu0
  %v3372 = vadd.f32 %v3083, %v3371
  %v3373 = vpop.f32.mrb[0].mxu0
  %v3374 = vpop.f32.mrb[0].mxu0
  %v3375 = vadd.f32 %v3086, %v3374
  %v3376 = vpop.f32.mrb[0].mxu0
  %3377 = vmatprep.mubr.bf16.mxu0 %v1488
  %3378 = vmatmul.mubr.bf16.gmra.mrb[0].mxu0 %v1487
  %v3379 = vpop.f32.mrb[0].mxu0
  %v3380 = vadd.f32 %v3091, %v3379
  %v3381 = vpop.f32.mrb[0].mxu0
  %v3382 = vpop.f32.mrb[0].mxu0
  %v3383 = vadd.f32 %v3094, %v3382
  %v3384 = vpop.f32.mrb[0].mxu0
  %3385 = vmatprep.mubr.bf16.mxu0 %v1497
  %3386 = vmatmul.mubr.bf16.gmra.mrb[0].mxu0 %v1496
  %v3387 = vpop.f32.mrb[0].mxu0
  %v3388 = vadd.f32 %v3099, %v3387
  %v3389 = vpop.f32.mrb[0].mxu0
  %v3390 = vpop.f32.mrb[0].mxu0
  %v3391 = vadd.f32 %v3102, %v3390
  %v3392 = vpop.f32.mrb[0].mxu0
  %3393 = vmatprep.mubr.bf16.mxu0 %v1506
  %3394 = vmatmul.mubr.bf16.gmra.mrb[0].mxu0 %v1505
  %v3395 = vpop.f32.mrb[0].mxu0
  %v3396 = vadd.f32 %v3107, %v3395
  %v3397 = vpop.f32.mrb[0].mxu0
  %v3398 = vpop.f32.mrb[0].mxu0
  %v3399 = vadd.f32 %v3110, %v3398
  %v3400 = vpop.f32.mrb[0].mxu0
  %3401 = vmatprep.mubr.bf16.mxu0 %v1515
  %3402 = vmatmul.mubr.bf16.gmra.mrb[0].mxu0 %v1514
  %v3403 = vpop.f32.mrb[0].mxu0
  %v3404 = vadd.f32 %v3115, %v3403
  %v3405 = vpop.f32.mrb[0].mxu0
  %v3406 = vpop.f32.mrb[0].mxu0
  %v3407 = vadd.f32 %v3118, %v3406
  %v3408 = vpop.f32.mrb[0].mxu0
  %3409 = vmatprep.mubr.bf16.mxu0 %v1524
  %3410 = vmatmul.mubr.bf16.gmra.mrb[0].mxu0 %v1523
  %v3411 = vpop.f32.mrb[0].mxu0
  %v3412 = vadd.f32 %v3123, %v3411
  %v3413 = vpop.f32.mrb[0].mxu0
  %v3414 = vpop.f32.mrb[0].mxu0
  %v3415 = vadd.f32 %v3126, %v3414
  %v3416 = vpop.f32.mrb[0].mxu0
  %3417 = vmatprep.mubr.bf16.mxu0 %v1533
  %3418 = vmatmul.mubr.bf16.gmra.mrb[0].mxu0 %v1532
  %v3419 = vpop.f32.mrb[0].mxu0
  %v3420 = vadd.f32 %v3131, %v3419
  %v3421 = vpop.f32.mrb[0].mxu0
  %v3422 = vpop.f32.mrb[0].mxu0
  %v3423 = vadd.f32 %v3134, %v3422
  %v3424 = vpop.f32.mrb[0].mxu0
  %3425 = vmatprep.mubr.bf16.mxu0 %v1542
  %3426 = vmatmul.mubr.bf16.gmra.mrb[0].mxu0 %v1541
  %v3427 = vpop.f32.mrb[0].mxu0
  %v3428 = vadd.f32 %v3139, %v3427
  %v3429 = vpop.f32.mrb[0].mxu0
  %v3430 = vpop.f32.mrb[0].mxu0
  %v3431 = vadd.f32 %v3142, %v3430
  %v3432 = vpop.f32.mrb[0].mxu0
  %3433 = vmatprep.mubr.bf16.mxu0 %v1551
  %3434 = vmatmul.mubr.bf16.gmra.mrb[0].mxu0 %v1550
  %v3435 = vpop.f32.mrb[0].mxu0
  %v3436 = vadd.f32 %v3147, %v3435
  %v3437 = vpop.f32.mrb[0].mxu0
  %v3438 = vpop.f32.mrb[0].mxu0
  %v3439 = vadd.f32 %v3150, %v3438
  %v3440 = vpop.f32.mrb[0].mxu0
  %3441 = vmatprep.mubr.bf16.mxu0 %v1560
  %3442 = vmatmul.mubr.bf16.gmra.mrb[0].mxu0 %v1559
  %v3443 = vpop.f32.mrb[0].mxu0
  %v3444 = vadd.f32 %v3155, %v3443
  %v3445 = vpop.f32.mrb[0].mxu0
  %v3446 = vpop.f32.mrb[0].mxu0
  %v3447 = vadd.f32 %v3158, %v3446
  %v3448 = vpop.f32.mrb[0].mxu0
  %3449 = vmatprep.mubr.bf16.mxu0 %v1569
  %3450 = vmatmul.mubr.bf16.gmra.mrb[0].mxu0 %v1568
  %v3451 = vpop.f32.mrb[0].mxu0
  %v3452 = vadd.f32 %v3163, %v3451
  %v3453 = vpop.f32.mrb[0].mxu0
  %v3454 = vpop.f32.mrb[0].mxu0
  %v3455 = vadd.f32 %v3166, %v3454
  %v3456 = vpop.f32.mrb[0].mxu0
  %3457 = vmatprep.mubr.bf16.mxu0 %v1578
  %3458 = vmatmul.mubr.bf16.gmra.mrb[0].mxu0 %v1577
  %v3459 = vpop.f32.mrb[0].mxu0
  %v3460 = vadd.f32 %v3171, %v3459
  %v3461 = vpop.f32.mrb[0].mxu0
  %v3462 = vpop.f32.mrb[0].mxu0
  %v3463 = vadd.f32 %v3174, %v3462
  %v3464 = vpop.f32.mrb[0].mxu0
  %3465 = vmatprep.mubr.bf16.mxu0 %v1587
  %3466 = vmatmul.mubr.bf16.gmra.mrb[0].mxu0 %v1586
  %v3467 = vpop.f32.mrb[0].mxu0
  %v3468 = vadd.f32 %v3179, %v3467
  %v3469 = vpop.f32.mrb[0].mxu0
  %v3470 = vpop.f32.mrb[0].mxu0
  %v3471 = vadd.f32 %v3182, %v3470
  %v3472 = vpop.f32.mrb[0].mxu0
  %3473 = vmatprep.mubr.bf16.mxu0 %v1596
  %3474 = vmatmul.mubr.bf16.gmra.mrb[0].mxu0 %v1595
  %v3475 = vpop.f32.mrb[0].mxu0
  %v3476 = vadd.f32 %v3187, %v3475
  %v3477 = vpop.f32.mrb[0].mxu0
  %v3478 = vpop.f32.mrb[0].mxu0
  %v3479 = vadd.f32 %v3190, %v3478
  %v3480 = vpop.f32.mrb[0].mxu0
  %3481 = vmatprep.mubr.bf16.mxu0 %v1605
  %3482 = vmatmul.mubr.bf16.gmra.mrb[0].mxu0 %v1604
  %v3483 = vpop.f32.mrb[0].mxu0
  %v3484 = vadd.f32 %v3195, %v3483
  %v3485 = vpop.f32.mrb[0].mxu0
  %v3486 = vpop.f32.mrb[0].mxu0
  %v3487 = vadd.f32 %v3198, %v3486
  %v3488 = vpop.f32.mrb[0].mxu0
  %3489 = vmatprep.mubr.bf16.mxu0 %v1614
  %3490 = vmatmul.mubr.bf16.gmra.mrb[0].mxu0 %v1613
  %v3491 = vpop.f32.mrb[0].mxu0
  %v3492 = vadd.f32 %v3203, %v3491
  %v3493 = vpop.f32.mrb[0].mxu0
  %v3494 = vpop.f32.mrb[0].mxu0
  %v3495 = vadd.f32 %v3206, %v3494
  %v3496 = vpop.f32.mrb[0].mxu0
  %3497 = vmatprep.mubr.bf16.mxu0 %v1623
  %3498 = vmatmul.mubr.bf16.gmra.mrb[0].mxu0 %v1622
  %v3499 = vpop.f32.mrb[0].mxu0
  %v3500 = vadd.f32 %v3211, %v3499
  %v3501 = vpop.f32.mrb[0].mxu0
  %v3502 = vpop.f32.mrb[0].mxu0
  %v3503 = vadd.f32 %v3214, %v3502
  %v3504 = vpop.f32.mrb[0].mxu0
  %3505 = vmatprep.mubr.bf16.mxu0 %v1632
  %3506 = vmatmul.mubr.bf16.gmra.mrb[0].mxu0 %v1631
  %v3507 = vpop.f32.mrb[0].mxu0
  %v3508 = vadd.f32 %v3219, %v3507
  %v3509 = vpop.f32.mrb[0].mxu0
  %v3510 = vpop.f32.mrb[0].mxu0
  %v3511 = vadd.f32 %v3222, %v3510
  %v3512 = vpop.f32.mrb[0].mxu0
  %3513 = vmatprep.mubr.bf16.mxu0 %v1641
  %3514 = vmatmul.mubr.bf16.gmra.mrb[0].mxu0 %v1640
  %v3515 = vpop.f32.mrb[0].mxu0
  %v3516 = vadd.f32 %v3227, %v3515
  %v3517 = vpop.f32.mrb[0].mxu0
  %v3518 = vpop.f32.mrb[0].mxu0
  %v3519 = vadd.f32 %v3230, %v3518
  %v3520 = vpop.f32.mrb[0].mxu0
  %3521 = vmatprep.mubr.bf16.mxu0 %v1650
  %3522 = vmatmul.mubr.bf16.gmra.mrb[0].mxu0 %v1649
  %v3523 = vpop.f32.mrb[0].mxu0
  %v3524 = vadd.f32 %v3235, %v3523
  %v3525 = vpop.f32.mrb[0].mxu0
  %v3526 = vpop.f32.mrb[0].mxu0
  %v3527 = vadd.f32 %v3238, %v3526
  %v3528 = vpop.f32.mrb[0].mxu0
  %3529 = vmatprep.mubr.bf16.mxu0 %v1659
  %3530 = vmatmul.mubr.bf16.gmra.mrb[0].mxu0 %v1658
  %v3531 = vpop.f32.mrb[0].mxu0
  %v3532 = vadd.f32 %v3243, %v3531
  %v3533 = vpop.f32.mrb[0].mxu0
  %v3534 = vpop.f32.mrb[0].mxu0
  %v3535 = vadd.f32 %v3246, %v3534
  %v3536 = vpop.f32.mrb[0].mxu0
  %3537 = vmatprep.mubr.bf16.mxu0 %v1668
  %3538 = vmatmul.mubr.bf16.gmra.mrb[0].mxu0 %v1667
  %v3539 = vpop.f32.mrb[0].mxu0
  %v3540 = vadd.f32 %v3251, %v3539
  %v3541 = vpop.f32.mrb[0].mxu0
  %v3542 = vpop.f32.mrb[0].mxu0
  %v3543 = vadd.f32 %v3254, %v3542
  %v3544 = vpop.f32.mrb[0].mxu0
  %3545 = vdwg.mxu0
  %3546 = vmatprep.subr.bf16.mxu0 0
  %3547 = vmatpush1.bf16.msra.mxu0 %v2310
  %3548 = vmatprep.subr.bf16.mxu0 0
  %3549 = vmatpush1.bf16.msra.mxu0 %v2311
  %3550 = vmatprep.subr.bf16.mxu0 0
  %3551 = vmatpush1.bf16.msra.mxu0 %v2312
  %3552 = vmatprep.subr.bf16.mxu0 0
  %3553 = vmatpush1.bf16.msra.mxu0 %v2313
  %3554 = vmatprep.subr.bf16.mxu0 0
  %3555 = vmatpush1.bf16.msra.mxu0 %v2314
  %3556 = vmatprep.subr.bf16.mxu0 0
  %3557 = vmatpush1.bf16.msra.mxu0 %v2315
  %3558 = vmatprep.subr.bf16.mxu0 0
  %3559 = vmatpush1.bf16.msra.mxu0 %v2316
  %3560 = vmatprep.subr.bf16.mxu0 0
  %3561 = vmatpush1.bf16.msra.mxu0 %v2317
  %3562 = vmatprep.subr.bf16.mxu0 0
  %3563 = vmatpush1.bf16.msra.mxu0 0
  %3564 = vmatprep.subr.bf16.mxu0 0
  %3565 = vmatpush1.bf16.msra.mxu0 0
  %3566 = vmatprep.subr.bf16.mxu0 0
  %3567 = vmatpush1.bf16.msra.mxu0 0
  %3568 = vmatprep.subr.bf16.mxu0 0
  %3569 = vmatpush1.bf16.msra.mxu0 0
  %3570 = vmatprep.subr.bf16.mxu0 0
  %3571 = vmatpush1.bf16.msra.mxu0 0
  %3572 = vmatprep.subr.bf16.mxu0 0
  %3573 = vmatpush1.bf16.msra.mxu0 0
  %3574 = vmatprep.subr.bf16.mxu0 0
  %3575 = vmatpush1.bf16.msra.mxu0 0
  %3576 = vmatprep.subr.bf16.mxu0 0
  %3577 = vmatpush1.bf16.msra.mxu0 0
  %3578 = vmatprep.mubr.bf16.mxu0 0
  %3579 = vmatmul.mubr.bf16.gmra.mrb[0].mxu0 %v1390
  %v3580 = vpop.f32.mrb[0].mxu0
  %v3581 = vadd.f32 %v3292, %v3580
  %v3582 = vpop.f32.mrb[0].mxu0
  %v3583 = vpop.f32.mrb[0].mxu0
  %v3584 = vadd.f32 %v3295, %v3583
  %v3585 = vpop.f32.mrb[0].mxu0
  %3586 = vmatprep.mubr.bf16.mxu0 0
  %3587 = vmatmul.mubr.bf16.gmra.mrb[0].mxu0 %v1399
  %v3588 = vpop.f32.mrb[0].mxu0
  %v3589 = vadd.f32 %v3300, %v3588
  %v3590 = vpop.f32.mrb[0].mxu0
  %v3591 = vpop.f32.mrb[0].mxu0
  %v3592 = vadd.f32 %v3303, %v3591
  %v3593 = vpop.f32.mrb[0].mxu0
  %3594 = vmatprep.mubr.bf16.mxu0 0
  %3595 = vmatmul.mubr.bf16.gmra.mrb[0].mxu0 %v1408
  %v3596 = vpop.f32.mrb[0].mxu0
  %v3597 = vadd.f32 %v3308, %v3596
  %v3598 = vpop.f32.mrb[0].mxu0
  %v3599 = vpop.f32.mrb[0].mxu0
  %v3600 = vadd.f32 %v3311, %v3599
  %v3601 = vpop.f32.mrb[0].mxu0
  %3602 = vmatprep.mubr.bf16.mxu0 0
  %3603 = vmatmul.mubr.bf16.gmra.mrb[0].mxu0 %v1417
  %v3604 = vpop.f32.mrb[0].mxu0
  %v3605 = vadd.f32 %v3316, %v3604
  %v3606 = vpop.f32.mrb[0].mxu0
  %v3607 = vpop.f32.mrb[0].mxu0
  %v3608 = vadd.f32 %v3319, %v3607
  %v3609 = vpop.f32.mrb[0].mxu0
  %3610 = vmatprep.mubr.bf16.mxu0 0
  %3611 = vmatmul.mubr.bf16.gmra.mrb[0].mxu0 %v1426
  %v3612 = vpop.f32.mrb[0].mxu0
  %v3613 = vadd.f32 %v3324, %v3612
  %v3614 = vpop.f32.mrb[0].mxu0
  %v3615 = vpop.f32.mrb[0].mxu0
  %v3616 = vadd.f32 %v3327, %v3615
  %v3617 = vpop.f32.mrb[0].mxu0
  %3618 = vmatprep.mubr.bf16.mxu0 0
  %3619 = vmatmul.mubr.bf16.gmra.mrb[0].mxu0 %v1435
  %v3620 = vpop.f32.mrb[0].mxu0
  %v3621 = vadd.f32 %v3332, %v3620
  %v3622 = vpop.f32.mrb[0].mxu0
  %v3623 = vpop.f32.mrb[0].mxu0
  %v3624 = vadd.f32 %v3335, %v3623
  %v3625 = vpop.f32.mrb[0].mxu0
  %3626 = vmatprep.mubr.bf16.mxu0 0
  %3627 = vmatmul.mubr.bf16.gmra.mrb[0].mxu0 %v1444
  %v3628 = vpop.f32.mrb[0].mxu0
  %v3629 = vadd.f32 %v3340, %v3628
  %v3630 = vpop.f32.mrb[0].mxu0
  %v3631 = vpop.f32.mrb[0].mxu0
  %v3632 = vadd.f32 %v3343, %v3631
  %v3633 = vpop.f32.mrb[0].mxu0
  %3634 = vmatprep.mubr.bf16.mxu0 0
  %3635 = vmatmul.mubr.bf16.gmra.mrb[0].mxu0 %v1453
  %v3636 = vpop.f32.mrb[0].mxu0
  %v3637 = vadd.f32 %v3348, %v3636
  %v3638 = vpop.f32.mrb[0].mxu0
  %v3639 = vpop.f32.mrb[0].mxu0
  %v3640 = vadd.f32 %v3351, %v3639
  %v3641 = vpop.f32.mrb[0].mxu0
  %3642 = vmatprep.mubr.bf16.mxu0 0
  %3643 = vmatmul.mubr.bf16.gmra.mrb[0].mxu0 %v1462
  %v3644 = vpop.f32.mrb[0].mxu0
  %v3645 = vadd.f32 %v3356, %v3644
  %v3646 = vpop.f32.mrb[0].mxu0
  %v3647 = vpop.f32.mrb[0].mxu0
  %v3648 = vadd.f32 %v3359, %v3647
  %v3649 = vpop.f32.mrb[0].mxu0
  %3650 = vmatprep.mubr.bf16.mxu0 0
  %3651 = vmatmul.mubr.bf16.gmra.mrb[0].mxu0 %v1471
  %v3652 = vpop.f32.mrb[0].mxu0
  %v3653 = vadd.f32 %v3364, %v3652
  %v3654 = vpop.f32.mrb[0].mxu0
  %v3655 = vpop.f32.mrb[0].mxu0
  %v3656 = vadd.f32 %v3367, %v3655
  %v3657 = vpop.f32.mrb[0].mxu0
  %3658 = vmatprep.mubr.bf16.mxu0 0
  %3659 = vmatmul.mubr.bf16.gmra.mrb[0].mxu0 %v1480
  %v3660 = vpop.f32.mrb[0].mxu0
  %v3661 = vadd.f32 %v3372, %v3660
  %v3662 = vpop.f32.mrb[0].mxu0
  %v3663 = vpop.f32.mrb[0].mxu0
  %v3664 = vadd.f32 %v3375, %v3663
  %v3665 = vpop.f32.mrb[0].mxu0
  %3666 = vmatprep.mubr.bf16.mxu0 0
  %3667 = vmatmul.mubr.bf16.gmra.mrb[0].mxu0 %v1489
  %v3668 = vpop.f32.mrb[0].mxu0
  %v3669 = vadd.f32 %v3380, %v3668
  %v3670 = vpop.f32.mrb[0].mxu0
  %v3671 = vpop.f32.mrb[0].mxu0
  %v3672 = vadd.f32 %v3383, %v3671
  %v3673 = vpop.f32.mrb[0].mxu0
  %3674 = vmatprep.mubr.bf16.mxu0 0
  %3675 = vmatmul.mubr.bf16.gmra.mrb[0].mxu0 %v1498
  %v3676 = vpop.f32.mrb[0].mxu0
  %v3677 = vadd.f32 %v3388, %v3676
  %v3678 = vpop.f32.mrb[0].mxu0
  %v3679 = vpop.f32.mrb[0].mxu0
  %v3680 = vadd.f32 %v3391, %v3679
  %v3681 = vpop.f32.mrb[0].mxu0
  %3682 = vmatprep.mubr.bf16.mxu0 0
  %3683 = vmatmul.mubr.bf16.gmra.mrb[0].mxu0 %v1507
  %v3684 = vpop.f32.mrb[0].mxu0
  %v3685 = vadd.f32 %v3396, %v3684
  %v3686 = vpop.f32.mrb[0].mxu0
  %v3687 = vpop.f32.mrb[0].mxu0
  %v3688 = vadd.f32 %v3399, %v3687
  %v3689 = vpop.f32.mrb[0].mxu0
  %3690 = vmatprep.mubr.bf16.mxu0 0
  %3691 = vmatmul.mubr.bf16.gmra.mrb[0].mxu0 %v1516
  %v3692 = vpop.f32.mrb[0].mxu0
  %v3693 = vadd.f32 %v3404, %v3692
  %v3694 = vpop.f32.mrb[0].mxu0
  %v3695 = vpop.f32.mrb[0].mxu0
  %v3696 = vadd.f32 %v3407, %v3695
  %v3697 = vpop.f32.mrb[0].mxu0
  %3698 = vmatprep.mubr.bf16.mxu0 0
  %3699 = vmatmul.mubr.bf16.gmra.mrb[0].mxu0 %v1525
  %v3700 = vpop.f32.mrb[0].mxu0
  %v3701 = vadd.f32 %v3412, %v3700
  %v3702 = vpop.f32.mrb[0].mxu0
  %v3703 = vpop.f32.mrb[0].mxu0
  %v3704 = vadd.f32 %v3415, %v3703
  %v3705 = vpop.f32.mrb[0].mxu0
  %3706 = vmatprep.mubr.bf16.mxu0 0
  %3707 = vmatmul.mubr.bf16.gmra.mrb[0].mxu0 %v1534
  %v3708 = vpop.f32.mrb[0].mxu0
  %v3709 = vadd.f32 %v3420, %v3708
  %v3710 = vpop.f32.mrb[0].mxu0
  %v3711 = vpop.f32.mrb[0].mxu0
  %v3712 = vadd.f32 %v3423, %v3711
  %v3713 = vpop.f32.mrb[0].mxu0
  %3714 = vmatprep.mubr.bf16.mxu0 0
  %3715 = vmatmul.mubr.bf16.gmra.mrb[0].mxu0 %v1543
  %v3716 = vpop.f32.mrb[0].mxu0
  %v3717 = vadd.f32 %v3428, %v3716
  %v3718 = vpop.f32.mrb[0].mxu0
  %v3719 = vpop.f32.mrb[0].mxu0
  %v3720 = vadd.f32 %v3431, %v3719
  %v3721 = vpop.f32.mrb[0].mxu0
  %3722 = vmatprep.mubr.bf16.mxu0 0
  %3723 = vmatmul.mubr.bf16.gmra.mrb[0].mxu0 %v1552
  %v3724 = vpop.f32.mrb[0].mxu0
  %v3725 = vadd.f32 %v3436, %v3724
  %v3726 = vpop.f32.mrb[0].mxu0
  %v3727 = vpop.f32.mrb[0].mxu0
  %v3728 = vadd.f32 %v3439, %v3727
  %v3729 = vpop.f32.mrb[0].mxu0
  %3730 = vmatprep.mubr.bf16.mxu0 0
  %3731 = vmatmul.mubr.bf16.gmra.mrb[0].mxu0 %v1561
  %v3732 = vpop.f32.mrb[0].mxu0
  %v3733 = vadd.f32 %v3444, %v3732
  %v3734 = vpop.f32.mrb[0].mxu0
  %v3735 = vpop.f32.mrb[0].mxu0
  %v3736 = vadd.f32 %v3447, %v3735
  %v3737 = vpop.f32.mrb[0].mxu0
  %3738 = vmatprep.mubr.bf16.mxu0 0
  %3739 = vmatmul.mubr.bf16.gmra.mrb[0].mxu0 %v1570
  %v3740 = vpop.f32.mrb[0].mxu0
  %v3741 = vadd.f32 %v3452, %v3740
  %v3742 = vpop.f32.mrb[0].mxu0
  %v3743 = vpop.f32.mrb[0].mxu0
  %v3744 = vadd.f32 %v3455, %v3743
  %v3745 = vpop.f32.mrb[0].mxu0
  %3746 = vmatprep.mubr.bf16.mxu0 0
  %3747 = vmatmul.mubr.bf16.gmra.mrb[0].mxu0 %v1579
  %v3748 = vpop.f32.mrb[0].mxu0
  %v3749 = vadd.f32 %v3460, %v3748
  %v3750 = vpop.f32.mrb[0].mxu0
  %v3751 = vpop.f32.mrb[0].mxu0
  %v3752 = vadd.f32 %v3463, %v3751
  %v3753 = vpop.f32.mrb[0].mxu0
  %3754 = vmatprep.mubr.bf16.mxu0 0
  %3755 = vmatmul.mubr.bf16.gmra.mrb[0].mxu0 %v1588
  %v3756 = vpop.f32.mrb[0].mxu0
  %v3757 = vadd.f32 %v3468, %v3756
  %v3758 = vpop.f32.mrb[0].mxu0
  %v3759 = vpop.f32.mrb[0].mxu0
  %v3760 = vadd.f32 %v3471, %v3759
  %v3761 = vpop.f32.mrb[0].mxu0
  %3762 = vmatprep.mubr.bf16.mxu0 0
  %3763 = vmatmul.mubr.bf16.gmra.mrb[0].mxu0 %v1597
  %v3764 = vpop.f32.mrb[0].mxu0
  %v3765 = vadd.f32 %v3476, %v3764
  %v3766 = vpop.f32.mrb[0].mxu0
  %v3767 = vpop.f32.mrb[0].mxu0
  %v3768 = vadd.f32 %v3479, %v3767
  %v3769 = vpop.f32.mrb[0].mxu0
  %3770 = vmatprep.mubr.bf16.mxu0 0
  %3771 = vmatmul.mubr.bf16.gmra.mrb[0].mxu0 %v1606
  %v3772 = vpop.f32.mrb[0].mxu0
  %v3773 = vadd.f32 %v3484, %v3772
  %v3774 = vpop.f32.mrb[0].mxu0
  %v3775 = vpop.f32.mrb[0].mxu0
  %v3776 = vadd.f32 %v3487, %v3775
  %v3777 = vpop.f32.mrb[0].mxu0
  %3778 = vmatprep.mubr.bf16.mxu0 0
  %3779 = vmatmul.mubr.bf16.gmra.mrb[0].mxu0 %v1615
  %v3780 = vpop.f32.mrb[0].mxu0
  %v3781 = vadd.f32 %v3492, %v3780
  %v3782 = vpop.f32.mrb[0].mxu0
  %v3783 = vpop.f32.mrb[0].mxu0
  %v3784 = vadd.f32 %v3495, %v3783
  %v3785 = vpop.f32.mrb[0].mxu0
  %3786 = vmatprep.mubr.bf16.mxu0 0
  %3787 = vmatmul.mubr.bf16.gmra.mrb[0].mxu0 %v1624
  %v3788 = vpop.f32.mrb[0].mxu0
  %v3789 = vadd.f32 %v3500, %v3788
  %v3790 = vpop.f32.mrb[0].mxu0
  %v3791 = vpop.f32.mrb[0].mxu0
  %v3792 = vadd.f32 %v3503, %v3791
  %v3793 = vpop.f32.mrb[0].mxu0
  %3794 = vmatprep.mubr.bf16.mxu0 0
  %3795 = vmatmul.mubr.bf16.gmra.mrb[0].mxu0 %v1633
  %v3796 = vpop.f32.mrb[0].mxu0
  %v3797 = vadd.f32 %v3508, %v3796
  %v3798 = vpop.f32.mrb[0].mxu0
  %v3799 = vpop.f32.mrb[0].mxu0
  %v3800 = vadd.f32 %v3511, %v3799
  %v3801 = vpop.f32.mrb[0].mxu0
  %3802 = vmatprep.mubr.bf16.mxu0 0
  %3803 = vmatmul.mubr.bf16.gmra.mrb[0].mxu0 %v1642
  %v3804 = vpop.f32.mrb[0].mxu0
  %v3805 = vadd.f32 %v3516, %v3804
  %v3806 = vpop.f32.mrb[0].mxu0
  %v3807 = vpop.f32.mrb[0].mxu0
  %v3808 = vadd.f32 %v3519, %v3807
  %v3809 = vpop.f32.mrb[0].mxu0
  %3810 = vmatprep.mubr.bf16.mxu0 0
  %3811 = vmatmul.mubr.bf16.gmra.mrb[0].mxu0 %v1651
  %v3812 = vpop.f32.mrb[0].mxu0
  %v3813 = vadd.f32 %v3524, %v3812
  %v3814 = vpop.f32.mrb[0].mxu0
  %v3815 = vpop.f32.mrb[0].mxu0
  %v3816 = vadd.f32 %v3527, %v3815
  %v3817 = vpop.f32.mrb[0].mxu0
  %3818 = vmatprep.mubr.bf16.mxu0 0
  %3819 = vmatmul.mubr.bf16.gmra.mrb[0].mxu0 %v1660
  %v3820 = vpop.f32.mrb[0].mxu0
  %v3821 = vadd.f32 %v3532, %v3820
  %v3822 = vpop.f32.mrb[0].mxu0
  %v3823 = vpop.f32.mrb[0].mxu0
  %v3824 = vadd.f32 %v3535, %v3823
  %v3825 = vpop.f32.mrb[0].mxu0
  %3826 = vmatprep.mubr.bf16.mxu0 0
  %3827 = vmatmul.mubr.bf16.gmra.mrb[0].mxu0 %v1669
  %v3828 = vpop.f32.mrb[0].mxu0
  %v3829 = vadd.f32 %v3540, %v3828
  %v3830 = vpop.f32.mrb[0].mxu0
  %v3831 = vpop.f32.mrb[0].mxu0
  %v3832 = vadd.f32 %v3543, %v3831
  %v3833 = vpop.f32.mrb[0].mxu0
  %3834 = vdwg.mxu0
  %v3835 = vtanh.pop %v3581
  %v3836 = vtanh.pop %v3584
  %v3837 = vtanh.pop %v3589
  %v3838 = vtanh.pop %v3592
  %v3839 = vtanh.pop %v3597
  %v3840 = vtanh.pop %v3600
  %v3841 = vtanh.pop %v3605
  %v3842 = vtanh.pop %v3608
  %v3843 = vtanh.pop %v3613
  %v3844 = vtanh.pop %v3616
  %v3845 = vtanh.pop %v3621
  %v3846 = vtanh.pop %v3624
  %v3847 = vtanh.pop %v3629
  %v3848 = vtanh.pop %v3632
  %v3849 = vtanh.pop %v3637
  %v3850 = vtanh.pop %v3640
  %v3851 = vtanh.pop %v3645
  %v3852 = vtanh.pop %v3648
  %v3853 = vtanh.pop %v3653
  %v3854 = vtanh.pop %v3656
  %v3855 = vtanh.pop %v3661
  %v3856 = vtanh.pop %v3664
  %v3857 = vtanh.pop %v3669
  %v3858 = vtanh.pop %v3672
  %v3859 = vtanh.pop %v3677
  %v3860 = vtanh.pop %v3680
  %v3861 = vtanh.pop %v3685
  %v3862 = vtanh.pop %v3688
  %v3863 = vtanh.pop %v3693
  %v3864 = vtanh.pop %v3696
  %v3865 = vtanh.pop %v3701
  %v3866 = vtanh.pop %v3704
  %v3867 = vtanh.pop %v3709
  %v3868 = vtanh.pop %v3712
  %v3869 = vtanh.pop %v3717
  %v3870 = vtanh.pop %v3720
  %v3871 = vtanh.pop %v3725
  %v3872 = vtanh.pop %v3728
  %v3873 = vtanh.pop %v3733
  %v3874 = vtanh.pop %v3736
  %v3875 = vtanh.pop %v3741
  %v3876 = vtanh.pop %v3744
  %v3877 = vtanh.pop %v3749
  %v3878 = vtanh.pop %v3752
  %v3879 = vtanh.pop %v3757
  %v3880 = vtanh.pop %v3760
  %v3881 = vtanh.pop %v3765
  %v3882 = vtanh.pop %v3768
  %v3883 = vtanh.pop %v3773
  %v3884 = vtanh.pop %v3776
  %v3885 = vtanh.pop %v3781
  %v3886 = vtanh.pop %v3784
  %v3887 = vtanh.pop %v3789
  %v3888 = vtanh.pop %v3792
  %v3889 = vtanh.pop %v3797
  %v3890 = vtanh.pop %v3800
  %v3891 = vtanh.pop %v3805
  %v3892 = vtanh.pop %v3808
  %v3893 = vtanh.pop %v3813
  %v3894 = vtanh.pop %v3816
  %v3895 = vtanh.pop %v3821
  %v3896 = vtanh.pop %v3824
  %v3897 = vtanh.pop %v3829
  %v3898 = vtanh.pop %v3832
  %3899 = vst [vmem:[%s3] sm:$0xff] %v3835
  %3900 = vst [vmem:[%s3 + $0x8] sm:$0xff] %v3836
  %3901 = vst [vmem:[%s3 + $0x10] sm:$0xff] %v3837
  %3902 = vst [vmem:[%s3 + $0x18] sm:$0xff] %v3838
  %3903 = vst [vmem:[%s3 + $0x20] sm:$0xff] %v3839
  %3904 = vst [vmem:[%s3 + $0x28] sm:$0xff] %v3840
  %3905 = vst [vmem:[%s3 + $0x30] sm:$0xff] %v3841
  %3906 = vst [vmem:[%s3 + $0x38] sm:$0xff] %v3842
  %3907 = vst [vmem:[%s3 + $0x40] sm:$0xff] %v3843
  %3908 = vst [vmem:[%s3 + $0x48] sm:$0xff] %v3844
  %3909 = vst [vmem:[%s3 + $0x50] sm:$0xff] %v3845
  %3910 = vst [vmem:[%s3 + $0x58] sm:$0xff] %v3846
  %3911 = vst [vmem:[%s3 + $0x60] sm:$0xff] %v3847
  %3912 = vst [vmem:[%s3 + $0x68] sm:$0xff] %v3848
  %3913 = vst [vmem:[%s3 + $0x70] sm:$0xff] %v3849
  %3914 = vst [vmem:[%s3 + $0x78] sm:$0xff] %v3850
  %3915 = vst [vmem:[%s3 + $0x80] sm:$0xff] %v3851
  %3916 = vst [vmem:[%s3 + $0x88] sm:$0xff] %v3852
  %3917 = vst [vmem:[%s3 + $0x90] sm:$0xff] %v3853
  %3918 = vst [vmem:[%s3 + $0x98] sm:$0xff] %v3854
  %3919 = vst [vmem:[%s3 + $0xa0] sm:$0xff] %v3855
  %3920 = vst [vmem:[%s3 + $0xa8] sm:$0xff] %v3856
  %3921 = vst [vmem:[%s3 + $0xb0] sm:$0xff] %v3857
  %3922 = vst [vmem:[%s3 + $0xb8] sm:$0xff] %v3858
  %3923 = vst [vmem:[%s3 + $0xc0] sm:$0xff] %v3859
  %3924 = vst [vmem:[%s3 + $0xc8] sm:$0xff] %v3860
  %3925 = vst [vmem:[%s3 + $0xd0] sm:$0xff] %v3861
  %3926 = vst [vmem:[%s3 + $0xd8] sm:$0xff] %v3862
  %3927 = vst [vmem:[%s3 + $0xe0] sm:$0xff] %v3863
  %3928 = vst [vmem:[%s3 + $0xe8] sm:$0xff] %v3864
  %3929 = vst [vmem:[%s3 + $0xf0] sm:$0xff] %v3865
  %3930 = vst [vmem:[%s3 + $0xf8] sm:$0xff] %v3866
  %3931 = vst [vmem:[%s3 + $0x100] sm:$0xff] %v3867
  %3932 = vst [vmem:[%s3 + $0x108] sm:$0xff] %v3868
  %3933 = vst [vmem:[%s3 + $0x110] sm:$0xff] %v3869
  %3934 = vst [vmem:[%s3 + $0x118] sm:$0xff] %v3870
  %3935 = vst [vmem:[%s3 + $0x120] sm:$0xff] %v3871
  %3936 = vst [vmem:[%s3 + $0x128] sm:$0xff] %v3872
  %3937 = vst [vmem:[%s3 + $0x130] sm:$0xff] %v3873
  %3938 = vst [vmem:[%s3 + $0x138] sm:$0xff] %v3874
  %3939 = vst [vmem:[%s3 + $0x140] sm:$0xff] %v3875
  %3940 = vst [vmem:[%s3 + $0x148] sm:$0xff] %v3876
  %3941 = vst [vmem:[%s3 + $0x150] sm:$0xff] %v3877
  %3942 = vst [vmem:[%s3 + $0x158] sm:$0xff] %v3878
  %3943 = vst [vmem:[%s3 + $0x160] sm:$0xff] %v3879
  %3944 = vst [vmem:[%s3 + $0x168] sm:$0xff] %v3880
  %3945 = vst [vmem:[%s3 + $0x170] sm:$0xff] %v3881
  %3946 = vst [vmem:[%s3 + $0x178] sm:$0xff] %v3882
  %3947 = vst [vmem:[%s3 + $0x180] sm:$0xff] %v3883
  %3948 = vst [vmem:[%s3 + $0x188] sm:$0xff] %v3884
  %3949 = vst [vmem:[%s3 + $0x190] sm:$0xff] %v3885
  %3950 = vst [vmem:[%s3 + $0x198] sm:$0xff] %v3886
  %3951 = vst [vmem:[%s3 + $0x1a0] sm:$0xff] %v3887
  %3952 = vst [vmem:[%s3 + $0x1a8] sm:$0xff] %v3888
  %3953 = vst [vmem:[%s3 + $0x1b0] sm:$0xff] %v3889
  %3954 = vst [vmem:[%s3 + $0x1b8] sm:$0xff] %v3890
  %3955 = vst [vmem:[%s3 + $0x1c0] sm:$0xff] %v3891
  %3956 = vst [vmem:[%s3 + $0x1c8] sm:$0xff] %v3892
  %3957 = vst [vmem:[%s3 + $0x1d0] sm:$0xff] %v3893
  %3958 = vst [vmem:[%s3 + $0x1d8] sm:$0xff] %v3894
  %3959 = vst [vmem:[%s3 + $0x1e0] sm:$0xff] %v3895
  %3960 = vst [vmem:[%s3 + $0x1e8] sm:$0xff] %v3896
  %3961 = vst [vmem:[%s3 + $0x1f0] sm:$0xff] %v3897
  %3962 = vst [vmem:[%s3 + $0x1f8] sm:$0xff] %v3898
  // Predicated region
  $region14: #{vqvae_forward.11} parent=0 // pred_check
    _
  $region15: #{vqvae_forward.11} parent=0 // pred_check_branch
    %3964 = sbr.rel (0) target = $region17
  $region16: #{vqvae_forward.11} parent=0 // pred_region
    _
  $region17: #{vqvae_forward.11} parent=0 // pred_fallthru
    _
  // Predicated region
  $region18: #{vqvae_forward.11} parent=0 // pred_check
    _
  $region19: #{vqvae_forward.11} parent=0 // pred_check_branch
    %3966 = sbr.rel (0) target = $region21
  $region20: #{vqvae_forward.11} parent=0 // pred_region
    _
  $region21: #{vqvae_forward.11} parent=0 // pred_fallthru
    _

</llo_original>
